<compile_context>
chip_gen: v7x
topology: tpu7x:2x2x1
jax: 0.10.0
libtpu: 0.0.40
codegen_flags: <defaults>
</compile_context>

<pallas_src>
import numpy as np
import jax
import jax.numpy as jnp
from jax.experimental import pallas as pl
from jax.experimental.pallas import tpu as pltpu

BN_EPS = 1e-5


# ---------------------------------------------------------------------------
# In-kernel 3x3 conv on the flat padded activation (3 K-packed MXU matmuls)
# ---------------------------------------------------------------------------
def _conv3x3_accumulate(xp_ref, w_ref, acc_ref, WP, R):
    """acc_ref[...] <- 3x3 conv of the flat padded activation.

    xp_ref:  (NPAD, Cin)       f32   flat row-major (H+2, W+2, Cin) padded activation
    w_ref:   (3, 3*Cin, Cout)  bf16  tap-packed weights, index [i, j*Cin + cin, cout]
    acc_ref: (R, Cout)         f32   R = H*(W+2); last 2 rows per image row are junk
    """
    for i in range(3):
        # Pack the 3 W-taps along K: each piece is a contiguous pl.ds slice (no reshape),
        # concat on the lane axis is vreg placement only -> one K=3*Cin MXU matmul.
        lhs = jnp.concatenate(
            [xp_ref[pl.ds(i * WP + j, R), :].astype(jnp.bfloat16) for j in range(3)],
            axis=-1)
        part = jnp.dot(lhs, w_ref[i], preferred_element_type=jnp.float32)
        if i == 0:
            acc_ref[...] = part
        else:
            acc_ref[...] = acc_ref[...] + part


# ---------------------------------------------------------------------------
# Fused ResidualBlock kernel: one grid step == one batch sample
# ---------------------------------------------------------------------------
def _residual_block_kernel(x_ref, w1_ref, s1_ref, b1_ref, w2_ref, s2_ref, b2_ref,
                           o_ref, xp1_ref, xp2_ref, acc_ref):
    _, H, W, _ = x_ref.shape
    WP = W + 2
    R = H * WP

    # ---- in-kernel zero padding (replaces two wrapper jnp.pad HBM passes) ----
    xp1_ref[...] = jnp.zeros(xp1_ref.shape, xp1_ref.dtype)
    xp2_ref[...] = jnp.zeros(xp2_ref.shape, xp2_ref.dtype)
    for h in range(H):
        xp1_ref[pl.ds((h + 1) * WP + 1, W), :] = x_ref[0, h]

    # ---- conv1 -> BN1 -> ReLU; h1 stays in VMEM (interior of conv2's padded buffer) ----
    _conv3x3_accumulate(xp1_ref, w1_ref, acc_ref, WP, R)
    h1 = jnp.maximum(acc_ref[...] * s1_ref[...] + b1_ref[...], 0.0)
    for h in range(H):
        xp2_ref[pl.ds((h + 1) * WP + 1, W), :] = h1[h * WP:h * WP + W, :]

    # ---- conv2 -> BN2 -> +identity residual (from VMEM-resident x) -> ReLU ----
    _conv3x3_accumulate(xp2_ref, w2_ref, acc_ref, WP, R)
    y2 = acc_ref[...] * s2_ref[...] + b2_ref[...]
    for h in range(H):
        row = y2[h * WP:h * WP + W, :] + x_ref[0, h]          # residual add in f32
        o_ref[0, h] = jnp.maximum(row, 0.0).astype(o_ref.dtype)


# ---------------------------------------------------------------------------
# Wrapper (single pallas_call)
# ---------------------------------------------------------------------------
def residual_block_forward_nhwc(x_nhwc, params):
    (w1, s1, b1), (w2, s2, b2) = params
    N, H, W, Cin = x_nhwc.shape
    Cmid = w1.shape[-1]
    Cout = w2.shape[-1]
    assert Cmid == Cout, "both convs emit `outchannel` features"
    assert Cin == Cout, "identity residual (shortcut=None) requires inchannel == outchannel"

    WP = W + 2
    R = H * WP                       # flat conv-output rows per sample
    NPAD = (H + 2) * WP + 8          # flat padded rows (+8 keeps the last tap slice in-bounds)

    # Tap-packed bf16 weights: index [i, j*Cin + cin, cout] (HWIO reshaped).
    w1k = w1.reshape(3, 3 * Cin, Cmid).astype(jnp.bfloat16)
    w2k = w2.reshape(3, 3 * Cmid, Cout).astype(jnp.bfloat16)

    # TODO(synk): for Cin/Cout >= 512 tile Cout (and set vmem_limit_bytes) to respect
    #             v7x's 32 MiB scoped-VMEM default; at C=128 everything fits everywhere.
    return pl.pallas_call(
        _residual_block_kernel,
        out_shape=jax.ShapeDtypeStruct((N, H, W, Cout), jnp.float32),
        grid=(N,),
        in_specs=[
            pl.BlockSpec((1, H, W, Cin), lambda n: (n, 0, 0, 0)),     # x (also residual source)
            pl.BlockSpec((3, 3 * Cin, Cmid), lambda n: (0, 0, 0)),    # conv1 weights
            pl.BlockSpec((1, Cmid), lambda n: (0, 0)),                # bn1 scale
            pl.BlockSpec((1, Cmid), lambda n: (0, 0)),                # bn1 shift
            pl.BlockSpec((3, 3 * Cmid, Cout), lambda n: (0, 0, 0)),   # conv2 weights
            pl.BlockSpec((1, Cout), lambda n: (0, 0)),                # bn2 scale
            pl.BlockSpec((1, Cout), lambda n: (0, 0)),                # bn2 shift
        ],
        out_specs=pl.BlockSpec((1, H, W, Cout), lambda n: (n, 0, 0, 0)),
        scratch_shapes=[
            pltpu.VMEM((NPAD, Cin), jnp.float32),    # padded x, flat (H+2)*(W+2) rows
            pltpu.VMEM((NPAD, Cmid), jnp.float32),   # padded h1 (fused VMEM intermediate)
            pltpu.VMEM((R, Cout), jnp.float32),      # f32 conv accumulator
        ],
        compiler_params=pltpu.CompilerParams(
            dimension_semantics=("parallel",),       # N>=2 -> both v7x TensorCores get work
        ),
    )(x_nhwc.astype(jnp.float32), w1k, s1, b1, w2k, s2, b2)


def residual_block_forward(x_nchw, params):
    """ResidualBlock.forward (stride=1, shortcut=None) on PyTorch NCHW input."""
    # NCHW -> NHWC relayout (channels on TPU lanes). These transposes are HBM passes
    # outside the kernel and disappear in an NHWC end-to-end model.
    x = jnp.transpose(x_nchw, (0, 2, 3, 1)).astype(jnp.float32)
    out = residual_block_forward_nhwc(x, params)
    return jnp.transpose(out, (0, 3, 1, 2))


# ---------------------------------------------------------------------------
# Parameters (eval-mode BN folded to scale/shift)
# ---------------------------------------------------------------------------
def init_params(key, inchannel, outchannel):
    params = []
    cin = inchannel
    for _ in range(2):
        key, kw, kg, kb, km, kv = jax.random.split(key, 6)
        cout = outchannel
        fan_in = 9 * cin
        w = jax.random.normal(kw, (3, 3, cin, cout), jnp.float32) * (2.0 / fan_in) ** 0.5
        gamma = 1.0 + 0.1 * jax.random.normal(kg, (cout,), jnp.float32)
        beta = 0.1 * jax.random.normal(kb, (cout,), jnp.float32)
        mean = 0.1 * jax.random.normal(km, (cout,), jnp.float32)
        var = 0.5 + jax.random.uniform(kv, (cout,), jnp.float32)
        scale = gamma / jnp.sqrt(var + BN_EPS)
        shift = beta - mean * scale
        params.append((w, scale.reshape(1, cout), shift.reshape(1, cout)))
        cin = cout
    return params


# ---------------------------------------------------------------------------
# Pure-JAX reference (mirrors the bf16 MXU operand quantization)
# ---------------------------------------------------------------------------
def ref_forward(x_nchw, params):
    (w1, s1, b1), (w2, s2, b2) = params
    x = jnp.transpose(x_nchw, (0, 2, 3, 1)).astype(jnp.float32)

    def conv(v, w):
        v = v.astype(jnp.bfloat16).astype(jnp.float32)
        w = w.astype(jnp.bfloat16).astype(jnp.float32)
        return jax.lax.conv_general_dilated(
            v, w, (1, 1), [(1, 1), (1, 1)],
            dimension_numbers=("NHWC", "HWIO", "NHWC"))

    h1 = jnp.maximum(conv(x, w1) * s1.reshape(1, 1, 1, -1) + b1.reshape(1, 1, 1, -1), 0.0)
    out = conv(h1, w2) * s2.reshape(1, 1, 1, -1) + b2.reshape(1, 1, 1, -1) + x
    out = jnp.maximum(out, 0.0)
    return jnp.transpose(out, (0, 3, 1, 2))


# ---------------------------------------------------------------------------
# Main
# ---------------------------------------------------------------------------
if __name__ == "__main__":
    key = jax.random.PRNGKey(0)
    k_x, k_p = jax.random.split(key)

    # module defaults: stride=1, shortcut=None -> inchannel == outchannel
    N, C, H, W = 2, 128, 16, 16
    x = jax.random.normal(k_x, (N, C, H, W), jnp.float32)
    params = init_params(k_p, C, C)

    out = jax.jit(residual_block_forward)(x, params)
    out = jax.block_until_ready(out)
    assert out.shape == (N, C, H, W), out.shape

    ref = ref_forward(x, params)
    np.testing.assert_allclose(np.asarray(out), np.asarray(ref), rtol=2e-3, atol=2e-3)

    print("KERNEL_OK")
</pallas_src>

<mosaic_0001>
module attributes {stable_mosaic.version = 11 : i64} {
  func.func @_residual_block_kernel(%arg0: i32, %arg1: memref<1x16x16x128xf32, #tpu.memory_space<vmem>>, %arg2: memref<3x384x128xbf16, #tpu.memory_space<vmem>>, %arg3: memref<1x128xf32, #tpu.memory_space<vmem>>, %arg4: memref<1x128xf32, #tpu.memory_space<vmem>>, %arg5: memref<3x384x128xbf16, #tpu.memory_space<vmem>>, %arg6: memref<1x128xf32, #tpu.memory_space<vmem>>, %arg7: memref<1x128xf32, #tpu.memory_space<vmem>>, %arg8: memref<1x16x16x128xf32, #tpu.memory_space<vmem>>, %arg9: memref<332x128xf32, #tpu.memory_space<vmem>>, %arg10: memref<332x128xf32, #tpu.memory_space<vmem>>, %arg11: memref<288x128xf32, #tpu.memory_space<vmem>>) attributes {dimension_semantics = [#tpu.dimension_semantics<parallel>], iteration_bounds = array<i64: 2>, scalar_prefetch = 0 : i64, scratch_operands = 3 : i64, tpu.core_type = #tpu.core_type<tc>, window_params = [{transform_indices = @transform_0, window_bounds = array<i64: 1, 16, 16, 128>}, {pipeline_mode = #tpu.pipeline_mode<synchronous>, transform_indices = @transform_1, window_bounds = array<i64: 3, 384, 128>}, {pipeline_mode = #tpu.pipeline_mode<synchronous>, transform_indices = @transform_2, window_bounds = array<i64: 1, 128>}, {pipeline_mode = #tpu.pipeline_mode<synchronous>, transform_indices = @transform_3, window_bounds = array<i64: 1, 128>}, {pipeline_mode = #tpu.pipeline_mode<synchronous>, transform_indices = @transform_4, window_bounds = array<i64: 3, 384, 128>}, {pipeline_mode = #tpu.pipeline_mode<synchronous>, transform_indices = @transform_5, window_bounds = array<i64: 1, 128>}, {pipeline_mode = #tpu.pipeline_mode<synchronous>, transform_indices = @transform_6, window_bounds = array<i64: 1, 128>}, {transform_indices = @transform_7, window_bounds = array<i64: 1, 16, 16, 128>}]} {
    %cst = arith.constant 0.000000e+00 : f32
    %0 = vector.broadcast %cst : f32 to vector<332x128xf32>
    %c0 = arith.constant 0 : index
    %c0_0 = arith.constant 0 : index
    %1 = vector.load %arg9[%c0, %c0_0] : memref<332x128xf32, #tpu.memory_space<vmem>>, vector<332x128xf32>
    tpu.vector_store %arg9[%c0, %c0_0], %0 {strides = array<i32>} : memref<332x128xf32, #tpu.memory_space<vmem>>, vector<332x128xf32>,
    %cst_1 = arith.constant 0.000000e+00 : f32
    %2 = vector.broadcast %cst_1 : f32 to vector<332x128xf32>
    %c0_2 = arith.constant 0 : index
    %c0_3 = arith.constant 0 : index
    %3 = vector.load %arg10[%c0_2, %c0_3] : memref<332x128xf32, #tpu.memory_space<vmem>>, vector<332x128xf32>
    tpu.vector_store %arg10[%c0_2, %c0_3], %2 {strides = array<i32>} : memref<332x128xf32, #tpu.memory_space<vmem>>, vector<332x128xf32>,
    %c0_4 = arith.constant 0 : index
    %c0_5 = arith.constant 0 : index
    %c0_6 = arith.constant 0 : index
    %c0_7 = arith.constant 0 : index
    %4 = vector.load %arg1[%c0_4, %c0_5, %c0_6, %c0_7] : memref<1x16x16x128xf32, #tpu.memory_space<vmem>>, vector<1x1x16x128xf32>
    %5 = vector.shape_cast %4 : vector<1x1x16x128xf32> to vector<16x128xf32>
    %c19 = arith.constant 19 : index
    %c0_8 = arith.constant 0 : index
    %6 = vector.load %arg9[%c19, %c0_8] : memref<332x128xf32, #tpu.memory_space<vmem>>, vector<16x128xf32>
    tpu.vector_store %arg9[%c19, %c0_8], %5 {strides = array<i32>} : memref<332x128xf32, #tpu.memory_space<vmem>>, vector<16x128xf32>,
    %c0_9 = arith.constant 0 : index
    %c1 = arith.constant 1 : index
    %c0_10 = arith.constant 0 : index
    %c0_11 = arith.constant 0 : index
    %7 = vector.load %arg1[%c0_9, %c1, %c0_10, %c0_11] : memref<1x16x16x128xf32, #tpu.memory_space<vmem>>, vector<1x1x16x128xf32>
    %8 = vector.shape_cast %7 : vector<1x1x16x128xf32> to vector<16x128xf32>
    %c37 = arith.constant 37 : index
    %c0_12 = arith.constant 0 : index
    %9 = vector.load %arg9[%c37, %c0_12] : memref<332x128xf32, #tpu.memory_space<vmem>>, vector<16x128xf32>
    tpu.vector_store %arg9[%c37, %c0_12], %8 {strides = array<i32>} : memref<332x128xf32, #tpu.memory_space<vmem>>, vector<16x128xf32>,
    %c0_13 = arith.constant 0 : index
    %c2 = arith.constant 2 : index
    %c0_14 = arith.constant 0 : index
    %c0_15 = arith.constant 0 : index
    %10 = vector.load %arg1[%c0_13, %c2, %c0_14, %c0_15] : memref<1x16x16x128xf32, #tpu.memory_space<vmem>>, vector<1x1x16x128xf32>
    %11 = vector.shape_cast %10 : vector<1x1x16x128xf32> to vector<16x128xf32>
    %c55 = arith.constant 55 : index
    %c0_16 = arith.constant 0 : index
    %12 = vector.load %arg9[%c55, %c0_16] : memref<332x128xf32, #tpu.memory_space<vmem>>, vector<16x128xf32>
    tpu.vector_store %arg9[%c55, %c0_16], %11 {strides = array<i32>} : memref<332x128xf32, #tpu.memory_space<vmem>>, vector<16x128xf32>,
    %c0_17 = arith.constant 0 : index
    %c3 = arith.constant 3 : index
    %c0_18 = arith.constant 0 : index
    %c0_19 = arith.constant 0 : index
    %13 = vector.load %arg1[%c0_17, %c3, %c0_18, %c0_19] : memref<1x16x16x128xf32, #tpu.memory_space<vmem>>, vector<1x1x16x128xf32>
    %14 = vector.shape_cast %13 : vector<1x1x16x128xf32> to vector<16x128xf32>
    %c73 = arith.constant 73 : index
    %c0_20 = arith.constant 0 : index
    %15 = vector.load %arg9[%c73, %c0_20] : memref<332x128xf32, #tpu.memory_space<vmem>>, vector<16x128xf32>
    tpu.vector_store %arg9[%c73, %c0_20], %14 {strides = array<i32>} : memref<332x128xf32, #tpu.memory_space<vmem>>, vector<16x128xf32>,
    %c0_21 = arith.constant 0 : index
    %c4 = arith.constant 4 : index
    %c0_22 = arith.constant 0 : index
    %c0_23 = arith.constant 0 : index
    %16 = vector.load %arg1[%c0_21, %c4, %c0_22, %c0_23] : memref<1x16x16x128xf32, #tpu.memory_space<vmem>>, vector<1x1x16x128xf32>
    %17 = vector.shape_cast %16 : vector<1x1x16x128xf32> to vector<16x128xf32>
    %c91 = arith.constant 91 : index
    %c0_24 = arith.constant 0 : index
    %18 = vector.load %arg9[%c91, %c0_24] : memref<332x128xf32, #tpu.memory_space<vmem>>, vector<16x128xf32>
    tpu.vector_store %arg9[%c91, %c0_24], %17 {strides = array<i32>} : memref<332x128xf32, #tpu.memory_space<vmem>>, vector<16x128xf32>,
    %c0_25 = arith.constant 0 : index
    %c5 = arith.constant 5 : index
    %c0_26 = arith.constant 0 : index
    %c0_27 = arith.constant 0 : index
    %19 = vector.load %arg1[%c0_25, %c5, %c0_26, %c0_27] : memref<1x16x16x128xf32, #tpu.memory_space<vmem>>, vector<1x1x16x128xf32>
    %20 = vector.shape_cast %19 : vector<1x1x16x128xf32> to vector<16x128xf32>
    %c109 = arith.constant 109 : index
    %c0_28 = arith.constant 0 : index
    %21 = vector.load %arg9[%c109, %c0_28] : memref<332x128xf32, #tpu.memory_space<vmem>>, vector<16x128xf32>
    tpu.vector_store %arg9[%c109, %c0_28], %20 {strides = array<i32>} : memref<332x128xf32, #tpu.memory_space<vmem>>, vector<16x128xf32>,
    %c0_29 = arith.constant 0 : index
    %c6 = arith.constant 6 : index
    %c0_30 = arith.constant 0 : index
    %c0_31 = arith.constant 0 : index
    %22 = vector.load %arg1[%c0_29, %c6, %c0_30, %c0_31] : memref<1x16x16x128xf32, #tpu.memory_space<vmem>>, vector<1x1x16x128xf32>
    %23 = vector.shape_cast %22 : vector<1x1x16x128xf32> to vector<16x128xf32>
    %c127 = arith.constant 127 : index
    %c0_32 = arith.constant 0 : index
    %24 = vector.load %arg9[%c127, %c0_32] : memref<332x128xf32, #tpu.memory_space<vmem>>, vector<16x128xf32>
    tpu.vector_store %arg9[%c127, %c0_32], %23 {strides = array<i32>} : memref<332x128xf32, #tpu.memory_space<vmem>>, vector<16x128xf32>,
    %c0_33 = arith.constant 0 : index
    %c7 = arith.constant 7 : index
    %c0_34 = arith.constant 0 : index
    %c0_35 = arith.constant 0 : index
    %25 = vector.load %arg1[%c0_33, %c7, %c0_34, %c0_35] : memref<1x16x16x128xf32, #tpu.memory_space<vmem>>, vector<1x1x16x128xf32>
    %26 = vector.shape_cast %25 : vector<1x1x16x128xf32> to vector<16x128xf32>
    %c145 = arith.constant 145 : index
    %c0_36 = arith.constant 0 : index
    %27 = vector.load %arg9[%c145, %c0_36] : memref<332x128xf32, #tpu.memory_space<vmem>>, vector<16x128xf32>
    tpu.vector_store %arg9[%c145, %c0_36], %26 {strides = array<i32>} : memref<332x128xf32, #tpu.memory_space<vmem>>, vector<16x128xf32>,
    %c0_37 = arith.constant 0 : index
    %c8 = arith.constant 8 : index
    %c0_38 = arith.constant 0 : index
    %c0_39 = arith.constant 0 : index
    %28 = vector.load %arg1[%c0_37, %c8, %c0_38, %c0_39] : memref<1x16x16x128xf32, #tpu.memory_space<vmem>>, vector<1x1x16x128xf32>
    %29 = vector.shape_cast %28 : vector<1x1x16x128xf32> to vector<16x128xf32>
    %c163 = arith.constant 163 : index
    %c0_40 = arith.constant 0 : index
    %30 = vector.load %arg9[%c163, %c0_40] : memref<332x128xf32, #tpu.memory_space<vmem>>, vector<16x128xf32>
    tpu.vector_store %arg9[%c163, %c0_40], %29 {strides = array<i32>} : memref<332x128xf32, #tpu.memory_space<vmem>>, vector<16x128xf32>,
    %c0_41 = arith.constant 0 : index
    %c9 = arith.constant 9 : index
    %c0_42 = arith.constant 0 : index
    %c0_43 = arith.constant 0 : index
    %31 = vector.load %arg1[%c0_41, %c9, %c0_42, %c0_43] : memref<1x16x16x128xf32, #tpu.memory_space<vmem>>, vector<1x1x16x128xf32>
    %32 = vector.shape_cast %31 : vector<1x1x16x128xf32> to vector<16x128xf32>
    %c181 = arith.constant 181 : index
    %c0_44 = arith.constant 0 : index
    %33 = vector.load %arg9[%c181, %c0_44] : memref<332x128xf32, #tpu.memory_space<vmem>>, vector<16x128xf32>
    tpu.vector_store %arg9[%c181, %c0_44], %32 {strides = array<i32>} : memref<332x128xf32, #tpu.memory_space<vmem>>, vector<16x128xf32>,
    %c0_45 = arith.constant 0 : index
    %c10 = arith.constant 10 : index
    %c0_46 = arith.constant 0 : index
    %c0_47 = arith.constant 0 : index
    %34 = vector.load %arg1[%c0_45, %c10, %c0_46, %c0_47] : memref<1x16x16x128xf32, #tpu.memory_space<vmem>>, vector<1x1x16x128xf32>
    %35 = vector.shape_cast %34 : vector<1x1x16x128xf32> to vector<16x128xf32>
    %c199 = arith.constant 199 : index
    %c0_48 = arith.constant 0 : index
    %36 = vector.load %arg9[%c199, %c0_48] : memref<332x128xf32, #tpu.memory_space<vmem>>, vector<16x128xf32>
    tpu.vector_store %arg9[%c199, %c0_48], %35 {strides = array<i32>} : memref<332x128xf32, #tpu.memory_space<vmem>>, vector<16x128xf32>,
    %c0_49 = arith.constant 0 : index
    %c11 = arith.constant 11 : index
    %c0_50 = arith.constant 0 : index
    %c0_51 = arith.constant 0 : index
    %37 = vector.load %arg1[%c0_49, %c11, %c0_50, %c0_51] : memref<1x16x16x128xf32, #tpu.memory_space<vmem>>, vector<1x1x16x128xf32>
    %38 = vector.shape_cast %37 : vector<1x1x16x128xf32> to vector<16x128xf32>
    %c217 = arith.constant 217 : index
    %c0_52 = arith.constant 0 : index
    %39 = vector.load %arg9[%c217, %c0_52] : memref<332x128xf32, #tpu.memory_space<vmem>>, vector<16x128xf32>
    tpu.vector_store %arg9[%c217, %c0_52], %38 {strides = array<i32>} : memref<332x128xf32, #tpu.memory_space<vmem>>, vector<16x128xf32>,
    %c0_53 = arith.constant 0 : index
    %c12 = arith.constant 12 : index
    %c0_54 = arith.constant 0 : index
    %c0_55 = arith.constant 0 : index
    %40 = vector.load %arg1[%c0_53, %c12, %c0_54, %c0_55] : memref<1x16x16x128xf32, #tpu.memory_space<vmem>>, vector<1x1x16x128xf32>
    %41 = vector.shape_cast %40 : vector<1x1x16x128xf32> to vector<16x128xf32>
    %c235 = arith.constant 235 : index
    %c0_56 = arith.constant 0 : index
    %42 = vector.load %arg9[%c235, %c0_56] : memref<332x128xf32, #tpu.memory_space<vmem>>, vector<16x128xf32>
    tpu.vector_store %arg9[%c235, %c0_56], %41 {strides = array<i32>} : memref<332x128xf32, #tpu.memory_space<vmem>>, vector<16x128xf32>,
    %c0_57 = arith.constant 0 : index
    %c13 = arith.constant 13 : index
    %c0_58 = arith.constant 0 : index
    %c0_59 = arith.constant 0 : index
    %43 = vector.load %arg1[%c0_57, %c13, %c0_58, %c0_59] : memref<1x16x16x128xf32, #tpu.memory_space<vmem>>, vector<1x1x16x128xf32>
    %44 = vector.shape_cast %43 : vector<1x1x16x128xf32> to vector<16x128xf32>
    %c253 = arith.constant 253 : index
    %c0_60 = arith.constant 0 : index
    %45 = vector.load %arg9[%c253, %c0_60] : memref<332x128xf32, #tpu.memory_space<vmem>>, vector<16x128xf32>
    tpu.vector_store %arg9[%c253, %c0_60], %44 {strides = array<i32>} : memref<332x128xf32, #tpu.memory_space<vmem>>, vector<16x128xf32>,
    %c0_61 = arith.constant 0 : index
    %c14 = arith.constant 14 : index
    %c0_62 = arith.constant 0 : index
    %c0_63 = arith.constant 0 : index
    %46 = vector.load %arg1[%c0_61, %c14, %c0_62, %c0_63] : memref<1x16x16x128xf32, #tpu.memory_space<vmem>>, vector<1x1x16x128xf32>
    %47 = vector.shape_cast %46 : vector<1x1x16x128xf32> to vector<16x128xf32>
    %c271 = arith.constant 271 : index
    %c0_64 = arith.constant 0 : index
    %48 = vector.load %arg9[%c271, %c0_64] : memref<332x128xf32, #tpu.memory_space<vmem>>, vector<16x128xf32>
    tpu.vector_store %arg9[%c271, %c0_64], %47 {strides = array<i32>} : memref<332x128xf32, #tpu.memory_space<vmem>>, vector<16x128xf32>,
    %c0_65 = arith.constant 0 : index
    %c15 = arith.constant 15 : index
    %c0_66 = arith.constant 0 : index
    %c0_67 = arith.constant 0 : index
    %49 = vector.load %arg1[%c0_65, %c15, %c0_66, %c0_67] : memref<1x16x16x128xf32, #tpu.memory_space<vmem>>, vector<1x1x16x128xf32>
    %50 = vector.shape_cast %49 : vector<1x1x16x128xf32> to vector<16x128xf32>
    %c289 = arith.constant 289 : index
    %c0_68 = arith.constant 0 : index
    %51 = vector.load %arg9[%c289, %c0_68] : memref<332x128xf32, #tpu.memory_space<vmem>>, vector<16x128xf32>
    tpu.vector_store %arg9[%c289, %c0_68], %50 {strides = array<i32>} : memref<332x128xf32, #tpu.memory_space<vmem>>, vector<16x128xf32>,
    %c0_69 = arith.constant 0 : index
    %c0_70 = arith.constant 0 : index
    %52 = vector.load %arg9[%c0_69, %c0_70] : memref<332x128xf32, #tpu.memory_space<vmem>>, vector<288x128xf32>
    %53 = arith.truncf %52 : vector<288x128xf32> to vector<288x128xbf16>
    %c1_71 = arith.constant 1 : index
    %c0_72 = arith.constant 0 : index
    %54 = vector.load %arg9[%c1_71, %c0_72] : memref<332x128xf32, #tpu.memory_space<vmem>>, vector<288x128xf32>
    %55 = arith.truncf %54 : vector<288x128xf32> to vector<288x128xbf16>
    %c2_73 = arith.constant 2 : index
    %c0_74 = arith.constant 0 : index
    %56 = vector.load %arg9[%c2_73, %c0_74] : memref<332x128xf32, #tpu.memory_space<vmem>>, vector<288x128xf32>
    %57 = arith.truncf %56 : vector<288x128xf32> to vector<288x128xbf16>
    %58 = tpu.concatenate %53, %55, %57 in 1 : vector<288x128xbf16>, vector<288x128xbf16>, vector<288x128xbf16> -> vector<288x384xbf16>
    %c0_75 = arith.constant 0 : index
    %c0_76 = arith.constant 0 : index
    %c0_77 = arith.constant 0 : index
    %59 = vector.load %arg2[%c0_75, %c0_76, %c0_77] : memref<3x384x128xbf16, #tpu.memory_space<vmem>>, vector<1x384x128xbf16>
    %60 = vector.shape_cast %59 : vector<1x384x128xbf16> to vector<384x128xbf16>
    %cst_78 = arith.constant dense<0.000000e+00> : vector<288x128xf32>
    %61 = tpu.matmul %58, %60, %cst_78 {dimension_numbers = #tpu.dot_dimension_numbers<[1], [0], [0], [1], [0, 0, 1, 1], [], []>} : vector<288x384xbf16>, vector<384x128xbf16>, vector<288x128xf32> -> vector<288x128xf32>
    %c0_79 = arith.constant 0 : index
    %c0_80 = arith.constant 0 : index
    %62 = vector.load %arg11[%c0_79, %c0_80] : memref<288x128xf32, #tpu.memory_space<vmem>>, vector<288x128xf32>
    tpu.vector_store %arg11[%c0_79, %c0_80], %61 {strides = array<i32>} : memref<288x128xf32, #tpu.memory_space<vmem>>, vector<288x128xf32>,
    %c18 = arith.constant 18 : index
    %c0_81 = arith.constant 0 : index
    %63 = vector.load %arg9[%c18, %c0_81] : memref<332x128xf32, #tpu.memory_space<vmem>>, vector<288x128xf32>
    %64 = arith.truncf %63 : vector<288x128xf32> to vector<288x128xbf16>
    %c19_82 = arith.constant 19 : index
    %c0_83 = arith.constant 0 : index
    %65 = vector.load %arg9[%c19_82, %c0_83] : memref<332x128xf32, #tpu.memory_space<vmem>>, vector<288x128xf32>
    %66 = arith.truncf %65 : vector<288x128xf32> to vector<288x128xbf16>
    %c20 = arith.constant 20 : index
    %c0_84 = arith.constant 0 : index
    %67 = vector.load %arg9[%c20, %c0_84] : memref<332x128xf32, #tpu.memory_space<vmem>>, vector<288x128xf32>
    %68 = arith.truncf %67 : vector<288x128xf32> to vector<288x128xbf16>
    %69 = tpu.concatenate %64, %66, %68 in 1 : vector<288x128xbf16>, vector<288x128xbf16>, vector<288x128xbf16> -> vector<288x384xbf16>
    %c1_85 = arith.constant 1 : index
    %c0_86 = arith.constant 0 : index
    %c0_87 = arith.constant 0 : index
    %70 = vector.load %arg2[%c1_85, %c0_86, %c0_87] : memref<3x384x128xbf16, #tpu.memory_space<vmem>>, vector<1x384x128xbf16>
    %71 = vector.shape_cast %70 : vector<1x384x128xbf16> to vector<384x128xbf16>
    %cst_88 = arith.constant dense<0.000000e+00> : vector<288x128xf32>
    %72 = tpu.matmul %69, %71, %cst_88 {dimension_numbers = #tpu.dot_dimension_numbers<[1], [0], [0], [1], [0, 0, 1, 1], [], []>} : vector<288x384xbf16>, vector<384x128xbf16>, vector<288x128xf32> -> vector<288x128xf32>
    %c0_89 = arith.constant 0 : index
    %c0_90 = arith.constant 0 : index
    %73 = vector.load %arg11[%c0_89, %c0_90] : memref<288x128xf32, #tpu.memory_space<vmem>>, vector<288x128xf32>
    %74 = arith.addf %73, %72 : vector<288x128xf32>
    %c0_91 = arith.constant 0 : index
    %c0_92 = arith.constant 0 : index
    %75 = vector.load %arg11[%c0_91, %c0_92] : memref<288x128xf32, #tpu.memory_space<vmem>>, vector<288x128xf32>
    tpu.vector_store %arg11[%c0_91, %c0_92], %74 {strides = array<i32>} : memref<288x128xf32, #tpu.memory_space<vmem>>, vector<288x128xf32>,
    %c36 = arith.constant 36 : index
    %c0_93 = arith.constant 0 : index
    %76 = vector.load %arg9[%c36, %c0_93] : memref<332x128xf32, #tpu.memory_space<vmem>>, vector<288x128xf32>
    %77 = arith.truncf %76 : vector<288x128xf32> to vector<288x128xbf16>
    %c37_94 = arith.constant 37 : index
    %c0_95 = arith.constant 0 : index
    %78 = vector.load %arg9[%c37_94, %c0_95] : memref<332x128xf32, #tpu.memory_space<vmem>>, vector<288x128xf32>
    %79 = arith.truncf %78 : vector<288x128xf32> to vector<288x128xbf16>
    %c38 = arith.constant 38 : index
    %c0_96 = arith.constant 0 : index
    %80 = vector.load %arg9[%c38, %c0_96] : memref<332x128xf32, #tpu.memory_space<vmem>>, vector<288x128xf32>
    %81 = arith.truncf %80 : vector<288x128xf32> to vector<288x128xbf16>
    %82 = tpu.concatenate %77, %79, %81 in 1 : vector<288x128xbf16>, vector<288x128xbf16>, vector<288x128xbf16> -> vector<288x384xbf16>
    %c2_97 = arith.constant 2 : index
    %c0_98 = arith.constant 0 : index
    %c0_99 = arith.constant 0 : index
    %83 = vector.load %arg2[%c2_97, %c0_98, %c0_99] : memref<3x384x128xbf16, #tpu.memory_space<vmem>>, vector<1x384x128xbf16>
    %84 = vector.shape_cast %83 : vector<1x384x128xbf16> to vector<384x128xbf16>
    %cst_100 = arith.constant dense<0.000000e+00> : vector<288x128xf32>
    %85 = tpu.matmul %82, %84, %cst_100 {dimension_numbers = #tpu.dot_dimension_numbers<[1], [0], [0], [1], [0, 0, 1, 1], [], []>} : vector<288x384xbf16>, vector<384x128xbf16>, vector<288x128xf32> -> vector<288x128xf32>
    %c0_101 = arith.constant 0 : index
    %c0_102 = arith.constant 0 : index
    %86 = vector.load %arg11[%c0_101, %c0_102] : memref<288x128xf32, #tpu.memory_space<vmem>>, vector<288x128xf32>
    %87 = arith.addf %86, %85 : vector<288x128xf32>
    %c0_103 = arith.constant 0 : index
    %c0_104 = arith.constant 0 : index
    %88 = vector.load %arg11[%c0_103, %c0_104] : memref<288x128xf32, #tpu.memory_space<vmem>>, vector<288x128xf32>
    tpu.vector_store %arg11[%c0_103, %c0_104], %87 {strides = array<i32>} : memref<288x128xf32, #tpu.memory_space<vmem>>, vector<288x128xf32>,
    %c0_105 = arith.constant 0 : index
    %c0_106 = arith.constant 0 : index
    %89 = vector.load %arg11[%c0_105, %c0_106] : memref<288x128xf32, #tpu.memory_space<vmem>>, vector<288x128xf32>
    %c0_107 = arith.constant 0 : index
    %c0_108 = arith.constant 0 : index
    %90 = vector.load %arg3[%c0_107, %c0_108] : memref<1x128xf32, #tpu.memory_space<vmem>>, vector<1x128xf32>
    %91 = vector.broadcast %90 : vector<1x128xf32> to vector<288x128xf32>
    %92 = arith.mulf %89, %91 : vector<288x128xf32>
    %c0_109 = arith.constant 0 : index
    %c0_110 = arith.constant 0 : index
    %93 = vector.load %arg4[%c0_109, %c0_110] : memref<1x128xf32, #tpu.memory_space<vmem>>, vector<1x128xf32>
    %94 = vector.broadcast %93 : vector<1x128xf32> to vector<288x128xf32>
    %95 = arith.addf %92, %94 : vector<288x128xf32>
    %cst_111 = arith.constant 0.000000e+00 : f32
    %96 = vector.broadcast %cst_111 : f32 to vector<288x128xf32>
    %97 = arith.maximumf %95, %96 : vector<288x128xf32>
    %98 = vector.extract_strided_slice %97 {offsets = [0, 0], sizes = [16, 128], strides = [1, 1]} : vector<288x128xf32> to vector<16x128xf32>
    %c19_112 = arith.constant 19 : index
    %c0_113 = arith.constant 0 : index
    %99 = vector.load %arg10[%c19_112, %c0_113] : memref<332x128xf32, #tpu.memory_space<vmem>>, vector<16x128xf32>
    tpu.vector_store %arg10[%c19_112, %c0_113], %98 {strides = array<i32>} : memref<332x128xf32, #tpu.memory_space<vmem>>, vector<16x128xf32>,
    %100 = vector.extract_strided_slice %97 {offsets = [18, 0], sizes = [16, 128], strides = [1, 1]} : vector<288x128xf32> to vector<16x128xf32>
    %c37_114 = arith.constant 37 : index
    %c0_115 = arith.constant 0 : index
    %101 = vector.load %arg10[%c37_114, %c0_115] : memref<332x128xf32, #tpu.memory_space<vmem>>, vector<16x128xf32>
    tpu.vector_store %arg10[%c37_114, %c0_115], %100 {strides = array<i32>} : memref<332x128xf32, #tpu.memory_space<vmem>>, vector<16x128xf32>,
    %102 = vector.extract_strided_slice %97 {offsets = [36, 0], sizes = [16, 128], strides = [1, 1]} : vector<288x128xf32> to vector<16x128xf32>
    %c55_116 = arith.constant 55 : index
    %c0_117 = arith.constant 0 : index
    %103 = vector.load %arg10[%c55_116, %c0_117] : memref<332x128xf32, #tpu.memory_space<vmem>>, vector<16x128xf32>
    tpu.vector_store %arg10[%c55_116, %c0_117], %102 {strides = array<i32>} : memref<332x128xf32, #tpu.memory_space<vmem>>, vector<16x128xf32>,
    %104 = vector.extract_strided_slice %97 {offsets = [54, 0], sizes = [16, 128], strides = [1, 1]} : vector<288x128xf32> to vector<16x128xf32>
    %c73_118 = arith.constant 73 : index
    %c0_119 = arith.constant 0 : index
    %105 = vector.load %arg10[%c73_118, %c0_119] : memref<332x128xf32, #tpu.memory_space<vmem>>, vector<16x128xf32>
    tpu.vector_store %arg10[%c73_118, %c0_119], %104 {strides = array<i32>} : memref<332x128xf32, #tpu.memory_space<vmem>>, vector<16x128xf32>,
    %106 = vector.extract_strided_slice %97 {offsets = [72, 0], sizes = [16, 128], strides = [1, 1]} : vector<288x128xf32> to vector<16x128xf32>
    %c91_120 = arith.constant 91 : index
    %c0_121 = arith.constant 0 : index
    %107 = vector.load %arg10[%c91_120, %c0_121] : memref<332x128xf32, #tpu.memory_space<vmem>>, vector<16x128xf32>
    tpu.vector_store %arg10[%c91_120, %c0_121], %106 {strides = array<i32>} : memref<332x128xf32, #tpu.memory_space<vmem>>, vector<16x128xf32>,
    %108 = vector.extract_strided_slice %97 {offsets = [90, 0], sizes = [16, 128], strides = [1, 1]} : vector<288x128xf32> to vector<16x128xf32>
    %c109_122 = arith.constant 109 : index
    %c0_123 = arith.constant 0 : index
    %109 = vector.load %arg10[%c109_122, %c0_123] : memref<332x128xf32, #tpu.memory_space<vmem>>, vector<16x128xf32>
    tpu.vector_store %arg10[%c109_122, %c0_123], %108 {strides = array<i32>} : memref<332x128xf32, #tpu.memory_space<vmem>>, vector<16x128xf32>,
    %110 = vector.extract_strided_slice %97 {offsets = [108, 0], sizes = [16, 128], strides = [1, 1]} : vector<288x128xf32> to vector<16x128xf32>
    %c127_124 = arith.constant 127 : index
    %c0_125 = arith.constant 0 : index
    %111 = vector.load %arg10[%c127_124, %c0_125] : memref<332x128xf32, #tpu.memory_space<vmem>>, vector<16x128xf32>
    tpu.vector_store %arg10[%c127_124, %c0_125], %110 {strides = array<i32>} : memref<332x128xf32, #tpu.memory_space<vmem>>, vector<16x128xf32>,
    %112 = vector.extract_strided_slice %97 {offsets = [126, 0], sizes = [16, 128], strides = [1, 1]} : vector<288x128xf32> to vector<16x128xf32>
    %c145_126 = arith.constant 145 : index
    %c0_127 = arith.constant 0 : index
    %113 = vector.load %arg10[%c145_126, %c0_127] : memref<332x128xf32, #tpu.memory_space<vmem>>, vector<16x128xf32>
    tpu.vector_store %arg10[%c145_126, %c0_127], %112 {strides = array<i32>} : memref<332x128xf32, #tpu.memory_space<vmem>>, vector<16x128xf32>,
    %114 = vector.extract_strided_slice %97 {offsets = [144, 0], sizes = [16, 128], strides = [1, 1]} : vector<288x128xf32> to vector<16x128xf32>
    %c163_128 = arith.constant 163 : index
    %c0_129 = arith.constant 0 : index
    %115 = vector.load %arg10[%c163_128, %c0_129] : memref<332x128xf32, #tpu.memory_space<vmem>>, vector<16x128xf32>
    tpu.vector_store %arg10[%c163_128, %c0_129], %114 {strides = array<i32>} : memref<332x128xf32, #tpu.memory_space<vmem>>, vector<16x128xf32>,
    %116 = vector.extract_strided_slice %97 {offsets = [162, 0], sizes = [16, 128], strides = [1, 1]} : vector<288x128xf32> to vector<16x128xf32>
    %c181_130 = arith.constant 181 : index
    %c0_131 = arith.constant 0 : index
    %117 = vector.load %arg10[%c181_130, %c0_131] : memref<332x128xf32, #tpu.memory_space<vmem>>, vector<16x128xf32>
    tpu.vector_store %arg10[%c181_130, %c0_131], %116 {strides = array<i32>} : memref<332x128xf32, #tpu.memory_space<vmem>>, vector<16x128xf32>,
    %118 = vector.extract_strided_slice %97 {offsets = [180, 0], sizes = [16, 128], strides = [1, 1]} : vector<288x128xf32> to vector<16x128xf32>
    %c199_132 = arith.constant 199 : index
    %c0_133 = arith.constant 0 : index
    %119 = vector.load %arg10[%c199_132, %c0_133] : memref<332x128xf32, #tpu.memory_space<vmem>>, vector<16x128xf32>
    tpu.vector_store %arg10[%c199_132, %c0_133], %118 {strides = array<i32>} : memref<332x128xf32, #tpu.memory_space<vmem>>, vector<16x128xf32>,
    %120 = vector.extract_strided_slice %97 {offsets = [198, 0], sizes = [16, 128], strides = [1, 1]} : vector<288x128xf32> to vector<16x128xf32>
    %c217_134 = arith.constant 217 : index
    %c0_135 = arith.constant 0 : index
    %121 = vector.load %arg10[%c217_134, %c0_135] : memref<332x128xf32, #tpu.memory_space<vmem>>, vector<16x128xf32>
    tpu.vector_store %arg10[%c217_134, %c0_135], %120 {strides = array<i32>} : memref<332x128xf32, #tpu.memory_space<vmem>>, vector<16x128xf32>,
    %122 = vector.extract_strided_slice %97 {offsets = [216, 0], sizes = [16, 128], strides = [1, 1]} : vector<288x128xf32> to vector<16x128xf32>
    %c235_136 = arith.constant 235 : index
    %c0_137 = arith.constant 0 : index
    %123 = vector.load %arg10[%c235_136, %c0_137] : memref<332x128xf32, #tpu.memory_space<vmem>>, vector<16x128xf32>
    tpu.vector_store %arg10[%c235_136, %c0_137], %122 {strides = array<i32>} : memref<332x128xf32, #tpu.memory_space<vmem>>, vector<16x128xf32>,
    %124 = vector.extract_strided_slice %97 {offsets = [234, 0], sizes = [16, 128], strides = [1, 1]} : vector<288x128xf32> to vector<16x128xf32>
    %c253_138 = arith.constant 253 : index
    %c0_139 = arith.constant 0 : index
    %125 = vector.load %arg10[%c253_138, %c0_139] : memref<332x128xf32, #tpu.memory_space<vmem>>, vector<16x128xf32>
    tpu.vector_store %arg10[%c253_138, %c0_139], %124 {strides = array<i32>} : memref<332x128xf32, #tpu.memory_space<vmem>>, vector<16x128xf32>,
    %126 = vector.extract_strided_slice %97 {offsets = [252, 0], sizes = [16, 128], strides = [1, 1]} : vector<288x128xf32> to vector<16x128xf32>
    %c271_140 = arith.constant 271 : index
    %c0_141 = arith.constant 0 : index
    %127 = vector.load %arg10[%c271_140, %c0_141] : memref<332x128xf32, #tpu.memory_space<vmem>>, vector<16x128xf32>
    tpu.vector_store %arg10[%c271_140, %c0_141], %126 {strides = array<i32>} : memref<332x128xf32, #tpu.memory_space<vmem>>, vector<16x128xf32>,
    %128 = vector.extract_strided_slice %97 {offsets = [270, 0], sizes = [16, 128], strides = [1, 1]} : vector<288x128xf32> to vector<16x128xf32>
    %c289_142 = arith.constant 289 : index
    %c0_143 = arith.constant 0 : index
    %129 = vector.load %arg10[%c289_142, %c0_143] : memref<332x128xf32, #tpu.memory_space<vmem>>, vector<16x128xf32>
    tpu.vector_store %arg10[%c289_142, %c0_143], %128 {strides = array<i32>} : memref<332x128xf32, #tpu.memory_space<vmem>>, vector<16x128xf32>,
    %c0_144 = arith.constant 0 : index
    %c0_145 = arith.constant 0 : index
    %130 = vector.load %arg10[%c0_144, %c0_145] : memref<332x128xf32, #tpu.memory_space<vmem>>, vector<288x128xf32>
    %131 = arith.truncf %130 : vector<288x128xf32> to vector<288x128xbf16>
    %c1_146 = arith.constant 1 : index
    %c0_147 = arith.constant 0 : index
    %132 = vector.load %arg10[%c1_146, %c0_147] : memref<332x128xf32, #tpu.memory_space<vmem>>, vector<288x128xf32>
    %133 = arith.truncf %132 : vector<288x128xf32> to vector<288x128xbf16>
    %c2_148 = arith.constant 2 : index
    %c0_149 = arith.constant 0 : index
    %134 = vector.load %arg10[%c2_148, %c0_149] : memref<332x128xf32, #tpu.memory_space<vmem>>, vector<288x128xf32>
    %135 = arith.truncf %134 : vector<288x128xf32> to vector<288x128xbf16>
    %136 = tpu.concatenate %131, %133, %135 in 1 : vector<288x128xbf16>, vector<288x128xbf16>, vector<288x128xbf16> -> vector<288x384xbf16>
    %c0_150 = arith.constant 0 : index
    %c0_151 = arith.constant 0 : index
    %c0_152 = arith.constant 0 : index
    %137 = vector.load %arg5[%c0_150, %c0_151, %c0_152] : memref<3x384x128xbf16, #tpu.memory_space<vmem>>, vector<1x384x128xbf16>
    %138 = vector.shape_cast %137 : vector<1x384x128xbf16> to vector<384x128xbf16>
    %cst_153 = arith.constant dense<0.000000e+00> : vector<288x128xf32>
    %139 = tpu.matmul %136, %138, %cst_153 {dimension_numbers = #tpu.dot_dimension_numbers<[1], [0], [0], [1], [0, 0, 1, 1], [], []>} : vector<288x384xbf16>, vector<384x128xbf16>, vector<288x128xf32> -> vector<288x128xf32>
    %c0_154 = arith.constant 0 : index
    %c0_155 = arith.constant 0 : index
    %140 = vector.load %arg11[%c0_154, %c0_155] : memref<288x128xf32, #tpu.memory_space<vmem>>, vector<288x128xf32>
    tpu.vector_store %arg11[%c0_154, %c0_155], %139 {strides = array<i32>} : memref<288x128xf32, #tpu.memory_space<vmem>>, vector<288x128xf32>,
    %c18_156 = arith.constant 18 : index
    %c0_157 = arith.constant 0 : index
    %141 = vector.load %arg10[%c18_156, %c0_157] : memref<332x128xf32, #tpu.memory_space<vmem>>, vector<288x128xf32>
    %142 = arith.truncf %141 : vector<288x128xf32> to vector<288x128xbf16>
    %c19_158 = arith.constant 19 : index
    %c0_159 = arith.constant 0 : index
    %143 = vector.load %arg10[%c19_158, %c0_159] : memref<332x128xf32, #tpu.memory_space<vmem>>, vector<288x128xf32>
    %144 = arith.truncf %143 : vector<288x128xf32> to vector<288x128xbf16>
    %c20_160 = arith.constant 20 : index
    %c0_161 = arith.constant 0 : index
    %145 = vector.load %arg10[%c20_160, %c0_161] : memref<332x128xf32, #tpu.memory_space<vmem>>, vector<288x128xf32>
    %146 = arith.truncf %145 : vector<288x128xf32> to vector<288x128xbf16>
    %147 = tpu.concatenate %142, %144, %146 in 1 : vector<288x128xbf16>, vector<288x128xbf16>, vector<288x128xbf16> -> vector<288x384xbf16>
    %c1_162 = arith.constant 1 : index
    %c0_163 = arith.constant 0 : index
    %c0_164 = arith.constant 0 : index
    %148 = vector.load %arg5[%c1_162, %c0_163, %c0_164] : memref<3x384x128xbf16, #tpu.memory_space<vmem>>, vector<1x384x128xbf16>
    %149 = vector.shape_cast %148 : vector<1x384x128xbf16> to vector<384x128xbf16>
    %cst_165 = arith.constant dense<0.000000e+00> : vector<288x128xf32>
    %150 = tpu.matmul %147, %149, %cst_165 {dimension_numbers = #tpu.dot_dimension_numbers<[1], [0], [0], [1], [0, 0, 1, 1], [], []>} : vector<288x384xbf16>, vector<384x128xbf16>, vector<288x128xf32> -> vector<288x128xf32>
    %c0_166 = arith.constant 0 : index
    %c0_167 = arith.constant 0 : index
    %151 = vector.load %arg11[%c0_166, %c0_167] : memref<288x128xf32, #tpu.memory_space<vmem>>, vector<288x128xf32>
    %152 = arith.addf %151, %150 : vector<288x128xf32>
    %c0_168 = arith.constant 0 : index
    %c0_169 = arith.constant 0 : index
    %153 = vector.load %arg11[%c0_168, %c0_169] : memref<288x128xf32, #tpu.memory_space<vmem>>, vector<288x128xf32>
    tpu.vector_store %arg11[%c0_168, %c0_169], %152 {strides = array<i32>} : memref<288x128xf32, #tpu.memory_space<vmem>>, vector<288x128xf32>,
    %c36_170 = arith.constant 36 : index
    %c0_171 = arith.constant 0 : index
    %154 = vector.load %arg10[%c36_170, %c0_171] : memref<332x128xf32, #tpu.memory_space<vmem>>, vector<288x128xf32>
    %155 = arith.truncf %154 : vector<288x128xf32> to vector<288x128xbf16>
    %c37_172 = arith.constant 37 : index
    %c0_173 = arith.constant 0 : index
    %156 = vector.load %arg10[%c37_172, %c0_173] : memref<332x128xf32, #tpu.memory_space<vmem>>, vector<288x128xf32>
    %157 = arith.truncf %156 : vector<288x128xf32> to vector<288x128xbf16>
    %c38_174 = arith.constant 38 : index
    %c0_175 = arith.constant 0 : index
    %158 = vector.load %arg10[%c38_174, %c0_175] : memref<332x128xf32, #tpu.memory_space<vmem>>, vector<288x128xf32>
    %159 = arith.truncf %158 : vector<288x128xf32> to vector<288x128xbf16>
    %160 = tpu.concatenate %155, %157, %159 in 1 : vector<288x128xbf16>, vector<288x128xbf16>, vector<288x128xbf16> -> vector<288x384xbf16>
    %c2_176 = arith.constant 2 : index
    %c0_177 = arith.constant 0 : index
    %c0_178 = arith.constant 0 : index
    %161 = vector.load %arg5[%c2_176, %c0_177, %c0_178] : memref<3x384x128xbf16, #tpu.memory_space<vmem>>, vector<1x384x128xbf16>
    %162 = vector.shape_cast %161 : vector<1x384x128xbf16> to vector<384x128xbf16>
    %cst_179 = arith.constant dense<0.000000e+00> : vector<288x128xf32>
    %163 = tpu.matmul %160, %162, %cst_179 {dimension_numbers = #tpu.dot_dimension_numbers<[1], [0], [0], [1], [0, 0, 1, 1], [], []>} : vector<288x384xbf16>, vector<384x128xbf16>, vector<288x128xf32> -> vector<288x128xf32>
    %c0_180 = arith.constant 0 : index
    %c0_181 = arith.constant 0 : index
    %164 = vector.load %arg11[%c0_180, %c0_181] : memref<288x128xf32, #tpu.memory_space<vmem>>, vector<288x128xf32>
    %165 = arith.addf %164, %163 : vector<288x128xf32>
    %c0_182 = arith.constant 0 : index
    %c0_183 = arith.constant 0 : index
    %166 = vector.load %arg11[%c0_182, %c0_183] : memref<288x128xf32, #tpu.memory_space<vmem>>, vector<288x128xf32>
    tpu.vector_store %arg11[%c0_182, %c0_183], %165 {strides = array<i32>} : memref<288x128xf32, #tpu.memory_space<vmem>>, vector<288x128xf32>,
    %c0_184 = arith.constant 0 : index
    %c0_185 = arith.constant 0 : index
    %167 = vector.load %arg11[%c0_184, %c0_185] : memref<288x128xf32, #tpu.memory_space<vmem>>, vector<288x128xf32>
    %c0_186 = arith.constant 0 : index
    %c0_187 = arith.constant 0 : index
    %168 = vector.load %arg6[%c0_186, %c0_187] : memref<1x128xf32, #tpu.memory_space<vmem>>, vector<1x128xf32>
    %169 = vector.broadcast %168 : vector<1x128xf32> to vector<288x128xf32>
    %170 = arith.mulf %167, %169 : vector<288x128xf32>
    %c0_188 = arith.constant 0 : index
    %c0_189 = arith.constant 0 : index
    %171 = vector.load %arg7[%c0_188, %c0_189] : memref<1x128xf32, #tpu.memory_space<vmem>>, vector<1x128xf32>
    %172 = vector.broadcast %171 : vector<1x128xf32> to vector<288x128xf32>
    %173 = arith.addf %170, %172 : vector<288x128xf32>
    %174 = vector.extract_strided_slice %173 {offsets = [0, 0], sizes = [16, 128], strides = [1, 1]} : vector<288x128xf32> to vector<16x128xf32>
    %c0_190 = arith.constant 0 : index
    %c0_191 = arith.constant 0 : index
    %c0_192 = arith.constant 0 : index
    %c0_193 = arith.constant 0 : index
    %175 = vector.load %arg1[%c0_190, %c0_191, %c0_192, %c0_193] : memref<1x16x16x128xf32, #tpu.memory_space<vmem>>, vector<1x1x16x128xf32>
    %176 = vector.shape_cast %175 : vector<1x1x16x128xf32> to vector<16x128xf32>
    %177 = arith.addf %174, %176 : vector<16x128xf32>
    %cst_194 = arith.constant 0.000000e+00 : f32
    %178 = vector.broadcast %cst_194 : f32 to vector<16x128xf32>
    %179 = arith.maximumf %177, %178 : vector<16x128xf32>
    %c0_195 = arith.constant 0 : index
    %c0_196 = arith.constant 0 : index
    %c0_197 = arith.constant 0 : index
    %c0_198 = arith.constant 0 : index
    %180 = vector.load %arg8[%c0_195, %c0_196, %c0_197, %c0_198] : memref<1x16x16x128xf32, #tpu.memory_space<vmem>>, vector<1x1x16x128xf32>
    %181 = vector.shape_cast %180 : vector<1x1x16x128xf32> to vector<16x128xf32>
    %182 = vector.shape_cast %179 : vector<16x128xf32> to vector<1x1x16x128xf32>
    tpu.vector_store %arg8[%c0_195, %c0_196, %c0_197, %c0_198], %182 {strides = array<i32>} : memref<1x16x16x128xf32, #tpu.memory_space<vmem>>, vector<1x1x16x128xf32>,
    %183 = vector.extract_strided_slice %173 {offsets = [18, 0], sizes = [16, 128], strides = [1, 1]} : vector<288x128xf32> to vector<16x128xf32>
    %c0_199 = arith.constant 0 : index
    %c1_200 = arith.constant 1 : index
    %c0_201 = arith.constant 0 : index
    %c0_202 = arith.constant 0 : index
    %184 = vector.load %arg1[%c0_199, %c1_200, %c0_201, %c0_202] : memref<1x16x16x128xf32, #tpu.memory_space<vmem>>, vector<1x1x16x128xf32>
    %185 = vector.shape_cast %184 : vector<1x1x16x128xf32> to vector<16x128xf32>
    %186 = arith.addf %183, %185 : vector<16x128xf32>
    %cst_203 = arith.constant 0.000000e+00 : f32
    %187 = vector.broadcast %cst_203 : f32 to vector<16x128xf32>
    %188 = arith.maximumf %186, %187 : vector<16x128xf32>
    %c0_204 = arith.constant 0 : index
    %c1_205 = arith.constant 1 : index
    %c0_206 = arith.constant 0 : index
    %c0_207 = arith.constant 0 : index
    %189 = vector.load %arg8[%c0_204, %c1_205, %c0_206, %c0_207] : memref<1x16x16x128xf32, #tpu.memory_space<vmem>>, vector<1x1x16x128xf32>
    %190 = vector.shape_cast %189 : vector<1x1x16x128xf32> to vector<16x128xf32>
    %191 = vector.shape_cast %188 : vector<16x128xf32> to vector<1x1x16x128xf32>
    tpu.vector_store %arg8[%c0_204, %c1_205, %c0_206, %c0_207], %191 {strides = array<i32>} : memref<1x16x16x128xf32, #tpu.memory_space<vmem>>, vector<1x1x16x128xf32>,
    %192 = vector.extract_strided_slice %173 {offsets = [36, 0], sizes = [16, 128], strides = [1, 1]} : vector<288x128xf32> to vector<16x128xf32>
    %c0_208 = arith.constant 0 : index
    %c2_209 = arith.constant 2 : index
    %c0_210 = arith.constant 0 : index
    %c0_211 = arith.constant 0 : index
    %193 = vector.load %arg1[%c0_208, %c2_209, %c0_210, %c0_211] : memref<1x16x16x128xf32, #tpu.memory_space<vmem>>, vector<1x1x16x128xf32>
    %194 = vector.shape_cast %193 : vector<1x1x16x128xf32> to vector<16x128xf32>
    %195 = arith.addf %192, %194 : vector<16x128xf32>
    %cst_212 = arith.constant 0.000000e+00 : f32
    %196 = vector.broadcast %cst_212 : f32 to vector<16x128xf32>
    %197 = arith.maximumf %195, %196 : vector<16x128xf32>
    %c0_213 = arith.constant 0 : index
    %c2_214 = arith.constant 2 : index
    %c0_215 = arith.constant 0 : index
    %c0_216 = arith.constant 0 : index
    %198 = vector.load %arg8[%c0_213, %c2_214, %c0_215, %c0_216] : memref<1x16x16x128xf32, #tpu.memory_space<vmem>>, vector<1x1x16x128xf32>
    %199 = vector.shape_cast %198 : vector<1x1x16x128xf32> to vector<16x128xf32>
    %200 = vector.shape_cast %197 : vector<16x128xf32> to vector<1x1x16x128xf32>
    tpu.vector_store %arg8[%c0_213, %c2_214, %c0_215, %c0_216], %200 {strides = array<i32>} : memref<1x16x16x128xf32, #tpu.memory_space<vmem>>, vector<1x1x16x128xf32>,
    %201 = vector.extract_strided_slice %173 {offsets = [54, 0], sizes = [16, 128], strides = [1, 1]} : vector<288x128xf32> to vector<16x128xf32>
    %c0_217 = arith.constant 0 : index
    %c3_218 = arith.constant 3 : index
    %c0_219 = arith.constant 0 : index
    %c0_220 = arith.constant 0 : index
    %202 = vector.load %arg1[%c0_217, %c3_218, %c0_219, %c0_220] : memref<1x16x16x128xf32, #tpu.memory_space<vmem>>, vector<1x1x16x128xf32>
    %203 = vector.shape_cast %202 : vector<1x1x16x128xf32> to vector<16x128xf32>
    %204 = arith.addf %201, %203 : vector<16x128xf32>
    %cst_221 = arith.constant 0.000000e+00 : f32
    %205 = vector.broadcast %cst_221 : f32 to vector<16x128xf32>
    %206 = arith.maximumf %204, %205 : vector<16x128xf32>
    %c0_222 = arith.constant 0 : index
    %c3_223 = arith.constant 3 : index
    %c0_224 = arith.constant 0 : index
    %c0_225 = arith.constant 0 : index
    %207 = vector.load %arg8[%c0_222, %c3_223, %c0_224, %c0_225] : memref<1x16x16x128xf32, #tpu.memory_space<vmem>>, vector<1x1x16x128xf32>
    %208 = vector.shape_cast %207 : vector<1x1x16x128xf32> to vector<16x128xf32>
    %209 = vector.shape_cast %206 : vector<16x128xf32> to vector<1x1x16x128xf32>
    tpu.vector_store %arg8[%c0_222, %c3_223, %c0_224, %c0_225], %209 {strides = array<i32>} : memref<1x16x16x128xf32, #tpu.memory_space<vmem>>, vector<1x1x16x128xf32>,
    %210 = vector.extract_strided_slice %173 {offsets = [72, 0], sizes = [16, 128], strides = [1, 1]} : vector<288x128xf32> to vector<16x128xf32>
    %c0_226 = arith.constant 0 : index
    %c4_227 = arith.constant 4 : index
    %c0_228 = arith.constant 0 : index
    %c0_229 = arith.constant 0 : index
    %211 = vector.load %arg1[%c0_226, %c4_227, %c0_228, %c0_229] : memref<1x16x16x128xf32, #tpu.memory_space<vmem>>, vector<1x1x16x128xf32>
    %212 = vector.shape_cast %211 : vector<1x1x16x128xf32> to vector<16x128xf32>
    %213 = arith.addf %210, %212 : vector<16x128xf32>
    %cst_230 = arith.constant 0.000000e+00 : f32
    %214 = vector.broadcast %cst_230 : f32 to vector<16x128xf32>
    %215 = arith.maximumf %213, %214 : vector<16x128xf32>
    %c0_231 = arith.constant 0 : index
    %c4_232 = arith.constant 4 : index
    %c0_233 = arith.constant 0 : index
    %c0_234 = arith.constant 0 : index
    %216 = vector.load %arg8[%c0_231, %c4_232, %c0_233, %c0_234] : memref<1x16x16x128xf32, #tpu.memory_space<vmem>>, vector<1x1x16x128xf32>
    %217 = vector.shape_cast %216 : vector<1x1x16x128xf32> to vector<16x128xf32>
    %218 = vector.shape_cast %215 : vector<16x128xf32> to vector<1x1x16x128xf32>
    tpu.vector_store %arg8[%c0_231, %c4_232, %c0_233, %c0_234], %218 {strides = array<i32>} : memref<1x16x16x128xf32, #tpu.memory_space<vmem>>, vector<1x1x16x128xf32>,
    %219 = vector.extract_strided_slice %173 {offsets = [90, 0], sizes = [16, 128], strides = [1, 1]} : vector<288x128xf32> to vector<16x128xf32>
    %c0_235 = arith.constant 0 : index
    %c5_236 = arith.constant 5 : index
    %c0_237 = arith.constant 0 : index
    %c0_238 = arith.constant 0 : index
    %220 = vector.load %arg1[%c0_235, %c5_236, %c0_237, %c0_238] : memref<1x16x16x128xf32, #tpu.memory_space<vmem>>, vector<1x1x16x128xf32>
    %221 = vector.shape_cast %220 : vector<1x1x16x128xf32> to vector<16x128xf32>
    %222 = arith.addf %219, %221 : vector<16x128xf32>
    %cst_239 = arith.constant 0.000000e+00 : f32
    %223 = vector.broadcast %cst_239 : f32 to vector<16x128xf32>
    %224 = arith.maximumf %222, %223 : vector<16x128xf32>
    %c0_240 = arith.constant 0 : index
    %c5_241 = arith.constant 5 : index
    %c0_242 = arith.constant 0 : index
    %c0_243 = arith.constant 0 : index
    %225 = vector.load %arg8[%c0_240, %c5_241, %c0_242, %c0_243] : memref<1x16x16x128xf32, #tpu.memory_space<vmem>>, vector<1x1x16x128xf32>
    %226 = vector.shape_cast %225 : vector<1x1x16x128xf32> to vector<16x128xf32>
    %227 = vector.shape_cast %224 : vector<16x128xf32> to vector<1x1x16x128xf32>
    tpu.vector_store %arg8[%c0_240, %c5_241, %c0_242, %c0_243], %227 {strides = array<i32>} : memref<1x16x16x128xf32, #tpu.memory_space<vmem>>, vector<1x1x16x128xf32>,
    %228 = vector.extract_strided_slice %173 {offsets = [108, 0], sizes = [16, 128], strides = [1, 1]} : vector<288x128xf32> to vector<16x128xf32>
    %c0_244 = arith.constant 0 : index
    %c6_245 = arith.constant 6 : index
    %c0_246 = arith.constant 0 : index
    %c0_247 = arith.constant 0 : index
    %229 = vector.load %arg1[%c0_244, %c6_245, %c0_246, %c0_247] : memref<1x16x16x128xf32, #tpu.memory_space<vmem>>, vector<1x1x16x128xf32>
    %230 = vector.shape_cast %229 : vector<1x1x16x128xf32> to vector<16x128xf32>
    %231 = arith.addf %228, %230 : vector<16x128xf32>
    %cst_248 = arith.constant 0.000000e+00 : f32
    %232 = vector.broadcast %cst_248 : f32 to vector<16x128xf32>
    %233 = arith.maximumf %231, %232 : vector<16x128xf32>
    %c0_249 = arith.constant 0 : index
    %c6_250 = arith.constant 6 : index
    %c0_251 = arith.constant 0 : index
    %c0_252 = arith.constant 0 : index
    %234 = vector.load %arg8[%c0_249, %c6_250, %c0_251, %c0_252] : memref<1x16x16x128xf32, #tpu.memory_space<vmem>>, vector<1x1x16x128xf32>
    %235 = vector.shape_cast %234 : vector<1x1x16x128xf32> to vector<16x128xf32>
    %236 = vector.shape_cast %233 : vector<16x128xf32> to vector<1x1x16x128xf32>
    tpu.vector_store %arg8[%c0_249, %c6_250, %c0_251, %c0_252], %236 {strides = array<i32>} : memref<1x16x16x128xf32, #tpu.memory_space<vmem>>, vector<1x1x16x128xf32>,
    %237 = vector.extract_strided_slice %173 {offsets = [126, 0], sizes = [16, 128], strides = [1, 1]} : vector<288x128xf32> to vector<16x128xf32>
    %c0_253 = arith.constant 0 : index
    %c7_254 = arith.constant 7 : index
    %c0_255 = arith.constant 0 : index
    %c0_256 = arith.constant 0 : index
    %238 = vector.load %arg1[%c0_253, %c7_254, %c0_255, %c0_256] : memref<1x16x16x128xf32, #tpu.memory_space<vmem>>, vector<1x1x16x128xf32>
    %239 = vector.shape_cast %238 : vector<1x1x16x128xf32> to vector<16x128xf32>
    %240 = arith.addf %237, %239 : vector<16x128xf32>
    %cst_257 = arith.constant 0.000000e+00 : f32
    %241 = vector.broadcast %cst_257 : f32 to vector<16x128xf32>
    %242 = arith.maximumf %240, %241 : vector<16x128xf32>
    %c0_258 = arith.constant 0 : index
    %c7_259 = arith.constant 7 : index
    %c0_260 = arith.constant 0 : index
    %c0_261 = arith.constant 0 : index
    %243 = vector.load %arg8[%c0_258, %c7_259, %c0_260, %c0_261] : memref<1x16x16x128xf32, #tpu.memory_space<vmem>>, vector<1x1x16x128xf32>
    %244 = vector.shape_cast %243 : vector<1x1x16x128xf32> to vector<16x128xf32>
    %245 = vector.shape_cast %242 : vector<16x128xf32> to vector<1x1x16x128xf32>
    tpu.vector_store %arg8[%c0_258, %c7_259, %c0_260, %c0_261], %245 {strides = array<i32>} : memref<1x16x16x128xf32, #tpu.memory_space<vmem>>, vector<1x1x16x128xf32>,
    %246 = vector.extract_strided_slice %173 {offsets = [144, 0], sizes = [16, 128], strides = [1, 1]} : vector<288x128xf32> to vector<16x128xf32>
    %c0_262 = arith.constant 0 : index
    %c8_263 = arith.constant 8 : index
    %c0_264 = arith.constant 0 : index
    %c0_265 = arith.constant 0 : index
    %247 = vector.load %arg1[%c0_262, %c8_263, %c0_264, %c0_265] : memref<1x16x16x128xf32, #tpu.memory_space<vmem>>, vector<1x1x16x128xf32>
    %248 = vector.shape_cast %247 : vector<1x1x16x128xf32> to vector<16x128xf32>
    %249 = arith.addf %246, %248 : vector<16x128xf32>
    %cst_266 = arith.constant 0.000000e+00 : f32
    %250 = vector.broadcast %cst_266 : f32 to vector<16x128xf32>
    %251 = arith.maximumf %249, %250 : vector<16x128xf32>
    %c0_267 = arith.constant 0 : index
    %c8_268 = arith.constant 8 : index
    %c0_269 = arith.constant 0 : index
    %c0_270 = arith.constant 0 : index
    %252 = vector.load %arg8[%c0_267, %c8_268, %c0_269, %c0_270] : memref<1x16x16x128xf32, #tpu.memory_space<vmem>>, vector<1x1x16x128xf32>
    %253 = vector.shape_cast %252 : vector<1x1x16x128xf32> to vector<16x128xf32>
    %254 = vector.shape_cast %251 : vector<16x128xf32> to vector<1x1x16x128xf32>
    tpu.vector_store %arg8[%c0_267, %c8_268, %c0_269, %c0_270], %254 {strides = array<i32>} : memref<1x16x16x128xf32, #tpu.memory_space<vmem>>, vector<1x1x16x128xf32>,
    %255 = vector.extract_strided_slice %173 {offsets = [162, 0], sizes = [16, 128], strides = [1, 1]} : vector<288x128xf32> to vector<16x128xf32>
    %c0_271 = arith.constant 0 : index
    %c9_272 = arith.constant 9 : index
    %c0_273 = arith.constant 0 : index
    %c0_274 = arith.constant 0 : index
    %256 = vector.load %arg1[%c0_271, %c9_272, %c0_273, %c0_274] : memref<1x16x16x128xf32, #tpu.memory_space<vmem>>, vector<1x1x16x128xf32>
    %257 = vector.shape_cast %256 : vector<1x1x16x128xf32> to vector<16x128xf32>
    %258 = arith.addf %255, %257 : vector<16x128xf32>
    %cst_275 = arith.constant 0.000000e+00 : f32
    %259 = vector.broadcast %cst_275 : f32 to vector<16x128xf32>
    %260 = arith.maximumf %258, %259 : vector<16x128xf32>
    %c0_276 = arith.constant 0 : index
    %c9_277 = arith.constant 9 : index
    %c0_278 = arith.constant 0 : index
    %c0_279 = arith.constant 0 : index
    %261 = vector.load %arg8[%c0_276, %c9_277, %c0_278, %c0_279] : memref<1x16x16x128xf32, #tpu.memory_space<vmem>>, vector<1x1x16x128xf32>
    %262 = vector.shape_cast %261 : vector<1x1x16x128xf32> to vector<16x128xf32>
    %263 = vector.shape_cast %260 : vector<16x128xf32> to vector<1x1x16x128xf32>
    tpu.vector_store %arg8[%c0_276, %c9_277, %c0_278, %c0_279], %263 {strides = array<i32>} : memref<1x16x16x128xf32, #tpu.memory_space<vmem>>, vector<1x1x16x128xf32>,
    %264 = vector.extract_strided_slice %173 {offsets = [180, 0], sizes = [16, 128], strides = [1, 1]} : vector<288x128xf32> to vector<16x128xf32>
    %c0_280 = arith.constant 0 : index
    %c10_281 = arith.constant 10 : index
    %c0_282 = arith.constant 0 : index
    %c0_283 = arith.constant 0 : index
    %265 = vector.load %arg1[%c0_280, %c10_281, %c0_282, %c0_283] : memref<1x16x16x128xf32, #tpu.memory_space<vmem>>, vector<1x1x16x128xf32>
    %266 = vector.shape_cast %265 : vector<1x1x16x128xf32> to vector<16x128xf32>
    %267 = arith.addf %264, %266 : vector<16x128xf32>
    %cst_284 = arith.constant 0.000000e+00 : f32
    %268 = vector.broadcast %cst_284 : f32 to vector<16x128xf32>
    %269 = arith.maximumf %267, %268 : vector<16x128xf32>
    %c0_285 = arith.constant 0 : index
    %c10_286 = arith.constant 10 : index
    %c0_287 = arith.constant 0 : index
    %c0_288 = arith.constant 0 : index
    %270 = vector.load %arg8[%c0_285, %c10_286, %c0_287, %c0_288] : memref<1x16x16x128xf32, #tpu.memory_space<vmem>>, vector<1x1x16x128xf32>
    %271 = vector.shape_cast %270 : vector<1x1x16x128xf32> to vector<16x128xf32>
    %272 = vector.shape_cast %269 : vector<16x128xf32> to vector<1x1x16x128xf32>
    tpu.vector_store %arg8[%c0_285, %c10_286, %c0_287, %c0_288], %272 {strides = array<i32>} : memref<1x16x16x128xf32, #tpu.memory_space<vmem>>, vector<1x1x16x128xf32>,
    %273 = vector.extract_strided_slice %173 {offsets = [198, 0], sizes = [16, 128], strides = [1, 1]} : vector<288x128xf32> to vector<16x128xf32>
    %c0_289 = arith.constant 0 : index
    %c11_290 = arith.constant 11 : index
    %c0_291 = arith.constant 0 : index
    %c0_292 = arith.constant 0 : index
    %274 = vector.load %arg1[%c0_289, %c11_290, %c0_291, %c0_292] : memref<1x16x16x128xf32, #tpu.memory_space<vmem>>, vector<1x1x16x128xf32>
    %275 = vector.shape_cast %274 : vector<1x1x16x128xf32> to vector<16x128xf32>
    %276 = arith.addf %273, %275 : vector<16x128xf32>
    %cst_293 = arith.constant 0.000000e+00 : f32
    %277 = vector.broadcast %cst_293 : f32 to vector<16x128xf32>
    %278 = arith.maximumf %276, %277 : vector<16x128xf32>
    %c0_294 = arith.constant 0 : index
    %c11_295 = arith.constant 11 : index
    %c0_296 = arith.constant 0 : index
    %c0_297 = arith.constant 0 : index
    %279 = vector.load %arg8[%c0_294, %c11_295, %c0_296, %c0_297] : memref<1x16x16x128xf32, #tpu.memory_space<vmem>>, vector<1x1x16x128xf32>
    %280 = vector.shape_cast %279 : vector<1x1x16x128xf32> to vector<16x128xf32>
    %281 = vector.shape_cast %278 : vector<16x128xf32> to vector<1x1x16x128xf32>
    tpu.vector_store %arg8[%c0_294, %c11_295, %c0_296, %c0_297], %281 {strides = array<i32>} : memref<1x16x16x128xf32, #tpu.memory_space<vmem>>, vector<1x1x16x128xf32>,
    %282 = vector.extract_strided_slice %173 {offsets = [216, 0], sizes = [16, 128], strides = [1, 1]} : vector<288x128xf32> to vector<16x128xf32>
    %c0_298 = arith.constant 0 : index
    %c12_299 = arith.constant 12 : index
    %c0_300 = arith.constant 0 : index
    %c0_301 = arith.constant 0 : index
    %283 = vector.load %arg1[%c0_298, %c12_299, %c0_300, %c0_301] : memref<1x16x16x128xf32, #tpu.memory_space<vmem>>, vector<1x1x16x128xf32>
    %284 = vector.shape_cast %283 : vector<1x1x16x128xf32> to vector<16x128xf32>
    %285 = arith.addf %282, %284 : vector<16x128xf32>
    %cst_302 = arith.constant 0.000000e+00 : f32
    %286 = vector.broadcast %cst_302 : f32 to vector<16x128xf32>
    %287 = arith.maximumf %285, %286 : vector<16x128xf32>
    %c0_303 = arith.constant 0 : index
    %c12_304 = arith.constant 12 : index
    %c0_305 = arith.constant 0 : index
    %c0_306 = arith.constant 0 : index
    %288 = vector.load %arg8[%c0_303, %c12_304, %c0_305, %c0_306] : memref<1x16x16x128xf32, #tpu.memory_space<vmem>>, vector<1x1x16x128xf32>
    %289 = vector.shape_cast %288 : vector<1x1x16x128xf32> to vector<16x128xf32>
    %290 = vector.shape_cast %287 : vector<16x128xf32> to vector<1x1x16x128xf32>
    tpu.vector_store %arg8[%c0_303, %c12_304, %c0_305, %c0_306], %290 {strides = array<i32>} : memref<1x16x16x128xf32, #tpu.memory_space<vmem>>, vector<1x1x16x128xf32>,
    %291 = vector.extract_strided_slice %173 {offsets = [234, 0], sizes = [16, 128], strides = [1, 1]} : vector<288x128xf32> to vector<16x128xf32>
    %c0_307 = arith.constant 0 : index
    %c13_308 = arith.constant 13 : index
    %c0_309 = arith.constant 0 : index
    %c0_310 = arith.constant 0 : index
    %292 = vector.load %arg1[%c0_307, %c13_308, %c0_309, %c0_310] : memref<1x16x16x128xf32, #tpu.memory_space<vmem>>, vector<1x1x16x128xf32>
    %293 = vector.shape_cast %292 : vector<1x1x16x128xf32> to vector<16x128xf32>
    %294 = arith.addf %291, %293 : vector<16x128xf32>
    %cst_311 = arith.constant 0.000000e+00 : f32
    %295 = vector.broadcast %cst_311 : f32 to vector<16x128xf32>
    %296 = arith.maximumf %294, %295 : vector<16x128xf32>
    %c0_312 = arith.constant 0 : index
    %c13_313 = arith.constant 13 : index
    %c0_314 = arith.constant 0 : index
    %c0_315 = arith.constant 0 : index
    %297 = vector.load %arg8[%c0_312, %c13_313, %c0_314, %c0_315] : memref<1x16x16x128xf32, #tpu.memory_space<vmem>>, vector<1x1x16x128xf32>
    %298 = vector.shape_cast %297 : vector<1x1x16x128xf32> to vector<16x128xf32>
    %299 = vector.shape_cast %296 : vector<16x128xf32> to vector<1x1x16x128xf32>
    tpu.vector_store %arg8[%c0_312, %c13_313, %c0_314, %c0_315], %299 {strides = array<i32>} : memref<1x16x16x128xf32, #tpu.memory_space<vmem>>, vector<1x1x16x128xf32>,
    %300 = vector.extract_strided_slice %173 {offsets = [252, 0], sizes = [16, 128], strides = [1, 1]} : vector<288x128xf32> to vector<16x128xf32>
    %c0_316 = arith.constant 0 : index
    %c14_317 = arith.constant 14 : index
    %c0_318 = arith.constant 0 : index
    %c0_319 = arith.constant 0 : index
    %301 = vector.load %arg1[%c0_316, %c14_317, %c0_318, %c0_319] : memref<1x16x16x128xf32, #tpu.memory_space<vmem>>, vector<1x1x16x128xf32>
    %302 = vector.shape_cast %301 : vector<1x1x16x128xf32> to vector<16x128xf32>
    %303 = arith.addf %300, %302 : vector<16x128xf32>
    %cst_320 = arith.constant 0.000000e+00 : f32
    %304 = vector.broadcast %cst_320 : f32 to vector<16x128xf32>
    %305 = arith.maximumf %303, %304 : vector<16x128xf32>
    %c0_321 = arith.constant 0 : index
    %c14_322 = arith.constant 14 : index
    %c0_323 = arith.constant 0 : index
    %c0_324 = arith.constant 0 : index
    %306 = vector.load %arg8[%c0_321, %c14_322, %c0_323, %c0_324] : memref<1x16x16x128xf32, #tpu.memory_space<vmem>>, vector<1x1x16x128xf32>
    %307 = vector.shape_cast %306 : vector<1x1x16x128xf32> to vector<16x128xf32>
    %308 = vector.shape_cast %305 : vector<16x128xf32> to vector<1x1x16x128xf32>
    tpu.vector_store %arg8[%c0_321, %c14_322, %c0_323, %c0_324], %308 {strides = array<i32>} : memref<1x16x16x128xf32, #tpu.memory_space<vmem>>, vector<1x1x16x128xf32>,
    %309 = vector.extract_strided_slice %173 {offsets = [270, 0], sizes = [16, 128], strides = [1, 1]} : vector<288x128xf32> to vector<16x128xf32>
    %c0_325 = arith.constant 0 : index
    %c15_326 = arith.constant 15 : index
    %c0_327 = arith.constant 0 : index
    %c0_328 = arith.constant 0 : index
    %310 = vector.load %arg1[%c0_325, %c15_326, %c0_327, %c0_328] : memref<1x16x16x128xf32, #tpu.memory_space<vmem>>, vector<1x1x16x128xf32>
    %311 = vector.shape_cast %310 : vector<1x1x16x128xf32> to vector<16x128xf32>
    %312 = arith.addf %309, %311 : vector<16x128xf32>
    %cst_329 = arith.constant 0.000000e+00 : f32
    %313 = vector.broadcast %cst_329 : f32 to vector<16x128xf32>
    %314 = arith.maximumf %312, %313 : vector<16x128xf32>
    %c0_330 = arith.constant 0 : index
    %c15_331 = arith.constant 15 : index
    %c0_332 = arith.constant 0 : index
    %c0_333 = arith.constant 0 : index
    %315 = vector.load %arg8[%c0_330, %c15_331, %c0_332, %c0_333] : memref<1x16x16x128xf32, #tpu.memory_space<vmem>>, vector<1x1x16x128xf32>
    %316 = vector.shape_cast %315 : vector<1x1x16x128xf32> to vector<16x128xf32>
    %317 = vector.shape_cast %314 : vector<16x128xf32> to vector<1x1x16x128xf32>
    tpu.vector_store %arg8[%c0_330, %c15_331, %c0_332, %c0_333], %317 {strides = array<i32>} : memref<1x16x16x128xf32, #tpu.memory_space<vmem>>, vector<1x1x16x128xf32>,
    return
  }
  func.func @transform_0(%arg0: i32) -> (i32, i32, i32, i32) {
    %c0_i32 = arith.constant 0 : i32
    %c0_i32_0 = arith.constant 0 : i32
    %c0_i32_1 = arith.constant 0 : i32
    %c0_i32_2 = arith.constant 0 : i32
    return %arg0, %c0_i32, %c0_i32_0, %c0_i32_1 : i32, i32, i32, i32
  }
  func.func @transform_1(%arg0: i32) -> (i32, i32, i32) {
    %c0_i32 = arith.constant 0 : i32
    %c0_i32_0 = arith.constant 0 : i32
    %c0_i32_1 = arith.constant 0 : i32
    %c0_i32_2 = arith.constant 0 : i32
    return %c0_i32, %c0_i32_0, %c0_i32_1 : i32, i32, i32
  }
  func.func @transform_2(%arg0: i32) -> (i32, i32) {
    %c0_i32 = arith.constant 0 : i32
    %c0_i32_0 = arith.constant 0 : i32
    %c0_i32_1 = arith.constant 0 : i32
    return %c0_i32, %c0_i32_0 : i32, i32
  }
  func.func @transform_3(%arg0: i32) -> (i32, i32) {
    %c0_i32 = arith.constant 0 : i32
    %c0_i32_0 = arith.constant 0 : i32
    %c0_i32_1 = arith.constant 0 : i32
    return %c0_i32, %c0_i32_0 : i32, i32
  }
  func.func @transform_4(%arg0: i32) -> (i32, i32, i32) {
    %c0_i32 = arith.constant 0 : i32
    %c0_i32_0 = arith.constant 0 : i32
    %c0_i32_1 = arith.constant 0 : i32
    %c0_i32_2 = arith.constant 0 : i32
    return %c0_i32, %c0_i32_0, %c0_i32_1 : i32, i32, i32
  }
  func.func @transform_5(%arg0: i32) -> (i32, i32) {
    %c0_i32 = arith.constant 0 : i32
    %c0_i32_0 = arith.constant 0 : i32
    %c0_i32_1 = arith.constant 0 : i32
    return %c0_i32, %c0_i32_0 : i32, i32
  }
  func.func @transform_6(%arg0: i32) -> (i32, i32) {
    %c0_i32 = arith.constant 0 : i32
    %c0_i32_0 = arith.constant 0 : i32
    %c0_i32_1 = arith.constant 0 : i32
    return %c0_i32, %c0_i32_0 : i32, i32
  }
  func.func @transform_7(%arg0: i32) -> (i32, i32, i32, i32) {
    %c0_i32 = arith.constant 0 : i32
    %c0_i32_0 = arith.constant 0 : i32
    %c0_i32_1 = arith.constant 0 : i32
    %c0_i32_2 = arith.constant 0 : i32
    return %arg0, %c0_i32, %c0_i32_0, %c0_i32_1 : i32, i32, i32, i32
  }
}

</mosaic_0001>

<llo_original>
// kernel: residual_block_forward.1
$region0: #{residual_block_forward.1}
  #allocation0 [shape = 'u32[]', space=smem, size = 0x4, offset = 0x4, fixed_abs, tag = 'smem constant byte address 0x4 - core index']
  #allocation1 [shape = 'u32[144,128]{1,0:T(1,128)}', space=vmem, size = 0x12000, scoped, tag = 'internal scratch']
  #allocation2 [shape = 'f32[332,128]{1,0:T(8,128)}', space=vmem, size = 0x2a000, scoped, tag = 'scratch operand']
  #allocation3 [shape = 'f32[332,128]{1,0:T(8,128)}', space=vmem, size = 0x2a000, scoped, tag = 'scratch operand']
  #allocation4 [shape = 'f32[288,128]{1,0:T(8,128)}', space=vmem, size = 0x24000, scoped, tag = 'scratch operand']
  %s0 = inlined_call_operand.vmem [shape: f32[2,16,16,128], index: 0, kind: input, shape index: {}]
  %s1 = inlined_call_operand.vmem [shape: bf16[3,384,128], index: 1, kind: input, shape index: {}]
  %s2 = inlined_call_operand.vmem [shape: f32[1,128], index: 2, kind: input, shape index: {}]
  %s3 = inlined_call_operand.vmem [shape: f32[1,128], index: 3, kind: input, shape index: {}]
  %s4 = inlined_call_operand.vmem [shape: bf16[3,384,128], index: 4, kind: input, shape index: {}]
  %s5 = inlined_call_operand.vmem [shape: f32[1,128], index: 5, kind: input, shape index: {}]
  %s6 = inlined_call_operand.vmem [shape: f32[1,128], index: 6, kind: input, shape index: {}]
  %s7 = inlined_call_operand.hbm [shape: f32[2,16,16,128], index: 7, kind: output, shape index: {}]
  %s8 = sld [smem:[#allocation0]]
  $region61: #{residual_block_forward.1} parent=0
    _
  %s10 = ssub.s32 1, %s8
  %s11 = scalar_select 0, %s10, %s8
  $region1: #{residual_block_forward.1} parent=0
    #allocation5 [shape = 'u8[262144]{0}', space=vmem, size = 0x40000, scoped, tag = 'output window, operand 0']
    #allocation6 [shape = 's32[2]{0}', space=sflag, size = 0x8, scoped, tag = 'scoped memory for residual_block_forward.1']
    %12 = vsyncpa [#allocation6], 0
    %s13 = scalar_lea.sflag [#allocation6], 1
    %14 = vsyncpa %s13, 0
    loop: start=0, step=1, limit=4
    $region2: #{residual_block_forward.1} parent=1 // loop_pre_header
      _
    $region3: #{residual_block_forward.1} parent=1 // loop_header
      %s16 = sphi 0, %s20
      %p17 = scmp.ge.s32.totalorder %s16, 4
      %s26 = sphi 0, %s28
      %s29 = sphi 0, %s26
      %s30 = sphi 0, %s29
      %s46 = sphi 0, %s30
      %s50 = sphi 0, %s50
      %s52 = sphi 0, %s50
      %s53 = sphi 0, %s52
      %s67 = sphi 0, %s53
      %s71 = sphi 0, %s71
      %s73 = sphi 0, %s71
      %s74 = sphi 0, %s73
      %s88 = sphi 0, %s74
      %s92 = sphi 0, %s92
      %s94 = sphi 0, %s92
      %s95 = sphi 0, %s94
      %s109 = sphi 0, %s95
      %s113 = sphi 0, %s113
      %s115 = sphi 0, %s113
      %s116 = sphi 0, %s115
      %s130 = sphi 0, %s116
      %s134 = sphi 0, %s134
      %s136 = sphi 0, %s134
      %s137 = sphi 0, %s136
      %s151 = sphi 0, %s137
      %s155 = sphi 0, %s155
      %s157 = sphi 0, %s155
      %s158 = sphi 0, %s157
      %s172 = sphi 0, %s158
      %s178 = sphi 0, %s180
      %s181 = sphi 0, %s178
      %s182 = sphi 0, %s181
      %s198 = sphi 0, %s182
    $region4: #{residual_block_forward.1} parent=1 // loop_header_branch
      %19 = sbr.rel (%p17) target = $region8
    $region5: #{residual_block_forward.1} parent=1 // loop_body
      %s21 = ssub.s32 %s16, 1
      %s22 = ssub.s32 %s16, 2
      %s23 = sadd.s32 %s16, 1
      %s24 = ssub.s32 %s16, %s23
      %p25 = scmp.eq.s32.totalorder %s24, 0
      %s27 = sadd.s32 %s26, 1
      %s28 = scalar_select %p25, %s26, %s27
      %p31 = pneg %p25
      %p32 = scmp.eq.s32.totalorder %s16, 1
      %p33 = por %p31, %p32
      %p34 = scmp.ne.s32.totalorder %s26, %s29
      %p35 = scmp.eq.s32.totalorder %s16, 0
      %p36 = por %p34, %p35
      %p37 = scmp.ne.s32.totalorder %s26, %s29
      %p38 = scmp.eq.s32.totalorder %s21, 1
      %p39 = por %p37, %p38
      %p40 = scmp.ne.s32.totalorder %s29, %s30
      %p41 = scmp.eq.s32.totalorder %s21, 0
      %p42 = por %p40, %p41
      %p43 = scmp.ne.s32.totalorder %s29, %s30
      %p44 = scmp.eq.s32.totalorder %s22, 1
      %p45 = por %p43, %p44
      %p47 = scmp.ne.s32.totalorder %s30, %s46
      %p48 = scmp.eq.s32.totalorder %s22, 0
      %p49 = por %p47, %p48
      %s51 = sadd.s32 %s50, 1
      %p54 = scmp.eq.s32.totalorder %s16, 1
      %p55 = scmp.ne.s32.totalorder %s50, %s52
      %p56 = scmp.eq.s32.totalorder %s16, 0
      %p57 = por %p55, %p56
      %p58 = scmp.ne.s32.totalorder %s50, %s52
      %p59 = scmp.eq.s32.totalorder %s21, 1
      %p60 = por %p58, %p59
      %p61 = scmp.ne.s32.totalorder %s52, %s53
      %p62 = scmp.eq.s32.totalorder %s21, 0
      %p63 = por %p61, %p62
      %p64 = scmp.ne.s32.totalorder %s52, %s53
      %p65 = scmp.eq.s32.totalorder %s22, 1
      %p66 = por %p64, %p65
      %p68 = scmp.ne.s32.totalorder %s53, %s67
      %p69 = scmp.eq.s32.totalorder %s22, 0
      %p70 = por %p68, %p69
      %s72 = sadd.s32 %s71, 1
      %p75 = scmp.eq.s32.totalorder %s16, 1
      %p76 = scmp.ne.s32.totalorder %s71, %s73
      %p77 = scmp.eq.s32.totalorder %s16, 0
      %p78 = por %p76, %p77
      %p79 = scmp.ne.s32.totalorder %s71, %s73
      %p80 = scmp.eq.s32.totalorder %s21, 1
      %p81 = por %p79, %p80
      %p82 = scmp.ne.s32.totalorder %s73, %s74
      %p83 = scmp.eq.s32.totalorder %s21, 0
      %p84 = por %p82, %p83
      %p85 = scmp.ne.s32.totalorder %s73, %s74
      %p86 = scmp.eq.s32.totalorder %s22, 1
      %p87 = por %p85, %p86
      %p89 = scmp.ne.s32.totalorder %s74, %s88
      %p90 = scmp.eq.s32.totalorder %s22, 0
      %p91 = por %p89, %p90
      %s93 = sadd.s32 %s92, 1
      %p96 = scmp.eq.s32.totalorder %s16, 1
      %p97 = scmp.ne.s32.totalorder %s92, %s94
      %p98 = scmp.eq.s32.totalorder %s16, 0
      %p99 = por %p97, %p98
      %p100 = scmp.ne.s32.totalorder %s92, %s94
      %p101 = scmp.eq.s32.totalorder %s21, 1
      %p102 = por %p100, %p101
      %p103 = scmp.ne.s32.totalorder %s94, %s95
      %p104 = scmp.eq.s32.totalorder %s21, 0
      %p105 = por %p103, %p104
      %p106 = scmp.ne.s32.totalorder %s94, %s95
      %p107 = scmp.eq.s32.totalorder %s22, 1
      %p108 = por %p106, %p107
      %p110 = scmp.ne.s32.totalorder %s95, %s109
      %p111 = scmp.eq.s32.totalorder %s22, 0
      %p112 = por %p110, %p111
      %s114 = sadd.s32 %s113, 1
      %p117 = scmp.eq.s32.totalorder %s16, 1
      %p118 = scmp.ne.s32.totalorder %s113, %s115
      %p119 = scmp.eq.s32.totalorder %s16, 0
      %p120 = por %p118, %p119
      %p121 = scmp.ne.s32.totalorder %s113, %s115
      %p122 = scmp.eq.s32.totalorder %s21, 1
      %p123 = por %p121, %p122
      %p124 = scmp.ne.s32.totalorder %s115, %s116
      %p125 = scmp.eq.s32.totalorder %s21, 0
      %p126 = por %p124, %p125
      %p127 = scmp.ne.s32.totalorder %s115, %s116
      %p128 = scmp.eq.s32.totalorder %s22, 1
      %p129 = por %p127, %p128
      %p131 = scmp.ne.s32.totalorder %s116, %s130
      %p132 = scmp.eq.s32.totalorder %s22, 0
      %p133 = por %p131, %p132
      %s135 = sadd.s32 %s134, 1
      %p138 = scmp.eq.s32.totalorder %s16, 1
      %p139 = scmp.ne.s32.totalorder %s134, %s136
      %p140 = scmp.eq.s32.totalorder %s16, 0
      %p141 = por %p139, %p140
      %p142 = scmp.ne.s32.totalorder %s134, %s136
      %p143 = scmp.eq.s32.totalorder %s21, 1
      %p144 = por %p142, %p143
      %p145 = scmp.ne.s32.totalorder %s136, %s137
      %p146 = scmp.eq.s32.totalorder %s21, 0
      %p147 = por %p145, %p146
      %p148 = scmp.ne.s32.totalorder %s136, %s137
      %p149 = scmp.eq.s32.totalorder %s22, 1
      %p150 = por %p148, %p149
      %p152 = scmp.ne.s32.totalorder %s137, %s151
      %p153 = scmp.eq.s32.totalorder %s22, 0
      %p154 = por %p152, %p153
      %s156 = sadd.s32 %s155, 1
      %p159 = scmp.eq.s32.totalorder %s16, 1
      %p160 = scmp.ne.s32.totalorder %s155, %s157
      %p161 = scmp.eq.s32.totalorder %s16, 0
      %p162 = por %p160, %p161
      %p163 = scmp.ne.s32.totalorder %s155, %s157
      %p164 = scmp.eq.s32.totalorder %s21, 1
      %p165 = por %p163, %p164
      %p166 = scmp.ne.s32.totalorder %s157, %s158
      %p167 = scmp.eq.s32.totalorder %s21, 0
      %p168 = por %p166, %p167
      %p169 = scmp.ne.s32.totalorder %s157, %s158
      %p170 = scmp.eq.s32.totalorder %s22, 1
      %p171 = por %p169, %p170
      %p173 = scmp.ne.s32.totalorder %s158, %s172
      %p174 = scmp.eq.s32.totalorder %s22, 0
      %p175 = por %p173, %p174
      %s176 = ssub.s32 %s16, %s23
      %p177 = scmp.eq.s32.totalorder %s176, 0
      %s179 = sadd.s32 %s178, 1
      %s180 = scalar_select %p177, %s178, %s179
      %p183 = pneg %p177
      %p184 = scmp.eq.s32.totalorder %s16, 1
      %p185 = por %p183, %p184
      %p186 = scmp.ne.s32.totalorder %s178, %s181
      %p187 = scmp.eq.s32.totalorder %s16, 0
      %p188 = por %p186, %p187
      %p189 = scmp.ne.s32.totalorder %s178, %s181
      %p190 = scmp.eq.s32.totalorder %s21, 1
      %p191 = por %p189, %p190
      %p192 = scmp.ne.s32.totalorder %s181, %s182
      %p193 = scmp.eq.s32.totalorder %s21, 0
      %p194 = por %p192, %p193
      %p195 = scmp.ne.s32.totalorder %s181, %s182
      %p196 = scmp.eq.s32.totalorder %s22, 1
      %p197 = por %p195, %p196
      %p199 = scmp.ne.s32.totalorder %s182, %s198
      %p200 = scmp.eq.s32.totalorder %s22, 0
      %p201 = por %p199, %p200
      %p202 = scmp.le.s32.totalorder 1, %s16
      %p203 = scmp.lt.s32.totalorder %s16, 3
      %p204 = pnand %p202, %p203
      %p205 = pneg %p204
      // Predicated region
      $region9: #{residual_block_forward.1} parent=5 // pred_check
        _
      $region10: #{residual_block_forward.1} parent=5 // pred_check_branch
        %207 = sbr.rel (%p204) target = $region12
      $region11: #{residual_block_forward.1} parent=5 // pred_region
        %s208 = ssub.s32 %s16, 1
        // Predicated region
        $region13: #{residual_block_forward.1} parent=11 // pred_check
          %p209 = pneg %p63
        $region14: #{residual_block_forward.1} parent=11 // pred_check_branch
          %211 = sbr.rel (%p209) target = $region16
        $region15: #{residual_block_forward.1} parent=11 // pred_region
          _
        $region16: #{residual_block_forward.1} parent=11 // pred_fallthru
          _
        // Predicated region
        $region17: #{residual_block_forward.1} parent=11 // pred_check
          %p212 = pneg %p84
        $region18: #{residual_block_forward.1} parent=11 // pred_check_branch
          %214 = sbr.rel (%p212) target = $region20
        $region19: #{residual_block_forward.1} parent=11 // pred_region
          _
        $region20: #{residual_block_forward.1} parent=11 // pred_fallthru
          _
        // Predicated region
        $region21: #{residual_block_forward.1} parent=11 // pred_check
          %p215 = pneg %p105
        $region22: #{residual_block_forward.1} parent=11 // pred_check_branch
          %217 = sbr.rel (%p215) target = $region24
        $region23: #{residual_block_forward.1} parent=11 // pred_region
          _
        $region24: #{residual_block_forward.1} parent=11 // pred_fallthru
          _
        // Predicated region
        $region25: #{residual_block_forward.1} parent=11 // pred_check
          %p218 = pneg %p126
        $region26: #{residual_block_forward.1} parent=11 // pred_check_branch
          %220 = sbr.rel (%p218) target = $region28
        $region27: #{residual_block_forward.1} parent=11 // pred_region
          _
        $region28: #{residual_block_forward.1} parent=11 // pred_fallthru
          _
        // Predicated region
        $region29: #{residual_block_forward.1} parent=11 // pred_check
          %p221 = pneg %p147
        $region30: #{residual_block_forward.1} parent=11 // pred_check_branch
          %223 = sbr.rel (%p221) target = $region32
        $region31: #{residual_block_forward.1} parent=11 // pred_region
          _
        $region32: #{residual_block_forward.1} parent=11 // pred_fallthru
          _
        // Predicated region
        $region33: #{residual_block_forward.1} parent=11 // pred_check
          %p224 = pneg %p168
        $region34: #{residual_block_forward.1} parent=11 // pred_check_branch
          %226 = sbr.rel (%p224) target = $region36
        $region35: #{residual_block_forward.1} parent=11 // pred_region
          _
        $region36: #{residual_block_forward.1} parent=11 // pred_fallthru
          _
      $region12: #{residual_block_forward.1} parent=5 // pred_fallthru
        _
      %p227 = scmp.lt.s32.totalorder %s16, 2
      // Predicated region
      $region37: #{residual_block_forward.1} parent=5 // pred_check
        %p228 = pneg %p227
      $region38: #{residual_block_forward.1} parent=5 // pred_check_branch
        %230 = sbr.rel (%p228) target = $region40
      $region39: #{residual_block_forward.1} parent=5 // pred_region
        // Predicated region
        $region41: #{residual_block_forward.1} parent=39 // pred_check
          %p231 = pneg %p36
        $region42: #{residual_block_forward.1} parent=39 // pred_check_branch
          %233 = sbr.rel (%p231) target = $region44
        $region43: #{residual_block_forward.1} parent=39 // pred_region
          %p234 = scmp.lt.s32.totalorder %s16, 1
          %s235 = scalar_select %p234, %s16, 1
          %s236 = smul.addr %s235, 32
          %s237 = smul.addr %s236, 8
          %s238 = scalar_lea.vmem %s0, %s237
        $region44: #{residual_block_forward.1} parent=39 // pred_fallthru
          _
      $region40: #{residual_block_forward.1} parent=5 // pred_fallthru
        _
      %p239 = scmp.le.s32.totalorder 1, %s16
      %p240 = scmp.lt.s32.totalorder %s16, 3
      %p241 = pnand %p239, %p240
      %p242 = pneg %p241
      // Predicated region
      $region45: #{residual_block_forward.1} parent=5 // pred_check
        _
      $region46: #{residual_block_forward.1} parent=5 // pred_check_branch
        %244 = sbr.rel (%p241) target = $region48
      $region47: #{residual_block_forward.1} parent=5 // pred_region
        %s245 = ssub.s32 %s16, 1
        %p246 = scmp.lt.s32.totalorder %s21, 1
        %s247 = scalar_select %p246, %s21, 1
        %s248 = smul.addr %s247, 32
        %s249 = smul.addr %s248, 8
        %s250 = scalar_lea.vmem %s0, %s249
        %p251 = pneg %p42
        %p252 = pneg %p39
        %p253 = pneg %p63
        %p254 = pneg %p60
        %p255 = pneg %p84
        %p256 = pneg %p81
        %p257 = pneg %p105
        %p258 = pneg %p102
        %p259 = pneg %p126
        %p260 = pneg %p123
        %p261 = pneg %p147
        %p262 = pneg %p144
        %p263 = pneg %p168
        %p264 = pneg %p165
        %p265 = pneg %p194
        %p266 = pneg %p191
        %s267 = sand.u32 %s181, 1
        %s268 = scalar_lea.sflag [#allocation6], %s267
        %s269 = sand.u32 %s181, 1
        %s270 = smul.addr %s269, 256
        %s271 = scalar_lea.vmem [#allocation5], %s270
        %p272 = scmp.lt.s32.totalorder %s21, 1
        %s273 = scalar_select %p272, %s21, 1
        %s274 = smul.addr %s273, 32
        %s275 = smul.addr %s274, 8
        %s276 = scalar_lea.vmem %s0, %s275
        %278 = vst [vmem:[#allocation2] sm:$0xff] 0.0
        %279 = vst [vmem:[#allocation2 + $0x8] sm:$0xff] 0.0
        %280 = vst [vmem:[#allocation2 + $0x10] sm:$0xff] 0.0
        %281 = vst [vmem:[#allocation2 + $0x18] sm:$0xff] 0.0
        %282 = vst [vmem:[#allocation2 + $0x20] sm:$0xff] 0.0
        %283 = vst [vmem:[#allocation2 + $0x28] sm:$0xff] 0.0
        %284 = vst [vmem:[#allocation2 + $0x30] sm:$0xff] 0.0
        %285 = vst [vmem:[#allocation2 + $0x38] sm:$0xff] 0.0
        %286 = vst [vmem:[#allocation2 + $0x40] sm:$0xff] 0.0
        %287 = vst [vmem:[#allocation2 + $0x48] sm:$0xff] 0.0
        %288 = vst [vmem:[#allocation2 + $0x50] sm:$0xff] 0.0
        %289 = vst [vmem:[#allocation2 + $0x58] sm:$0xff] 0.0
        %290 = vst [vmem:[#allocation2 + $0x60] sm:$0xff] 0.0
        %291 = vst [vmem:[#allocation2 + $0x68] sm:$0xff] 0.0
        %292 = vst [vmem:[#allocation2 + $0x70] sm:$0xff] 0.0
        %293 = vst [vmem:[#allocation2 + $0x78] sm:$0xff] 0.0
        %294 = vst [vmem:[#allocation2 + $0x80] sm:$0xff] 0.0
        %295 = vst [vmem:[#allocation2 + $0x88] sm:$0xff] 0.0
        %296 = vst [vmem:[#allocation2 + $0x90] sm:$0xff] 0.0
        %297 = vst [vmem:[#allocation2 + $0x98] sm:$0xff] 0.0
        %298 = vst [vmem:[#allocation2 + $0xa0] sm:$0xff] 0.0
        %299 = vst [vmem:[#allocation2 + $0xa8] sm:$0xff] 0.0
        %300 = vst [vmem:[#allocation2 + $0xb0] sm:$0xff] 0.0
        %301 = vst [vmem:[#allocation2 + $0xb8] sm:$0xff] 0.0
        %302 = vst [vmem:[#allocation2 + $0xc0] sm:$0xff] 0.0
        %303 = vst [vmem:[#allocation2 + $0xc8] sm:$0xff] 0.0
        %304 = vst [vmem:[#allocation2 + $0xd0] sm:$0xff] 0.0
        %305 = vst [vmem:[#allocation2 + $0xd8] sm:$0xff] 0.0
        %306 = vst [vmem:[#allocation2 + $0xe0] sm:$0xff] 0.0
        %307 = vst [vmem:[#allocation2 + $0xe8] sm:$0xff] 0.0
        %308 = vst [vmem:[#allocation2 + $0xf0] sm:$0xff] 0.0
        %309 = vst [vmem:[#allocation2 + $0xf8] sm:$0xff] 0.0
        %310 = vst [vmem:[#allocation2 + $0x100] sm:$0xff] 0.0
        %311 = vst [vmem:[#allocation2 + $0x108] sm:$0xff] 0.0
        %312 = vst [vmem:[#allocation2 + $0x110] sm:$0xff] 0.0
        %313 = vst [vmem:[#allocation2 + $0x118] sm:$0xff] 0.0
        %314 = vst [vmem:[#allocation2 + $0x120] sm:$0xff] 0.0
        %315 = vst [vmem:[#allocation2 + $0x128] sm:$0xff] 0.0
        %316 = vst [vmem:[#allocation2 + $0x130] sm:$0xff] 0.0
        %317 = vst [vmem:[#allocation2 + $0x138] sm:$0xff] 0.0
        %318 = vst [vmem:[#allocation2 + $0x140] sm:$0xff] 0.0
        %319 = vst [vmem:[#allocation2 + $0x148] sm:$0xf] 0.0
        %320 = vst [vmem:[#allocation3] sm:$0xff] 0.0
        %321 = vst [vmem:[#allocation3 + $0x8] sm:$0xff] 0.0
        %322 = vst [vmem:[#allocation3 + $0x10] sm:$0xff] 0.0
        %323 = vst [vmem:[#allocation3 + $0x18] sm:$0xff] 0.0
        %324 = vst [vmem:[#allocation3 + $0x20] sm:$0xff] 0.0
        %325 = vst [vmem:[#allocation3 + $0x28] sm:$0xff] 0.0
        %326 = vst [vmem:[#allocation3 + $0x30] sm:$0xff] 0.0
        %327 = vst [vmem:[#allocation3 + $0x38] sm:$0xff] 0.0
        %328 = vst [vmem:[#allocation3 + $0x40] sm:$0xff] 0.0
        %329 = vst [vmem:[#allocation3 + $0x48] sm:$0xff] 0.0
        %330 = vst [vmem:[#allocation3 + $0x50] sm:$0xff] 0.0
        %331 = vst [vmem:[#allocation3 + $0x58] sm:$0xff] 0.0
        %332 = vst [vmem:[#allocation3 + $0x60] sm:$0xff] 0.0
        %333 = vst [vmem:[#allocation3 + $0x68] sm:$0xff] 0.0
        %334 = vst [vmem:[#allocation3 + $0x70] sm:$0xff] 0.0
        %335 = vst [vmem:[#allocation3 + $0x78] sm:$0xff] 0.0
        %336 = vst [vmem:[#allocation3 + $0x80] sm:$0xff] 0.0
        %337 = vst [vmem:[#allocation3 + $0x88] sm:$0xff] 0.0
        %338 = vst [vmem:[#allocation3 + $0x90] sm:$0xff] 0.0
        %339 = vst [vmem:[#allocation3 + $0x98] sm:$0xff] 0.0
        %340 = vst [vmem:[#allocation3 + $0xa0] sm:$0xff] 0.0
        %341 = vst [vmem:[#allocation3 + $0xa8] sm:$0xff] 0.0
        %342 = vst [vmem:[#allocation3 + $0xb0] sm:$0xff] 0.0
        %343 = vst [vmem:[#allocation3 + $0xb8] sm:$0xff] 0.0
        %344 = vst [vmem:[#allocation3 + $0xc0] sm:$0xff] 0.0
        %345 = vst [vmem:[#allocation3 + $0xc8] sm:$0xff] 0.0
        %346 = vst [vmem:[#allocation3 + $0xd0] sm:$0xff] 0.0
        %347 = vst [vmem:[#allocation3 + $0xd8] sm:$0xff] 0.0
        %348 = vst [vmem:[#allocation3 + $0xe0] sm:$0xff] 0.0
        %349 = vst [vmem:[#allocation3 + $0xe8] sm:$0xff] 0.0
        %350 = vst [vmem:[#allocation3 + $0xf0] sm:$0xff] 0.0
        %351 = vst [vmem:[#allocation3 + $0xf8] sm:$0xff] 0.0
        %352 = vst [vmem:[#allocation3 + $0x100] sm:$0xff] 0.0
        %353 = vst [vmem:[#allocation3 + $0x108] sm:$0xff] 0.0
        %354 = vst [vmem:[#allocation3 + $0x110] sm:$0xff] 0.0
        %355 = vst [vmem:[#allocation3 + $0x118] sm:$0xff] 0.0
        %356 = vst [vmem:[#allocation3 + $0x120] sm:$0xff] 0.0
        %357 = vst [vmem:[#allocation3 + $0x128] sm:$0xff] 0.0
        %358 = vst [vmem:[#allocation3 + $0x130] sm:$0xff] 0.0
        %359 = vst [vmem:[#allocation3 + $0x138] sm:$0xff] 0.0
        %360 = vst [vmem:[#allocation3 + $0x140] sm:$0xff] 0.0
        %361 = vst [vmem:[#allocation3 + $0x148] sm:$0xf] 0.0
        %v362 = vld [vmem:[%s276] sm:$0xff]
        %v363 = vld [vmem:[%s276 + $0x8] sm:$0xff]
        %364 = vst [vmem:[#allocation2 + $0x13] sm:$0xff] %v362
        %365 = vst [vmem:[#allocation2 + $0x1b] sm:$0xff] %v363
        %s366 = scalar_lea.vmem %s276, 16
        %v367 = vld [vmem:[%s366] sm:$0xff]
        %v368 = vld [vmem:[%s366 + $0x8] sm:$0xff]
        %369 = vst [vmem:[#allocation2 + $0x25] sm:$0xff] %v367
        %370 = vst [vmem:[#allocation2 + $0x2d] sm:$0xff] %v368
        %s371 = scalar_lea.vmem %s276, 32
        %v372 = vld [vmem:[%s371] sm:$0xff]
        %v373 = vld [vmem:[%s371 + $0x8] sm:$0xff]
        %374 = vst [vmem:[#allocation2 + $0x37] sm:$0xff] %v372
        %375 = vst [vmem:[#allocation2 + $0x3f] sm:$0xff] %v373
        %s376 = scalar_lea.vmem %s276, 48
        %v377 = vld [vmem:[%s376] sm:$0xff]
        %v378 = vld [vmem:[%s376 + $0x8] sm:$0xff]
        %379 = vst [vmem:[#allocation2 + $0x49] sm:$0xff] %v377
        %380 = vst [vmem:[#allocation2 + $0x51] sm:$0xff] %v378
        %s381 = scalar_lea.vmem %s276, 64
        %v382 = vld [vmem:[%s381] sm:$0xff]
        %v383 = vld [vmem:[%s381 + $0x8] sm:$0xff]
        %384 = vst [vmem:[#allocation2 + $0x5b] sm:$0xff] %v382
        %385 = vst [vmem:[#allocation2 + $0x63] sm:$0xff] %v383
        %s386 = scalar_lea.vmem %s276, 80
        %v387 = vld [vmem:[%s386] sm:$0xff]
        %v388 = vld [vmem:[%s386 + $0x8] sm:$0xff]
        %389 = vst [vmem:[#allocation2 + $0x6d] sm:$0xff] %v387
        %390 = vst [vmem:[#allocation2 + $0x75] sm:$0xff] %v388
        %s391 = scalar_lea.vmem %s276, 96
        %v392 = vld [vmem:[%s391] sm:$0xff]
        %v393 = vld [vmem:[%s391 + $0x8] sm:$0xff]
        %394 = vst [vmem:[#allocation2 + $0x7f] sm:$0xff] %v392
        %395 = vst [vmem:[#allocation2 + $0x87] sm:$0xff] %v393
        %s396 = scalar_lea.vmem %s276, 112
        %v397 = vld [vmem:[%s396] sm:$0xff]
        %v398 = vld [vmem:[%s396 + $0x8] sm:$0xff]
        %399 = vst [vmem:[#allocation2 + $0x91] sm:$0xff] %v397
        %400 = vst [vmem:[#allocation2 + $0x99] sm:$0xff] %v398
        %s401 = scalar_lea.vmem %s276, 128
        %v402 = vld [vmem:[%s401] sm:$0xff]
        %v403 = vld [vmem:[%s401 + $0x8] sm:$0xff]
        %404 = vst [vmem:[#allocation2 + $0xa3] sm:$0xff] %v402
        %405 = vst [vmem:[#allocation2 + $0xab] sm:$0xff] %v403
        %s406 = scalar_lea.vmem %s276, 144
        %v407 = vld [vmem:[%s406] sm:$0xff]
        %v408 = vld [vmem:[%s406 + $0x8] sm:$0xff]
        %409 = vst [vmem:[#allocation2 + $0xb5] sm:$0xff] %v407
        %410 = vst [vmem:[#allocation2 + $0xbd] sm:$0xff] %v408
        %s411 = scalar_lea.vmem %s276, 160
        %v412 = vld [vmem:[%s411] sm:$0xff]
        %v413 = vld [vmem:[%s411 + $0x8] sm:$0xff]
        %414 = vst [vmem:[#allocation2 + $0xc7] sm:$0xff] %v412
        %415 = vst [vmem:[#allocation2 + $0xcf] sm:$0xff] %v413
        %s416 = scalar_lea.vmem %s276, 176
        %v417 = vld [vmem:[%s416] sm:$0xff]
        %v418 = vld [vmem:[%s416 + $0x8] sm:$0xff]
        %419 = vst [vmem:[#allocation2 + $0xd9] sm:$0xff] %v417
        %420 = vst [vmem:[#allocation2 + $0xe1] sm:$0xff] %v418
        %s421 = scalar_lea.vmem %s276, 192
        %v422 = vld [vmem:[%s421] sm:$0xff]
        %v423 = vld [vmem:[%s421 + $0x8] sm:$0xff]
        %424 = vst [vmem:[#allocation2 + $0xeb] sm:$0xff] %v422
        %425 = vst [vmem:[#allocation2 + $0xf3] sm:$0xff] %v423
        %s426 = scalar_lea.vmem %s276, 208
        %v427 = vld [vmem:[%s426] sm:$0xff]
        %v428 = vld [vmem:[%s426 + $0x8] sm:$0xff]
        %429 = vst [vmem:[#allocation2 + $0xfd] sm:$0xff] %v427
        %430 = vst [vmem:[#allocation2 + $0x105] sm:$0xff] %v428
        %s431 = scalar_lea.vmem %s276, 224
        %v432 = vld [vmem:[%s431] sm:$0xff]
        %v433 = vld [vmem:[%s431 + $0x8] sm:$0xff]
        %434 = vst [vmem:[#allocation2 + $0x10f] sm:$0xff] %v432
        %435 = vst [vmem:[#allocation2 + $0x117] sm:$0xff] %v433
        %s436 = scalar_lea.vmem %s276, 240
        %v437 = vld [vmem:[%s436] sm:$0xff]
        %v438 = vld [vmem:[%s436 + $0x8] sm:$0xff]
        %439 = vst [vmem:[#allocation2 + $0x121] sm:$0xff] %v437
        %440 = vst [vmem:[#allocation2 + $0x129] sm:$0xff] %v438
        %v441 = vld [vmem:[#allocation2] sm:$0xff]
        %v442 = vld [vmem:[#allocation2 + $0x8] sm:$0xff]
        %v443 = vld [vmem:[#allocation2 + $0x10] sm:$0xff]
        %v444 = vld [vmem:[#allocation2 + $0x18] sm:$0xff]
        %v445 = vld [vmem:[#allocation2 + $0x20] sm:$0xff]
        %v446 = vld [vmem:[#allocation2 + $0x28] sm:$0xff]
        %v447 = vld [vmem:[#allocation2 + $0x30] sm:$0xff]
        %v448 = vld [vmem:[#allocation2 + $0x38] sm:$0xff]
        %v449 = vld [vmem:[#allocation2 + $0x40] sm:$0xff]
        %v450 = vld [vmem:[#allocation2 + $0x48] sm:$0xff]
        %v451 = vld [vmem:[#allocation2 + $0x50] sm:$0xff]
        %v452 = vld [vmem:[#allocation2 + $0x58] sm:$0xff]
        %v453 = vld [vmem:[#allocation2 + $0x60] sm:$0xff]
        %v454 = vld [vmem:[#allocation2 + $0x68] sm:$0xff]
        %v455 = vld [vmem:[#allocation2 + $0x70] sm:$0xff]
        %v456 = vld [vmem:[#allocation2 + $0x78] sm:$0xff]
        %v457 = vld [vmem:[#allocation2 + $0x80] sm:$0xff]
        %v458 = vld [vmem:[#allocation2 + $0x88] sm:$0xff]
        %v459 = vld [vmem:[#allocation2 + $0x90] sm:$0xff]
        %v460 = vld [vmem:[#allocation2 + $0x98] sm:$0xff]
        %v461 = vld [vmem:[#allocation2 + $0xa0] sm:$0xff]
        %v462 = vld [vmem:[#allocation2 + $0xa8] sm:$0xff]
        %v463 = vld [vmem:[#allocation2 + $0xb0] sm:$0xff]
        %v464 = vld [vmem:[#allocation2 + $0xb8] sm:$0xff]
        %v465 = vld [vmem:[#allocation2 + $0xc0] sm:$0xff]
        %v466 = vld [vmem:[#allocation2 + $0xc8] sm:$0xff]
        %v467 = vld [vmem:[#allocation2 + $0xd0] sm:$0xff]
        %v468 = vld [vmem:[#allocation2 + $0xd8] sm:$0xff]
        %v469 = vld [vmem:[#allocation2 + $0xe0] sm:$0xff]
        %v470 = vld [vmem:[#allocation2 + $0xe8] sm:$0xff]
        %v471 = vld [vmem:[#allocation2 + $0xf0] sm:$0xff]
        %v472 = vld [vmem:[#allocation2 + $0xf8] sm:$0xff]
        %v473 = vld [vmem:[#allocation2 + $0x100] sm:$0xff]
        %v474 = vld [vmem:[#allocation2 + $0x108] sm:$0xff]
        %v475 = vld [vmem:[#allocation2 + $0x110] sm:$0xff]
        %v476 = vld [vmem:[#allocation2 + $0x118] sm:$0xff]
        %v477 = vpack.c.bf16 %v442, %v441
        %v478 = vpack.c.bf16 %v444, %v443
        %v479 = vpack.c.bf16 %v446, %v445
        %v480 = vpack.c.bf16 %v448, %v447
        %v481 = vpack.c.bf16 %v450, %v449
        %v482 = vpack.c.bf16 %v452, %v451
        %v483 = vpack.c.bf16 %v454, %v453
        %v484 = vpack.c.bf16 %v456, %v455
        %v485 = vpack.c.bf16 %v458, %v457
        %v486 = vpack.c.bf16 %v460, %v459
        %v487 = vpack.c.bf16 %v462, %v461
        %v488 = vpack.c.bf16 %v464, %v463
        %v489 = vpack.c.bf16 %v466, %v465
        %v490 = vpack.c.bf16 %v468, %v467
        %v491 = vpack.c.bf16 %v470, %v469
        %v492 = vpack.c.bf16 %v472, %v471
        %v493 = vpack.c.bf16 %v474, %v473
        %v494 = vpack.c.bf16 %v476, %v475
        %v495 = vld [vmem:[#allocation2 + $0x1] sm:$0xff]
        %v496 = vld [vmem:[#allocation2 + $0x9] sm:$0xff]
        %v497 = vld [vmem:[#allocation2 + $0x11] sm:$0xff]
        %v498 = vld [vmem:[#allocation2 + $0x19] sm:$0xff]
        %v499 = vld [vmem:[#allocation2 + $0x21] sm:$0xff]
        %v500 = vld [vmem:[#allocation2 + $0x29] sm:$0xff]
        %v501 = vld [vmem:[#allocation2 + $0x31] sm:$0xff]
        %v502 = vld [vmem:[#allocation2 + $0x39] sm:$0xff]
        %v503 = vld [vmem:[#allocation2 + $0x41] sm:$0xff]
        %v504 = vld [vmem:[#allocation2 + $0x49] sm:$0xff]
        %v505 = vld [vmem:[#allocation2 + $0x51] sm:$0xff]
        %v506 = vld [vmem:[#allocation2 + $0x59] sm:$0xff]
        %v507 = vld [vmem:[#allocation2 + $0x61] sm:$0xff]
        %v508 = vld [vmem:[#allocation2 + $0x69] sm:$0xff]
        %v509 = vld [vmem:[#allocation2 + $0x71] sm:$0xff]
        %v510 = vld [vmem:[#allocation2 + $0x79] sm:$0xff]
        %v511 = vld [vmem:[#allocation2 + $0x81] sm:$0xff]
        %v512 = vld [vmem:[#allocation2 + $0x89] sm:$0xff]
        %v513 = vld [vmem:[#allocation2 + $0x91] sm:$0xff]
        %v514 = vld [vmem:[#allocation2 + $0x99] sm:$0xff]
        %v515 = vld [vmem:[#allocation2 + $0xa1] sm:$0xff]
        %v516 = vld [vmem:[#allocation2 + $0xa9] sm:$0xff]
        %v517 = vld [vmem:[#allocation2 + $0xb1] sm:$0xff]
        %v518 = vld [vmem:[#allocation2 + $0xb9] sm:$0xff]
        %v519 = vld [vmem:[#allocation2 + $0xc1] sm:$0xff]
        %v520 = vld [vmem:[#allocation2 + $0xc9] sm:$0xff]
        %v521 = vld [vmem:[#allocation2 + $0xd1] sm:$0xff]
        %v522 = vld [vmem:[#allocation2 + $0xd9] sm:$0xff]
        %v523 = vld [vmem:[#allocation2 + $0xe1] sm:$0xff]
        %v524 = vld [vmem:[#allocation2 + $0xe9] sm:$0xff]
        %v525 = vld [vmem:[#allocation2 + $0xf1] sm:$0xff]
        %v526 = vld [vmem:[#allocation2 + $0xf9] sm:$0xff]
        %v527 = vld [vmem:[#allocation2 + $0x101] sm:$0xff]
        %v528 = vld [vmem:[#allocation2 + $0x109] sm:$0xff]
        %v529 = vld [vmem:[#allocation2 + $0x111] sm:$0xff]
        %v530 = vld [vmem:[#allocation2 + $0x119] sm:$0xff]
        %v531 = vpack.c.bf16 %v496, %v495
        %v532 = vpack.c.bf16 %v498, %v497
        %v533 = vpack.c.bf16 %v500, %v499
        %v534 = vpack.c.bf16 %v502, %v501
        %v535 = vpack.c.bf16 %v504, %v503
        %v536 = vpack.c.bf16 %v506, %v505
        %v537 = vpack.c.bf16 %v508, %v507
        %v538 = vpack.c.bf16 %v510, %v509
        %v539 = vpack.c.bf16 %v512, %v511
        %v540 = vpack.c.bf16 %v514, %v513
        %v541 = vpack.c.bf16 %v516, %v515
        %v542 = vpack.c.bf16 %v518, %v517
        %v543 = vpack.c.bf16 %v520, %v519
        %v544 = vpack.c.bf16 %v522, %v521
        %v545 = vpack.c.bf16 %v524, %v523
        %v546 = vpack.c.bf16 %v526, %v525
        %v547 = vpack.c.bf16 %v528, %v527
        %v548 = vpack.c.bf16 %v530, %v529
        %v549 = vld [vmem:[#allocation2 + $0x2] sm:$0xff]
        %v550 = vld [vmem:[#allocation2 + $0xa] sm:$0xff]
        %v551 = vld [vmem:[#allocation2 + $0x12] sm:$0xff]
        %v552 = vld [vmem:[#allocation2 + $0x1a] sm:$0xff]
        %v553 = vld [vmem:[#allocation2 + $0x22] sm:$0xff]
        %v554 = vld [vmem:[#allocation2 + $0x2a] sm:$0xff]
        %v555 = vld [vmem:[#allocation2 + $0x32] sm:$0xff]
        %v556 = vld [vmem:[#allocation2 + $0x3a] sm:$0xff]
        %v557 = vld [vmem:[#allocation2 + $0x42] sm:$0xff]
        %v558 = vld [vmem:[#allocation2 + $0x4a] sm:$0xff]
        %v559 = vld [vmem:[#allocation2 + $0x52] sm:$0xff]
        %v560 = vld [vmem:[#allocation2 + $0x5a] sm:$0xff]
        %v561 = vld [vmem:[#allocation2 + $0x62] sm:$0xff]
        %v562 = vld [vmem:[#allocation2 + $0x6a] sm:$0xff]
        %v563 = vld [vmem:[#allocation2 + $0x72] sm:$0xff]
        %v564 = vld [vmem:[#allocation2 + $0x7a] sm:$0xff]
        %v565 = vld [vmem:[#allocation2 + $0x82] sm:$0xff]
        %v566 = vld [vmem:[#allocation2 + $0x8a] sm:$0xff]
        %v567 = vld [vmem:[#allocation2 + $0x92] sm:$0xff]
        %v568 = vld [vmem:[#allocation2 + $0x9a] sm:$0xff]
        %v569 = vld [vmem:[#allocation2 + $0xa2] sm:$0xff]
        %v570 = vld [vmem:[#allocation2 + $0xaa] sm:$0xff]
        %v571 = vld [vmem:[#allocation2 + $0xb2] sm:$0xff]
        %v572 = vld [vmem:[#allocation2 + $0xba] sm:$0xff]
        %v573 = vld [vmem:[#allocation2 + $0xc2] sm:$0xff]
        %v574 = vld [vmem:[#allocation2 + $0xca] sm:$0xff]
        %v575 = vld [vmem:[#allocation2 + $0xd2] sm:$0xff]
        %v576 = vld [vmem:[#allocation2 + $0xda] sm:$0xff]
        %v577 = vld [vmem:[#allocation2 + $0xe2] sm:$0xff]
        %v578 = vld [vmem:[#allocation2 + $0xea] sm:$0xff]
        %v579 = vld [vmem:[#allocation2 + $0xf2] sm:$0xff]
        %v580 = vld [vmem:[#allocation2 + $0xfa] sm:$0xff]
        %v581 = vld [vmem:[#allocation2 + $0x102] sm:$0xff]
        %v582 = vld [vmem:[#allocation2 + $0x10a] sm:$0xff]
        %v583 = vld [vmem:[#allocation2 + $0x112] sm:$0xff]
        %v584 = vld [vmem:[#allocation2 + $0x11a] sm:$0xff]
        %v585 = vpack.c.bf16 %v550, %v549
        %v586 = vpack.c.bf16 %v552, %v551
        %v587 = vpack.c.bf16 %v554, %v553
        %v588 = vpack.c.bf16 %v556, %v555
        %v589 = vpack.c.bf16 %v558, %v557
        %v590 = vpack.c.bf16 %v560, %v559
        %v591 = vpack.c.bf16 %v562, %v561
        %v592 = vpack.c.bf16 %v564, %v563
        %v593 = vpack.c.bf16 %v566, %v565
        %v594 = vpack.c.bf16 %v568, %v567
        %v595 = vpack.c.bf16 %v570, %v569
        %v596 = vpack.c.bf16 %v572, %v571
        %v597 = vpack.c.bf16 %v574, %v573
        %v598 = vpack.c.bf16 %v576, %v575
        %v599 = vpack.c.bf16 %v578, %v577
        %v600 = vpack.c.bf16 %v580, %v579
        %v601 = vpack.c.bf16 %v582, %v581
        %v602 = vpack.c.bf16 %v584, %v583
        %v603 = vld [vmem:[%s1] sm:$0xf]
        %v604 = vld [vmem:[%s1 + $0x4] sm:$0xf]
        %v605 = vld [vmem:[%s1 + $0x8] sm:$0xf]
        %v606 = vld [vmem:[%s1 + $0xc] sm:$0xf]
        %v607 = vld [vmem:[%s1 + $0x10] sm:$0xf]
        %v608 = vld [vmem:[%s1 + $0x14] sm:$0xf]
        %v609 = vld [vmem:[%s1 + $0x18] sm:$0xf]
        %v610 = vld [vmem:[%s1 + $0x1c] sm:$0xf]
        %v611 = vld [vmem:[%s1 + $0x20] sm:$0xf]
        %v612 = vld [vmem:[%s1 + $0x24] sm:$0xf]
        %v613 = vld [vmem:[%s1 + $0x28] sm:$0xf]
        %v614 = vld [vmem:[%s1 + $0x2c] sm:$0xf]
        %v615 = vld [vmem:[%s1 + $0x30] sm:$0xf]
        %v616 = vld [vmem:[%s1 + $0x34] sm:$0xf]
        %v617 = vld [vmem:[%s1 + $0x38] sm:$0xf]
        %v618 = vld [vmem:[%s1 + $0x3c] sm:$0xf]
        %v619 = vld [vmem:[%s1 + $0x40] sm:$0xf]
        %v620 = vld [vmem:[%s1 + $0x44] sm:$0xf]
        %v621 = vld [vmem:[%s1 + $0x48] sm:$0xf]
        %v622 = vld [vmem:[%s1 + $0x4c] sm:$0xf]
        %v623 = vld [vmem:[%s1 + $0x50] sm:$0xf]
        %v624 = vld [vmem:[%s1 + $0x54] sm:$0xf]
        %v625 = vld [vmem:[%s1 + $0x58] sm:$0xf]
        %v626 = vld [vmem:[%s1 + $0x5c] sm:$0xf]
        %v627 = vld [vmem:[%s1 + $0x60] sm:$0xf]
        %v628 = vld [vmem:[%s1 + $0x64] sm:$0xf]
        %v629 = vld [vmem:[%s1 + $0x68] sm:$0xf]
        %v630 = vld [vmem:[%s1 + $0x6c] sm:$0xf]
        %v631 = vld [vmem:[%s1 + $0x70] sm:$0xf]
        %v632 = vld [vmem:[%s1 + $0x74] sm:$0xf]
        %v633 = vld [vmem:[%s1 + $0x78] sm:$0xf]
        %v634 = vld [vmem:[%s1 + $0x7c] sm:$0xf]
        %v635 = vld [vmem:[%s1 + $0x80] sm:$0xf]
        %v636 = vld [vmem:[%s1 + $0x84] sm:$0xf]
        %v637 = vld [vmem:[%s1 + $0x88] sm:$0xf]
        %v638 = vld [vmem:[%s1 + $0x8c] sm:$0xf]
        %v639 = vld [vmem:[%s1 + $0x90] sm:$0xf]
        %v640 = vld [vmem:[%s1 + $0x94] sm:$0xf]
        %v641 = vld [vmem:[%s1 + $0x98] sm:$0xf]
        %v642 = vld [vmem:[%s1 + $0x9c] sm:$0xf]
        %v643 = vld [vmem:[%s1 + $0xa0] sm:$0xf]
        %v644 = vld [vmem:[%s1 + $0xa4] sm:$0xf]
        %v645 = vld [vmem:[%s1 + $0xa8] sm:$0xf]
        %v646 = vld [vmem:[%s1 + $0xac] sm:$0xf]
        %v647 = vld [vmem:[%s1 + $0xb0] sm:$0xf]
        %v648 = vld [vmem:[%s1 + $0xb4] sm:$0xf]
        %v649 = vld [vmem:[%s1 + $0xb8] sm:$0xf]
        %v650 = vld [vmem:[%s1 + $0xbc] sm:$0xf]
        %v699 = vunpack.c.l.b16 %v603
        %v700 = vunpack.c.l.b16 %v604
        %v701 = vunpack.c.l.b16 %v605
        %v702 = vunpack.c.l.b16 %v606
        %v703 = vunpack.c.l.b16 %v607
        %v704 = vunpack.c.l.b16 %v608
        %v705 = vunpack.c.l.b16 %v609
        %v706 = vunpack.c.l.b16 %v610
        %v707 = vunpack.c.l.b16 %v611
        %v708 = vunpack.c.l.b16 %v612
        %v709 = vunpack.c.l.b16 %v613
        %v710 = vunpack.c.l.b16 %v614
        %v711 = vunpack.c.l.b16 %v615
        %v712 = vunpack.c.l.b16 %v616
        %v713 = vunpack.c.l.b16 %v617
        %v714 = vunpack.c.l.b16 %v618
        %v715 = vunpack.c.l.b16 %v619
        %v716 = vunpack.c.l.b16 %v620
        %v717 = vunpack.c.l.b16 %v621
        %v718 = vunpack.c.l.b16 %v622
        %v719 = vunpack.c.l.b16 %v623
        %v720 = vunpack.c.l.b16 %v624
        %v721 = vunpack.c.l.b16 %v625
        %v722 = vunpack.c.l.b16 %v626
        %v723 = vunpack.c.l.b16 %v627
        %v724 = vunpack.c.l.b16 %v628
        %v725 = vunpack.c.l.b16 %v629
        %v726 = vunpack.c.l.b16 %v630
        %v727 = vunpack.c.l.b16 %v631
        %v728 = vunpack.c.l.b16 %v632
        %v729 = vunpack.c.l.b16 %v633
        %v730 = vunpack.c.l.b16 %v634
        %v731 = vunpack.c.l.b16 %v635
        %v732 = vunpack.c.l.b16 %v636
        %v733 = vunpack.c.l.b16 %v637
        %v734 = vunpack.c.l.b16 %v638
        %v735 = vunpack.c.l.b16 %v639
        %v736 = vunpack.c.l.b16 %v640
        %v737 = vunpack.c.l.b16 %v641
        %v738 = vunpack.c.l.b16 %v642
        %v739 = vunpack.c.l.b16 %v643
        %v740 = vunpack.c.l.b16 %v644
        %v741 = vunpack.c.l.b16 %v645
        %v742 = vunpack.c.l.b16 %v646
        %v743 = vunpack.c.l.b16 %v647
        %v744 = vunpack.c.l.b16 %v648
        %v745 = vunpack.c.l.b16 %v649
        %v746 = vunpack.c.l.b16 %v650
        %v747 = vpack.c.b16 %v700, %v699
        %v748 = vpack.c.b16 %v702, %v701
        %v749 = vpack.c.b16 %v704, %v703
        %v750 = vpack.c.b16 %v706, %v705
        %v751 = vpack.c.b16 %v708, %v707
        %v752 = vpack.c.b16 %v710, %v709
        %v753 = vpack.c.b16 %v712, %v711
        %v754 = vpack.c.b16 %v714, %v713
        %v755 = vpack.c.b16 %v716, %v715
        %v756 = vpack.c.b16 %v718, %v717
        %v757 = vpack.c.b16 %v720, %v719
        %v758 = vpack.c.b16 %v722, %v721
        %v759 = vpack.c.b16 %v724, %v723
        %v760 = vpack.c.b16 %v726, %v725
        %v761 = vpack.c.b16 %v728, %v727
        %v762 = vpack.c.b16 %v730, %v729
        %v763 = vpack.c.b16 %v732, %v731
        %v764 = vpack.c.b16 %v734, %v733
        %v765 = vpack.c.b16 %v736, %v735
        %v766 = vpack.c.b16 %v738, %v737
        %v767 = vpack.c.b16 %v740, %v739
        %v768 = vpack.c.b16 %v742, %v741
        %v769 = vpack.c.b16 %v744, %v743
        %v770 = vpack.c.b16 %v746, %v745
        %795 = vmatprep.subr.bf16.mxu0 0
        %796 = vmatpush1.bf16.msra.mxu0 %v747
        %797 = vmatprep.subr.bf16.mxu0 0
        %798 = vmatpush1.bf16.msra.mxu0 %v748
        %799 = vmatprep.subr.bf16.mxu0 0
        %800 = vmatpush1.bf16.msra.mxu0 %v749
        %801 = vmatprep.subr.bf16.mxu0 0
        %802 = vmatpush1.bf16.msra.mxu0 %v750
        %803 = vmatprep.subr.bf16.mxu0 0
        %804 = vmatpush1.bf16.msra.mxu0 %v751
        %805 = vmatprep.subr.bf16.mxu0 0
        %806 = vmatpush1.bf16.msra.mxu0 %v752
        %807 = vmatprep.subr.bf16.mxu0 0
        %808 = vmatpush1.bf16.msra.mxu0 %v753
        %809 = vmatprep.subr.bf16.mxu0 0
        %810 = vmatpush1.bf16.msra.mxu0 %v754
        %811 = vmatprep.subr.bf16.mxu0 0
        %812 = vmatpush1.bf16.msra.mxu0 %v755
        %813 = vmatprep.subr.bf16.mxu0 0
        %814 = vmatpush1.bf16.msra.mxu0 %v756
        %815 = vmatprep.subr.bf16.mxu0 0
        %816 = vmatpush1.bf16.msra.mxu0 %v757
        %817 = vmatprep.subr.bf16.mxu0 0
        %818 = vmatpush1.bf16.msra.mxu0 %v758
        %819 = vmatprep.subr.bf16.mxu0 0
        %820 = vmatpush1.bf16.msra.mxu0 %v759
        %821 = vmatprep.subr.bf16.mxu0 0
        %822 = vmatpush1.bf16.msra.mxu0 %v760
        %823 = vmatprep.subr.bf16.mxu0 0
        %824 = vmatpush1.bf16.msra.mxu0 %v761
        %825 = vmatprep.subr.bf16.mxu0 0
        %826 = vmatpush1.bf16.msra.mxu0 %v762
        %827 = vmatprep.mubr.bf16.mxu0 %v531
        %828 = vmatmul.mubr.bf16.gmra.mrb[0].mxu0 %v477
        %v829 = vpop.f32.mrb[0].mxu0
        %v830 = vadd.f32 0.0, %v829
        %v831 = vpop.f32.mrb[0].mxu0
        %v832 = vpop.f32.mrb[0].mxu0
        %v833 = vadd.f32 0.0, %v832
        %v834 = vpop.f32.mrb[0].mxu0
        %835 = vmatprep.mubr.bf16.mxu0 %v532
        %836 = vmatmul.mubr.bf16.gmra.mrb[0].mxu0 %v478
        %v837 = vpop.f32.mrb[0].mxu0
        %v838 = vadd.f32 0.0, %v837
        %v839 = vpop.f32.mrb[0].mxu0
        %v840 = vpop.f32.mrb[0].mxu0
        %v841 = vadd.f32 0.0, %v840
        %v842 = vpop.f32.mrb[0].mxu0
        %843 = vmatprep.mubr.bf16.mxu0 %v533
        %844 = vmatmul.mubr.bf16.gmra.mrb[0].mxu0 %v479
        %v845 = vpop.f32.mrb[0].mxu0
        %v846 = vadd.f32 0.0, %v845
        %v847 = vpop.f32.mrb[0].mxu0
        %v848 = vpop.f32.mrb[0].mxu0
        %v849 = vadd.f32 0.0, %v848
        %v850 = vpop.f32.mrb[0].mxu0
        %851 = vmatprep.mubr.bf16.mxu0 %v534
        %852 = vmatmul.mubr.bf16.gmra.mrb[0].mxu0 %v480
        %v853 = vpop.f32.mrb[0].mxu0
        %v854 = vadd.f32 0.0, %v853
        %v855 = vpop.f32.mrb[0].mxu0
        %v856 = vpop.f32.mrb[0].mxu0
        %v857 = vadd.f32 0.0, %v856
        %v858 = vpop.f32.mrb[0].mxu0
        %859 = vmatprep.mubr.bf16.mxu0 %v535
        %860 = vmatmul.mubr.bf16.gmra.mrb[0].mxu0 %v481
        %v861 = vpop.f32.mrb[0].mxu0
        %v862 = vadd.f32 0.0, %v861
        %v863 = vpop.f32.mrb[0].mxu0
        %v864 = vpop.f32.mrb[0].mxu0
        %v865 = vadd.f32 0.0, %v864
        %v866 = vpop.f32.mrb[0].mxu0
        %867 = vmatprep.mubr.bf16.mxu0 %v536
        %868 = vmatmul.mubr.bf16.gmra.mrb[0].mxu0 %v482
        %v869 = vpop.f32.mrb[0].mxu0
        %v870 = vadd.f32 0.0, %v869
        %v871 = vpop.f32.mrb[0].mxu0
        %v872 = vpop.f32.mrb[0].mxu0
        %v873 = vadd.f32 0.0, %v872
        %v874 = vpop.f32.mrb[0].mxu0
        %875 = vmatprep.mubr.bf16.mxu0 %v537
        %876 = vmatmul.mubr.bf16.gmra.mrb[0].mxu0 %v483
        %v877 = vpop.f32.mrb[0].mxu0
        %v878 = vadd.f32 0.0, %v877
        %v879 = vpop.f32.mrb[0].mxu0
        %v880 = vpop.f32.mrb[0].mxu0
        %v881 = vadd.f32 0.0, %v880
        %v882 = vpop.f32.mrb[0].mxu0
        %883 = vmatprep.mubr.bf16.mxu0 %v538
        %884 = vmatmul.mubr.bf16.gmra.mrb[0].mxu0 %v484
        %v885 = vpop.f32.mrb[0].mxu0
        %v886 = vadd.f32 0.0, %v885
        %v887 = vpop.f32.mrb[0].mxu0
        %v888 = vpop.f32.mrb[0].mxu0
        %v889 = vadd.f32 0.0, %v888
        %v890 = vpop.f32.mrb[0].mxu0
        %891 = vmatprep.mubr.bf16.mxu0 %v539
        %892 = vmatmul.mubr.bf16.gmra.mrb[0].mxu0 %v485
        %v893 = vpop.f32.mrb[0].mxu0
        %v894 = vadd.f32 0.0, %v893
        %v895 = vpop.f32.mrb[0].mxu0
        %v896 = vpop.f32.mrb[0].mxu0
        %v897 = vadd.f32 0.0, %v896
        %v898 = vpop.f32.mrb[0].mxu0
        %899 = vmatprep.mubr.bf16.mxu0 %v540
        %900 = vmatmul.mubr.bf16.gmra.mrb[0].mxu0 %v486
        %v901 = vpop.f32.mrb[0].mxu0
        %v902 = vadd.f32 0.0, %v901
        %v903 = vpop.f32.mrb[0].mxu0
        %v904 = vpop.f32.mrb[0].mxu0
        %v905 = vadd.f32 0.0, %v904
        %v906 = vpop.f32.mrb[0].mxu0
        %907 = vmatprep.mubr.bf16.mxu0 %v541
        %908 = vmatmul.mubr.bf16.gmra.mrb[0].mxu0 %v487
        %v909 = vpop.f32.mrb[0].mxu0
        %v910 = vadd.f32 0.0, %v909
        %v911 = vpop.f32.mrb[0].mxu0
        %v912 = vpop.f32.mrb[0].mxu0
        %v913 = vadd.f32 0.0, %v912
        %v914 = vpop.f32.mrb[0].mxu0
        %915 = vmatprep.mubr.bf16.mxu0 %v542
        %916 = vmatmul.mubr.bf16.gmra.mrb[0].mxu0 %v488
        %v917 = vpop.f32.mrb[0].mxu0
        %v918 = vadd.f32 0.0, %v917
        %v919 = vpop.f32.mrb[0].mxu0
        %v920 = vpop.f32.mrb[0].mxu0
        %v921 = vadd.f32 0.0, %v920
        %v922 = vpop.f32.mrb[0].mxu0
        %923 = vmatprep.mubr.bf16.mxu0 %v543
        %924 = vmatmul.mubr.bf16.gmra.mrb[0].mxu0 %v489
        %v925 = vpop.f32.mrb[0].mxu0
        %v926 = vadd.f32 0.0, %v925
        %v927 = vpop.f32.mrb[0].mxu0
        %v928 = vpop.f32.mrb[0].mxu0
        %v929 = vadd.f32 0.0, %v928
        %v930 = vpop.f32.mrb[0].mxu0
        %931 = vmatprep.mubr.bf16.mxu0 %v544
        %932 = vmatmul.mubr.bf16.gmra.mrb[0].mxu0 %v490
        %v933 = vpop.f32.mrb[0].mxu0
        %v934 = vadd.f32 0.0, %v933
        %v935 = vpop.f32.mrb[0].mxu0
        %v936 = vpop.f32.mrb[0].mxu0
        %v937 = vadd.f32 0.0, %v936
        %v938 = vpop.f32.mrb[0].mxu0
        %939 = vmatprep.mubr.bf16.mxu0 %v545
        %940 = vmatmul.mubr.bf16.gmra.mrb[0].mxu0 %v491
        %v941 = vpop.f32.mrb[0].mxu0
        %v942 = vadd.f32 0.0, %v941
        %v943 = vpop.f32.mrb[0].mxu0
        %v944 = vpop.f32.mrb[0].mxu0
        %v945 = vadd.f32 0.0, %v944
        %v946 = vpop.f32.mrb[0].mxu0
        %947 = vmatprep.mubr.bf16.mxu0 %v546
        %948 = vmatmul.mubr.bf16.gmra.mrb[0].mxu0 %v492
        %v949 = vpop.f32.mrb[0].mxu0
        %v950 = vadd.f32 0.0, %v949
        %v951 = vpop.f32.mrb[0].mxu0
        %v952 = vpop.f32.mrb[0].mxu0
        %v953 = vadd.f32 0.0, %v952
        %v954 = vpop.f32.mrb[0].mxu0
        %955 = vmatprep.mubr.bf16.mxu0 %v547
        %956 = vmatmul.mubr.bf16.gmra.mrb[0].mxu0 %v493
        %v957 = vpop.f32.mrb[0].mxu0
        %v958 = vadd.f32 0.0, %v957
        %v959 = vpop.f32.mrb[0].mxu0
        %v960 = vpop.f32.mrb[0].mxu0
        %v961 = vadd.f32 0.0, %v960
        %v962 = vpop.f32.mrb[0].mxu0
        %963 = vmatprep.mubr.bf16.mxu0 %v548
        %964 = vmatmul.mubr.bf16.gmra.mrb[0].mxu0 %v494
        %v965 = vpop.f32.mrb[0].mxu0
        %v966 = vadd.f32 0.0, %v965
        %v967 = vpop.f32.mrb[0].mxu0
        %v968 = vpop.f32.mrb[0].mxu0
        %v969 = vadd.f32 0.0, %v968
        %v970 = vpop.f32.mrb[0].mxu0
        %971 = vdwg.mxu0
        %972 = vmatprep.subr.bf16.mxu0 0
        %973 = vmatpush1.bf16.msra.mxu0 %v763
        %974 = vmatprep.subr.bf16.mxu0 0
        %975 = vmatpush1.bf16.msra.mxu0 %v764
        %976 = vmatprep.subr.bf16.mxu0 0
        %977 = vmatpush1.bf16.msra.mxu0 %v765
        %978 = vmatprep.subr.bf16.mxu0 0
        %979 = vmatpush1.bf16.msra.mxu0 %v766
        %980 = vmatprep.subr.bf16.mxu0 0
        %981 = vmatpush1.bf16.msra.mxu0 %v767
        %982 = vmatprep.subr.bf16.mxu0 0
        %983 = vmatpush1.bf16.msra.mxu0 %v768
        %984 = vmatprep.subr.bf16.mxu0 0
        %985 = vmatpush1.bf16.msra.mxu0 %v769
        %986 = vmatprep.subr.bf16.mxu0 0
        %987 = vmatpush1.bf16.msra.mxu0 %v770
        %988 = vmatprep.subr.bf16.mxu0 0
        %989 = vmatpush1.bf16.msra.mxu0 0
        %990 = vmatprep.subr.bf16.mxu0 0
        %991 = vmatpush1.bf16.msra.mxu0 0
        %992 = vmatprep.subr.bf16.mxu0 0
        %993 = vmatpush1.bf16.msra.mxu0 0
        %994 = vmatprep.subr.bf16.mxu0 0
        %995 = vmatpush1.bf16.msra.mxu0 0
        %996 = vmatprep.subr.bf16.mxu0 0
        %997 = vmatpush1.bf16.msra.mxu0 0
        %998 = vmatprep.subr.bf16.mxu0 0
        %999 = vmatpush1.bf16.msra.mxu0 0
        %1000 = vmatprep.subr.bf16.mxu0 0
        %1001 = vmatpush1.bf16.msra.mxu0 0
        %1002 = vmatprep.subr.bf16.mxu0 0
        %1003 = vmatpush1.bf16.msra.mxu0 0
        %1004 = vmatprep.mubr.bf16.mxu0 0
        %1005 = vmatmul.mubr.bf16.gmra.mrb[0].mxu0 %v585
        %v1006 = vpop.f32.mrb[0].mxu0
        %v1007 = vadd.f32 %v830, %v1006
        %v1008 = vpop.f32.mrb[0].mxu0
        %v1009 = vpop.f32.mrb[0].mxu0
        %v1010 = vadd.f32 %v833, %v1009
        %v1011 = vpop.f32.mrb[0].mxu0
        %1012 = vmatprep.mubr.bf16.mxu0 0
        %1013 = vmatmul.mubr.bf16.gmra.mrb[0].mxu0 %v586
        %v1014 = vpop.f32.mrb[0].mxu0
        %v1015 = vadd.f32 %v838, %v1014
        %v1016 = vpop.f32.mrb[0].mxu0
        %v1017 = vpop.f32.mrb[0].mxu0
        %v1018 = vadd.f32 %v841, %v1017
        %v1019 = vpop.f32.mrb[0].mxu0
        %1020 = vmatprep.mubr.bf16.mxu0 0
        %1021 = vmatmul.mubr.bf16.gmra.mrb[0].mxu0 %v587
        %v1022 = vpop.f32.mrb[0].mxu0
        %v1023 = vadd.f32 %v846, %v1022
        %v1024 = vpop.f32.mrb[0].mxu0
        %v1025 = vpop.f32.mrb[0].mxu0
        %v1026 = vadd.f32 %v849, %v1025
        %v1027 = vpop.f32.mrb[0].mxu0
        %1028 = vmatprep.mubr.bf16.mxu0 0
        %1029 = vmatmul.mubr.bf16.gmra.mrb[0].mxu0 %v588
        %v1030 = vpop.f32.mrb[0].mxu0
        %v1031 = vadd.f32 %v854, %v1030
        %v1032 = vpop.f32.mrb[0].mxu0
        %v1033 = vpop.f32.mrb[0].mxu0
        %v1034 = vadd.f32 %v857, %v1033
        %v1035 = vpop.f32.mrb[0].mxu0
        %1036 = vmatprep.mubr.bf16.mxu0 0
        %1037 = vmatmul.mubr.bf16.gmra.mrb[0].mxu0 %v589
        %v1038 = vpop.f32.mrb[0].mxu0
        %v1039 = vadd.f32 %v862, %v1038
        %v1040 = vpop.f32.mrb[0].mxu0
        %v1041 = vpop.f32.mrb[0].mxu0
        %v1042 = vadd.f32 %v865, %v1041
        %v1043 = vpop.f32.mrb[0].mxu0
        %1044 = vmatprep.mubr.bf16.mxu0 0
        %1045 = vmatmul.mubr.bf16.gmra.mrb[0].mxu0 %v590
        %v1046 = vpop.f32.mrb[0].mxu0
        %v1047 = vadd.f32 %v870, %v1046
        %v1048 = vpop.f32.mrb[0].mxu0
        %v1049 = vpop.f32.mrb[0].mxu0
        %v1050 = vadd.f32 %v873, %v1049
        %v1051 = vpop.f32.mrb[0].mxu0
        %1052 = vmatprep.mubr.bf16.mxu0 0
        %1053 = vmatmul.mubr.bf16.gmra.mrb[0].mxu0 %v591
        %v1054 = vpop.f32.mrb[0].mxu0
        %v1055 = vadd.f32 %v878, %v1054
        %v1056 = vpop.f32.mrb[0].mxu0
        %v1057 = vpop.f32.mrb[0].mxu0
        %v1058 = vadd.f32 %v881, %v1057
        %v1059 = vpop.f32.mrb[0].mxu0
        %1060 = vmatprep.mubr.bf16.mxu0 0
        %1061 = vmatmul.mubr.bf16.gmra.mrb[0].mxu0 %v592
        %v1062 = vpop.f32.mrb[0].mxu0
        %v1063 = vadd.f32 %v886, %v1062
        %v1064 = vpop.f32.mrb[0].mxu0
        %v1065 = vpop.f32.mrb[0].mxu0
        %v1066 = vadd.f32 %v889, %v1065
        %v1067 = vpop.f32.mrb[0].mxu0
        %1068 = vmatprep.mubr.bf16.mxu0 0
        %1069 = vmatmul.mubr.bf16.gmra.mrb[0].mxu0 %v593
        %v1070 = vpop.f32.mrb[0].mxu0
        %v1071 = vadd.f32 %v894, %v1070
        %v1072 = vpop.f32.mrb[0].mxu0
        %v1073 = vpop.f32.mrb[0].mxu0
        %v1074 = vadd.f32 %v897, %v1073
        %v1075 = vpop.f32.mrb[0].mxu0
        %1076 = vmatprep.mubr.bf16.mxu0 0
        %1077 = vmatmul.mubr.bf16.gmra.mrb[0].mxu0 %v594
        %v1078 = vpop.f32.mrb[0].mxu0
        %v1079 = vadd.f32 %v902, %v1078
        %v1080 = vpop.f32.mrb[0].mxu0
        %v1081 = vpop.f32.mrb[0].mxu0
        %v1082 = vadd.f32 %v905, %v1081
        %v1083 = vpop.f32.mrb[0].mxu0
        %1084 = vmatprep.mubr.bf16.mxu0 0
        %1085 = vmatmul.mubr.bf16.gmra.mrb[0].mxu0 %v595
        %v1086 = vpop.f32.mrb[0].mxu0
        %v1087 = vadd.f32 %v910, %v1086
        %v1088 = vpop.f32.mrb[0].mxu0
        %v1089 = vpop.f32.mrb[0].mxu0
        %v1090 = vadd.f32 %v913, %v1089
        %v1091 = vpop.f32.mrb[0].mxu0
        %1092 = vmatprep.mubr.bf16.mxu0 0
        %1093 = vmatmul.mubr.bf16.gmra.mrb[0].mxu0 %v596
        %v1094 = vpop.f32.mrb[0].mxu0
        %v1095 = vadd.f32 %v918, %v1094
        %v1096 = vpop.f32.mrb[0].mxu0
        %v1097 = vpop.f32.mrb[0].mxu0
        %v1098 = vadd.f32 %v921, %v1097
        %v1099 = vpop.f32.mrb[0].mxu0
        %1100 = vmatprep.mubr.bf16.mxu0 0
        %1101 = vmatmul.mubr.bf16.gmra.mrb[0].mxu0 %v597
        %v1102 = vpop.f32.mrb[0].mxu0
        %v1103 = vadd.f32 %v926, %v1102
        %v1104 = vpop.f32.mrb[0].mxu0
        %v1105 = vpop.f32.mrb[0].mxu0
        %v1106 = vadd.f32 %v929, %v1105
        %v1107 = vpop.f32.mrb[0].mxu0
        %1108 = vmatprep.mubr.bf16.mxu0 0
        %1109 = vmatmul.mubr.bf16.gmra.mrb[0].mxu0 %v598
        %v1110 = vpop.f32.mrb[0].mxu0
        %v1111 = vadd.f32 %v934, %v1110
        %v1112 = vpop.f32.mrb[0].mxu0
        %v1113 = vpop.f32.mrb[0].mxu0
        %v1114 = vadd.f32 %v937, %v1113
        %v1115 = vpop.f32.mrb[0].mxu0
        %1116 = vmatprep.mubr.bf16.mxu0 0
        %1117 = vmatmul.mubr.bf16.gmra.mrb[0].mxu0 %v599
        %v1118 = vpop.f32.mrb[0].mxu0
        %v1119 = vadd.f32 %v942, %v1118
        %v1120 = vpop.f32.mrb[0].mxu0
        %v1121 = vpop.f32.mrb[0].mxu0
        %v1122 = vadd.f32 %v945, %v1121
        %v1123 = vpop.f32.mrb[0].mxu0
        %1124 = vmatprep.mubr.bf16.mxu0 0
        %1125 = vmatmul.mubr.bf16.gmra.mrb[0].mxu0 %v600
        %v1126 = vpop.f32.mrb[0].mxu0
        %v1127 = vadd.f32 %v950, %v1126
        %v1128 = vpop.f32.mrb[0].mxu0
        %v1129 = vpop.f32.mrb[0].mxu0
        %v1130 = vadd.f32 %v953, %v1129
        %v1131 = vpop.f32.mrb[0].mxu0
        %1132 = vmatprep.mubr.bf16.mxu0 0
        %1133 = vmatmul.mubr.bf16.gmra.mrb[0].mxu0 %v601
        %v1134 = vpop.f32.mrb[0].mxu0
        %v1135 = vadd.f32 %v958, %v1134
        %v1136 = vpop.f32.mrb[0].mxu0
        %v1137 = vpop.f32.mrb[0].mxu0
        %v1138 = vadd.f32 %v961, %v1137
        %v1139 = vpop.f32.mrb[0].mxu0
        %1140 = vmatprep.mubr.bf16.mxu0 0
        %1141 = vmatmul.mubr.bf16.gmra.mrb[0].mxu0 %v602
        %v1142 = vpop.f32.mrb[0].mxu0
        %v1143 = vadd.f32 %v966, %v1142
        %v1144 = vpop.f32.mrb[0].mxu0
        %v1145 = vpop.f32.mrb[0].mxu0
        %v1146 = vadd.f32 %v969, %v1145
        %v1147 = vpop.f32.mrb[0].mxu0
        %1148 = vdwg.mxu0
        %1149 = vst [vmem:[#allocation4] sm:$0xff] %v1007
        %1150 = vst [vmem:[#allocation4 + $0x8] sm:$0xff] %v1010
        %1151 = vst [vmem:[#allocation4 + $0x10] sm:$0xff] %v1015
        %1152 = vst [vmem:[#allocation4 + $0x18] sm:$0xff] %v1018
        %1153 = vst [vmem:[#allocation4 + $0x20] sm:$0xff] %v1023
        %1154 = vst [vmem:[#allocation4 + $0x28] sm:$0xff] %v1026
        %1155 = vst [vmem:[#allocation4 + $0x30] sm:$0xff] %v1031
        %1156 = vst [vmem:[#allocation4 + $0x38] sm:$0xff] %v1034
        %1157 = vst [vmem:[#allocation4 + $0x40] sm:$0xff] %v1039
        %1158 = vst [vmem:[#allocation4 + $0x48] sm:$0xff] %v1042
        %1159 = vst [vmem:[#allocation4 + $0x50] sm:$0xff] %v1047
        %1160 = vst [vmem:[#allocation4 + $0x58] sm:$0xff] %v1050
        %1161 = vst [vmem:[#allocation4 + $0x60] sm:$0xff] %v1055
        %1162 = vst [vmem:[#allocation4 + $0x68] sm:$0xff] %v1058
        %1163 = vst [vmem:[#allocation4 + $0x70] sm:$0xff] %v1063
        %1164 = vst [vmem:[#allocation4 + $0x78] sm:$0xff] %v1066
        %1165 = vst [vmem:[#allocation4 + $0x80] sm:$0xff] %v1071
        %1166 = vst [vmem:[#allocation4 + $0x88] sm:$0xff] %v1074
        %1167 = vst [vmem:[#allocation4 + $0x90] sm:$0xff] %v1079
        %1168 = vst [vmem:[#allocation4 + $0x98] sm:$0xff] %v1082
        %1169 = vst [vmem:[#allocation4 + $0xa0] sm:$0xff] %v1087
        %1170 = vst [vmem:[#allocation4 + $0xa8] sm:$0xff] %v1090
        %1171 = vst [vmem:[#allocation4 + $0xb0] sm:$0xff] %v1095
        %1172 = vst [vmem:[#allocation4 + $0xb8] sm:$0xff] %v1098
        %1173 = vst [vmem:[#allocation4 + $0xc0] sm:$0xff] %v1103
        %1174 = vst [vmem:[#allocation4 + $0xc8] sm:$0xff] %v1106
        %1175 = vst [vmem:[#allocation4 + $0xd0] sm:$0xff] %v1111
        %1176 = vst [vmem:[#allocation4 + $0xd8] sm:$0xff] %v1114
        %1177 = vst [vmem:[#allocation4 + $0xe0] sm:$0xff] %v1119
        %1178 = vst [vmem:[#allocation4 + $0xe8] sm:$0xff] %v1122
        %1179 = vst [vmem:[#allocation4 + $0xf0] sm:$0xff] %v1127
        %1180 = vst [vmem:[#allocation4 + $0xf8] sm:$0xff] %v1130
        %1181 = vst [vmem:[#allocation4 + $0x100] sm:$0xff] %v1135
        %1182 = vst [vmem:[#allocation4 + $0x108] sm:$0xff] %v1138
        %1183 = vst [vmem:[#allocation4 + $0x110] sm:$0xff] %v1143
        %1184 = vst [vmem:[#allocation4 + $0x118] sm:$0xff] %v1146
        %v1185 = vld [vmem:[#allocation2 + $0x12] sm:$0xff]
        %v1186 = vld [vmem:[#allocation2 + $0x1a] sm:$0xff]
        %v1187 = vld [vmem:[#allocation2 + $0x22] sm:$0xff]
        %v1188 = vld [vmem:[#allocation2 + $0x2a] sm:$0xff]
        %v1189 = vld [vmem:[#allocation2 + $0x32] sm:$0xff]
        %v1190 = vld [vmem:[#allocation2 + $0x3a] sm:$0xff]
        %v1191 = vld [vmem:[#allocation2 + $0x42] sm:$0xff]
        %v1192 = vld [vmem:[#allocation2 + $0x4a] sm:$0xff]
        %v1193 = vld [vmem:[#allocation2 + $0x52] sm:$0xff]
        %v1194 = vld [vmem:[#allocation2 + $0x5a] sm:$0xff]
        %v1195 = vld [vmem:[#allocation2 + $0x62] sm:$0xff]
        %v1196 = vld [vmem:[#allocation2 + $0x6a] sm:$0xff]
        %v1197 = vld [vmem:[#allocation2 + $0x72] sm:$0xff]
        %v1198 = vld [vmem:[#allocation2 + $0x7a] sm:$0xff]
        %v1199 = vld [vmem:[#allocation2 + $0x82] sm:$0xff]
        %v1200 = vld [vmem:[#allocation2 + $0x8a] sm:$0xff]
        %v1201 = vld [vmem:[#allocation2 + $0x92] sm:$0xff]
        %v1202 = vld [vmem:[#allocation2 + $0x9a] sm:$0xff]
        %v1203 = vld [vmem:[#allocation2 + $0xa2] sm:$0xff]
        %v1204 = vld [vmem:[#allocation2 + $0xaa] sm:$0xff]
        %v1205 = vld [vmem:[#allocation2 + $0xb2] sm:$0xff]
        %v1206 = vld [vmem:[#allocation2 + $0xba] sm:$0xff]
        %v1207 = vld [vmem:[#allocation2 + $0xc2] sm:$0xff]
        %v1208 = vld [vmem:[#allocation2 + $0xca] sm:$0xff]
        %v1209 = vld [vmem:[#allocation2 + $0xd2] sm:$0xff]
        %v1210 = vld [vmem:[#allocation2 + $0xda] sm:$0xff]
        %v1211 = vld [vmem:[#allocation2 + $0xe2] sm:$0xff]
        %v1212 = vld [vmem:[#allocation2 + $0xea] sm:$0xff]
        %v1213 = vld [vmem:[#allocation2 + $0xf2] sm:$0xff]
        %v1214 = vld [vmem:[#allocation2 + $0xfa] sm:$0xff]
        %v1215 = vld [vmem:[#allocation2 + $0x102] sm:$0xff]
        %v1216 = vld [vmem:[#allocation2 + $0x10a] sm:$0xff]
        %v1217 = vld [vmem:[#allocation2 + $0x112] sm:$0xff]
        %v1218 = vld [vmem:[#allocation2 + $0x11a] sm:$0xff]
        %v1219 = vld [vmem:[#allocation2 + $0x122] sm:$0xff]
        %v1220 = vld [vmem:[#allocation2 + $0x12a] sm:$0xff]
        %v1221 = vpack.c.bf16 %v1186, %v1185
        %v1222 = vpack.c.bf16 %v1188, %v1187
        %v1223 = vpack.c.bf16 %v1190, %v1189
        %v1224 = vpack.c.bf16 %v1192, %v1191
        %v1225 = vpack.c.bf16 %v1194, %v1193
        %v1226 = vpack.c.bf16 %v1196, %v1195
        %v1227 = vpack.c.bf16 %v1198, %v1197
        %v1228 = vpack.c.bf16 %v1200, %v1199
        %v1229 = vpack.c.bf16 %v1202, %v1201
        %v1230 = vpack.c.bf16 %v1204, %v1203
        %v1231 = vpack.c.bf16 %v1206, %v1205
        %v1232 = vpack.c.bf16 %v1208, %v1207
        %v1233 = vpack.c.bf16 %v1210, %v1209
        %v1234 = vpack.c.bf16 %v1212, %v1211
        %v1235 = vpack.c.bf16 %v1214, %v1213
        %v1236 = vpack.c.bf16 %v1216, %v1215
        %v1237 = vpack.c.bf16 %v1218, %v1217
        %v1238 = vpack.c.bf16 %v1220, %v1219
        %v1239 = vld [vmem:[#allocation2 + $0x13] sm:$0xff]
        %v1240 = vld [vmem:[#allocation2 + $0x1b] sm:$0xff]
        %v1241 = vld [vmem:[#allocation2 + $0x23] sm:$0xff]
        %v1242 = vld [vmem:[#allocation2 + $0x2b] sm:$0xff]
        %v1243 = vld [vmem:[#allocation2 + $0x33] sm:$0xff]
        %v1244 = vld [vmem:[#allocation2 + $0x3b] sm:$0xff]
        %v1245 = vld [vmem:[#allocation2 + $0x43] sm:$0xff]
        %v1246 = vld [vmem:[#allocation2 + $0x4b] sm:$0xff]
        %v1247 = vld [vmem:[#allocation2 + $0x53] sm:$0xff]
        %v1248 = vld [vmem:[#allocation2 + $0x5b] sm:$0xff]
        %v1249 = vld [vmem:[#allocation2 + $0x63] sm:$0xff]
        %v1250 = vld [vmem:[#allocation2 + $0x6b] sm:$0xff]
        %v1251 = vld [vmem:[#allocation2 + $0x73] sm:$0xff]
        %v1252 = vld [vmem:[#allocation2 + $0x7b] sm:$0xff]
        %v1253 = vld [vmem:[#allocation2 + $0x83] sm:$0xff]
        %v1254 = vld [vmem:[#allocation2 + $0x8b] sm:$0xff]
        %v1255 = vld [vmem:[#allocation2 + $0x93] sm:$0xff]
        %v1256 = vld [vmem:[#allocation2 + $0x9b] sm:$0xff]
        %v1257 = vld [vmem:[#allocation2 + $0xa3] sm:$0xff]
        %v1258 = vld [vmem:[#allocation2 + $0xab] sm:$0xff]
        %v1259 = vld [vmem:[#allocation2 + $0xb3] sm:$0xff]
        %v1260 = vld [vmem:[#allocation2 + $0xbb] sm:$0xff]
        %v1261 = vld [vmem:[#allocation2 + $0xc3] sm:$0xff]
        %v1262 = vld [vmem:[#allocation2 + $0xcb] sm:$0xff]
        %v1263 = vld [vmem:[#allocation2 + $0xd3] sm:$0xff]
        %v1264 = vld [vmem:[#allocation2 + $0xdb] sm:$0xff]
        %v1265 = vld [vmem:[#allocation2 + $0xe3] sm:$0xff]
        %v1266 = vld [vmem:[#allocation2 + $0xeb] sm:$0xff]
        %v1267 = vld [vmem:[#allocation2 + $0xf3] sm:$0xff]
        %v1268 = vld [vmem:[#allocation2 + $0xfb] sm:$0xff]
        %v1269 = vld [vmem:[#allocation2 + $0x103] sm:$0xff]
        %v1270 = vld [vmem:[#allocation2 + $0x10b] sm:$0xff]
        %v1271 = vld [vmem:[#allocation2 + $0x113] sm:$0xff]
        %v1272 = vld [vmem:[#allocation2 + $0x11b] sm:$0xff]
        %v1273 = vld [vmem:[#allocation2 + $0x123] sm:$0xff]
        %v1274 = vld [vmem:[#allocation2 + $0x12b] sm:$0xff]
        %v1275 = vpack.c.bf16 %v1240, %v1239
        %v1276 = vpack.c.bf16 %v1242, %v1241
        %v1277 = vpack.c.bf16 %v1244, %v1243
        %v1278 = vpack.c.bf16 %v1246, %v1245
        %v1279 = vpack.c.bf16 %v1248, %v1247
        %v1280 = vpack.c.bf16 %v1250, %v1249
        %v1281 = vpack.c.bf16 %v1252, %v1251
        %v1282 = vpack.c.bf16 %v1254, %v1253
        %v1283 = vpack.c.bf16 %v1256, %v1255
        %v1284 = vpack.c.bf16 %v1258, %v1257
        %v1285 = vpack.c.bf16 %v1260, %v1259
        %v1286 = vpack.c.bf16 %v1262, %v1261
        %v1287 = vpack.c.bf16 %v1264, %v1263
        %v1288 = vpack.c.bf16 %v1266, %v1265
        %v1289 = vpack.c.bf16 %v1268, %v1267
        %v1290 = vpack.c.bf16 %v1270, %v1269
        %v1291 = vpack.c.bf16 %v1272, %v1271
        %v1292 = vpack.c.bf16 %v1274, %v1273
        %v1293 = vld [vmem:[#allocation2 + $0x14] sm:$0xff]
        %v1294 = vld [vmem:[#allocation2 + $0x1c] sm:$0xff]
        %v1295 = vld [vmem:[#allocation2 + $0x24] sm:$0xff]
        %v1296 = vld [vmem:[#allocation2 + $0x2c] sm:$0xff]
        %v1297 = vld [vmem:[#allocation2 + $0x34] sm:$0xff]
        %v1298 = vld [vmem:[#allocation2 + $0x3c] sm:$0xff]
        %v1299 = vld [vmem:[#allocation2 + $0x44] sm:$0xff]
        %v1300 = vld [vmem:[#allocation2 + $0x4c] sm:$0xff]
        %v1301 = vld [vmem:[#allocation2 + $0x54] sm:$0xff]
        %v1302 = vld [vmem:[#allocation2 + $0x5c] sm:$0xff]
        %v1303 = vld [vmem:[#allocation2 + $0x64] sm:$0xff]
        %v1304 = vld [vmem:[#allocation2 + $0x6c] sm:$0xff]
        %v1305 = vld [vmem:[#allocation2 + $0x74] sm:$0xff]
        %v1306 = vld [vmem:[#allocation2 + $0x7c] sm:$0xff]
        %v1307 = vld [vmem:[#allocation2 + $0x84] sm:$0xff]
        %v1308 = vld [vmem:[#allocation2 + $0x8c] sm:$0xff]
        %v1309 = vld [vmem:[#allocation2 + $0x94] sm:$0xff]
        %v1310 = vld [vmem:[#allocation2 + $0x9c] sm:$0xff]
        %v1311 = vld [vmem:[#allocation2 + $0xa4] sm:$0xff]
        %v1312 = vld [vmem:[#allocation2 + $0xac] sm:$0xff]
        %v1313 = vld [vmem:[#allocation2 + $0xb4] sm:$0xff]
        %v1314 = vld [vmem:[#allocation2 + $0xbc] sm:$0xff]
        %v1315 = vld [vmem:[#allocation2 + $0xc4] sm:$0xff]
        %v1316 = vld [vmem:[#allocation2 + $0xcc] sm:$0xff]
        %v1317 = vld [vmem:[#allocation2 + $0xd4] sm:$0xff]
        %v1318 = vld [vmem:[#allocation2 + $0xdc] sm:$0xff]
        %v1319 = vld [vmem:[#allocation2 + $0xe4] sm:$0xff]
        %v1320 = vld [vmem:[#allocation2 + $0xec] sm:$0xff]
        %v1321 = vld [vmem:[#allocation2 + $0xf4] sm:$0xff]
        %v1322 = vld [vmem:[#allocation2 + $0xfc] sm:$0xff]
        %v1323 = vld [vmem:[#allocation2 + $0x104] sm:$0xff]
        %v1324 = vld [vmem:[#allocation2 + $0x10c] sm:$0xff]
        %v1325 = vld [vmem:[#allocation2 + $0x114] sm:$0xff]
        %v1326 = vld [vmem:[#allocation2 + $0x11c] sm:$0xff]
        %v1327 = vld [vmem:[#allocation2 + $0x124] sm:$0xff]
        %v1328 = vld [vmem:[#allocation2 + $0x12c] sm:$0xff]
        %v1329 = vpack.c.bf16 %v1294, %v1293
        %v1330 = vpack.c.bf16 %v1296, %v1295
        %v1331 = vpack.c.bf16 %v1298, %v1297
        %v1332 = vpack.c.bf16 %v1300, %v1299
        %v1333 = vpack.c.bf16 %v1302, %v1301
        %v1334 = vpack.c.bf16 %v1304, %v1303
        %v1335 = vpack.c.bf16 %v1306, %v1305
        %v1336 = vpack.c.bf16 %v1308, %v1307
        %v1337 = vpack.c.bf16 %v1310, %v1309
        %v1338 = vpack.c.bf16 %v1312, %v1311
        %v1339 = vpack.c.bf16 %v1314, %v1313
        %v1340 = vpack.c.bf16 %v1316, %v1315
        %v1341 = vpack.c.bf16 %v1318, %v1317
        %v1342 = vpack.c.bf16 %v1320, %v1319
        %v1343 = vpack.c.bf16 %v1322, %v1321
        %v1344 = vpack.c.bf16 %v1324, %v1323
        %v1345 = vpack.c.bf16 %v1326, %v1325
        %v1346 = vpack.c.bf16 %v1328, %v1327
        %s1347 = scalar_lea.vmem %s1, 192
        %v1348 = vld [vmem:[%s1347] sm:$0xf]
        %v1349 = vld [vmem:[%s1347 + $0x4] sm:$0xf]
        %v1350 = vld [vmem:[%s1347 + $0x8] sm:$0xf]
        %v1351 = vld [vmem:[%s1347 + $0xc] sm:$0xf]
        %v1352 = vld [vmem:[%s1347 + $0x10] sm:$0xf]
        %v1353 = vld [vmem:[%s1347 + $0x14] sm:$0xf]
        %v1354 = vld [vmem:[%s1347 + $0x18] sm:$0xf]
        %v1355 = vld [vmem:[%s1347 + $0x1c] sm:$0xf]
        %v1356 = vld [vmem:[%s1347 + $0x20] sm:$0xf]
        %v1357 = vld [vmem:[%s1347 + $0x24] sm:$0xf]
        %v1358 = vld [vmem:[%s1347 + $0x28] sm:$0xf]
        %v1359 = vld [vmem:[%s1347 + $0x2c] sm:$0xf]
        %v1360 = vld [vmem:[%s1347 + $0x30] sm:$0xf]
        %v1361 = vld [vmem:[%s1347 + $0x34] sm:$0xf]
        %v1362 = vld [vmem:[%s1347 + $0x38] sm:$0xf]
        %v1363 = vld [vmem:[%s1347 + $0x3c] sm:$0xf]
        %v1364 = vld [vmem:[%s1347 + $0x40] sm:$0xf]
        %v1365 = vld [vmem:[%s1347 + $0x44] sm:$0xf]
        %v1366 = vld [vmem:[%s1347 + $0x48] sm:$0xf]
        %v1367 = vld [vmem:[%s1347 + $0x4c] sm:$0xf]
        %v1368 = vld [vmem:[%s1347 + $0x50] sm:$0xf]
        %v1369 = vld [vmem:[%s1347 + $0x54] sm:$0xf]
        %v1370 = vld [vmem:[%s1347 + $0x58] sm:$0xf]
        %v1371 = vld [vmem:[%s1347 + $0x5c] sm:$0xf]
        %v1372 = vld [vmem:[%s1347 + $0x60] sm:$0xf]
        %v1373 = vld [vmem:[%s1347 + $0x64] sm:$0xf]
        %v1374 = vld [vmem:[%s1347 + $0x68] sm:$0xf]
        %v1375 = vld [vmem:[%s1347 + $0x6c] sm:$0xf]
        %v1376 = vld [vmem:[%s1347 + $0x70] sm:$0xf]
        %v1377 = vld [vmem:[%s1347 + $0x74] sm:$0xf]
        %v1378 = vld [vmem:[%s1347 + $0x78] sm:$0xf]
        %v1379 = vld [vmem:[%s1347 + $0x7c] sm:$0xf]
        %v1380 = vld [vmem:[%s1347 + $0x80] sm:$0xf]
        %v1381 = vld [vmem:[%s1347 + $0x84] sm:$0xf]
        %v1382 = vld [vmem:[%s1347 + $0x88] sm:$0xf]
        %v1383 = vld [vmem:[%s1347 + $0x8c] sm:$0xf]
        %v1384 = vld [vmem:[%s1347 + $0x90] sm:$0xf]
        %v1385 = vld [vmem:[%s1347 + $0x94] sm:$0xf]
        %v1386 = vld [vmem:[%s1347 + $0x98] sm:$0xf]
        %v1387 = vld [vmem:[%s1347 + $0x9c] sm:$0xf]
        %v1388 = vld [vmem:[%s1347 + $0xa0] sm:$0xf]
        %v1389 = vld [vmem:[%s1347 + $0xa4] sm:$0xf]
        %v1390 = vld [vmem:[%s1347 + $0xa8] sm:$0xf]
        %v1391 = vld [vmem:[%s1347 + $0xac] sm:$0xf]
        %v1392 = vld [vmem:[%s1347 + $0xb0] sm:$0xf]
        %v1393 = vld [vmem:[%s1347 + $0xb4] sm:$0xf]
        %v1394 = vld [vmem:[%s1347 + $0xb8] sm:$0xf]
        %v1395 = vld [vmem:[%s1347 + $0xbc] sm:$0xf]
        %v1444 = vunpack.c.l.b16 %v1348
        %v1445 = vunpack.c.l.b16 %v1349
        %v1446 = vunpack.c.l.b16 %v1350
        %v1447 = vunpack.c.l.b16 %v1351
        %v1448 = vunpack.c.l.b16 %v1352
        %v1449 = vunpack.c.l.b16 %v1353
        %v1450 = vunpack.c.l.b16 %v1354
        %v1451 = vunpack.c.l.b16 %v1355
        %v1452 = vunpack.c.l.b16 %v1356
        %v1453 = vunpack.c.l.b16 %v1357
        %v1454 = vunpack.c.l.b16 %v1358
        %v1455 = vunpack.c.l.b16 %v1359
        %v1456 = vunpack.c.l.b16 %v1360
        %v1457 = vunpack.c.l.b16 %v1361
        %v1458 = vunpack.c.l.b16 %v1362
        %v1459 = vunpack.c.l.b16 %v1363
        %v1460 = vunpack.c.l.b16 %v1364
        %v1461 = vunpack.c.l.b16 %v1365
        %v1462 = vunpack.c.l.b16 %v1366
        %v1463 = vunpack.c.l.b16 %v1367
        %v1464 = vunpack.c.l.b16 %v1368
        %v1465 = vunpack.c.l.b16 %v1369
        %v1466 = vunpack.c.l.b16 %v1370
        %v1467 = vunpack.c.l.b16 %v1371
        %v1468 = vunpack.c.l.b16 %v1372
        %v1469 = vunpack.c.l.b16 %v1373
        %v1470 = vunpack.c.l.b16 %v1374
        %v1471 = vunpack.c.l.b16 %v1375
        %v1472 = vunpack.c.l.b16 %v1376
        %v1473 = vunpack.c.l.b16 %v1377
        %v1474 = vunpack.c.l.b16 %v1378
        %v1475 = vunpack.c.l.b16 %v1379
        %v1476 = vunpack.c.l.b16 %v1380
        %v1477 = vunpack.c.l.b16 %v1381
        %v1478 = vunpack.c.l.b16 %v1382
        %v1479 = vunpack.c.l.b16 %v1383
        %v1480 = vunpack.c.l.b16 %v1384
        %v1481 = vunpack.c.l.b16 %v1385
        %v1482 = vunpack.c.l.b16 %v1386
        %v1483 = vunpack.c.l.b16 %v1387
        %v1484 = vunpack.c.l.b16 %v1388
        %v1485 = vunpack.c.l.b16 %v1389
        %v1486 = vunpack.c.l.b16 %v1390
        %v1487 = vunpack.c.l.b16 %v1391
        %v1488 = vunpack.c.l.b16 %v1392
        %v1489 = vunpack.c.l.b16 %v1393
        %v1490 = vunpack.c.l.b16 %v1394
        %v1491 = vunpack.c.l.b16 %v1395
        %v1492 = vpack.c.b16 %v1445, %v1444
        %v1493 = vpack.c.b16 %v1447, %v1446
        %v1494 = vpack.c.b16 %v1449, %v1448
        %v1495 = vpack.c.b16 %v1451, %v1450
        %v1496 = vpack.c.b16 %v1453, %v1452
        %v1497 = vpack.c.b16 %v1455, %v1454
        %v1498 = vpack.c.b16 %v1457, %v1456
        %v1499 = vpack.c.b16 %v1459, %v1458
        %v1500 = vpack.c.b16 %v1461, %v1460
        %v1501 = vpack.c.b16 %v1463, %v1462
        %v1502 = vpack.c.b16 %v1465, %v1464
        %v1503 = vpack.c.b16 %v1467, %v1466
        %v1504 = vpack.c.b16 %v1469, %v1468
        %v1505 = vpack.c.b16 %v1471, %v1470
        %v1506 = vpack.c.b16 %v1473, %v1472
        %v1507 = vpack.c.b16 %v1475, %v1474
        %v1508 = vpack.c.b16 %v1477, %v1476
        %v1509 = vpack.c.b16 %v1479, %v1478
        %v1510 = vpack.c.b16 %v1481, %v1480
        %v1511 = vpack.c.b16 %v1483, %v1482
        %v1512 = vpack.c.b16 %v1485, %v1484
        %v1513 = vpack.c.b16 %v1487, %v1486
        %v1514 = vpack.c.b16 %v1489, %v1488
        %v1515 = vpack.c.b16 %v1491, %v1490
        %1540 = vmatprep.subr.bf16.mxu0 0
        %1541 = vmatpush1.bf16.msra.mxu0 %v1492
        %1542 = vmatprep.subr.bf16.mxu0 0
        %1543 = vmatpush1.bf16.msra.mxu0 %v1493
        %1544 = vmatprep.subr.bf16.mxu0 0
        %1545 = vmatpush1.bf16.msra.mxu0 %v1494
        %1546 = vmatprep.subr.bf16.mxu0 0
        %1547 = vmatpush1.bf16.msra.mxu0 %v1495
        %1548 = vmatprep.subr.bf16.mxu0 0
        %1549 = vmatpush1.bf16.msra.mxu0 %v1496
        %1550 = vmatprep.subr.bf16.mxu0 0
        %1551 = vmatpush1.bf16.msra.mxu0 %v1497
        %1552 = vmatprep.subr.bf16.mxu0 0
        %1553 = vmatpush1.bf16.msra.mxu0 %v1498
        %1554 = vmatprep.subr.bf16.mxu0 0
        %1555 = vmatpush1.bf16.msra.mxu0 %v1499
        %1556 = vmatprep.subr.bf16.mxu0 0
        %1557 = vmatpush1.bf16.msra.mxu0 %v1500
        %1558 = vmatprep.subr.bf16.mxu0 0
        %1559 = vmatpush1.bf16.msra.mxu0 %v1501
        %1560 = vmatprep.subr.bf16.mxu0 0
        %1561 = vmatpush1.bf16.msra.mxu0 %v1502
        %1562 = vmatprep.subr.bf16.mxu0 0
        %1563 = vmatpush1.bf16.msra.mxu0 %v1503
        %1564 = vmatprep.subr.bf16.mxu0 0
        %1565 = vmatpush1.bf16.msra.mxu0 %v1504
        %1566 = vmatprep.subr.bf16.mxu0 0
        %1567 = vmatpush1.bf16.msra.mxu0 %v1505
        %1568 = vmatprep.subr.bf16.mxu0 0
        %1569 = vmatpush1.bf16.msra.mxu0 %v1506
        %1570 = vmatprep.subr.bf16.mxu0 0
        %1571 = vmatpush1.bf16.msra.mxu0 %v1507
        %1572 = vmatprep.mubr.bf16.mxu0 %v1275
        %1573 = vmatmul.mubr.bf16.gmra.mrb[0].mxu0 %v1221
        %v1574 = vpop.f32.mrb[0].mxu0
        %v1575 = vadd.f32 0.0, %v1574
        %v1576 = vpop.f32.mrb[0].mxu0
        %v1577 = vpop.f32.mrb[0].mxu0
        %v1578 = vadd.f32 0.0, %v1577
        %v1579 = vpop.f32.mrb[0].mxu0
        %1580 = vmatprep.mubr.bf16.mxu0 %v1276
        %1581 = vmatmul.mubr.bf16.gmra.mrb[0].mxu0 %v1222
        %v1582 = vpop.f32.mrb[0].mxu0
        %v1583 = vadd.f32 0.0, %v1582
        %v1584 = vpop.f32.mrb[0].mxu0
        %v1585 = vpop.f32.mrb[0].mxu0
        %v1586 = vadd.f32 0.0, %v1585
        %v1587 = vpop.f32.mrb[0].mxu0
        %1588 = vmatprep.mubr.bf16.mxu0 %v1277
        %1589 = vmatmul.mubr.bf16.gmra.mrb[0].mxu0 %v1223
        %v1590 = vpop.f32.mrb[0].mxu0
        %v1591 = vadd.f32 0.0, %v1590
        %v1592 = vpop.f32.mrb[0].mxu0
        %v1593 = vpop.f32.mrb[0].mxu0
        %v1594 = vadd.f32 0.0, %v1593
        %v1595 = vpop.f32.mrb[0].mxu0
        %1596 = vmatprep.mubr.bf16.mxu0 %v1278
        %1597 = vmatmul.mubr.bf16.gmra.mrb[0].mxu0 %v1224
        %v1598 = vpop.f32.mrb[0].mxu0
        %v1599 = vadd.f32 0.0, %v1598
        %v1600 = vpop.f32.mrb[0].mxu0
        %v1601 = vpop.f32.mrb[0].mxu0
        %v1602 = vadd.f32 0.0, %v1601
        %v1603 = vpop.f32.mrb[0].mxu0
        %1604 = vmatprep.mubr.bf16.mxu0 %v1279
        %1605 = vmatmul.mubr.bf16.gmra.mrb[0].mxu0 %v1225
        %v1606 = vpop.f32.mrb[0].mxu0
        %v1607 = vadd.f32 0.0, %v1606
        %v1608 = vpop.f32.mrb[0].mxu0
        %v1609 = vpop.f32.mrb[0].mxu0
        %v1610 = vadd.f32 0.0, %v1609
        %v1611 = vpop.f32.mrb[0].mxu0
        %1612 = vmatprep.mubr.bf16.mxu0 %v1280
        %1613 = vmatmul.mubr.bf16.gmra.mrb[0].mxu0 %v1226
        %v1614 = vpop.f32.mrb[0].mxu0
        %v1615 = vadd.f32 0.0, %v1614
        %v1616 = vpop.f32.mrb[0].mxu0
        %v1617 = vpop.f32.mrb[0].mxu0
        %v1618 = vadd.f32 0.0, %v1617
        %v1619 = vpop.f32.mrb[0].mxu0
        %1620 = vmatprep.mubr.bf16.mxu0 %v1281
        %1621 = vmatmul.mubr.bf16.gmra.mrb[0].mxu0 %v1227
        %v1622 = vpop.f32.mrb[0].mxu0
        %v1623 = vadd.f32 0.0, %v1622
        %v1624 = vpop.f32.mrb[0].mxu0
        %v1625 = vpop.f32.mrb[0].mxu0
        %v1626 = vadd.f32 0.0, %v1625
        %v1627 = vpop.f32.mrb[0].mxu0
        %1628 = vmatprep.mubr.bf16.mxu0 %v1282
        %1629 = vmatmul.mubr.bf16.gmra.mrb[0].mxu0 %v1228
        %v1630 = vpop.f32.mrb[0].mxu0
        %v1631 = vadd.f32 0.0, %v1630
        %v1632 = vpop.f32.mrb[0].mxu0
        %v1633 = vpop.f32.mrb[0].mxu0
        %v1634 = vadd.f32 0.0, %v1633
        %v1635 = vpop.f32.mrb[0].mxu0
        %1636 = vmatprep.mubr.bf16.mxu0 %v1283
        %1637 = vmatmul.mubr.bf16.gmra.mrb[0].mxu0 %v1229
        %v1638 = vpop.f32.mrb[0].mxu0
        %v1639 = vadd.f32 0.0, %v1638
        %v1640 = vpop.f32.mrb[0].mxu0
        %v1641 = vpop.f32.mrb[0].mxu0
        %v1642 = vadd.f32 0.0, %v1641
        %v1643 = vpop.f32.mrb[0].mxu0
        %1644 = vmatprep.mubr.bf16.mxu0 %v1284
        %1645 = vmatmul.mubr.bf16.gmra.mrb[0].mxu0 %v1230
        %v1646 = vpop.f32.mrb[0].mxu0
        %v1647 = vadd.f32 0.0, %v1646
        %v1648 = vpop.f32.mrb[0].mxu0
        %v1649 = vpop.f32.mrb[0].mxu0
        %v1650 = vadd.f32 0.0, %v1649
        %v1651 = vpop.f32.mrb[0].mxu0
        %1652 = vmatprep.mubr.bf16.mxu0 %v1285
        %1653 = vmatmul.mubr.bf16.gmra.mrb[0].mxu0 %v1231
        %v1654 = vpop.f32.mrb[0].mxu0
        %v1655 = vadd.f32 0.0, %v1654
        %v1656 = vpop.f32.mrb[0].mxu0
        %v1657 = vpop.f32.mrb[0].mxu0
        %v1658 = vadd.f32 0.0, %v1657
        %v1659 = vpop.f32.mrb[0].mxu0
        %1660 = vmatprep.mubr.bf16.mxu0 %v1286
        %1661 = vmatmul.mubr.bf16.gmra.mrb[0].mxu0 %v1232
        %v1662 = vpop.f32.mrb[0].mxu0
        %v1663 = vadd.f32 0.0, %v1662
        %v1664 = vpop.f32.mrb[0].mxu0
        %v1665 = vpop.f32.mrb[0].mxu0
        %v1666 = vadd.f32 0.0, %v1665
        %v1667 = vpop.f32.mrb[0].mxu0
        %1668 = vmatprep.mubr.bf16.mxu0 %v1287
        %1669 = vmatmul.mubr.bf16.gmra.mrb[0].mxu0 %v1233
        %v1670 = vpop.f32.mrb[0].mxu0
        %v1671 = vadd.f32 0.0, %v1670
        %v1672 = vpop.f32.mrb[0].mxu0
        %v1673 = vpop.f32.mrb[0].mxu0
        %v1674 = vadd.f32 0.0, %v1673
        %v1675 = vpop.f32.mrb[0].mxu0
        %1676 = vmatprep.mubr.bf16.mxu0 %v1288
        %1677 = vmatmul.mubr.bf16.gmra.mrb[0].mxu0 %v1234
        %v1678 = vpop.f32.mrb[0].mxu0
        %v1679 = vadd.f32 0.0, %v1678
        %v1680 = vpop.f32.mrb[0].mxu0
        %v1681 = vpop.f32.mrb[0].mxu0
        %v1682 = vadd.f32 0.0, %v1681
        %v1683 = vpop.f32.mrb[0].mxu0
        %1684 = vmatprep.mubr.bf16.mxu0 %v1289
        %1685 = vmatmul.mubr.bf16.gmra.mrb[0].mxu0 %v1235
        %v1686 = vpop.f32.mrb[0].mxu0
        %v1687 = vadd.f32 0.0, %v1686
        %v1688 = vpop.f32.mrb[0].mxu0
        %v1689 = vpop.f32.mrb[0].mxu0
        %v1690 = vadd.f32 0.0, %v1689
        %v1691 = vpop.f32.mrb[0].mxu0
        %1692 = vmatprep.mubr.bf16.mxu0 %v1290
        %1693 = vmatmul.mubr.bf16.gmra.mrb[0].mxu0 %v1236
        %v1694 = vpop.f32.mrb[0].mxu0
        %v1695 = vadd.f32 0.0, %v1694
        %v1696 = vpop.f32.mrb[0].mxu0
        %v1697 = vpop.f32.mrb[0].mxu0
        %v1698 = vadd.f32 0.0, %v1697
        %v1699 = vpop.f32.mrb[0].mxu0
        %1700 = vmatprep.mubr.bf16.mxu0 %v1291
        %1701 = vmatmul.mubr.bf16.gmra.mrb[0].mxu0 %v1237
        %v1702 = vpop.f32.mrb[0].mxu0
        %v1703 = vadd.f32 0.0, %v1702
        %v1704 = vpop.f32.mrb[0].mxu0
        %v1705 = vpop.f32.mrb[0].mxu0
        %v1706 = vadd.f32 0.0, %v1705
        %v1707 = vpop.f32.mrb[0].mxu0
        %1708 = vmatprep.mubr.bf16.mxu0 %v1292
        %1709 = vmatmul.mubr.bf16.gmra.mrb[0].mxu0 %v1238
        %v1710 = vpop.f32.mrb[0].mxu0
        %v1711 = vadd.f32 0.0, %v1710
        %v1712 = vpop.f32.mrb[0].mxu0
        %v1713 = vpop.f32.mrb[0].mxu0
        %v1714 = vadd.f32 0.0, %v1713
        %v1715 = vpop.f32.mrb[0].mxu0
        %1716 = vdwg.mxu0
        %1717 = vmatprep.subr.bf16.mxu0 0
        %1718 = vmatpush1.bf16.msra.mxu0 %v1508
        %1719 = vmatprep.subr.bf16.mxu0 0
        %1720 = vmatpush1.bf16.msra.mxu0 %v1509
        %1721 = vmatprep.subr.bf16.mxu0 0
        %1722 = vmatpush1.bf16.msra.mxu0 %v1510
        %1723 = vmatprep.subr.bf16.mxu0 0
        %1724 = vmatpush1.bf16.msra.mxu0 %v1511
        %1725 = vmatprep.subr.bf16.mxu0 0
        %1726 = vmatpush1.bf16.msra.mxu0 %v1512
        %1727 = vmatprep.subr.bf16.mxu0 0
        %1728 = vmatpush1.bf16.msra.mxu0 %v1513
        %1729 = vmatprep.subr.bf16.mxu0 0
        %1730 = vmatpush1.bf16.msra.mxu0 %v1514
        %1731 = vmatprep.subr.bf16.mxu0 0
        %1732 = vmatpush1.bf16.msra.mxu0 %v1515
        %1733 = vmatprep.subr.bf16.mxu0 0
        %1734 = vmatpush1.bf16.msra.mxu0 0
        %1735 = vmatprep.subr.bf16.mxu0 0
        %1736 = vmatpush1.bf16.msra.mxu0 0
        %1737 = vmatprep.subr.bf16.mxu0 0
        %1738 = vmatpush1.bf16.msra.mxu0 0
        %1739 = vmatprep.subr.bf16.mxu0 0
        %1740 = vmatpush1.bf16.msra.mxu0 0
        %1741 = vmatprep.subr.bf16.mxu0 0
        %1742 = vmatpush1.bf16.msra.mxu0 0
        %1743 = vmatprep.subr.bf16.mxu0 0
        %1744 = vmatpush1.bf16.msra.mxu0 0
        %1745 = vmatprep.subr.bf16.mxu0 0
        %1746 = vmatpush1.bf16.msra.mxu0 0
        %1747 = vmatprep.subr.bf16.mxu0 0
        %1748 = vmatpush1.bf16.msra.mxu0 0
        %1749 = vmatprep.mubr.bf16.mxu0 0
        %1750 = vmatmul.mubr.bf16.gmra.mrb[0].mxu0 %v1329
        %v1751 = vpop.f32.mrb[0].mxu0
        %v1752 = vadd.f32 %v1575, %v1751
        %v1753 = vpop.f32.mrb[0].mxu0
        %v1754 = vpop.f32.mrb[0].mxu0
        %v1755 = vadd.f32 %v1578, %v1754
        %v1756 = vpop.f32.mrb[0].mxu0
        %1757 = vmatprep.mubr.bf16.mxu0 0
        %1758 = vmatmul.mubr.bf16.gmra.mrb[0].mxu0 %v1330
        %v1759 = vpop.f32.mrb[0].mxu0
        %v1760 = vadd.f32 %v1583, %v1759
        %v1761 = vpop.f32.mrb[0].mxu0
        %v1762 = vpop.f32.mrb[0].mxu0
        %v1763 = vadd.f32 %v1586, %v1762
        %v1764 = vpop.f32.mrb[0].mxu0
        %1765 = vmatprep.mubr.bf16.mxu0 0
        %1766 = vmatmul.mubr.bf16.gmra.mrb[0].mxu0 %v1331
        %v1767 = vpop.f32.mrb[0].mxu0
        %v1768 = vadd.f32 %v1591, %v1767
        %v1769 = vpop.f32.mrb[0].mxu0
        %v1770 = vpop.f32.mrb[0].mxu0
        %v1771 = vadd.f32 %v1594, %v1770
        %v1772 = vpop.f32.mrb[0].mxu0
        %1773 = vmatprep.mubr.bf16.mxu0 0
        %1774 = vmatmul.mubr.bf16.gmra.mrb[0].mxu0 %v1332
        %v1775 = vpop.f32.mrb[0].mxu0
        %v1776 = vadd.f32 %v1599, %v1775
        %v1777 = vpop.f32.mrb[0].mxu0
        %v1778 = vpop.f32.mrb[0].mxu0
        %v1779 = vadd.f32 %v1602, %v1778
        %v1780 = vpop.f32.mrb[0].mxu0
        %1781 = vmatprep.mubr.bf16.mxu0 0
        %1782 = vmatmul.mubr.bf16.gmra.mrb[0].mxu0 %v1333
        %v1783 = vpop.f32.mrb[0].mxu0
        %v1784 = vadd.f32 %v1607, %v1783
        %v1785 = vpop.f32.mrb[0].mxu0
        %v1786 = vpop.f32.mrb[0].mxu0
        %v1787 = vadd.f32 %v1610, %v1786
        %v1788 = vpop.f32.mrb[0].mxu0
        %1789 = vmatprep.mubr.bf16.mxu0 0
        %1790 = vmatmul.mubr.bf16.gmra.mrb[0].mxu0 %v1334
        %v1791 = vpop.f32.mrb[0].mxu0
        %v1792 = vadd.f32 %v1615, %v1791
        %v1793 = vpop.f32.mrb[0].mxu0
        %v1794 = vpop.f32.mrb[0].mxu0
        %v1795 = vadd.f32 %v1618, %v1794
        %v1796 = vpop.f32.mrb[0].mxu0
        %1797 = vmatprep.mubr.bf16.mxu0 0
        %1798 = vmatmul.mubr.bf16.gmra.mrb[0].mxu0 %v1335
        %v1799 = vpop.f32.mrb[0].mxu0
        %v1800 = vadd.f32 %v1623, %v1799
        %v1801 = vpop.f32.mrb[0].mxu0
        %v1802 = vpop.f32.mrb[0].mxu0
        %v1803 = vadd.f32 %v1626, %v1802
        %v1804 = vpop.f32.mrb[0].mxu0
        %1805 = vmatprep.mubr.bf16.mxu0 0
        %1806 = vmatmul.mubr.bf16.gmra.mrb[0].mxu0 %v1336
        %v1807 = vpop.f32.mrb[0].mxu0
        %v1808 = vadd.f32 %v1631, %v1807
        %v1809 = vpop.f32.mrb[0].mxu0
        %v1810 = vpop.f32.mrb[0].mxu0
        %v1811 = vadd.f32 %v1634, %v1810
        %v1812 = vpop.f32.mrb[0].mxu0
        %1813 = vmatprep.mubr.bf16.mxu0 0
        %1814 = vmatmul.mubr.bf16.gmra.mrb[0].mxu0 %v1337
        %v1815 = vpop.f32.mrb[0].mxu0
        %v1816 = vadd.f32 %v1639, %v1815
        %v1817 = vpop.f32.mrb[0].mxu0
        %v1818 = vpop.f32.mrb[0].mxu0
        %v1819 = vadd.f32 %v1642, %v1818
        %v1820 = vpop.f32.mrb[0].mxu0
        %1821 = vmatprep.mubr.bf16.mxu0 0
        %1822 = vmatmul.mubr.bf16.gmra.mrb[0].mxu0 %v1338
        %v1823 = vpop.f32.mrb[0].mxu0
        %v1824 = vadd.f32 %v1647, %v1823
        %v1825 = vpop.f32.mrb[0].mxu0
        %v1826 = vpop.f32.mrb[0].mxu0
        %v1827 = vadd.f32 %v1650, %v1826
        %v1828 = vpop.f32.mrb[0].mxu0
        %1829 = vmatprep.mubr.bf16.mxu0 0
        %1830 = vmatmul.mubr.bf16.gmra.mrb[0].mxu0 %v1339
        %v1831 = vpop.f32.mrb[0].mxu0
        %v1832 = vadd.f32 %v1655, %v1831
        %v1833 = vpop.f32.mrb[0].mxu0
        %v1834 = vpop.f32.mrb[0].mxu0
        %v1835 = vadd.f32 %v1658, %v1834
        %v1836 = vpop.f32.mrb[0].mxu0
        %1837 = vmatprep.mubr.bf16.mxu0 0
        %1838 = vmatmul.mubr.bf16.gmra.mrb[0].mxu0 %v1340
        %v1839 = vpop.f32.mrb[0].mxu0
        %v1840 = vadd.f32 %v1663, %v1839
        %v1841 = vpop.f32.mrb[0].mxu0
        %v1842 = vpop.f32.mrb[0].mxu0
        %v1843 = vadd.f32 %v1666, %v1842
        %v1844 = vpop.f32.mrb[0].mxu0
        %1845 = vmatprep.mubr.bf16.mxu0 0
        %1846 = vmatmul.mubr.bf16.gmra.mrb[0].mxu0 %v1341
        %v1847 = vpop.f32.mrb[0].mxu0
        %v1848 = vadd.f32 %v1671, %v1847
        %v1849 = vpop.f32.mrb[0].mxu0
        %v1850 = vpop.f32.mrb[0].mxu0
        %v1851 = vadd.f32 %v1674, %v1850
        %v1852 = vpop.f32.mrb[0].mxu0
        %1853 = vmatprep.mubr.bf16.mxu0 0
        %1854 = vmatmul.mubr.bf16.gmra.mrb[0].mxu0 %v1342
        %v1855 = vpop.f32.mrb[0].mxu0
        %v1856 = vadd.f32 %v1679, %v1855
        %v1857 = vpop.f32.mrb[0].mxu0
        %v1858 = vpop.f32.mrb[0].mxu0
        %v1859 = vadd.f32 %v1682, %v1858
        %v1860 = vpop.f32.mrb[0].mxu0
        %1861 = vmatprep.mubr.bf16.mxu0 0
        %1862 = vmatmul.mubr.bf16.gmra.mrb[0].mxu0 %v1343
        %v1863 = vpop.f32.mrb[0].mxu0
        %v1864 = vadd.f32 %v1687, %v1863
        %v1865 = vpop.f32.mrb[0].mxu0
        %v1866 = vpop.f32.mrb[0].mxu0
        %v1867 = vadd.f32 %v1690, %v1866
        %v1868 = vpop.f32.mrb[0].mxu0
        %1869 = vmatprep.mubr.bf16.mxu0 0
        %1870 = vmatmul.mubr.bf16.gmra.mrb[0].mxu0 %v1344
        %v1871 = vpop.f32.mrb[0].mxu0
        %v1872 = vadd.f32 %v1695, %v1871
        %v1873 = vpop.f32.mrb[0].mxu0
        %v1874 = vpop.f32.mrb[0].mxu0
        %v1875 = vadd.f32 %v1698, %v1874
        %v1876 = vpop.f32.mrb[0].mxu0
        %1877 = vmatprep.mubr.bf16.mxu0 0
        %1878 = vmatmul.mubr.bf16.gmra.mrb[0].mxu0 %v1345
        %v1879 = vpop.f32.mrb[0].mxu0
        %v1880 = vadd.f32 %v1703, %v1879
        %v1881 = vpop.f32.mrb[0].mxu0
        %v1882 = vpop.f32.mrb[0].mxu0
        %v1883 = vadd.f32 %v1706, %v1882
        %v1884 = vpop.f32.mrb[0].mxu0
        %1885 = vmatprep.mubr.bf16.mxu0 0
        %1886 = vmatmul.mubr.bf16.gmra.mrb[0].mxu0 %v1346
        %v1887 = vpop.f32.mrb[0].mxu0
        %v1888 = vadd.f32 %v1711, %v1887
        %v1889 = vpop.f32.mrb[0].mxu0
        %v1890 = vpop.f32.mrb[0].mxu0
        %v1891 = vadd.f32 %v1714, %v1890
        %v1892 = vpop.f32.mrb[0].mxu0
        %1893 = vdwg.mxu0
        %v1894 = vld [vmem:[#allocation4] sm:$0xff]
        %v1895 = vld [vmem:[#allocation4 + $0x8] sm:$0xff]
        %v1896 = vld [vmem:[#allocation4 + $0x10] sm:$0xff]
        %v1897 = vld [vmem:[#allocation4 + $0x18] sm:$0xff]
        %v1898 = vld [vmem:[#allocation4 + $0x20] sm:$0xff]
        %v1899 = vld [vmem:[#allocation4 + $0x28] sm:$0xff]
        %v1900 = vld [vmem:[#allocation4 + $0x30] sm:$0xff]
        %v1901 = vld [vmem:[#allocation4 + $0x38] sm:$0xff]
        %v1902 = vld [vmem:[#allocation4 + $0x40] sm:$0xff]
        %v1903 = vld [vmem:[#allocation4 + $0x48] sm:$0xff]
        %v1904 = vld [vmem:[#allocation4 + $0x50] sm:$0xff]
        %v1905 = vld [vmem:[#allocation4 + $0x58] sm:$0xff]
        %v1906 = vld [vmem:[#allocation4 + $0x60] sm:$0xff]
        %v1907 = vld [vmem:[#allocation4 + $0x68] sm:$0xff]
        %v1908 = vld [vmem:[#allocation4 + $0x70] sm:$0xff]
        %v1909 = vld [vmem:[#allocation4 + $0x78] sm:$0xff]
        %v1910 = vld [vmem:[#allocation4 + $0x80] sm:$0xff]
        %v1911 = vld [vmem:[#allocation4 + $0x88] sm:$0xff]
        %v1912 = vld [vmem:[#allocation4 + $0x90] sm:$0xff]
        %v1913 = vld [vmem:[#allocation4 + $0x98] sm:$0xff]
        %v1914 = vld [vmem:[#allocation4 + $0xa0] sm:$0xff]
        %v1915 = vld [vmem:[#allocation4 + $0xa8] sm:$0xff]
        %v1916 = vld [vmem:[#allocation4 + $0xb0] sm:$0xff]
        %v1917 = vld [vmem:[#allocation4 + $0xb8] sm:$0xff]
        %v1918 = vld [vmem:[#allocation4 + $0xc0] sm:$0xff]
        %v1919 = vld [vmem:[#allocation4 + $0xc8] sm:$0xff]
        %v1920 = vld [vmem:[#allocation4 + $0xd0] sm:$0xff]
        %v1921 = vld [vmem:[#allocation4 + $0xd8] sm:$0xff]
        %v1922 = vld [vmem:[#allocation4 + $0xe0] sm:$0xff]
        %v1923 = vld [vmem:[#allocation4 + $0xe8] sm:$0xff]
        %v1924 = vld [vmem:[#allocation4 + $0xf0] sm:$0xff]
        %v1925 = vld [vmem:[#allocation4 + $0xf8] sm:$0xff]
        %v1926 = vld [vmem:[#allocation4 + $0x100] sm:$0xff]
        %v1927 = vld [vmem:[#allocation4 + $0x108] sm:$0xff]
        %v1928 = vld [vmem:[#allocation4 + $0x110] sm:$0xff]
        %v1929 = vld [vmem:[#allocation4 + $0x118] sm:$0xff]
        %v1930 = vadd.f32 %v1894, %v1752
        %v1931 = vadd.f32 %v1895, %v1755
        %v1932 = vadd.f32 %v1896, %v1760
        %v1933 = vadd.f32 %v1897, %v1763
        %v1934 = vadd.f32 %v1898, %v1768
        %v1935 = vadd.f32 %v1899, %v1771
        %v1936 = vadd.f32 %v1900, %v1776
        %v1937 = vadd.f32 %v1901, %v1779
        %v1938 = vadd.f32 %v1902, %v1784
        %v1939 = vadd.f32 %v1903, %v1787
        %v1940 = vadd.f32 %v1904, %v1792
        %v1941 = vadd.f32 %v1905, %v1795
        %v1942 = vadd.f32 %v1906, %v1800
        %v1943 = vadd.f32 %v1907, %v1803
        %v1944 = vadd.f32 %v1908, %v1808
        %v1945 = vadd.f32 %v1909, %v1811
        %v1946 = vadd.f32 %v1910, %v1816
        %v1947 = vadd.f32 %v1911, %v1819
        %v1948 = vadd.f32 %v1912, %v1824
        %v1949 = vadd.f32 %v1913, %v1827
        %v1950 = vadd.f32 %v1914, %v1832
        %v1951 = vadd.f32 %v1915, %v1835
        %v1952 = vadd.f32 %v1916, %v1840
        %v1953 = vadd.f32 %v1917, %v1843
        %v1954 = vadd.f32 %v1918, %v1848
        %v1955 = vadd.f32 %v1919, %v1851
        %v1956 = vadd.f32 %v1920, %v1856
        %v1957 = vadd.f32 %v1921, %v1859
        %v1958 = vadd.f32 %v1922, %v1864
        %v1959 = vadd.f32 %v1923, %v1867
        %v1960 = vadd.f32 %v1924, %v1872
        %v1961 = vadd.f32 %v1925, %v1875
        %v1962 = vadd.f32 %v1926, %v1880
        %v1963 = vadd.f32 %v1927, %v1883
        %v1964 = vadd.f32 %v1928, %v1888
        %v1965 = vadd.f32 %v1929, %v1891
        %1966 = vst [vmem:[#allocation4] sm:$0xff] %v1930
        %1967 = vst [vmem:[#allocation4 + $0x8] sm:$0xff] %v1931
        %1968 = vst [vmem:[#allocation4 + $0x10] sm:$0xff] %v1932
        %1969 = vst [vmem:[#allocation4 + $0x18] sm:$0xff] %v1933
        %1970 = vst [vmem:[#allocation4 + $0x20] sm:$0xff] %v1934
        %1971 = vst [vmem:[#allocation4 + $0x28] sm:$0xff] %v1935
        %1972 = vst [vmem:[#allocation4 + $0x30] sm:$0xff] %v1936
        %1973 = vst [vmem:[#allocation4 + $0x38] sm:$0xff] %v1937
        %1974 = vst [vmem:[#allocation4 + $0x40] sm:$0xff] %v1938
        %1975 = vst [vmem:[#allocation4 + $0x48] sm:$0xff] %v1939
        %1976 = vst [vmem:[#allocation4 + $0x50] sm:$0xff] %v1940
        %1977 = vst [vmem:[#allocation4 + $0x58] sm:$0xff] %v1941
        %1978 = vst [vmem:[#allocation4 + $0x60] sm:$0xff] %v1942
        %1979 = vst [vmem:[#allocation4 + $0x68] sm:$0xff] %v1943
        %1980 = vst [vmem:[#allocation4 + $0x70] sm:$0xff] %v1944
        %1981 = vst [vmem:[#allocation4 + $0x78] sm:$0xff] %v1945
        %1982 = vst [vmem:[#allocation4 + $0x80] sm:$0xff] %v1946
        %1983 = vst [vmem:[#allocation4 + $0x88] sm:$0xff] %v1947
        %1984 = vst [vmem:[#allocation4 + $0x90] sm:$0xff] %v1948
        %1985 = vst [vmem:[#allocation4 + $0x98] sm:$0xff] %v1949
        %1986 = vst [vmem:[#allocation4 + $0xa0] sm:$0xff] %v1950
        %1987 = vst [vmem:[#allocation4 + $0xa8] sm:$0xff] %v1951
        %1988 = vst [vmem:[#allocation4 + $0xb0] sm:$0xff] %v1952
        %1989 = vst [vmem:[#allocation4 + $0xb8] sm:$0xff] %v1953
        %1990 = vst [vmem:[#allocation4 + $0xc0] sm:$0xff] %v1954
        %1991 = vst [vmem:[#allocation4 + $0xc8] sm:$0xff] %v1955
        %1992 = vst [vmem:[#allocation4 + $0xd0] sm:$0xff] %v1956
        %1993 = vst [vmem:[#allocation4 + $0xd8] sm:$0xff] %v1957
        %1994 = vst [vmem:[#allocation4 + $0xe0] sm:$0xff] %v1958
        %1995 = vst [vmem:[#allocation4 + $0xe8] sm:$0xff] %v1959
        %1996 = vst [vmem:[#allocation4 + $0xf0] sm:$0xff] %v1960
        %1997 = vst [vmem:[#allocation4 + $0xf8] sm:$0xff] %v1961
        %1998 = vst [vmem:[#allocation4 + $0x100] sm:$0xff] %v1962
        %1999 = vst [vmem:[#allocation4 + $0x108] sm:$0xff] %v1963
        %2000 = vst [vmem:[#allocation4 + $0x110] sm:$0xff] %v1964
        %2001 = vst [vmem:[#allocation4 + $0x118] sm:$0xff] %v1965
        %v2002 = vld [vmem:[#allocation2 + $0x24] sm:$0xff]
        %v2003 = vld [vmem:[#allocation2 + $0x2c] sm:$0xff]
        %v2004 = vld [vmem:[#allocation2 + $0x34] sm:$0xff]
        %v2005 = vld [vmem:[#allocation2 + $0x3c] sm:$0xff]
        %v2006 = vld [vmem:[#allocation2 + $0x44] sm:$0xff]
        %v2007 = vld [vmem:[#allocation2 + $0x4c] sm:$0xff]
        %v2008 = vld [vmem:[#allocation2 + $0x54] sm:$0xff]
        %v2009 = vld [vmem:[#allocation2 + $0x5c] sm:$0xff]
        %v2010 = vld [vmem:[#allocation2 + $0x64] sm:$0xff]
        %v2011 = vld [vmem:[#allocation2 + $0x6c] sm:$0xff]
        %v2012 = vld [vmem:[#allocation2 + $0x74] sm:$0xff]
        %v2013 = vld [vmem:[#allocation2 + $0x7c] sm:$0xff]
        %v2014 = vld [vmem:[#allocation2 + $0x84] sm:$0xff]
        %v2015 = vld [vmem:[#allocation2 + $0x8c] sm:$0xff]
        %v2016 = vld [vmem:[#allocation2 + $0x94] sm:$0xff]
        %v2017 = vld [vmem:[#allocation2 + $0x9c] sm:$0xff]
        %v2018 = vld [vmem:[#allocation2 + $0xa4] sm:$0xff]
        %v2019 = vld [vmem:[#allocation2 + $0xac] sm:$0xff]
        %v2020 = vld [vmem:[#allocation2 + $0xb4] sm:$0xff]
        %v2021 = vld [vmem:[#allocation2 + $0xbc] sm:$0xff]
        %v2022 = vld [vmem:[#allocation2 + $0xc4] sm:$0xff]
        %v2023 = vld [vmem:[#allocation2 + $0xcc] sm:$0xff]
        %v2024 = vld [vmem:[#allocation2 + $0xd4] sm:$0xff]
        %v2025 = vld [vmem:[#allocation2 + $0xdc] sm:$0xff]
        %v2026 = vld [vmem:[#allocation2 + $0xe4] sm:$0xff]
        %v2027 = vld [vmem:[#allocation2 + $0xec] sm:$0xff]
        %v2028 = vld [vmem:[#allocation2 + $0xf4] sm:$0xff]
        %v2029 = vld [vmem:[#allocation2 + $0xfc] sm:$0xff]
        %v2030 = vld [vmem:[#allocation2 + $0x104] sm:$0xff]
        %v2031 = vld [vmem:[#allocation2 + $0x10c] sm:$0xff]
        %v2032 = vld [vmem:[#allocation2 + $0x114] sm:$0xff]
        %v2033 = vld [vmem:[#allocation2 + $0x11c] sm:$0xff]
        %v2034 = vld [vmem:[#allocation2 + $0x124] sm:$0xff]
        %v2035 = vld [vmem:[#allocation2 + $0x12c] sm:$0xff]
        %v2036 = vld [vmem:[#allocation2 + $0x134] sm:$0xff]
        %v2037 = vld [vmem:[#allocation2 + $0x13c] sm:$0xff]
        %v2038 = vpack.c.bf16 %v2003, %v2002
        %v2039 = vpack.c.bf16 %v2005, %v2004
        %v2040 = vpack.c.bf16 %v2007, %v2006
        %v2041 = vpack.c.bf16 %v2009, %v2008
        %v2042 = vpack.c.bf16 %v2011, %v2010
        %v2043 = vpack.c.bf16 %v2013, %v2012
        %v2044 = vpack.c.bf16 %v2015, %v2014
        %v2045 = vpack.c.bf16 %v2017, %v2016
        %v2046 = vpack.c.bf16 %v2019, %v2018
        %v2047 = vpack.c.bf16 %v2021, %v2020
        %v2048 = vpack.c.bf16 %v2023, %v2022
        %v2049 = vpack.c.bf16 %v2025, %v2024
        %v2050 = vpack.c.bf16 %v2027, %v2026
        %v2051 = vpack.c.bf16 %v2029, %v2028
        %v2052 = vpack.c.bf16 %v2031, %v2030
        %v2053 = vpack.c.bf16 %v2033, %v2032
        %v2054 = vpack.c.bf16 %v2035, %v2034
        %v2055 = vpack.c.bf16 %v2037, %v2036
        %v2056 = vld [vmem:[#allocation2 + $0x25] sm:$0xff]
        %v2057 = vld [vmem:[#allocation2 + $0x2d] sm:$0xff]
        %v2058 = vld [vmem:[#allocation2 + $0x35] sm:$0xff]
        %v2059 = vld [vmem:[#allocation2 + $0x3d] sm:$0xff]
        %v2060 = vld [vmem:[#allocation2 + $0x45] sm:$0xff]
        %v2061 = vld [vmem:[#allocation2 + $0x4d] sm:$0xff]
        %v2062 = vld [vmem:[#allocation2 + $0x55] sm:$0xff]
        %v2063 = vld [vmem:[#allocation2 + $0x5d] sm:$0xff]
        %v2064 = vld [vmem:[#allocation2 + $0x65] sm:$0xff]
        %v2065 = vld [vmem:[#allocation2 + $0x6d] sm:$0xff]
        %v2066 = vld [vmem:[#allocation2 + $0x75] sm:$0xff]
        %v2067 = vld [vmem:[#allocation2 + $0x7d] sm:$0xff]
        %v2068 = vld [vmem:[#allocation2 + $0x85] sm:$0xff]
        %v2069 = vld [vmem:[#allocation2 + $0x8d] sm:$0xff]
        %v2070 = vld [vmem:[#allocation2 + $0x95] sm:$0xff]
        %v2071 = vld [vmem:[#allocation2 + $0x9d] sm:$0xff]
        %v2072 = vld [vmem:[#allocation2 + $0xa5] sm:$0xff]
        %v2073 = vld [vmem:[#allocation2 + $0xad] sm:$0xff]
        %v2074 = vld [vmem:[#allocation2 + $0xb5] sm:$0xff]
        %v2075 = vld [vmem:[#allocation2 + $0xbd] sm:$0xff]
        %v2076 = vld [vmem:[#allocation2 + $0xc5] sm:$0xff]
        %v2077 = vld [vmem:[#allocation2 + $0xcd] sm:$0xff]
        %v2078 = vld [vmem:[#allocation2 + $0xd5] sm:$0xff]
        %v2079 = vld [vmem:[#allocation2 + $0xdd] sm:$0xff]
        %v2080 = vld [vmem:[#allocation2 + $0xe5] sm:$0xff]
        %v2081 = vld [vmem:[#allocation2 + $0xed] sm:$0xff]
        %v2082 = vld [vmem:[#allocation2 + $0xf5] sm:$0xff]
        %v2083 = vld [vmem:[#allocation2 + $0xfd] sm:$0xff]
        %v2084 = vld [vmem:[#allocation2 + $0x105] sm:$0xff]
        %v2085 = vld [vmem:[#allocation2 + $0x10d] sm:$0xff]
        %v2086 = vld [vmem:[#allocation2 + $0x115] sm:$0xff]
        %v2087 = vld [vmem:[#allocation2 + $0x11d] sm:$0xff]
        %v2088 = vld [vmem:[#allocation2 + $0x125] sm:$0xff]
        %v2089 = vld [vmem:[#allocation2 + $0x12d] sm:$0xff]
        %v2090 = vld [vmem:[#allocation2 + $0x135] sm:$0xff]
        %v2091 = vld [vmem:[#allocation2 + $0x13d] sm:$0xff]
        %v2092 = vpack.c.bf16 %v2057, %v2056
        %v2093 = vpack.c.bf16 %v2059, %v2058
        %v2094 = vpack.c.bf16 %v2061, %v2060
        %v2095 = vpack.c.bf16 %v2063, %v2062
        %v2096 = vpack.c.bf16 %v2065, %v2064
        %v2097 = vpack.c.bf16 %v2067, %v2066
        %v2098 = vpack.c.bf16 %v2069, %v2068
        %v2099 = vpack.c.bf16 %v2071, %v2070
        %v2100 = vpack.c.bf16 %v2073, %v2072
        %v2101 = vpack.c.bf16 %v2075, %v2074
        %v2102 = vpack.c.bf16 %v2077, %v2076
        %v2103 = vpack.c.bf16 %v2079, %v2078
        %v2104 = vpack.c.bf16 %v2081, %v2080
        %v2105 = vpack.c.bf16 %v2083, %v2082
        %v2106 = vpack.c.bf16 %v2085, %v2084
        %v2107 = vpack.c.bf16 %v2087, %v2086
        %v2108 = vpack.c.bf16 %v2089, %v2088
        %v2109 = vpack.c.bf16 %v2091, %v2090
        %v2110 = vld [vmem:[#allocation2 + $0x26] sm:$0xff]
        %v2111 = vld [vmem:[#allocation2 + $0x2e] sm:$0xff]
        %v2112 = vld [vmem:[#allocation2 + $0x36] sm:$0xff]
        %v2113 = vld [vmem:[#allocation2 + $0x3e] sm:$0xff]
        %v2114 = vld [vmem:[#allocation2 + $0x46] sm:$0xff]
        %v2115 = vld [vmem:[#allocation2 + $0x4e] sm:$0xff]
        %v2116 = vld [vmem:[#allocation2 + $0x56] sm:$0xff]
        %v2117 = vld [vmem:[#allocation2 + $0x5e] sm:$0xff]
        %v2118 = vld [vmem:[#allocation2 + $0x66] sm:$0xff]
        %v2119 = vld [vmem:[#allocation2 + $0x6e] sm:$0xff]
        %v2120 = vld [vmem:[#allocation2 + $0x76] sm:$0xff]
        %v2121 = vld [vmem:[#allocation2 + $0x7e] sm:$0xff]
        %v2122 = vld [vmem:[#allocation2 + $0x86] sm:$0xff]
        %v2123 = vld [vmem:[#allocation2 + $0x8e] sm:$0xff]
        %v2124 = vld [vmem:[#allocation2 + $0x96] sm:$0xff]
        %v2125 = vld [vmem:[#allocation2 + $0x9e] sm:$0xff]
        %v2126 = vld [vmem:[#allocation2 + $0xa6] sm:$0xff]
        %v2127 = vld [vmem:[#allocation2 + $0xae] sm:$0xff]
        %v2128 = vld [vmem:[#allocation2 + $0xb6] sm:$0xff]
        %v2129 = vld [vmem:[#allocation2 + $0xbe] sm:$0xff]
        %v2130 = vld [vmem:[#allocation2 + $0xc6] sm:$0xff]
        %v2131 = vld [vmem:[#allocation2 + $0xce] sm:$0xff]
        %v2132 = vld [vmem:[#allocation2 + $0xd6] sm:$0xff]
        %v2133 = vld [vmem:[#allocation2 + $0xde] sm:$0xff]
        %v2134 = vld [vmem:[#allocation2 + $0xe6] sm:$0xff]
        %v2135 = vld [vmem:[#allocation2 + $0xee] sm:$0xff]
        %v2136 = vld [vmem:[#allocation2 + $0xf6] sm:$0xff]
        %v2137 = vld [vmem:[#allocation2 + $0xfe] sm:$0xff]
        %v2138 = vld [vmem:[#allocation2 + $0x106] sm:$0xff]
        %v2139 = vld [vmem:[#allocation2 + $0x10e] sm:$0xff]
        %v2140 = vld [vmem:[#allocation2 + $0x116] sm:$0xff]
        %v2141 = vld [vmem:[#allocation2 + $0x11e] sm:$0xff]
        %v2142 = vld [vmem:[#allocation2 + $0x126] sm:$0xff]
        %v2143 = vld [vmem:[#allocation2 + $0x12e] sm:$0xff]
        %v2144 = vld [vmem:[#allocation2 + $0x136] sm:$0xff]
        %v2145 = vld [vmem:[#allocation2 + $0x13e] sm:$0xff]
        %v2146 = vpack.c.bf16 %v2111, %v2110
        %v2147 = vpack.c.bf16 %v2113, %v2112
        %v2148 = vpack.c.bf16 %v2115, %v2114
        %v2149 = vpack.c.bf16 %v2117, %v2116
        %v2150 = vpack.c.bf16 %v2119, %v2118
        %v2151 = vpack.c.bf16 %v2121, %v2120
        %v2152 = vpack.c.bf16 %v2123, %v2122
        %v2153 = vpack.c.bf16 %v2125, %v2124
        %v2154 = vpack.c.bf16 %v2127, %v2126
        %v2155 = vpack.c.bf16 %v2129, %v2128
        %v2156 = vpack.c.bf16 %v2131, %v2130
        %v2157 = vpack.c.bf16 %v2133, %v2132
        %v2158 = vpack.c.bf16 %v2135, %v2134
        %v2159 = vpack.c.bf16 %v2137, %v2136
        %v2160 = vpack.c.bf16 %v2139, %v2138
        %v2161 = vpack.c.bf16 %v2141, %v2140
        %v2162 = vpack.c.bf16 %v2143, %v2142
        %v2163 = vpack.c.bf16 %v2145, %v2144
        %s2164 = scalar_lea.vmem %s1, 384
        %v2165 = vld [vmem:[%s2164] sm:$0xf]
        %v2166 = vld [vmem:[%s2164 + $0x4] sm:$0xf]
        %v2167 = vld [vmem:[%s2164 + $0x8] sm:$0xf]
        %v2168 = vld [vmem:[%s2164 + $0xc] sm:$0xf]
        %v2169 = vld [vmem:[%s2164 + $0x10] sm:$0xf]
        %v2170 = vld [vmem:[%s2164 + $0x14] sm:$0xf]
        %v2171 = vld [vmem:[%s2164 + $0x18] sm:$0xf]
        %v2172 = vld [vmem:[%s2164 + $0x1c] sm:$0xf]
        %v2173 = vld [vmem:[%s2164 + $0x20] sm:$0xf]
        %v2174 = vld [vmem:[%s2164 + $0x24] sm:$0xf]
        %v2175 = vld [vmem:[%s2164 + $0x28] sm:$0xf]
        %v2176 = vld [vmem:[%s2164 + $0x2c] sm:$0xf]
        %v2177 = vld [vmem:[%s2164 + $0x30] sm:$0xf]
        %v2178 = vld [vmem:[%s2164 + $0x34] sm:$0xf]
        %v2179 = vld [vmem:[%s2164 + $0x38] sm:$0xf]
        %v2180 = vld [vmem:[%s2164 + $0x3c] sm:$0xf]
        %v2181 = vld [vmem:[%s2164 + $0x40] sm:$0xf]
        %v2182 = vld [vmem:[%s2164 + $0x44] sm:$0xf]
        %v2183 = vld [vmem:[%s2164 + $0x48] sm:$0xf]
        %v2184 = vld [vmem:[%s2164 + $0x4c] sm:$0xf]
        %v2185 = vld [vmem:[%s2164 + $0x50] sm:$0xf]
        %v2186 = vld [vmem:[%s2164 + $0x54] sm:$0xf]
        %v2187 = vld [vmem:[%s2164 + $0x58] sm:$0xf]
        %v2188 = vld [vmem:[%s2164 + $0x5c] sm:$0xf]
        %v2189 = vld [vmem:[%s2164 + $0x60] sm:$0xf]
        %v2190 = vld [vmem:[%s2164 + $0x64] sm:$0xf]
        %v2191 = vld [vmem:[%s2164 + $0x68] sm:$0xf]
        %v2192 = vld [vmem:[%s2164 + $0x6c] sm:$0xf]
        %v2193 = vld [vmem:[%s2164 + $0x70] sm:$0xf]
        %v2194 = vld [vmem:[%s2164 + $0x74] sm:$0xf]
        %v2195 = vld [vmem:[%s2164 + $0x78] sm:$0xf]
        %v2196 = vld [vmem:[%s2164 + $0x7c] sm:$0xf]
        %v2197 = vld [vmem:[%s2164 + $0x80] sm:$0xf]
        %v2198 = vld [vmem:[%s2164 + $0x84] sm:$0xf]
        %v2199 = vld [vmem:[%s2164 + $0x88] sm:$0xf]
        %v2200 = vld [vmem:[%s2164 + $0x8c] sm:$0xf]
        %v2201 = vld [vmem:[%s2164 + $0x90] sm:$0xf]
        %v2202 = vld [vmem:[%s2164 + $0x94] sm:$0xf]
        %v2203 = vld [vmem:[%s2164 + $0x98] sm:$0xf]
        %v2204 = vld [vmem:[%s2164 + $0x9c] sm:$0xf]
        %v2205 = vld [vmem:[%s2164 + $0xa0] sm:$0xf]
        %v2206 = vld [vmem:[%s2164 + $0xa4] sm:$0xf]
        %v2207 = vld [vmem:[%s2164 + $0xa8] sm:$0xf]
        %v2208 = vld [vmem:[%s2164 + $0xac] sm:$0xf]
        %v2209 = vld [vmem:[%s2164 + $0xb0] sm:$0xf]
        %v2210 = vld [vmem:[%s2164 + $0xb4] sm:$0xf]
        %v2211 = vld [vmem:[%s2164 + $0xb8] sm:$0xf]
        %v2212 = vld [vmem:[%s2164 + $0xbc] sm:$0xf]
        %v2261 = vunpack.c.l.b16 %v2165
        %v2262 = vunpack.c.l.b16 %v2166
        %v2263 = vunpack.c.l.b16 %v2167
        %v2264 = vunpack.c.l.b16 %v2168
        %v2265 = vunpack.c.l.b16 %v2169
        %v2266 = vunpack.c.l.b16 %v2170
        %v2267 = vunpack.c.l.b16 %v2171
        %v2268 = vunpack.c.l.b16 %v2172
        %v2269 = vunpack.c.l.b16 %v2173
        %v2270 = vunpack.c.l.b16 %v2174
        %v2271 = vunpack.c.l.b16 %v2175
        %v2272 = vunpack.c.l.b16 %v2176
        %v2273 = vunpack.c.l.b16 %v2177
        %v2274 = vunpack.c.l.b16 %v2178
        %v2275 = vunpack.c.l.b16 %v2179
        %v2276 = vunpack.c.l.b16 %v2180
        %v2277 = vunpack.c.l.b16 %v2181
        %v2278 = vunpack.c.l.b16 %v2182
        %v2279 = vunpack.c.l.b16 %v2183
        %v2280 = vunpack.c.l.b16 %v2184
        %v2281 = vunpack.c.l.b16 %v2185
        %v2282 = vunpack.c.l.b16 %v2186
        %v2283 = vunpack.c.l.b16 %v2187
        %v2284 = vunpack.c.l.b16 %v2188
        %v2285 = vunpack.c.l.b16 %v2189
        %v2286 = vunpack.c.l.b16 %v2190
        %v2287 = vunpack.c.l.b16 %v2191
        %v2288 = vunpack.c.l.b16 %v2192
        %v2289 = vunpack.c.l.b16 %v2193
        %v2290 = vunpack.c.l.b16 %v2194
        %v2291 = vunpack.c.l.b16 %v2195
        %v2292 = vunpack.c.l.b16 %v2196
        %v2293 = vunpack.c.l.b16 %v2197
        %v2294 = vunpack.c.l.b16 %v2198
        %v2295 = vunpack.c.l.b16 %v2199
        %v2296 = vunpack.c.l.b16 %v2200
        %v2297 = vunpack.c.l.b16 %v2201
        %v2298 = vunpack.c.l.b16 %v2202
        %v2299 = vunpack.c.l.b16 %v2203
        %v2300 = vunpack.c.l.b16 %v2204
        %v2301 = vunpack.c.l.b16 %v2205
        %v2302 = vunpack.c.l.b16 %v2206
        %v2303 = vunpack.c.l.b16 %v2207
        %v2304 = vunpack.c.l.b16 %v2208
        %v2305 = vunpack.c.l.b16 %v2209
        %v2306 = vunpack.c.l.b16 %v2210
        %v2307 = vunpack.c.l.b16 %v2211
        %v2308 = vunpack.c.l.b16 %v2212
        %v2309 = vpack.c.b16 %v2262, %v2261
        %v2310 = vpack.c.b16 %v2264, %v2263
        %v2311 = vpack.c.b16 %v2266, %v2265
        %v2312 = vpack.c.b16 %v2268, %v2267
        %v2313 = vpack.c.b16 %v2270, %v2269
        %v2314 = vpack.c.b16 %v2272, %v2271
        %v2315 = vpack.c.b16 %v2274, %v2273
        %v2316 = vpack.c.b16 %v2276, %v2275
        %v2317 = vpack.c.b16 %v2278, %v2277
        %v2318 = vpack.c.b16 %v2280, %v2279
        %v2319 = vpack.c.b16 %v2282, %v2281
        %v2320 = vpack.c.b16 %v2284, %v2283
        %v2321 = vpack.c.b16 %v2286, %v2285
        %v2322 = vpack.c.b16 %v2288, %v2287
        %v2323 = vpack.c.b16 %v2290, %v2289
        %v2324 = vpack.c.b16 %v2292, %v2291
        %v2325 = vpack.c.b16 %v2294, %v2293
        %v2326 = vpack.c.b16 %v2296, %v2295
        %v2327 = vpack.c.b16 %v2298, %v2297
        %v2328 = vpack.c.b16 %v2300, %v2299
        %v2329 = vpack.c.b16 %v2302, %v2301
        %v2330 = vpack.c.b16 %v2304, %v2303
        %v2331 = vpack.c.b16 %v2306, %v2305
        %v2332 = vpack.c.b16 %v2308, %v2307
        %2357 = vmatprep.subr.bf16.mxu0 0
        %2358 = vmatpush1.bf16.msra.mxu0 %v2309
        %2359 = vmatprep.subr.bf16.mxu0 0
        %2360 = vmatpush1.bf16.msra.mxu0 %v2310
        %2361 = vmatprep.subr.bf16.mxu0 0
        %2362 = vmatpush1.bf16.msra.mxu0 %v2311
        %2363 = vmatprep.subr.bf16.mxu0 0
        %2364 = vmatpush1.bf16.msra.mxu0 %v2312
        %2365 = vmatprep.subr.bf16.mxu0 0
        %2366 = vmatpush1.bf16.msra.mxu0 %v2313
        %2367 = vmatprep.subr.bf16.mxu0 0
        %2368 = vmatpush1.bf16.msra.mxu0 %v2314
        %2369 = vmatprep.subr.bf16.mxu0 0
        %2370 = vmatpush1.bf16.msra.mxu0 %v2315
        %2371 = vmatprep.subr.bf16.mxu0 0
        %2372 = vmatpush1.bf16.msra.mxu0 %v2316
        %2373 = vmatprep.subr.bf16.mxu0 0
        %2374 = vmatpush1.bf16.msra.mxu0 %v2317
        %2375 = vmatprep.subr.bf16.mxu0 0
        %2376 = vmatpush1.bf16.msra.mxu0 %v2318
        %2377 = vmatprep.subr.bf16.mxu0 0
        %2378 = vmatpush1.bf16.msra.mxu0 %v2319
        %2379 = vmatprep.subr.bf16.mxu0 0
        %2380 = vmatpush1.bf16.msra.mxu0 %v2320
        %2381 = vmatprep.subr.bf16.mxu0 0
        %2382 = vmatpush1.bf16.msra.mxu0 %v2321
        %2383 = vmatprep.subr.bf16.mxu0 0
        %2384 = vmatpush1.bf16.msra.mxu0 %v2322
        %2385 = vmatprep.subr.bf16.mxu0 0
        %2386 = vmatpush1.bf16.msra.mxu0 %v2323
        %2387 = vmatprep.subr.bf16.mxu0 0
        %2388 = vmatpush1.bf16.msra.mxu0 %v2324
        %2389 = vmatprep.mubr.bf16.mxu0 %v2092
        %2390 = vmatmul.mubr.bf16.gmra.mrb[0].mxu0 %v2038
        %v2391 = vpop.f32.mrb[0].mxu0
        %v2392 = vadd.f32 0.0, %v2391
        %v2393 = vpop.f32.mrb[0].mxu0
        %v2394 = vpop.f32.mrb[0].mxu0
        %v2395 = vadd.f32 0.0, %v2394
        %v2396 = vpop.f32.mrb[0].mxu0
        %2397 = vmatprep.mubr.bf16.mxu0 %v2093
        %2398 = vmatmul.mubr.bf16.gmra.mrb[0].mxu0 %v2039
        %v2399 = vpop.f32.mrb[0].mxu0
        %v2400 = vadd.f32 0.0, %v2399
        %v2401 = vpop.f32.mrb[0].mxu0
        %v2402 = vpop.f32.mrb[0].mxu0
        %v2403 = vadd.f32 0.0, %v2402
        %v2404 = vpop.f32.mrb[0].mxu0
        %2405 = vmatprep.mubr.bf16.mxu0 %v2094
        %2406 = vmatmul.mubr.bf16.gmra.mrb[0].mxu0 %v2040
        %v2407 = vpop.f32.mrb[0].mxu0
        %v2408 = vadd.f32 0.0, %v2407
        %v2409 = vpop.f32.mrb[0].mxu0
        %v2410 = vpop.f32.mrb[0].mxu0
        %v2411 = vadd.f32 0.0, %v2410
        %v2412 = vpop.f32.mrb[0].mxu0
        %2413 = vmatprep.mubr.bf16.mxu0 %v2095
        %2414 = vmatmul.mubr.bf16.gmra.mrb[0].mxu0 %v2041
        %v2415 = vpop.f32.mrb[0].mxu0
        %v2416 = vadd.f32 0.0, %v2415
        %v2417 = vpop.f32.mrb[0].mxu0
        %v2418 = vpop.f32.mrb[0].mxu0
        %v2419 = vadd.f32 0.0, %v2418
        %v2420 = vpop.f32.mrb[0].mxu0
        %2421 = vmatprep.mubr.bf16.mxu0 %v2096
        %2422 = vmatmul.mubr.bf16.gmra.mrb[0].mxu0 %v2042
        %v2423 = vpop.f32.mrb[0].mxu0
        %v2424 = vadd.f32 0.0, %v2423
        %v2425 = vpop.f32.mrb[0].mxu0
        %v2426 = vpop.f32.mrb[0].mxu0
        %v2427 = vadd.f32 0.0, %v2426
        %v2428 = vpop.f32.mrb[0].mxu0
        %2429 = vmatprep.mubr.bf16.mxu0 %v2097
        %2430 = vmatmul.mubr.bf16.gmra.mrb[0].mxu0 %v2043
        %v2431 = vpop.f32.mrb[0].mxu0
        %v2432 = vadd.f32 0.0, %v2431
        %v2433 = vpop.f32.mrb[0].mxu0
        %v2434 = vpop.f32.mrb[0].mxu0
        %v2435 = vadd.f32 0.0, %v2434
        %v2436 = vpop.f32.mrb[0].mxu0
        %2437 = vmatprep.mubr.bf16.mxu0 %v2098
        %2438 = vmatmul.mubr.bf16.gmra.mrb[0].mxu0 %v2044
        %v2439 = vpop.f32.mrb[0].mxu0
        %v2440 = vadd.f32 0.0, %v2439
        %v2441 = vpop.f32.mrb[0].mxu0
        %v2442 = vpop.f32.mrb[0].mxu0
        %v2443 = vadd.f32 0.0, %v2442
        %v2444 = vpop.f32.mrb[0].mxu0
        %2445 = vmatprep.mubr.bf16.mxu0 %v2099
        %2446 = vmatmul.mubr.bf16.gmra.mrb[0].mxu0 %v2045
        %v2447 = vpop.f32.mrb[0].mxu0
        %v2448 = vadd.f32 0.0, %v2447
        %v2449 = vpop.f32.mrb[0].mxu0
        %v2450 = vpop.f32.mrb[0].mxu0
        %v2451 = vadd.f32 0.0, %v2450
        %v2452 = vpop.f32.mrb[0].mxu0
        %2453 = vmatprep.mubr.bf16.mxu0 %v2100
        %2454 = vmatmul.mubr.bf16.gmra.mrb[0].mxu0 %v2046
        %v2455 = vpop.f32.mrb[0].mxu0
        %v2456 = vadd.f32 0.0, %v2455
        %v2457 = vpop.f32.mrb[0].mxu0
        %v2458 = vpop.f32.mrb[0].mxu0
        %v2459 = vadd.f32 0.0, %v2458
        %v2460 = vpop.f32.mrb[0].mxu0
        %2461 = vmatprep.mubr.bf16.mxu0 %v2101
        %2462 = vmatmul.mubr.bf16.gmra.mrb[0].mxu0 %v2047
        %v2463 = vpop.f32.mrb[0].mxu0
        %v2464 = vadd.f32 0.0, %v2463
        %v2465 = vpop.f32.mrb[0].mxu0
        %v2466 = vpop.f32.mrb[0].mxu0
        %v2467 = vadd.f32 0.0, %v2466
        %v2468 = vpop.f32.mrb[0].mxu0
        %2469 = vmatprep.mubr.bf16.mxu0 %v2102
        %2470 = vmatmul.mubr.bf16.gmra.mrb[0].mxu0 %v2048
        %v2471 = vpop.f32.mrb[0].mxu0
        %v2472 = vadd.f32 0.0, %v2471
        %v2473 = vpop.f32.mrb[0].mxu0
        %v2474 = vpop.f32.mrb[0].mxu0
        %v2475 = vadd.f32 0.0, %v2474
        %v2476 = vpop.f32.mrb[0].mxu0
        %2477 = vmatprep.mubr.bf16.mxu0 %v2103
        %2478 = vmatmul.mubr.bf16.gmra.mrb[0].mxu0 %v2049
        %v2479 = vpop.f32.mrb[0].mxu0
        %v2480 = vadd.f32 0.0, %v2479
        %v2481 = vpop.f32.mrb[0].mxu0
        %v2482 = vpop.f32.mrb[0].mxu0
        %v2483 = vadd.f32 0.0, %v2482
        %v2484 = vpop.f32.mrb[0].mxu0
        %2485 = vmatprep.mubr.bf16.mxu0 %v2104
        %2486 = vmatmul.mubr.bf16.gmra.mrb[0].mxu0 %v2050
        %v2487 = vpop.f32.mrb[0].mxu0
        %v2488 = vadd.f32 0.0, %v2487
        %v2489 = vpop.f32.mrb[0].mxu0
        %v2490 = vpop.f32.mrb[0].mxu0
        %v2491 = vadd.f32 0.0, %v2490
        %v2492 = vpop.f32.mrb[0].mxu0
        %2493 = vmatprep.mubr.bf16.mxu0 %v2105
        %2494 = vmatmul.mubr.bf16.gmra.mrb[0].mxu0 %v2051
        %v2495 = vpop.f32.mrb[0].mxu0
        %v2496 = vadd.f32 0.0, %v2495
        %v2497 = vpop.f32.mrb[0].mxu0
        %v2498 = vpop.f32.mrb[0].mxu0
        %v2499 = vadd.f32 0.0, %v2498
        %v2500 = vpop.f32.mrb[0].mxu0
        %2501 = vmatprep.mubr.bf16.mxu0 %v2106
        %2502 = vmatmul.mubr.bf16.gmra.mrb[0].mxu0 %v2052
        %v2503 = vpop.f32.mrb[0].mxu0
        %v2504 = vadd.f32 0.0, %v2503
        %v2505 = vpop.f32.mrb[0].mxu0
        %v2506 = vpop.f32.mrb[0].mxu0
        %v2507 = vadd.f32 0.0, %v2506
        %v2508 = vpop.f32.mrb[0].mxu0
        %2509 = vmatprep.mubr.bf16.mxu0 %v2107
        %2510 = vmatmul.mubr.bf16.gmra.mrb[0].mxu0 %v2053
        %v2511 = vpop.f32.mrb[0].mxu0
        %v2512 = vadd.f32 0.0, %v2511
        %v2513 = vpop.f32.mrb[0].mxu0
        %v2514 = vpop.f32.mrb[0].mxu0
        %v2515 = vadd.f32 0.0, %v2514
        %v2516 = vpop.f32.mrb[0].mxu0
        %2517 = vmatprep.mubr.bf16.mxu0 %v2108
        %2518 = vmatmul.mubr.bf16.gmra.mrb[0].mxu0 %v2054
        %v2519 = vpop.f32.mrb[0].mxu0
        %v2520 = vadd.f32 0.0, %v2519
        %v2521 = vpop.f32.mrb[0].mxu0
        %v2522 = vpop.f32.mrb[0].mxu0
        %v2523 = vadd.f32 0.0, %v2522
        %v2524 = vpop.f32.mrb[0].mxu0
        %2525 = vmatprep.mubr.bf16.mxu0 %v2109
        %2526 = vmatmul.mubr.bf16.gmra.mrb[0].mxu0 %v2055
        %v2527 = vpop.f32.mrb[0].mxu0
        %v2528 = vadd.f32 0.0, %v2527
        %v2529 = vpop.f32.mrb[0].mxu0
        %v2530 = vpop.f32.mrb[0].mxu0
        %v2531 = vadd.f32 0.0, %v2530
        %v2532 = vpop.f32.mrb[0].mxu0
        %2533 = vdwg.mxu0
        %2534 = vmatprep.subr.bf16.mxu0 0
        %2535 = vmatpush1.bf16.msra.mxu0 %v2325
        %2536 = vmatprep.subr.bf16.mxu0 0
        %2537 = vmatpush1.bf16.msra.mxu0 %v2326
        %2538 = vmatprep.subr.bf16.mxu0 0
        %2539 = vmatpush1.bf16.msra.mxu0 %v2327
        %2540 = vmatprep.subr.bf16.mxu0 0
        %2541 = vmatpush1.bf16.msra.mxu0 %v2328
        %2542 = vmatprep.subr.bf16.mxu0 0
        %2543 = vmatpush1.bf16.msra.mxu0 %v2329
        %2544 = vmatprep.subr.bf16.mxu0 0
        %2545 = vmatpush1.bf16.msra.mxu0 %v2330
        %2546 = vmatprep.subr.bf16.mxu0 0
        %2547 = vmatpush1.bf16.msra.mxu0 %v2331
        %2548 = vmatprep.subr.bf16.mxu0 0
        %2549 = vmatpush1.bf16.msra.mxu0 %v2332
        %2550 = vmatprep.subr.bf16.mxu0 0
        %2551 = vmatpush1.bf16.msra.mxu0 0
        %2552 = vmatprep.subr.bf16.mxu0 0
        %2553 = vmatpush1.bf16.msra.mxu0 0
        %2554 = vmatprep.subr.bf16.mxu0 0
        %2555 = vmatpush1.bf16.msra.mxu0 0
        %2556 = vmatprep.subr.bf16.mxu0 0
        %2557 = vmatpush1.bf16.msra.mxu0 0
        %2558 = vmatprep.subr.bf16.mxu0 0
        %2559 = vmatpush1.bf16.msra.mxu0 0
        %2560 = vmatprep.subr.bf16.mxu0 0
        %2561 = vmatpush1.bf16.msra.mxu0 0
        %2562 = vmatprep.subr.bf16.mxu0 0
        %2563 = vmatpush1.bf16.msra.mxu0 0
        %2564 = vmatprep.subr.bf16.mxu0 0
        %2565 = vmatpush1.bf16.msra.mxu0 0
        %2566 = vmatprep.mubr.bf16.mxu0 0
        %2567 = vmatmul.mubr.bf16.gmra.mrb[0].mxu0 %v2146
        %v2568 = vpop.f32.mrb[0].mxu0
        %v2569 = vadd.f32 %v2392, %v2568
        %v2570 = vpop.f32.mrb[0].mxu0
        %v2571 = vpop.f32.mrb[0].mxu0
        %v2572 = vadd.f32 %v2395, %v2571
        %v2573 = vpop.f32.mrb[0].mxu0
        %2574 = vmatprep.mubr.bf16.mxu0 0
        %2575 = vmatmul.mubr.bf16.gmra.mrb[0].mxu0 %v2147
        %v2576 = vpop.f32.mrb[0].mxu0
        %v2577 = vadd.f32 %v2400, %v2576
        %v2578 = vpop.f32.mrb[0].mxu0
        %v2579 = vpop.f32.mrb[0].mxu0
        %v2580 = vadd.f32 %v2403, %v2579
        %v2581 = vpop.f32.mrb[0].mxu0
        %2582 = vmatprep.mubr.bf16.mxu0 0
        %2583 = vmatmul.mubr.bf16.gmra.mrb[0].mxu0 %v2148
        %v2584 = vpop.f32.mrb[0].mxu0
        %v2585 = vadd.f32 %v2408, %v2584
        %v2586 = vpop.f32.mrb[0].mxu0
        %v2587 = vpop.f32.mrb[0].mxu0
        %v2588 = vadd.f32 %v2411, %v2587
        %v2589 = vpop.f32.mrb[0].mxu0
        %2590 = vmatprep.mubr.bf16.mxu0 0
        %2591 = vmatmul.mubr.bf16.gmra.mrb[0].mxu0 %v2149
        %v2592 = vpop.f32.mrb[0].mxu0
        %v2593 = vadd.f32 %v2416, %v2592
        %v2594 = vpop.f32.mrb[0].mxu0
        %v2595 = vpop.f32.mrb[0].mxu0
        %v2596 = vadd.f32 %v2419, %v2595
        %v2597 = vpop.f32.mrb[0].mxu0
        %2598 = vmatprep.mubr.bf16.mxu0 0
        %2599 = vmatmul.mubr.bf16.gmra.mrb[0].mxu0 %v2150
        %v2600 = vpop.f32.mrb[0].mxu0
        %v2601 = vadd.f32 %v2424, %v2600
        %v2602 = vpop.f32.mrb[0].mxu0
        %v2603 = vpop.f32.mrb[0].mxu0
        %v2604 = vadd.f32 %v2427, %v2603
        %v2605 = vpop.f32.mrb[0].mxu0
        %2606 = vmatprep.mubr.bf16.mxu0 0
        %2607 = vmatmul.mubr.bf16.gmra.mrb[0].mxu0 %v2151
        %v2608 = vpop.f32.mrb[0].mxu0
        %v2609 = vadd.f32 %v2432, %v2608
        %v2610 = vpop.f32.mrb[0].mxu0
        %v2611 = vpop.f32.mrb[0].mxu0
        %v2612 = vadd.f32 %v2435, %v2611
        %v2613 = vpop.f32.mrb[0].mxu0
        %2614 = vmatprep.mubr.bf16.mxu0 0
        %2615 = vmatmul.mubr.bf16.gmra.mrb[0].mxu0 %v2152
        %v2616 = vpop.f32.mrb[0].mxu0
        %v2617 = vadd.f32 %v2440, %v2616
        %v2618 = vpop.f32.mrb[0].mxu0
        %v2619 = vpop.f32.mrb[0].mxu0
        %v2620 = vadd.f32 %v2443, %v2619
        %v2621 = vpop.f32.mrb[0].mxu0
        %2622 = vmatprep.mubr.bf16.mxu0 0
        %2623 = vmatmul.mubr.bf16.gmra.mrb[0].mxu0 %v2153
        %v2624 = vpop.f32.mrb[0].mxu0
        %v2625 = vadd.f32 %v2448, %v2624
        %v2626 = vpop.f32.mrb[0].mxu0
        %v2627 = vpop.f32.mrb[0].mxu0
        %v2628 = vadd.f32 %v2451, %v2627
        %v2629 = vpop.f32.mrb[0].mxu0
        %2630 = vmatprep.mubr.bf16.mxu0 0
        %2631 = vmatmul.mubr.bf16.gmra.mrb[0].mxu0 %v2154
        %v2632 = vpop.f32.mrb[0].mxu0
        %v2633 = vadd.f32 %v2456, %v2632
        %v2634 = vpop.f32.mrb[0].mxu0
        %v2635 = vpop.f32.mrb[0].mxu0
        %v2636 = vadd.f32 %v2459, %v2635
        %v2637 = vpop.f32.mrb[0].mxu0
        %2638 = vmatprep.mubr.bf16.mxu0 0
        %2639 = vmatmul.mubr.bf16.gmra.mrb[0].mxu0 %v2155
        %v2640 = vpop.f32.mrb[0].mxu0
        %v2641 = vadd.f32 %v2464, %v2640
        %v2642 = vpop.f32.mrb[0].mxu0
        %v2643 = vpop.f32.mrb[0].mxu0
        %v2644 = vadd.f32 %v2467, %v2643
        %v2645 = vpop.f32.mrb[0].mxu0
        %2646 = vmatprep.mubr.bf16.mxu0 0
        %2647 = vmatmul.mubr.bf16.gmra.mrb[0].mxu0 %v2156
        %v2648 = vpop.f32.mrb[0].mxu0
        %v2649 = vadd.f32 %v2472, %v2648
        %v2650 = vpop.f32.mrb[0].mxu0
        %v2651 = vpop.f32.mrb[0].mxu0
        %v2652 = vadd.f32 %v2475, %v2651
        %v2653 = vpop.f32.mrb[0].mxu0
        %2654 = vmatprep.mubr.bf16.mxu0 0
        %2655 = vmatmul.mubr.bf16.gmra.mrb[0].mxu0 %v2157
        %v2656 = vpop.f32.mrb[0].mxu0
        %v2657 = vadd.f32 %v2480, %v2656
        %v2658 = vpop.f32.mrb[0].mxu0
        %v2659 = vpop.f32.mrb[0].mxu0
        %v2660 = vadd.f32 %v2483, %v2659
        %v2661 = vpop.f32.mrb[0].mxu0
        %2662 = vmatprep.mubr.bf16.mxu0 0
        %2663 = vmatmul.mubr.bf16.gmra.mrb[0].mxu0 %v2158
        %v2664 = vpop.f32.mrb[0].mxu0
        %v2665 = vadd.f32 %v2488, %v2664
        %v2666 = vpop.f32.mrb[0].mxu0
        %v2667 = vpop.f32.mrb[0].mxu0
        %v2668 = vadd.f32 %v2491, %v2667
        %v2669 = vpop.f32.mrb[0].mxu0
        %2670 = vmatprep.mubr.bf16.mxu0 0
        %2671 = vmatmul.mubr.bf16.gmra.mrb[0].mxu0 %v2159
        %v2672 = vpop.f32.mrb[0].mxu0
        %v2673 = vadd.f32 %v2496, %v2672
        %v2674 = vpop.f32.mrb[0].mxu0
        %v2675 = vpop.f32.mrb[0].mxu0
        %v2676 = vadd.f32 %v2499, %v2675
        %v2677 = vpop.f32.mrb[0].mxu0
        %2678 = vmatprep.mubr.bf16.mxu0 0
        %2679 = vmatmul.mubr.bf16.gmra.mrb[0].mxu0 %v2160
        %v2680 = vpop.f32.mrb[0].mxu0
        %v2681 = vadd.f32 %v2504, %v2680
        %v2682 = vpop.f32.mrb[0].mxu0
        %v2683 = vpop.f32.mrb[0].mxu0
        %v2684 = vadd.f32 %v2507, %v2683
        %v2685 = vpop.f32.mrb[0].mxu0
        %2686 = vmatprep.mubr.bf16.mxu0 0
        %2687 = vmatmul.mubr.bf16.gmra.mrb[0].mxu0 %v2161
        %v2688 = vpop.f32.mrb[0].mxu0
        %v2689 = vadd.f32 %v2512, %v2688
        %v2690 = vpop.f32.mrb[0].mxu0
        %v2691 = vpop.f32.mrb[0].mxu0
        %v2692 = vadd.f32 %v2515, %v2691
        %v2693 = vpop.f32.mrb[0].mxu0
        %2694 = vmatprep.mubr.bf16.mxu0 0
        %2695 = vmatmul.mubr.bf16.gmra.mrb[0].mxu0 %v2162
        %v2696 = vpop.f32.mrb[0].mxu0
        %v2697 = vadd.f32 %v2520, %v2696
        %v2698 = vpop.f32.mrb[0].mxu0
        %v2699 = vpop.f32.mrb[0].mxu0
        %v2700 = vadd.f32 %v2523, %v2699
        %v2701 = vpop.f32.mrb[0].mxu0
        %2702 = vmatprep.mubr.bf16.mxu0 0
        %2703 = vmatmul.mubr.bf16.gmra.mrb[0].mxu0 %v2163
        %v2704 = vpop.f32.mrb[0].mxu0
        %v2705 = vadd.f32 %v2528, %v2704
        %v2706 = vpop.f32.mrb[0].mxu0
        %v2707 = vpop.f32.mrb[0].mxu0
        %v2708 = vadd.f32 %v2531, %v2707
        %v2709 = vpop.f32.mrb[0].mxu0
        %2710 = vdwg.mxu0
        %v2711 = vld [vmem:[#allocation4] sm:$0xff]
        %v2712 = vld [vmem:[#allocation4 + $0x8] sm:$0xff]
        %v2713 = vld [vmem:[#allocation4 + $0x10] sm:$0xff]
        %v2714 = vld [vmem:[#allocation4 + $0x18] sm:$0xff]
        %v2715 = vld [vmem:[#allocation4 + $0x20] sm:$0xff]
        %v2716 = vld [vmem:[#allocation4 + $0x28] sm:$0xff]
        %v2717 = vld [vmem:[#allocation4 + $0x30] sm:$0xff]
        %v2718 = vld [vmem:[#allocation4 + $0x38] sm:$0xff]
        %v2719 = vld [vmem:[#allocation4 + $0x40] sm:$0xff]
        %v2720 = vld [vmem:[#allocation4 + $0x48] sm:$0xff]
        %v2721 = vld [vmem:[#allocation4 + $0x50] sm:$0xff]
        %v2722 = vld [vmem:[#allocation4 + $0x58] sm:$0xff]
        %v2723 = vld [vmem:[#allocation4 + $0x60] sm:$0xff]
        %v2724 = vld [vmem:[#allocation4 + $0x68] sm:$0xff]
        %v2725 = vld [vmem:[#allocation4 + $0x70] sm:$0xff]
        %v2726 = vld [vmem:[#allocation4 + $0x78] sm:$0xff]
        %v2727 = vld [vmem:[#allocation4 + $0x80] sm:$0xff]
        %v2728 = vld [vmem:[#allocation4 + $0x88] sm:$0xff]
        %v2729 = vld [vmem:[#allocation4 + $0x90] sm:$0xff]
        %v2730 = vld [vmem:[#allocation4 + $0x98] sm:$0xff]
        %v2731 = vld [vmem:[#allocation4 + $0xa0] sm:$0xff]
        %v2732 = vld [vmem:[#allocation4 + $0xa8] sm:$0xff]
        %v2733 = vld [vmem:[#allocation4 + $0xb0] sm:$0xff]
        %v2734 = vld [vmem:[#allocation4 + $0xb8] sm:$0xff]
        %v2735 = vld [vmem:[#allocation4 + $0xc0] sm:$0xff]
        %v2736 = vld [vmem:[#allocation4 + $0xc8] sm:$0xff]
        %v2737 = vld [vmem:[#allocation4 + $0xd0] sm:$0xff]
        %v2738 = vld [vmem:[#allocation4 + $0xd8] sm:$0xff]
        %v2739 = vld [vmem:[#allocation4 + $0xe0] sm:$0xff]
        %v2740 = vld [vmem:[#allocation4 + $0xe8] sm:$0xff]
        %v2741 = vld [vmem:[#allocation4 + $0xf0] sm:$0xff]
        %v2742 = vld [vmem:[#allocation4 + $0xf8] sm:$0xff]
        %v2743 = vld [vmem:[#allocation4 + $0x100] sm:$0xff]
        %v2744 = vld [vmem:[#allocation4 + $0x108] sm:$0xff]
        %v2745 = vld [vmem:[#allocation4 + $0x110] sm:$0xff]
        %v2746 = vld [vmem:[#allocation4 + $0x118] sm:$0xff]
        %v2747 = vadd.f32 %v2711, %v2569
        %v2748 = vadd.f32 %v2712, %v2572
        %v2749 = vadd.f32 %v2713, %v2577
        %v2750 = vadd.f32 %v2714, %v2580
        %v2751 = vadd.f32 %v2715, %v2585
        %v2752 = vadd.f32 %v2716, %v2588
        %v2753 = vadd.f32 %v2717, %v2593
        %v2754 = vadd.f32 %v2718, %v2596
        %v2755 = vadd.f32 %v2719, %v2601
        %v2756 = vadd.f32 %v2720, %v2604
        %v2757 = vadd.f32 %v2721, %v2609
        %v2758 = vadd.f32 %v2722, %v2612
        %v2759 = vadd.f32 %v2723, %v2617
        %v2760 = vadd.f32 %v2724, %v2620
        %v2761 = vadd.f32 %v2725, %v2625
        %v2762 = vadd.f32 %v2726, %v2628
        %v2763 = vadd.f32 %v2727, %v2633
        %v2764 = vadd.f32 %v2728, %v2636
        %v2765 = vadd.f32 %v2729, %v2641
        %v2766 = vadd.f32 %v2730, %v2644
        %v2767 = vadd.f32 %v2731, %v2649
        %v2768 = vadd.f32 %v2732, %v2652
        %v2769 = vadd.f32 %v2733, %v2657
        %v2770 = vadd.f32 %v2734, %v2660
        %v2771 = vadd.f32 %v2735, %v2665
        %v2772 = vadd.f32 %v2736, %v2668
        %v2773 = vadd.f32 %v2737, %v2673
        %v2774 = vadd.f32 %v2738, %v2676
        %v2775 = vadd.f32 %v2739, %v2681
        %v2776 = vadd.f32 %v2740, %v2684
        %v2777 = vadd.f32 %v2741, %v2689
        %v2778 = vadd.f32 %v2742, %v2692
        %v2779 = vadd.f32 %v2743, %v2697
        %v2780 = vadd.f32 %v2744, %v2700
        %v2781 = vadd.f32 %v2745, %v2705
        %v2782 = vadd.f32 %v2746, %v2708
        %2783 = vst [vmem:[#allocation4] sm:$0xff] %v2747
        %2784 = vst [vmem:[#allocation4 + $0x8] sm:$0xff] %v2748
        %2785 = vst [vmem:[#allocation4 + $0x10] sm:$0xff] %v2749
        %2786 = vst [vmem:[#allocation4 + $0x18] sm:$0xff] %v2750
        %2787 = vst [vmem:[#allocation4 + $0x20] sm:$0xff] %v2751
        %2788 = vst [vmem:[#allocation4 + $0x28] sm:$0xff] %v2752
        %2789 = vst [vmem:[#allocation4 + $0x30] sm:$0xff] %v2753
        %2790 = vst [vmem:[#allocation4 + $0x38] sm:$0xff] %v2754
        %2791 = vst [vmem:[#allocation4 + $0x40] sm:$0xff] %v2755
        %2792 = vst [vmem:[#allocation4 + $0x48] sm:$0xff] %v2756
        %2793 = vst [vmem:[#allocation4 + $0x50] sm:$0xff] %v2757
        %2794 = vst [vmem:[#allocation4 + $0x58] sm:$0xff] %v2758
        %2795 = vst [vmem:[#allocation4 + $0x60] sm:$0xff] %v2759
        %2796 = vst [vmem:[#allocation4 + $0x68] sm:$0xff] %v2760
        %2797 = vst [vmem:[#allocation4 + $0x70] sm:$0xff] %v2761
        %2798 = vst [vmem:[#allocation4 + $0x78] sm:$0xff] %v2762
        %2799 = vst [vmem:[#allocation4 + $0x80] sm:$0xff] %v2763
        %2800 = vst [vmem:[#allocation4 + $0x88] sm:$0xff] %v2764
        %2801 = vst [vmem:[#allocation4 + $0x90] sm:$0xff] %v2765
        %2802 = vst [vmem:[#allocation4 + $0x98] sm:$0xff] %v2766
        %2803 = vst [vmem:[#allocation4 + $0xa0] sm:$0xff] %v2767
        %2804 = vst [vmem:[#allocation4 + $0xa8] sm:$0xff] %v2768
        %2805 = vst [vmem:[#allocation4 + $0xb0] sm:$0xff] %v2769
        %2806 = vst [vmem:[#allocation4 + $0xb8] sm:$0xff] %v2770
        %2807 = vst [vmem:[#allocation4 + $0xc0] sm:$0xff] %v2771
        %2808 = vst [vmem:[#allocation4 + $0xc8] sm:$0xff] %v2772
        %2809 = vst [vmem:[#allocation4 + $0xd0] sm:$0xff] %v2773
        %2810 = vst [vmem:[#allocation4 + $0xd8] sm:$0xff] %v2774
        %2811 = vst [vmem:[#allocation4 + $0xe0] sm:$0xff] %v2775
        %2812 = vst [vmem:[#allocation4 + $0xe8] sm:$0xff] %v2776
        %2813 = vst [vmem:[#allocation4 + $0xf0] sm:$0xff] %v2777
        %2814 = vst [vmem:[#allocation4 + $0xf8] sm:$0xff] %v2778
        %2815 = vst [vmem:[#allocation4 + $0x100] sm:$0xff] %v2779
        %2816 = vst [vmem:[#allocation4 + $0x108] sm:$0xff] %v2780
        %2817 = vst [vmem:[#allocation4 + $0x110] sm:$0xff] %v2781
        %2818 = vst [vmem:[#allocation4 + $0x118] sm:$0xff] %v2782
        %v2819 = vld [vmem:[#allocation4] sm:$0xff]
        %v2820 = vld [vmem:[#allocation4 + $0x8] sm:$0xff]
        %v2821 = vld [vmem:[#allocation4 + $0x10] sm:$0xff]
        %v2822 = vld [vmem:[#allocation4 + $0x18] sm:$0xff]
        %v2823 = vld [vmem:[#allocation4 + $0x20] sm:$0xff]
        %v2824 = vld [vmem:[#allocation4 + $0x28] sm:$0xff]
        %v2825 = vld [vmem:[#allocation4 + $0x30] sm:$0xff]
        %v2826 = vld [vmem:[#allocation4 + $0x38] sm:$0xff]
        %v2827 = vld [vmem:[#allocation4 + $0x40] sm:$0xff]
        %v2828 = vld [vmem:[#allocation4 + $0x48] sm:$0xff]
        %v2829 = vld [vmem:[#allocation4 + $0x50] sm:$0xff]
        %v2830 = vld [vmem:[#allocation4 + $0x58] sm:$0xff]
        %v2831 = vld [vmem:[#allocation4 + $0x60] sm:$0xff]
        %v2832 = vld [vmem:[#allocation4 + $0x68] sm:$0xff]
        %v2833 = vld [vmem:[#allocation4 + $0x70] sm:$0xff]
        %v2834 = vld [vmem:[#allocation4 + $0x78] sm:$0xff]
        %v2835 = vld [vmem:[#allocation4 + $0x80] sm:$0xff]
        %v2836 = vld [vmem:[#allocation4 + $0x88] sm:$0xff]
        %v2837 = vld [vmem:[#allocation4 + $0x90] sm:$0xff]
        %v2838 = vld [vmem:[#allocation4 + $0x98] sm:$0xff]
        %v2839 = vld [vmem:[#allocation4 + $0xa0] sm:$0xff]
        %v2840 = vld [vmem:[#allocation4 + $0xa8] sm:$0xff]
        %v2841 = vld [vmem:[#allocation4 + $0xb0] sm:$0xff]
        %v2842 = vld [vmem:[#allocation4 + $0xb8] sm:$0xff]
        %v2843 = vld [vmem:[#allocation4 + $0xc0] sm:$0xff]
        %v2844 = vld [vmem:[#allocation4 + $0xc8] sm:$0xff]
        %v2845 = vld [vmem:[#allocation4 + $0xd0] sm:$0xff]
        %v2846 = vld [vmem:[#allocation4 + $0xd8] sm:$0xff]
        %v2847 = vld [vmem:[#allocation4 + $0xe0] sm:$0xff]
        %v2848 = vld [vmem:[#allocation4 + $0xe8] sm:$0xff]
        %v2849 = vld [vmem:[#allocation4 + $0xf0] sm:$0xff]
        %v2850 = vld [vmem:[#allocation4 + $0xf8] sm:$0xff]
        %v2851 = vld [vmem:[#allocation4 + $0x100] sm:$0xff]
        %v2852 = vld [vmem:[#allocation4 + $0x108] sm:$0xff]
        %v2853 = vld [vmem:[#allocation4 + $0x110] sm:$0xff]
        %v2854 = vld [vmem:[#allocation4 + $0x118] sm:$0xff]
        %v2855 = vld [vmem:[%s2] sm:$0x1]
        %v2857 = vlaneseq
        %v2858 = vshrl.u32 %v2857, 7
        %v2859 = vsub.s32 0, %v2858
        %v2860 = vrot.slane %v2855, %v2859
        %v2862 = vmul.f32 %v2819, %v2860
        %v2863 = vmul.f32 %v2820, %v2860
        %v2864 = vmul.f32 %v2821, %v2860
        %v2865 = vmul.f32 %v2822, %v2860
        %v2866 = vmul.f32 %v2823, %v2860
        %v2867 = vmul.f32 %v2824, %v2860
        %v2868 = vmul.f32 %v2825, %v2860
        %v2869 = vmul.f32 %v2826, %v2860
        %v2870 = vmul.f32 %v2827, %v2860
        %v2871 = vmul.f32 %v2828, %v2860
        %v2872 = vmul.f32 %v2829, %v2860
        %v2873 = vmul.f32 %v2830, %v2860
        %v2874 = vmul.f32 %v2831, %v2860
        %v2875 = vmul.f32 %v2832, %v2860
        %v2876 = vmul.f32 %v2833, %v2860
        %v2877 = vmul.f32 %v2834, %v2860
        %v2878 = vmul.f32 %v2835, %v2860
        %v2879 = vmul.f32 %v2836, %v2860
        %v2880 = vmul.f32 %v2837, %v2860
        %v2881 = vmul.f32 %v2838, %v2860
        %v2882 = vmul.f32 %v2839, %v2860
        %v2883 = vmul.f32 %v2840, %v2860
        %v2884 = vmul.f32 %v2841, %v2860
        %v2885 = vmul.f32 %v2842, %v2860
        %v2886 = vmul.f32 %v2843, %v2860
        %v2887 = vmul.f32 %v2844, %v2860
        %v2888 = vmul.f32 %v2845, %v2860
        %v2889 = vmul.f32 %v2846, %v2860
        %v2890 = vmul.f32 %v2847, %v2860
        %v2891 = vmul.f32 %v2848, %v2860
        %v2892 = vmul.f32 %v2849, %v2860
        %v2893 = vmul.f32 %v2850, %v2860
        %v2894 = vmul.f32 %v2851, %v2860
        %v2895 = vmul.f32 %v2852, %v2860
        %v2896 = vmul.f32 %v2853, %v2860
        %v2897 = vmul.f32 %v2854, %v2860
        %v2898 = vld [vmem:[%s3] sm:$0x1]
        %v2900 = vlaneseq
        %v2901 = vshrl.u32 %v2900, 7
        %v2902 = vsub.s32 0, %v2901
        %v2903 = vrot.slane %v2898, %v2902
        %v2905 = vadd.f32 %v2862, %v2903
        %v2906 = vadd.f32 %v2863, %v2903
        %v2907 = vadd.f32 %v2864, %v2903
        %v2908 = vadd.f32 %v2865, %v2903
        %v2909 = vadd.f32 %v2866, %v2903
        %v2910 = vadd.f32 %v2867, %v2903
        %v2911 = vadd.f32 %v2868, %v2903
        %v2912 = vadd.f32 %v2869, %v2903
        %v2913 = vadd.f32 %v2870, %v2903
        %v2914 = vadd.f32 %v2871, %v2903
        %v2915 = vadd.f32 %v2872, %v2903
        %v2916 = vadd.f32 %v2873, %v2903
        %v2917 = vadd.f32 %v2874, %v2903
        %v2918 = vadd.f32 %v2875, %v2903
        %v2919 = vadd.f32 %v2876, %v2903
        %v2920 = vadd.f32 %v2877, %v2903
        %v2921 = vadd.f32 %v2878, %v2903
        %v2922 = vadd.f32 %v2879, %v2903
        %v2923 = vadd.f32 %v2880, %v2903
        %v2924 = vadd.f32 %v2881, %v2903
        %v2925 = vadd.f32 %v2882, %v2903
        %v2926 = vadd.f32 %v2883, %v2903
        %v2927 = vadd.f32 %v2884, %v2903
        %v2928 = vadd.f32 %v2885, %v2903
        %v2929 = vadd.f32 %v2886, %v2903
        %v2930 = vadd.f32 %v2887, %v2903
        %v2931 = vadd.f32 %v2888, %v2903
        %v2932 = vadd.f32 %v2889, %v2903
        %v2933 = vadd.f32 %v2890, %v2903
        %v2934 = vadd.f32 %v2891, %v2903
        %v2935 = vadd.f32 %v2892, %v2903
        %v2936 = vadd.f32 %v2893, %v2903
        %v2937 = vadd.f32 %v2894, %v2903
        %v2938 = vadd.f32 %v2895, %v2903
        %v2939 = vadd.f32 %v2896, %v2903
        %v2940 = vadd.f32 %v2897, %v2903
        %v2941 = vmax.f32 %v2905, 0.0
        %v2942 = vmax.f32 %v2906, 0.0
        %v2943 = vmax.f32 %v2907, 0.0
        %v2944 = vmax.f32 %v2908, 0.0
        %v2945 = vmax.f32 %v2909, 0.0
        %v2946 = vmax.f32 %v2910, 0.0
        %v2947 = vmax.f32 %v2911, 0.0
        %v2948 = vmax.f32 %v2912, 0.0
        %v2949 = vmax.f32 %v2913, 0.0
        %v2950 = vmax.f32 %v2914, 0.0
        %v2951 = vmax.f32 %v2915, 0.0
        %v2952 = vmax.f32 %v2916, 0.0
        %v2953 = vmax.f32 %v2917, 0.0
        %v2954 = vmax.f32 %v2918, 0.0
        %v2955 = vmax.f32 %v2919, 0.0
        %v2956 = vmax.f32 %v2920, 0.0
        %v2957 = vmax.f32 %v2921, 0.0
        %v2958 = vmax.f32 %v2922, 0.0
        %v2959 = vmax.f32 %v2923, 0.0
        %v2960 = vmax.f32 %v2924, 0.0
        %v2961 = vmax.f32 %v2925, 0.0
        %v2962 = vmax.f32 %v2926, 0.0
        %v2963 = vmax.f32 %v2927, 0.0
        %v2964 = vmax.f32 %v2928, 0.0
        %v2965 = vmax.f32 %v2929, 0.0
        %v2966 = vmax.f32 %v2930, 0.0
        %v2967 = vmax.f32 %v2931, 0.0
        %v2968 = vmax.f32 %v2932, 0.0
        %v2969 = vmax.f32 %v2933, 0.0
        %v2970 = vmax.f32 %v2934, 0.0
        %v2971 = vmax.f32 %v2935, 0.0
        %v2972 = vmax.f32 %v2936, 0.0
        %v2973 = vmax.f32 %v2937, 0.0
        %v2974 = vmax.f32 %v2938, 0.0
        %v2975 = vmax.f32 %v2939, 0.0
        %v2976 = vmax.f32 %v2940, 0.0
        %2977 = vst [vmem:[#allocation3 + $0x13] sm:$0xff] %v2941
        %2978 = vst [vmem:[#allocation3 + $0x1b] sm:$0xff] %v2942
        %2979 = vst [vmem:[#allocation3 + $0x23] sm:$0xfc] %v2943
        %2980 = vst [vmem:[#allocation3 + $0x2b] sm:$0xff] %v2944
        %2981 = vst [vmem:[#allocation3 + $0x33] sm:$0x3] %v2945
        %2982 = vst [vmem:[#allocation3 + $0x33] sm:$0xf0] %v2945
        %2983 = vst [vmem:[#allocation3 + $0x3b] sm:$0xff] %v2946
        %2984 = vst [vmem:[#allocation3 + $0x43] sm:$0xf] %v2947
        %2985 = vst [vmem:[#allocation3 + $0x43] sm:$0xc0] %v2947
        %2986 = vst [vmem:[#allocation3 + $0x4b] sm:$0xff] %v2948
        %2987 = vst [vmem:[#allocation3 + $0x53] sm:$0x3f] %v2949
        %2988 = vst [vmem:[#allocation3 + $0x5b] sm:$0xff] %v2950
        %2989 = vst [vmem:[#allocation3 + $0x63] sm:$0xff] %v2951
        %2990 = vst [vmem:[#allocation3 + $0x6b] sm:$0xfc] %v2952
        %2991 = vst [vmem:[#allocation3 + $0x73] sm:$0xff] %v2953
        %2992 = vst [vmem:[#allocation3 + $0x7b] sm:$0x3] %v2954
        %2993 = vst [vmem:[#allocation3 + $0x7b] sm:$0xf0] %v2954
        %2994 = vst [vmem:[#allocation3 + $0x83] sm:$0xff] %v2955
        %2995 = vst [vmem:[#allocation3 + $0x8b] sm:$0xf] %v2956
        %2996 = vst [vmem:[#allocation3 + $0x8b] sm:$0xc0] %v2956
        %2997 = vst [vmem:[#allocation3 + $0x93] sm:$0xff] %v2957
        %2998 = vst [vmem:[#allocation3 + $0x9b] sm:$0x3f] %v2958
        %2999 = vst [vmem:[#allocation3 + $0xa3] sm:$0xff] %v2959
        %3000 = vst [vmem:[#allocation3 + $0xab] sm:$0xff] %v2960
        %3001 = vst [vmem:[#allocation3 + $0xb3] sm:$0xfc] %v2961
        %3002 = vst [vmem:[#allocation3 + $0xbb] sm:$0xff] %v2962
        %3003 = vst [vmem:[#allocation3 + $0xc3] sm:$0x3] %v2963
        %3004 = vst [vmem:[#allocation3 + $0xc3] sm:$0xf0] %v2963
        %3005 = vst [vmem:[#allocation3 + $0xcb] sm:$0xff] %v2964
        %3006 = vst [vmem:[#allocation3 + $0xd3] sm:$0xf] %v2965
        %3007 = vst [vmem:[#allocation3 + $0xd3] sm:$0xc0] %v2965
        %3008 = vst [vmem:[#allocation3 + $0xdb] sm:$0xff] %v2966
        %3009 = vst [vmem:[#allocation3 + $0xe3] sm:$0x3f] %v2967
        %3010 = vst [vmem:[#allocation3 + $0xeb] sm:$0xff] %v2968
        %3011 = vst [vmem:[#allocation3 + $0xf3] sm:$0xff] %v2969
        %3012 = vst [vmem:[#allocation3 + $0xfb] sm:$0xfc] %v2970
        %3013 = vst [vmem:[#allocation3 + $0x103] sm:$0xff] %v2971
        %3014 = vst [vmem:[#allocation3 + $0x10b] sm:$0x3] %v2972
        %3015 = vst [vmem:[#allocation3 + $0x10b] sm:$0xf0] %v2972
        %3016 = vst [vmem:[#allocation3 + $0x113] sm:$0xff] %v2973
        %3017 = vst [vmem:[#allocation3 + $0x11b] sm:$0xf] %v2974
        %3018 = vst [vmem:[#allocation3 + $0x11b] sm:$0xc0] %v2974
        %3019 = vst [vmem:[#allocation3 + $0x123] sm:$0xff] %v2975
        %3020 = vst [vmem:[#allocation3 + $0x12b] sm:$0x3f] %v2976
        %v3021 = vld [vmem:[#allocation3] sm:$0xff]
        %v3022 = vld [vmem:[#allocation3 + $0x8] sm:$0xff]
        %v3023 = vld [vmem:[#allocation3 + $0x10] sm:$0xff]
        %v3024 = vld [vmem:[#allocation3 + $0x18] sm:$0xff]
        %v3025 = vld [vmem:[#allocation3 + $0x20] sm:$0xff]
        %v3026 = vld [vmem:[#allocation3 + $0x28] sm:$0xff]
        %v3027 = vld [vmem:[#allocation3 + $0x30] sm:$0xff]
        %v3028 = vld [vmem:[#allocation3 + $0x38] sm:$0xff]
        %v3029 = vld [vmem:[#allocation3 + $0x40] sm:$0xff]
        %v3030 = vld [vmem:[#allocation3 + $0x48] sm:$0xff]
        %v3031 = vld [vmem:[#allocation3 + $0x50] sm:$0xff]
        %v3032 = vld [vmem:[#allocation3 + $0x58] sm:$0xff]
        %v3033 = vld [vmem:[#allocation3 + $0x60] sm:$0xff]
        %v3034 = vld [vmem:[#allocation3 + $0x68] sm:$0xff]
        %v3035 = vld [vmem:[#allocation3 + $0x70] sm:$0xff]
        %v3036 = vld [vmem:[#allocation3 + $0x78] sm:$0xff]
        %v3037 = vld [vmem:[#allocation3 + $0x80] sm:$0xff]
        %v3038 = vld [vmem:[#allocation3 + $0x88] sm:$0xff]
        %v3039 = vld [vmem:[#allocation3 + $0x90] sm:$0xff]
        %v3040 = vld [vmem:[#allocation3 + $0x98] sm:$0xff]
        %v3041 = vld [vmem:[#allocation3 + $0xa0] sm:$0xff]
        %v3042 = vld [vmem:[#allocation3 + $0xa8] sm:$0xff]
        %v3043 = vld [vmem:[#allocation3 + $0xb0] sm:$0xff]
        %v3044 = vld [vmem:[#allocation3 + $0xb8] sm:$0xff]
        %v3045 = vld [vmem:[#allocation3 + $0xc0] sm:$0xff]
        %v3046 = vld [vmem:[#allocation3 + $0xc8] sm:$0xff]
        %v3047 = vld [vmem:[#allocation3 + $0xd0] sm:$0xff]
        %v3048 = vld [vmem:[#allocation3 + $0xd8] sm:$0xff]
        %v3049 = vld [vmem:[#allocation3 + $0xe0] sm:$0xff]
        %v3050 = vld [vmem:[#allocation3 + $0xe8] sm:$0xff]
        %v3051 = vld [vmem:[#allocation3 + $0xf0] sm:$0xff]
        %v3052 = vld [vmem:[#allocation3 + $0xf8] sm:$0xff]
        %v3053 = vld [vmem:[#allocation3 + $0x100] sm:$0xff]
        %v3054 = vld [vmem:[#allocation3 + $0x108] sm:$0xff]
        %v3055 = vld [vmem:[#allocation3 + $0x110] sm:$0xff]
        %v3056 = vld [vmem:[#allocation3 + $0x118] sm:$0xff]
        %v3057 = vpack.c.bf16 %v3022, %v3021
        %v3058 = vpack.c.bf16 %v3024, %v3023
        %v3059 = vpack.c.bf16 %v3026, %v3025
        %v3060 = vpack.c.bf16 %v3028, %v3027
        %v3061 = vpack.c.bf16 %v3030, %v3029
        %v3062 = vpack.c.bf16 %v3032, %v3031
        %v3063 = vpack.c.bf16 %v3034, %v3033
        %v3064 = vpack.c.bf16 %v3036, %v3035
        %v3065 = vpack.c.bf16 %v3038, %v3037
        %v3066 = vpack.c.bf16 %v3040, %v3039
        %v3067 = vpack.c.bf16 %v3042, %v3041
        %v3068 = vpack.c.bf16 %v3044, %v3043
        %v3069 = vpack.c.bf16 %v3046, %v3045
        %v3070 = vpack.c.bf16 %v3048, %v3047
        %v3071 = vpack.c.bf16 %v3050, %v3049
        %v3072 = vpack.c.bf16 %v3052, %v3051
        %v3073 = vpack.c.bf16 %v3054, %v3053
        %v3074 = vpack.c.bf16 %v3056, %v3055
        %v3075 = vld [vmem:[#allocation3 + $0x1] sm:$0xff]
        %v3076 = vld [vmem:[#allocation3 + $0x9] sm:$0xff]
        %v3077 = vld [vmem:[#allocation3 + $0x11] sm:$0xff]
        %v3078 = vld [vmem:[#allocation3 + $0x19] sm:$0xff]
        %v3079 = vld [vmem:[#allocation3 + $0x21] sm:$0xff]
        %v3080 = vld [vmem:[#allocation3 + $0x29] sm:$0xff]
        %v3081 = vld [vmem:[#allocation3 + $0x31] sm:$0xff]
        %v3082 = vld [vmem:[#allocation3 + $0x39] sm:$0xff]
        %v3083 = vld [vmem:[#allocation3 + $0x41] sm:$0xff]
        %v3084 = vld [vmem:[#allocation3 + $0x49] sm:$0xff]
        %v3085 = vld [vmem:[#allocation3 + $0x51] sm:$0xff]
        %v3086 = vld [vmem:[#allocation3 + $0x59] sm:$0xff]
        %v3087 = vld [vmem:[#allocation3 + $0x61] sm:$0xff]
        %v3088 = vld [vmem:[#allocation3 + $0x69] sm:$0xff]
        %v3089 = vld [vmem:[#allocation3 + $0x71] sm:$0xff]
        %v3090 = vld [vmem:[#allocation3 + $0x79] sm:$0xff]
        %v3091 = vld [vmem:[#allocation3 + $0x81] sm:$0xff]
        %v3092 = vld [vmem:[#allocation3 + $0x89] sm:$0xff]
        %v3093 = vld [vmem:[#allocation3 + $0x91] sm:$0xff]
        %v3094 = vld [vmem:[#allocation3 + $0x99] sm:$0xff]
        %v3095 = vld [vmem:[#allocation3 + $0xa1] sm:$0xff]
        %v3096 = vld [vmem:[#allocation3 + $0xa9] sm:$0xff]
        %v3097 = vld [vmem:[#allocation3 + $0xb1] sm:$0xff]
        %v3098 = vld [vmem:[#allocation3 + $0xb9] sm:$0xff]
        %v3099 = vld [vmem:[#allocation3 + $0xc1] sm:$0xff]
        %v3100 = vld [vmem:[#allocation3 + $0xc9] sm:$0xff]
        %v3101 = vld [vmem:[#allocation3 + $0xd1] sm:$0xff]
        %v3102 = vld [vmem:[#allocation3 + $0xd9] sm:$0xff]
        %v3103 = vld [vmem:[#allocation3 + $0xe1] sm:$0xff]
        %v3104 = vld [vmem:[#allocation3 + $0xe9] sm:$0xff]
        %v3105 = vld [vmem:[#allocation3 + $0xf1] sm:$0xff]
        %v3106 = vld [vmem:[#allocation3 + $0xf9] sm:$0xff]
        %v3107 = vld [vmem:[#allocation3 + $0x101] sm:$0xff]
        %v3108 = vld [vmem:[#allocation3 + $0x109] sm:$0xff]
        %v3109 = vld [vmem:[#allocation3 + $0x111] sm:$0xff]
        %v3110 = vld [vmem:[#allocation3 + $0x119] sm:$0xff]
        %v3111 = vpack.c.bf16 %v3076, %v3075
        %v3112 = vpack.c.bf16 %v3078, %v3077
        %v3113 = vpack.c.bf16 %v3080, %v3079
        %v3114 = vpack.c.bf16 %v3082, %v3081
        %v3115 = vpack.c.bf16 %v3084, %v3083
        %v3116 = vpack.c.bf16 %v3086, %v3085
        %v3117 = vpack.c.bf16 %v3088, %v3087
        %v3118 = vpack.c.bf16 %v3090, %v3089
        %v3119 = vpack.c.bf16 %v3092, %v3091
        %v3120 = vpack.c.bf16 %v3094, %v3093
        %v3121 = vpack.c.bf16 %v3096, %v3095
        %v3122 = vpack.c.bf16 %v3098, %v3097
        %v3123 = vpack.c.bf16 %v3100, %v3099
        %v3124 = vpack.c.bf16 %v3102, %v3101
        %v3125 = vpack.c.bf16 %v3104, %v3103
        %v3126 = vpack.c.bf16 %v3106, %v3105
        %v3127 = vpack.c.bf16 %v3108, %v3107
        %v3128 = vpack.c.bf16 %v3110, %v3109
        %v3129 = vld [vmem:[#allocation3 + $0x2] sm:$0xff]
        %v3130 = vld [vmem:[#allocation3 + $0xa] sm:$0xff]
        %v3131 = vld [vmem:[#allocation3 + $0x12] sm:$0xff]
        %v3132 = vld [vmem:[#allocation3 + $0x1a] sm:$0xff]
        %v3133 = vld [vmem:[#allocation3 + $0x22] sm:$0xff]
        %v3134 = vld [vmem:[#allocation3 + $0x2a] sm:$0xff]
        %v3135 = vld [vmem:[#allocation3 + $0x32] sm:$0xff]
        %v3136 = vld [vmem:[#allocation3 + $0x3a] sm:$0xff]
        %v3137 = vld [vmem:[#allocation3 + $0x42] sm:$0xff]
        %v3138 = vld [vmem:[#allocation3 + $0x4a] sm:$0xff]
        %v3139 = vld [vmem:[#allocation3 + $0x52] sm:$0xff]
        %v3140 = vld [vmem:[#allocation3 + $0x5a] sm:$0xff]
        %v3141 = vld [vmem:[#allocation3 + $0x62] sm:$0xff]
        %v3142 = vld [vmem:[#allocation3 + $0x6a] sm:$0xff]
        %v3143 = vld [vmem:[#allocation3 + $0x72] sm:$0xff]
        %v3144 = vld [vmem:[#allocation3 + $0x7a] sm:$0xff]
        %v3145 = vld [vmem:[#allocation3 + $0x82] sm:$0xff]
        %v3146 = vld [vmem:[#allocation3 + $0x8a] sm:$0xff]
        %v3147 = vld [vmem:[#allocation3 + $0x92] sm:$0xff]
        %v3148 = vld [vmem:[#allocation3 + $0x9a] sm:$0xff]
        %v3149 = vld [vmem:[#allocation3 + $0xa2] sm:$0xff]
        %v3150 = vld [vmem:[#allocation3 + $0xaa] sm:$0xff]
        %v3151 = vld [vmem:[#allocation3 + $0xb2] sm:$0xff]
        %v3152 = vld [vmem:[#allocation3 + $0xba] sm:$0xff]
        %v3153 = vld [vmem:[#allocation3 + $0xc2] sm:$0xff]
        %v3154 = vld [vmem:[#allocation3 + $0xca] sm:$0xff]
        %v3155 = vld [vmem:[#allocation3 + $0xd2] sm:$0xff]
        %v3156 = vld [vmem:[#allocation3 + $0xda] sm:$0xff]
        %v3157 = vld [vmem:[#allocation3 + $0xe2] sm:$0xff]
        %v3158 = vld [vmem:[#allocation3 + $0xea] sm:$0xff]
        %v3159 = vld [vmem:[#allocation3 + $0xf2] sm:$0xff]
        %v3160 = vld [vmem:[#allocation3 + $0xfa] sm:$0xff]
        %v3161 = vld [vmem:[#allocation3 + $0x102] sm:$0xff]
        %v3162 = vld [vmem:[#allocation3 + $0x10a] sm:$0xff]
        %v3163 = vld [vmem:[#allocation3 + $0x112] sm:$0xff]
        %v3164 = vld [vmem:[#allocation3 + $0x11a] sm:$0xff]
        %v3165 = vpack.c.bf16 %v3130, %v3129
        %v3166 = vpack.c.bf16 %v3132, %v3131
        %v3167 = vpack.c.bf16 %v3134, %v3133
        %v3168 = vpack.c.bf16 %v3136, %v3135
        %v3169 = vpack.c.bf16 %v3138, %v3137
        %v3170 = vpack.c.bf16 %v3140, %v3139
        %v3171 = vpack.c.bf16 %v3142, %v3141
        %v3172 = vpack.c.bf16 %v3144, %v3143
        %v3173 = vpack.c.bf16 %v3146, %v3145
        %v3174 = vpack.c.bf16 %v3148, %v3147
        %v3175 = vpack.c.bf16 %v3150, %v3149
        %v3176 = vpack.c.bf16 %v3152, %v3151
        %v3177 = vpack.c.bf16 %v3154, %v3153
        %v3178 = vpack.c.bf16 %v3156, %v3155
        %v3179 = vpack.c.bf16 %v3158, %v3157
        %v3180 = vpack.c.bf16 %v3160, %v3159
        %v3181 = vpack.c.bf16 %v3162, %v3161
        %v3182 = vpack.c.bf16 %v3164, %v3163
        %v3183 = vld [vmem:[%s4] sm:$0xf]
        %v3184 = vld [vmem:[%s4 + $0x4] sm:$0xf]
        %v3185 = vld [vmem:[%s4 + $0x8] sm:$0xf]
        %v3186 = vld [vmem:[%s4 + $0xc] sm:$0xf]
        %v3187 = vld [vmem:[%s4 + $0x10] sm:$0xf]
        %v3188 = vld [vmem:[%s4 + $0x14] sm:$0xf]
        %v3189 = vld [vmem:[%s4 + $0x18] sm:$0xf]
        %v3190 = vld [vmem:[%s4 + $0x1c] sm:$0xf]
        %v3191 = vld [vmem:[%s4 + $0x20] sm:$0xf]
        %v3192 = vld [vmem:[%s4 + $0x24] sm:$0xf]
        %v3193 = vld [vmem:[%s4 + $0x28] sm:$0xf]
        %v3194 = vld [vmem:[%s4 + $0x2c] sm:$0xf]
        %v3195 = vld [vmem:[%s4 + $0x30] sm:$0xf]
        %v3196 = vld [vmem:[%s4 + $0x34] sm:$0xf]
        %v3197 = vld [vmem:[%s4 + $0x38] sm:$0xf]
        %v3198 = vld [vmem:[%s4 + $0x3c] sm:$0xf]
        %v3199 = vld [vmem:[%s4 + $0x40] sm:$0xf]
        %v3200 = vld [vmem:[%s4 + $0x44] sm:$0xf]
        %v3201 = vld [vmem:[%s4 + $0x48] sm:$0xf]
        %v3202 = vld [vmem:[%s4 + $0x4c] sm:$0xf]
        %v3203 = vld [vmem:[%s4 + $0x50] sm:$0xf]
        %v3204 = vld [vmem:[%s4 + $0x54] sm:$0xf]
        %v3205 = vld [vmem:[%s4 + $0x58] sm:$0xf]
        %v3206 = vld [vmem:[%s4 + $0x5c] sm:$0xf]
        %v3207 = vld [vmem:[%s4 + $0x60] sm:$0xf]
        %v3208 = vld [vmem:[%s4 + $0x64] sm:$0xf]
        %v3209 = vld [vmem:[%s4 + $0x68] sm:$0xf]
        %v3210 = vld [vmem:[%s4 + $0x6c] sm:$0xf]
        %v3211 = vld [vmem:[%s4 + $0x70] sm:$0xf]
        %v3212 = vld [vmem:[%s4 + $0x74] sm:$0xf]
        %v3213 = vld [vmem:[%s4 + $0x78] sm:$0xf]
        %v3214 = vld [vmem:[%s4 + $0x7c] sm:$0xf]
        %v3215 = vld [vmem:[%s4 + $0x80] sm:$0xf]
        %v3216 = vld [vmem:[%s4 + $0x84] sm:$0xf]
        %v3217 = vld [vmem:[%s4 + $0x88] sm:$0xf]
        %v3218 = vld [vmem:[%s4 + $0x8c] sm:$0xf]
        %v3219 = vld [vmem:[%s4 + $0x90] sm:$0xf]
        %v3220 = vld [vmem:[%s4 + $0x94] sm:$0xf]
        %v3221 = vld [vmem:[%s4 + $0x98] sm:$0xf]
        %v3222 = vld [vmem:[%s4 + $0x9c] sm:$0xf]
        %v3223 = vld [vmem:[%s4 + $0xa0] sm:$0xf]
        %v3224 = vld [vmem:[%s4 + $0xa4] sm:$0xf]
        %v3225 = vld [vmem:[%s4 + $0xa8] sm:$0xf]
        %v3226 = vld [vmem:[%s4 + $0xac] sm:$0xf]
        %v3227 = vld [vmem:[%s4 + $0xb0] sm:$0xf]
        %v3228 = vld [vmem:[%s4 + $0xb4] sm:$0xf]
        %v3229 = vld [vmem:[%s4 + $0xb8] sm:$0xf]
        %v3230 = vld [vmem:[%s4 + $0xbc] sm:$0xf]
        %v3279 = vunpack.c.l.b16 %v3183
        %v3280 = vunpack.c.l.b16 %v3184
        %v3281 = vunpack.c.l.b16 %v3185
        %v3282 = vunpack.c.l.b16 %v3186
        %v3283 = vunpack.c.l.b16 %v3187
        %v3284 = vunpack.c.l.b16 %v3188
        %v3285 = vunpack.c.l.b16 %v3189
        %v3286 = vunpack.c.l.b16 %v3190
        %v3287 = vunpack.c.l.b16 %v3191
        %v3288 = vunpack.c.l.b16 %v3192
        %v3289 = vunpack.c.l.b16 %v3193
        %v3290 = vunpack.c.l.b16 %v3194
        %v3291 = vunpack.c.l.b16 %v3195
        %v3292 = vunpack.c.l.b16 %v3196
        %v3293 = vunpack.c.l.b16 %v3197
        %v3294 = vunpack.c.l.b16 %v3198
        %v3295 = vunpack.c.l.b16 %v3199
        %v3296 = vunpack.c.l.b16 %v3200
        %v3297 = vunpack.c.l.b16 %v3201
        %v3298 = vunpack.c.l.b16 %v3202
        %v3299 = vunpack.c.l.b16 %v3203
        %v3300 = vunpack.c.l.b16 %v3204
        %v3301 = vunpack.c.l.b16 %v3205
        %v3302 = vunpack.c.l.b16 %v3206
        %v3303 = vunpack.c.l.b16 %v3207
        %v3304 = vunpack.c.l.b16 %v3208
        %v3305 = vunpack.c.l.b16 %v3209
        %v3306 = vunpack.c.l.b16 %v3210
        %v3307 = vunpack.c.l.b16 %v3211
        %v3308 = vunpack.c.l.b16 %v3212
        %v3309 = vunpack.c.l.b16 %v3213
        %v3310 = vunpack.c.l.b16 %v3214
        %v3311 = vunpack.c.l.b16 %v3215
        %v3312 = vunpack.c.l.b16 %v3216
        %v3313 = vunpack.c.l.b16 %v3217
        %v3314 = vunpack.c.l.b16 %v3218
        %v3315 = vunpack.c.l.b16 %v3219
        %v3316 = vunpack.c.l.b16 %v3220
        %v3317 = vunpack.c.l.b16 %v3221
        %v3318 = vunpack.c.l.b16 %v3222
        %v3319 = vunpack.c.l.b16 %v3223
        %v3320 = vunpack.c.l.b16 %v3224
        %v3321 = vunpack.c.l.b16 %v3225
        %v3322 = vunpack.c.l.b16 %v3226
        %v3323 = vunpack.c.l.b16 %v3227
        %v3324 = vunpack.c.l.b16 %v3228
        %v3325 = vunpack.c.l.b16 %v3229
        %v3326 = vunpack.c.l.b16 %v3230
        %v3327 = vpack.c.b16 %v3280, %v3279
        %v3328 = vpack.c.b16 %v3282, %v3281
        %v3329 = vpack.c.b16 %v3284, %v3283
        %v3330 = vpack.c.b16 %v3286, %v3285
        %v3331 = vpack.c.b16 %v3288, %v3287
        %v3332 = vpack.c.b16 %v3290, %v3289
        %v3333 = vpack.c.b16 %v3292, %v3291
        %v3334 = vpack.c.b16 %v3294, %v3293
        %v3335 = vpack.c.b16 %v3296, %v3295
        %v3336 = vpack.c.b16 %v3298, %v3297
        %v3337 = vpack.c.b16 %v3300, %v3299
        %v3338 = vpack.c.b16 %v3302, %v3301
        %v3339 = vpack.c.b16 %v3304, %v3303
        %v3340 = vpack.c.b16 %v3306, %v3305
        %v3341 = vpack.c.b16 %v3308, %v3307
        %v3342 = vpack.c.b16 %v3310, %v3309
        %v3343 = vpack.c.b16 %v3312, %v3311
        %v3344 = vpack.c.b16 %v3314, %v3313
        %v3345 = vpack.c.b16 %v3316, %v3315
        %v3346 = vpack.c.b16 %v3318, %v3317
        %v3347 = vpack.c.b16 %v3320, %v3319
        %v3348 = vpack.c.b16 %v3322, %v3321
        %v3349 = vpack.c.b16 %v3324, %v3323
        %v3350 = vpack.c.b16 %v3326, %v3325
        %3375 = vmatprep.subr.bf16.mxu0 0
        %3376 = vmatpush1.bf16.msra.mxu0 %v3327
        %3377 = vmatprep.subr.bf16.mxu0 0
        %3378 = vmatpush1.bf16.msra.mxu0 %v3328
        %3379 = vmatprep.subr.bf16.mxu0 0
        %3380 = vmatpush1.bf16.msra.mxu0 %v3329
        %3381 = vmatprep.subr.bf16.mxu0 0
        %3382 = vmatpush1.bf16.msra.mxu0 %v3330
        %3383 = vmatprep.subr.bf16.mxu0 0
        %3384 = vmatpush1.bf16.msra.mxu0 %v3331
        %3385 = vmatprep.subr.bf16.mxu0 0
        %3386 = vmatpush1.bf16.msra.mxu0 %v3332
        %3387 = vmatprep.subr.bf16.mxu0 0
        %3388 = vmatpush1.bf16.msra.mxu0 %v3333
        %3389 = vmatprep.subr.bf16.mxu0 0
        %3390 = vmatpush1.bf16.msra.mxu0 %v3334
        %3391 = vmatprep.subr.bf16.mxu0 0
        %3392 = vmatpush1.bf16.msra.mxu0 %v3335
        %3393 = vmatprep.subr.bf16.mxu0 0
        %3394 = vmatpush1.bf16.msra.mxu0 %v3336
        %3395 = vmatprep.subr.bf16.mxu0 0
        %3396 = vmatpush1.bf16.msra.mxu0 %v3337
        %3397 = vmatprep.subr.bf16.mxu0 0
        %3398 = vmatpush1.bf16.msra.mxu0 %v3338
        %3399 = vmatprep.subr.bf16.mxu0 0
        %3400 = vmatpush1.bf16.msra.mxu0 %v3339
        %3401 = vmatprep.subr.bf16.mxu0 0
        %3402 = vmatpush1.bf16.msra.mxu0 %v3340
        %3403 = vmatprep.subr.bf16.mxu0 0
        %3404 = vmatpush1.bf16.msra.mxu0 %v3341
        %3405 = vmatprep.subr.bf16.mxu0 0
        %3406 = vmatpush1.bf16.msra.mxu0 %v3342
        %3407 = vmatprep.mubr.bf16.mxu0 %v3111
        %3408 = vmatmul.mubr.bf16.gmra.mrb[0].mxu0 %v3057
        %v3409 = vpop.f32.mrb[0].mxu0
        %v3410 = vadd.f32 0.0, %v3409
        %v3411 = vpop.f32.mrb[0].mxu0
        %v3412 = vpop.f32.mrb[0].mxu0
        %v3413 = vadd.f32 0.0, %v3412
        %v3414 = vpop.f32.mrb[0].mxu0
        %3415 = vmatprep.mubr.bf16.mxu0 %v3112
        %3416 = vmatmul.mubr.bf16.gmra.mrb[0].mxu0 %v3058
        %v3417 = vpop.f32.mrb[0].mxu0
        %v3418 = vadd.f32 0.0, %v3417
        %v3419 = vpop.f32.mrb[0].mxu0
        %v3420 = vpop.f32.mrb[0].mxu0
        %v3421 = vadd.f32 0.0, %v3420
        %v3422 = vpop.f32.mrb[0].mxu0
        %3423 = vmatprep.mubr.bf16.mxu0 %v3113
        %3424 = vmatmul.mubr.bf16.gmra.mrb[0].mxu0 %v3059
        %v3425 = vpop.f32.mrb[0].mxu0
        %v3426 = vadd.f32 0.0, %v3425
        %v3427 = vpop.f32.mrb[0].mxu0
        %v3428 = vpop.f32.mrb[0].mxu0
        %v3429 = vadd.f32 0.0, %v3428
        %v3430 = vpop.f32.mrb[0].mxu0
        %3431 = vmatprep.mubr.bf16.mxu0 %v3114
        %3432 = vmatmul.mubr.bf16.gmra.mrb[0].mxu0 %v3060
        %v3433 = vpop.f32.mrb[0].mxu0
        %v3434 = vadd.f32 0.0, %v3433
        %v3435 = vpop.f32.mrb[0].mxu0
        %v3436 = vpop.f32.mrb[0].mxu0
        %v3437 = vadd.f32 0.0, %v3436
        %v3438 = vpop.f32.mrb[0].mxu0
        %3439 = vmatprep.mubr.bf16.mxu0 %v3115
        %3440 = vmatmul.mubr.bf16.gmra.mrb[0].mxu0 %v3061
        %v3441 = vpop.f32.mrb[0].mxu0
        %v3442 = vadd.f32 0.0, %v3441
        %v3443 = vpop.f32.mrb[0].mxu0
        %v3444 = vpop.f32.mrb[0].mxu0
        %v3445 = vadd.f32 0.0, %v3444
        %v3446 = vpop.f32.mrb[0].mxu0
        %3447 = vmatprep.mubr.bf16.mxu0 %v3116
        %3448 = vmatmul.mubr.bf16.gmra.mrb[0].mxu0 %v3062
        %v3449 = vpop.f32.mrb[0].mxu0
        %v3450 = vadd.f32 0.0, %v3449
        %v3451 = vpop.f32.mrb[0].mxu0
        %v3452 = vpop.f32.mrb[0].mxu0
        %v3453 = vadd.f32 0.0, %v3452
        %v3454 = vpop.f32.mrb[0].mxu0
        %3455 = vmatprep.mubr.bf16.mxu0 %v3117
        %3456 = vmatmul.mubr.bf16.gmra.mrb[0].mxu0 %v3063
        %v3457 = vpop.f32.mrb[0].mxu0
        %v3458 = vadd.f32 0.0, %v3457
        %v3459 = vpop.f32.mrb[0].mxu0
        %v3460 = vpop.f32.mrb[0].mxu0
        %v3461 = vadd.f32 0.0, %v3460
        %v3462 = vpop.f32.mrb[0].mxu0
        %3463 = vmatprep.mubr.bf16.mxu0 %v3118
        %3464 = vmatmul.mubr.bf16.gmra.mrb[0].mxu0 %v3064
        %v3465 = vpop.f32.mrb[0].mxu0
        %v3466 = vadd.f32 0.0, %v3465
        %v3467 = vpop.f32.mrb[0].mxu0
        %v3468 = vpop.f32.mrb[0].mxu0
        %v3469 = vadd.f32 0.0, %v3468
        %v3470 = vpop.f32.mrb[0].mxu0
        %3471 = vmatprep.mubr.bf16.mxu0 %v3119
        %3472 = vmatmul.mubr.bf16.gmra.mrb[0].mxu0 %v3065
        %v3473 = vpop.f32.mrb[0].mxu0
        %v3474 = vadd.f32 0.0, %v3473
        %v3475 = vpop.f32.mrb[0].mxu0
        %v3476 = vpop.f32.mrb[0].mxu0
        %v3477 = vadd.f32 0.0, %v3476
        %v3478 = vpop.f32.mrb[0].mxu0
        %3479 = vmatprep.mubr.bf16.mxu0 %v3120
        %3480 = vmatmul.mubr.bf16.gmra.mrb[0].mxu0 %v3066
        %v3481 = vpop.f32.mrb[0].mxu0
        %v3482 = vadd.f32 0.0, %v3481
        %v3483 = vpop.f32.mrb[0].mxu0
        %v3484 = vpop.f32.mrb[0].mxu0
        %v3485 = vadd.f32 0.0, %v3484
        %v3486 = vpop.f32.mrb[0].mxu0
        %3487 = vmatprep.mubr.bf16.mxu0 %v3121
        %3488 = vmatmul.mubr.bf16.gmra.mrb[0].mxu0 %v3067
        %v3489 = vpop.f32.mrb[0].mxu0
        %v3490 = vadd.f32 0.0, %v3489
        %v3491 = vpop.f32.mrb[0].mxu0
        %v3492 = vpop.f32.mrb[0].mxu0
        %v3493 = vadd.f32 0.0, %v3492
        %v3494 = vpop.f32.mrb[0].mxu0
        %3495 = vmatprep.mubr.bf16.mxu0 %v3122
        %3496 = vmatmul.mubr.bf16.gmra.mrb[0].mxu0 %v3068
        %v3497 = vpop.f32.mrb[0].mxu0
        %v3498 = vadd.f32 0.0, %v3497
        %v3499 = vpop.f32.mrb[0].mxu0
        %v3500 = vpop.f32.mrb[0].mxu0
        %v3501 = vadd.f32 0.0, %v3500
        %v3502 = vpop.f32.mrb[0].mxu0
        %3503 = vmatprep.mubr.bf16.mxu0 %v3123
        %3504 = vmatmul.mubr.bf16.gmra.mrb[0].mxu0 %v3069
        %v3505 = vpop.f32.mrb[0].mxu0
        %v3506 = vadd.f32 0.0, %v3505
        %v3507 = vpop.f32.mrb[0].mxu0
        %v3508 = vpop.f32.mrb[0].mxu0
        %v3509 = vadd.f32 0.0, %v3508
        %v3510 = vpop.f32.mrb[0].mxu0
        %3511 = vmatprep.mubr.bf16.mxu0 %v3124
        %3512 = vmatmul.mubr.bf16.gmra.mrb[0].mxu0 %v3070
        %v3513 = vpop.f32.mrb[0].mxu0
        %v3514 = vadd.f32 0.0, %v3513
        %v3515 = vpop.f32.mrb[0].mxu0
        %v3516 = vpop.f32.mrb[0].mxu0
        %v3517 = vadd.f32 0.0, %v3516
        %v3518 = vpop.f32.mrb[0].mxu0
        %3519 = vmatprep.mubr.bf16.mxu0 %v3125
        %3520 = vmatmul.mubr.bf16.gmra.mrb[0].mxu0 %v3071
        %v3521 = vpop.f32.mrb[0].mxu0
        %v3522 = vadd.f32 0.0, %v3521
        %v3523 = vpop.f32.mrb[0].mxu0
        %v3524 = vpop.f32.mrb[0].mxu0
        %v3525 = vadd.f32 0.0, %v3524
        %v3526 = vpop.f32.mrb[0].mxu0
        %3527 = vmatprep.mubr.bf16.mxu0 %v3126
        %3528 = vmatmul.mubr.bf16.gmra.mrb[0].mxu0 %v3072
        %v3529 = vpop.f32.mrb[0].mxu0
        %v3530 = vadd.f32 0.0, %v3529
        %v3531 = vpop.f32.mrb[0].mxu0
        %v3532 = vpop.f32.mrb[0].mxu0
        %v3533 = vadd.f32 0.0, %v3532
        %v3534 = vpop.f32.mrb[0].mxu0
        %3535 = vmatprep.mubr.bf16.mxu0 %v3127
        %3536 = vmatmul.mubr.bf16.gmra.mrb[0].mxu0 %v3073
        %v3537 = vpop.f32.mrb[0].mxu0
        %v3538 = vadd.f32 0.0, %v3537
        %v3539 = vpop.f32.mrb[0].mxu0
        %v3540 = vpop.f32.mrb[0].mxu0
        %v3541 = vadd.f32 0.0, %v3540
        %v3542 = vpop.f32.mrb[0].mxu0
        %3543 = vmatprep.mubr.bf16.mxu0 %v3128
        %3544 = vmatmul.mubr.bf16.gmra.mrb[0].mxu0 %v3074
        %v3545 = vpop.f32.mrb[0].mxu0
        %v3546 = vadd.f32 0.0, %v3545
        %v3547 = vpop.f32.mrb[0].mxu0
        %v3548 = vpop.f32.mrb[0].mxu0
        %v3549 = vadd.f32 0.0, %v3548
        %v3550 = vpop.f32.mrb[0].mxu0
        %3551 = vdwg.mxu0
        %3552 = vmatprep.subr.bf16.mxu0 0
        %3553 = vmatpush1.bf16.msra.mxu0 %v3343
        %3554 = vmatprep.subr.bf16.mxu0 0
        %3555 = vmatpush1.bf16.msra.mxu0 %v3344
        %3556 = vmatprep.subr.bf16.mxu0 0
        %3557 = vmatpush1.bf16.msra.mxu0 %v3345
        %3558 = vmatprep.subr.bf16.mxu0 0
        %3559 = vmatpush1.bf16.msra.mxu0 %v3346
        %3560 = vmatprep.subr.bf16.mxu0 0
        %3561 = vmatpush1.bf16.msra.mxu0 %v3347
        %3562 = vmatprep.subr.bf16.mxu0 0
        %3563 = vmatpush1.bf16.msra.mxu0 %v3348
        %3564 = vmatprep.subr.bf16.mxu0 0
        %3565 = vmatpush1.bf16.msra.mxu0 %v3349
        %3566 = vmatprep.subr.bf16.mxu0 0
        %3567 = vmatpush1.bf16.msra.mxu0 %v3350
        %3568 = vmatprep.subr.bf16.mxu0 0
        %3569 = vmatpush1.bf16.msra.mxu0 0
        %3570 = vmatprep.subr.bf16.mxu0 0
        %3571 = vmatpush1.bf16.msra.mxu0 0
        %3572 = vmatprep.subr.bf16.mxu0 0
        %3573 = vmatpush1.bf16.msra.mxu0 0
        %3574 = vmatprep.subr.bf16.mxu0 0
        %3575 = vmatpush1.bf16.msra.mxu0 0
        %3576 = vmatprep.subr.bf16.mxu0 0
        %3577 = vmatpush1.bf16.msra.mxu0 0
        %3578 = vmatprep.subr.bf16.mxu0 0
        %3579 = vmatpush1.bf16.msra.mxu0 0
        %3580 = vmatprep.subr.bf16.mxu0 0
        %3581 = vmatpush1.bf16.msra.mxu0 0
        %3582 = vmatprep.subr.bf16.mxu0 0
        %3583 = vmatpush1.bf16.msra.mxu0 0
        %3584 = vmatprep.mubr.bf16.mxu0 0
        %3585 = vmatmul.mubr.bf16.gmra.mrb[0].mxu0 %v3165
        %v3586 = vpop.f32.mrb[0].mxu0
        %v3587 = vadd.f32 %v3410, %v3586
        %v3588 = vpop.f32.mrb[0].mxu0
        %v3589 = vpop.f32.mrb[0].mxu0
        %v3590 = vadd.f32 %v3413, %v3589
        %v3591 = vpop.f32.mrb[0].mxu0
        %3592 = vmatprep.mubr.bf16.mxu0 0
        %3593 = vmatmul.mubr.bf16.gmra.mrb[0].mxu0 %v3166
        %v3594 = vpop.f32.mrb[0].mxu0
        %v3595 = vadd.f32 %v3418, %v3594
        %v3596 = vpop.f32.mrb[0].mxu0
        %v3597 = vpop.f32.mrb[0].mxu0
        %v3598 = vadd.f32 %v3421, %v3597
        %v3599 = vpop.f32.mrb[0].mxu0
        %3600 = vmatprep.mubr.bf16.mxu0 0
        %3601 = vmatmul.mubr.bf16.gmra.mrb[0].mxu0 %v3167
        %v3602 = vpop.f32.mrb[0].mxu0
        %v3603 = vadd.f32 %v3426, %v3602
        %v3604 = vpop.f32.mrb[0].mxu0
        %v3605 = vpop.f32.mrb[0].mxu0
        %v3606 = vadd.f32 %v3429, %v3605
        %v3607 = vpop.f32.mrb[0].mxu0
        %3608 = vmatprep.mubr.bf16.mxu0 0
        %3609 = vmatmul.mubr.bf16.gmra.mrb[0].mxu0 %v3168
        %v3610 = vpop.f32.mrb[0].mxu0
        %v3611 = vadd.f32 %v3434, %v3610
        %v3612 = vpop.f32.mrb[0].mxu0
        %v3613 = vpop.f32.mrb[0].mxu0
        %v3614 = vadd.f32 %v3437, %v3613
        %v3615 = vpop.f32.mrb[0].mxu0
        %3616 = vmatprep.mubr.bf16.mxu0 0
        %3617 = vmatmul.mubr.bf16.gmra.mrb[0].mxu0 %v3169
        %v3618 = vpop.f32.mrb[0].mxu0
        %v3619 = vadd.f32 %v3442, %v3618
        %v3620 = vpop.f32.mrb[0].mxu0
        %v3621 = vpop.f32.mrb[0].mxu0
        %v3622 = vadd.f32 %v3445, %v3621
        %v3623 = vpop.f32.mrb[0].mxu0
        %3624 = vmatprep.mubr.bf16.mxu0 0
        %3625 = vmatmul.mubr.bf16.gmra.mrb[0].mxu0 %v3170
        %v3626 = vpop.f32.mrb[0].mxu0
        %v3627 = vadd.f32 %v3450, %v3626
        %v3628 = vpop.f32.mrb[0].mxu0
        %v3629 = vpop.f32.mrb[0].mxu0
        %v3630 = vadd.f32 %v3453, %v3629
        %v3631 = vpop.f32.mrb[0].mxu0
        %3632 = vmatprep.mubr.bf16.mxu0 0
        %3633 = vmatmul.mubr.bf16.gmra.mrb[0].mxu0 %v3171
        %v3634 = vpop.f32.mrb[0].mxu0
        %v3635 = vadd.f32 %v3458, %v3634
        %v3636 = vpop.f32.mrb[0].mxu0
        %v3637 = vpop.f32.mrb[0].mxu0
        %v3638 = vadd.f32 %v3461, %v3637
        %v3639 = vpop.f32.mrb[0].mxu0
        %3640 = vmatprep.mubr.bf16.mxu0 0
        %3641 = vmatmul.mubr.bf16.gmra.mrb[0].mxu0 %v3172
        %v3642 = vpop.f32.mrb[0].mxu0
        %v3643 = vadd.f32 %v3466, %v3642
        %v3644 = vpop.f32.mrb[0].mxu0
        %v3645 = vpop.f32.mrb[0].mxu0
        %v3646 = vadd.f32 %v3469, %v3645
        %v3647 = vpop.f32.mrb[0].mxu0
        %3648 = vmatprep.mubr.bf16.mxu0 0
        %3649 = vmatmul.mubr.bf16.gmra.mrb[0].mxu0 %v3173
        %v3650 = vpop.f32.mrb[0].mxu0
        %v3651 = vadd.f32 %v3474, %v3650
        %v3652 = vpop.f32.mrb[0].mxu0
        %v3653 = vpop.f32.mrb[0].mxu0
        %v3654 = vadd.f32 %v3477, %v3653
        %v3655 = vpop.f32.mrb[0].mxu0
        %3656 = vmatprep.mubr.bf16.mxu0 0
        %3657 = vmatmul.mubr.bf16.gmra.mrb[0].mxu0 %v3174
        %v3658 = vpop.f32.mrb[0].mxu0
        %v3659 = vadd.f32 %v3482, %v3658
        %v3660 = vpop.f32.mrb[0].mxu0
        %v3661 = vpop.f32.mrb[0].mxu0
        %v3662 = vadd.f32 %v3485, %v3661
        %v3663 = vpop.f32.mrb[0].mxu0
        %3664 = vmatprep.mubr.bf16.mxu0 0
        %3665 = vmatmul.mubr.bf16.gmra.mrb[0].mxu0 %v3175
        %v3666 = vpop.f32.mrb[0].mxu0
        %v3667 = vadd.f32 %v3490, %v3666
        %v3668 = vpop.f32.mrb[0].mxu0
        %v3669 = vpop.f32.mrb[0].mxu0
        %v3670 = vadd.f32 %v3493, %v3669
        %v3671 = vpop.f32.mrb[0].mxu0
        %3672 = vmatprep.mubr.bf16.mxu0 0
        %3673 = vmatmul.mubr.bf16.gmra.mrb[0].mxu0 %v3176
        %v3674 = vpop.f32.mrb[0].mxu0
        %v3675 = vadd.f32 %v3498, %v3674
        %v3676 = vpop.f32.mrb[0].mxu0
        %v3677 = vpop.f32.mrb[0].mxu0
        %v3678 = vadd.f32 %v3501, %v3677
        %v3679 = vpop.f32.mrb[0].mxu0
        %3680 = vmatprep.mubr.bf16.mxu0 0
        %3681 = vmatmul.mubr.bf16.gmra.mrb[0].mxu0 %v3177
        %v3682 = vpop.f32.mrb[0].mxu0
        %v3683 = vadd.f32 %v3506, %v3682
        %v3684 = vpop.f32.mrb[0].mxu0
        %v3685 = vpop.f32.mrb[0].mxu0
        %v3686 = vadd.f32 %v3509, %v3685
        %v3687 = vpop.f32.mrb[0].mxu0
        %3688 = vmatprep.mubr.bf16.mxu0 0
        %3689 = vmatmul.mubr.bf16.gmra.mrb[0].mxu0 %v3178
        %v3690 = vpop.f32.mrb[0].mxu0
        %v3691 = vadd.f32 %v3514, %v3690
        %v3692 = vpop.f32.mrb[0].mxu0
        %v3693 = vpop.f32.mrb[0].mxu0
        %v3694 = vadd.f32 %v3517, %v3693
        %v3695 = vpop.f32.mrb[0].mxu0
        %3696 = vmatprep.mubr.bf16.mxu0 0
        %3697 = vmatmul.mubr.bf16.gmra.mrb[0].mxu0 %v3179
        %v3698 = vpop.f32.mrb[0].mxu0
        %v3699 = vadd.f32 %v3522, %v3698
        %v3700 = vpop.f32.mrb[0].mxu0
        %v3701 = vpop.f32.mrb[0].mxu0
        %v3702 = vadd.f32 %v3525, %v3701
        %v3703 = vpop.f32.mrb[0].mxu0
        %3704 = vmatprep.mubr.bf16.mxu0 0
        %3705 = vmatmul.mubr.bf16.gmra.mrb[0].mxu0 %v3180
        %v3706 = vpop.f32.mrb[0].mxu0
        %v3707 = vadd.f32 %v3530, %v3706
        %v3708 = vpop.f32.mrb[0].mxu0
        %v3709 = vpop.f32.mrb[0].mxu0
        %v3710 = vadd.f32 %v3533, %v3709
        %v3711 = vpop.f32.mrb[0].mxu0
        %3712 = vmatprep.mubr.bf16.mxu0 0
        %3713 = vmatmul.mubr.bf16.gmra.mrb[0].mxu0 %v3181
        %v3714 = vpop.f32.mrb[0].mxu0
        %v3715 = vadd.f32 %v3538, %v3714
        %v3716 = vpop.f32.mrb[0].mxu0
        %v3717 = vpop.f32.mrb[0].mxu0
        %v3718 = vadd.f32 %v3541, %v3717
        %v3719 = vpop.f32.mrb[0].mxu0
        %3720 = vmatprep.mubr.bf16.mxu0 0
        %3721 = vmatmul.mubr.bf16.gmra.mrb[0].mxu0 %v3182
        %v3722 = vpop.f32.mrb[0].mxu0
        %v3723 = vadd.f32 %v3546, %v3722
        %v3724 = vpop.f32.mrb[0].mxu0
        %v3725 = vpop.f32.mrb[0].mxu0
        %v3726 = vadd.f32 %v3549, %v3725
        %v3727 = vpop.f32.mrb[0].mxu0
        %3728 = vdwg.mxu0
        %3729 = vst [vmem:[#allocation4] sm:$0xff] %v3587
        %3730 = vst [vmem:[#allocation4 + $0x8] sm:$0xff] %v3590
        %3731 = vst [vmem:[#allocation4 + $0x10] sm:$0xff] %v3595
        %3732 = vst [vmem:[#allocation4 + $0x18] sm:$0xff] %v3598
        %3733 = vst [vmem:[#allocation4 + $0x20] sm:$0xff] %v3603
        %3734 = vst [vmem:[#allocation4 + $0x28] sm:$0xff] %v3606
        %3735 = vst [vmem:[#allocation4 + $0x30] sm:$0xff] %v3611
        %3736 = vst [vmem:[#allocation4 + $0x38] sm:$0xff] %v3614
        %3737 = vst [vmem:[#allocation4 + $0x40] sm:$0xff] %v3619
        %3738 = vst [vmem:[#allocation4 + $0x48] sm:$0xff] %v3622
        %3739 = vst [vmem:[#allocation4 + $0x50] sm:$0xff] %v3627
        %3740 = vst [vmem:[#allocation4 + $0x58] sm:$0xff] %v3630
        %3741 = vst [vmem:[#allocation4 + $0x60] sm:$0xff] %v3635
        %3742 = vst [vmem:[#allocation4 + $0x68] sm:$0xff] %v3638
        %3743 = vst [vmem:[#allocation4 + $0x70] sm:$0xff] %v3643
        %3744 = vst [vmem:[#allocation4 + $0x78] sm:$0xff] %v3646
        %3745 = vst [vmem:[#allocation4 + $0x80] sm:$0xff] %v3651
        %3746 = vst [vmem:[#allocation4 + $0x88] sm:$0xff] %v3654
        %3747 = vst [vmem:[#allocation4 + $0x90] sm:$0xff] %v3659
        %3748 = vst [vmem:[#allocation4 + $0x98] sm:$0xff] %v3662
        %3749 = vst [vmem:[#allocation4 + $0xa0] sm:$0xff] %v3667
        %3750 = vst [vmem:[#allocation4 + $0xa8] sm:$0xff] %v3670
        %3751 = vst [vmem:[#allocation4 + $0xb0] sm:$0xff] %v3675
        %3752 = vst [vmem:[#allocation4 + $0xb8] sm:$0xff] %v3678
        %3753 = vst [vmem:[#allocation4 + $0xc0] sm:$0xff] %v3683
        %3754 = vst [vmem:[#allocation4 + $0xc8] sm:$0xff] %v3686
        %3755 = vst [vmem:[#allocation4 + $0xd0] sm:$0xff] %v3691
        %3756 = vst [vmem:[#allocation4 + $0xd8] sm:$0xff] %v3694
        %3757 = vst [vmem:[#allocation4 + $0xe0] sm:$0xff] %v3699
        %3758 = vst [vmem:[#allocation4 + $0xe8] sm:$0xff] %v3702
        %3759 = vst [vmem:[#allocation4 + $0xf0] sm:$0xff] %v3707
        %3760 = vst [vmem:[#allocation4 + $0xf8] sm:$0xff] %v3710
        %3761 = vst [vmem:[#allocation4 + $0x100] sm:$0xff] %v3715
        %3762 = vst [vmem:[#allocation4 + $0x108] sm:$0xff] %v3718
        %3763 = vst [vmem:[#allocation4 + $0x110] sm:$0xff] %v3723
        %3764 = vst [vmem:[#allocation4 + $0x118] sm:$0xff] %v3726
        %v3765 = vld [vmem:[#allocation3 + $0x12] sm:$0xff]
        %v3766 = vld [vmem:[#allocation3 + $0x1a] sm:$0xff]
        %v3767 = vld [vmem:[#allocation3 + $0x22] sm:$0xff]
        %v3768 = vld [vmem:[#allocation3 + $0x2a] sm:$0xff]
        %v3769 = vld [vmem:[#allocation3 + $0x32] sm:$0xff]
        %v3770 = vld [vmem:[#allocation3 + $0x3a] sm:$0xff]
        %v3771 = vld [vmem:[#allocation3 + $0x42] sm:$0xff]
        %v3772 = vld [vmem:[#allocation3 + $0x4a] sm:$0xff]
        %v3773 = vld [vmem:[#allocation3 + $0x52] sm:$0xff]
        %v3774 = vld [vmem:[#allocation3 + $0x5a] sm:$0xff]
        %v3775 = vld [vmem:[#allocation3 + $0x62] sm:$0xff]
        %v3776 = vld [vmem:[#allocation3 + $0x6a] sm:$0xff]
        %v3777 = vld [vmem:[#allocation3 + $0x72] sm:$0xff]
        %v3778 = vld [vmem:[#allocation3 + $0x7a] sm:$0xff]
        %v3779 = vld [vmem:[#allocation3 + $0x82] sm:$0xff]
        %v3780 = vld [vmem:[#allocation3 + $0x8a] sm:$0xff]
        %v3781 = vld [vmem:[#allocation3 + $0x92] sm:$0xff]
        %v3782 = vld [vmem:[#allocation3 + $0x9a] sm:$0xff]
        %v3783 = vld [vmem:[#allocation3 + $0xa2] sm:$0xff]
        %v3784 = vld [vmem:[#allocation3 + $0xaa] sm:$0xff]
        %v3785 = vld [vmem:[#allocation3 + $0xb2] sm:$0xff]
        %v3786 = vld [vmem:[#allocation3 + $0xba] sm:$0xff]
        %v3787 = vld [vmem:[#allocation3 + $0xc2] sm:$0xff]
        %v3788 = vld [vmem:[#allocation3 + $0xca] sm:$0xff]
        %v3789 = vld [vmem:[#allocation3 + $0xd2] sm:$0xff]
        %v3790 = vld [vmem:[#allocation3 + $0xda] sm:$0xff]
        %v3791 = vld [vmem:[#allocation3 + $0xe2] sm:$0xff]
        %v3792 = vld [vmem:[#allocation3 + $0xea] sm:$0xff]
        %v3793 = vld [vmem:[#allocation3 + $0xf2] sm:$0xff]
        %v3794 = vld [vmem:[#allocation3 + $0xfa] sm:$0xff]
        %v3795 = vld [vmem:[#allocation3 + $0x102] sm:$0xff]
        %v3796 = vld [vmem:[#allocation3 + $0x10a] sm:$0xff]
        %v3797 = vld [vmem:[#allocation3 + $0x112] sm:$0xff]
        %v3798 = vld [vmem:[#allocation3 + $0x11a] sm:$0xff]
        %v3799 = vld [vmem:[#allocation3 + $0x122] sm:$0xff]
        %v3800 = vld [vmem:[#allocation3 + $0x12a] sm:$0xff]
        %v3801 = vpack.c.bf16 %v3766, %v3765
        %v3802 = vpack.c.bf16 %v3768, %v3767
        %v3803 = vpack.c.bf16 %v3770, %v3769
        %v3804 = vpack.c.bf16 %v3772, %v3771
        %v3805 = vpack.c.bf16 %v3774, %v3773
        %v3806 = vpack.c.bf16 %v3776, %v3775
        %v3807 = vpack.c.bf16 %v3778, %v3777
        %v3808 = vpack.c.bf16 %v3780, %v3779
        %v3809 = vpack.c.bf16 %v3782, %v3781
        %v3810 = vpack.c.bf16 %v3784, %v3783
        %v3811 = vpack.c.bf16 %v3786, %v3785
        %v3812 = vpack.c.bf16 %v3788, %v3787
        %v3813 = vpack.c.bf16 %v3790, %v3789
        %v3814 = vpack.c.bf16 %v3792, %v3791
        %v3815 = vpack.c.bf16 %v3794, %v3793
        %v3816 = vpack.c.bf16 %v3796, %v3795
        %v3817 = vpack.c.bf16 %v3798, %v3797
        %v3818 = vpack.c.bf16 %v3800, %v3799
        %v3819 = vld [vmem:[#allocation3 + $0x13] sm:$0xff]
        %v3820 = vld [vmem:[#allocation3 + $0x1b] sm:$0xff]
        %v3821 = vld [vmem:[#allocation3 + $0x23] sm:$0xff]
        %v3822 = vld [vmem:[#allocation3 + $0x2b] sm:$0xff]
        %v3823 = vld [vmem:[#allocation3 + $0x33] sm:$0xff]
        %v3824 = vld [vmem:[#allocation3 + $0x3b] sm:$0xff]
        %v3825 = vld [vmem:[#allocation3 + $0x43] sm:$0xff]
        %v3826 = vld [vmem:[#allocation3 + $0x4b] sm:$0xff]
        %v3827 = vld [vmem:[#allocation3 + $0x53] sm:$0xff]
        %v3828 = vld [vmem:[#allocation3 + $0x5b] sm:$0xff]
        %v3829 = vld [vmem:[#allocation3 + $0x63] sm:$0xff]
        %v3830 = vld [vmem:[#allocation3 + $0x6b] sm:$0xff]
        %v3831 = vld [vmem:[#allocation3 + $0x73] sm:$0xff]
        %v3832 = vld [vmem:[#allocation3 + $0x7b] sm:$0xff]
        %v3833 = vld [vmem:[#allocation3 + $0x83] sm:$0xff]
        %v3834 = vld [vmem:[#allocation3 + $0x8b] sm:$0xff]
        %v3835 = vld [vmem:[#allocation3 + $0x93] sm:$0xff]
        %v3836 = vld [vmem:[#allocation3 + $0x9b] sm:$0xff]
        %v3837 = vld [vmem:[#allocation3 + $0xa3] sm:$0xff]
        %v3838 = vld [vmem:[#allocation3 + $0xab] sm:$0xff]
        %v3839 = vld [vmem:[#allocation3 + $0xb3] sm:$0xff]
        %v3840 = vld [vmem:[#allocation3 + $0xbb] sm:$0xff]
        %v3841 = vld [vmem:[#allocation3 + $0xc3] sm:$0xff]
        %v3842 = vld [vmem:[#allocation3 + $0xcb] sm:$0xff]
        %v3843 = vld [vmem:[#allocation3 + $0xd3] sm:$0xff]
        %v3844 = vld [vmem:[#allocation3 + $0xdb] sm:$0xff]
        %v3845 = vld [vmem:[#allocation3 + $0xe3] sm:$0xff]
        %v3846 = vld [vmem:[#allocation3 + $0xeb] sm:$0xff]
        %v3847 = vld [vmem:[#allocation3 + $0xf3] sm:$0xff]
        %v3848 = vld [vmem:[#allocation3 + $0xfb] sm:$0xff]
        %v3849 = vld [vmem:[#allocation3 + $0x103] sm:$0xff]
        %v3850 = vld [vmem:[#allocation3 + $0x10b] sm:$0xff]
        %v3851 = vld [vmem:[#allocation3 + $0x113] sm:$0xff]
        %v3852 = vld [vmem:[#allocation3 + $0x11b] sm:$0xff]
        %v3853 = vld [vmem:[#allocation3 + $0x123] sm:$0xff]
        %v3854 = vld [vmem:[#allocation3 + $0x12b] sm:$0xff]
        %v3855 = vpack.c.bf16 %v3820, %v3819
        %v3856 = vpack.c.bf16 %v3822, %v3821
        %v3857 = vpack.c.bf16 %v3824, %v3823
        %v3858 = vpack.c.bf16 %v3826, %v3825
        %v3859 = vpack.c.bf16 %v3828, %v3827
        %v3860 = vpack.c.bf16 %v3830, %v3829
        %v3861 = vpack.c.bf16 %v3832, %v3831
        %v3862 = vpack.c.bf16 %v3834, %v3833
        %v3863 = vpack.c.bf16 %v3836, %v3835
        %v3864 = vpack.c.bf16 %v3838, %v3837
        %v3865 = vpack.c.bf16 %v3840, %v3839
        %v3866 = vpack.c.bf16 %v3842, %v3841
        %v3867 = vpack.c.bf16 %v3844, %v3843
        %v3868 = vpack.c.bf16 %v3846, %v3845
        %v3869 = vpack.c.bf16 %v3848, %v3847
        %v3870 = vpack.c.bf16 %v3850, %v3849
        %v3871 = vpack.c.bf16 %v3852, %v3851
        %v3872 = vpack.c.bf16 %v3854, %v3853
        %v3873 = vld [vmem:[#allocation3 + $0x14] sm:$0xff]
        %v3874 = vld [vmem:[#allocation3 + $0x1c] sm:$0xff]
        %v3875 = vld [vmem:[#allocation3 + $0x24] sm:$0xff]
        %v3876 = vld [vmem:[#allocation3 + $0x2c] sm:$0xff]
        %v3877 = vld [vmem:[#allocation3 + $0x34] sm:$0xff]
        %v3878 = vld [vmem:[#allocation3 + $0x3c] sm:$0xff]
        %v3879 = vld [vmem:[#allocation3 + $0x44] sm:$0xff]
        %v3880 = vld [vmem:[#allocation3 + $0x4c] sm:$0xff]
        %v3881 = vld [vmem:[#allocation3 + $0x54] sm:$0xff]
        %v3882 = vld [vmem:[#allocation3 + $0x5c] sm:$0xff]
        %v3883 = vld [vmem:[#allocation3 + $0x64] sm:$0xff]
        %v3884 = vld [vmem:[#allocation3 + $0x6c] sm:$0xff]
        %v3885 = vld [vmem:[#allocation3 + $0x74] sm:$0xff]
        %v3886 = vld [vmem:[#allocation3 + $0x7c] sm:$0xff]
        %v3887 = vld [vmem:[#allocation3 + $0x84] sm:$0xff]
        %v3888 = vld [vmem:[#allocation3 + $0x8c] sm:$0xff]
        %v3889 = vld [vmem:[#allocation3 + $0x94] sm:$0xff]
        %v3890 = vld [vmem:[#allocation3 + $0x9c] sm:$0xff]
        %v3891 = vld [vmem:[#allocation3 + $0xa4] sm:$0xff]
        %v3892 = vld [vmem:[#allocation3 + $0xac] sm:$0xff]
        %v3893 = vld [vmem:[#allocation3 + $0xb4] sm:$0xff]
        %v3894 = vld [vmem:[#allocation3 + $0xbc] sm:$0xff]
        %v3895 = vld [vmem:[#allocation3 + $0xc4] sm:$0xff]
        %v3896 = vld [vmem:[#allocation3 + $0xcc] sm:$0xff]
        %v3897 = vld [vmem:[#allocation3 + $0xd4] sm:$0xff]
        %v3898 = vld [vmem:[#allocation3 + $0xdc] sm:$0xff]
        %v3899 = vld [vmem:[#allocation3 + $0xe4] sm:$0xff]
        %v3900 = vld [vmem:[#allocation3 + $0xec] sm:$0xff]
        %v3901 = vld [vmem:[#allocation3 + $0xf4] sm:$0xff]
        %v3902 = vld [vmem:[#allocation3 + $0xfc] sm:$0xff]
        %v3903 = vld [vmem:[#allocation3 + $0x104] sm:$0xff]
        %v3904 = vld [vmem:[#allocation3 + $0x10c] sm:$0xff]
        %v3905 = vld [vmem:[#allocation3 + $0x114] sm:$0xff]
        %v3906 = vld [vmem:[#allocation3 + $0x11c] sm:$0xff]
        %v3907 = vld [vmem:[#allocation3 + $0x124] sm:$0xff]
        %v3908 = vld [vmem:[#allocation3 + $0x12c] sm:$0xff]
        %v3909 = vpack.c.bf16 %v3874, %v3873
        %v3910 = vpack.c.bf16 %v3876, %v3875
        %v3911 = vpack.c.bf16 %v3878, %v3877
        %v3912 = vpack.c.bf16 %v3880, %v3879
        %v3913 = vpack.c.bf16 %v3882, %v3881
        %v3914 = vpack.c.bf16 %v3884, %v3883
        %v3915 = vpack.c.bf16 %v3886, %v3885
        %v3916 = vpack.c.bf16 %v3888, %v3887
        %v3917 = vpack.c.bf16 %v3890, %v3889
        %v3918 = vpack.c.bf16 %v3892, %v3891
        %v3919 = vpack.c.bf16 %v3894, %v3893
        %v3920 = vpack.c.bf16 %v3896, %v3895
        %v3921 = vpack.c.bf16 %v3898, %v3897
        %v3922 = vpack.c.bf16 %v3900, %v3899
        %v3923 = vpack.c.bf16 %v3902, %v3901
        %v3924 = vpack.c.bf16 %v3904, %v3903
        %v3925 = vpack.c.bf16 %v3906, %v3905
        %v3926 = vpack.c.bf16 %v3908, %v3907
        %s3927 = scalar_lea.vmem %s4, 192
        %v3928 = vld [vmem:[%s3927] sm:$0xf]
        %v3929 = vld [vmem:[%s3927 + $0x4] sm:$0xf]
        %v3930 = vld [vmem:[%s3927 + $0x8] sm:$0xf]
        %v3931 = vld [vmem:[%s3927 + $0xc] sm:$0xf]
        %v3932 = vld [vmem:[%s3927 + $0x10] sm:$0xf]
        %v3933 = vld [vmem:[%s3927 + $0x14] sm:$0xf]
        %v3934 = vld [vmem:[%s3927 + $0x18] sm:$0xf]
        %v3935 = vld [vmem:[%s3927 + $0x1c] sm:$0xf]
        %v3936 = vld [vmem:[%s3927 + $0x20] sm:$0xf]
        %v3937 = vld [vmem:[%s3927 + $0x24] sm:$0xf]
        %v3938 = vld [vmem:[%s3927 + $0x28] sm:$0xf]
        %v3939 = vld [vmem:[%s3927 + $0x2c] sm:$0xf]
        %v3940 = vld [vmem:[%s3927 + $0x30] sm:$0xf]
        %v3941 = vld [vmem:[%s3927 + $0x34] sm:$0xf]
        %v3942 = vld [vmem:[%s3927 + $0x38] sm:$0xf]
        %v3943 = vld [vmem:[%s3927 + $0x3c] sm:$0xf]
        %v3944 = vld [vmem:[%s3927 + $0x40] sm:$0xf]
        %v3945 = vld [vmem:[%s3927 + $0x44] sm:$0xf]
        %v3946 = vld [vmem:[%s3927 + $0x48] sm:$0xf]
        %v3947 = vld [vmem:[%s3927 + $0x4c] sm:$0xf]
        %v3948 = vld [vmem:[%s3927 + $0x50] sm:$0xf]
        %v3949 = vld [vmem:[%s3927 + $0x54] sm:$0xf]
        %v3950 = vld [vmem:[%s3927 + $0x58] sm:$0xf]
        %v3951 = vld [vmem:[%s3927 + $0x5c] sm:$0xf]
        %v3952 = vld [vmem:[%s3927 + $0x60] sm:$0xf]
        %v3953 = vld [vmem:[%s3927 + $0x64] sm:$0xf]
        %v3954 = vld [vmem:[%s3927 + $0x68] sm:$0xf]
        %v3955 = vld [vmem:[%s3927 + $0x6c] sm:$0xf]
        %v3956 = vld [vmem:[%s3927 + $0x70] sm:$0xf]
        %v3957 = vld [vmem:[%s3927 + $0x74] sm:$0xf]
        %v3958 = vld [vmem:[%s3927 + $0x78] sm:$0xf]
        %v3959 = vld [vmem:[%s3927 + $0x7c] sm:$0xf]
        %v3960 = vld [vmem:[%s3927 + $0x80] sm:$0xf]
        %v3961 = vld [vmem:[%s3927 + $0x84] sm:$0xf]
        %v3962 = vld [vmem:[%s3927 + $0x88] sm:$0xf]
        %v3963 = vld [vmem:[%s3927 + $0x8c] sm:$0xf]
        %v3964 = vld [vmem:[%s3927 + $0x90] sm:$0xf]
        %v3965 = vld [vmem:[%s3927 + $0x94] sm:$0xf]
        %v3966 = vld [vmem:[%s3927 + $0x98] sm:$0xf]
        %v3967 = vld [vmem:[%s3927 + $0x9c] sm:$0xf]
        %v3968 = vld [vmem:[%s3927 + $0xa0] sm:$0xf]
        %v3969 = vld [vmem:[%s3927 + $0xa4] sm:$0xf]
        %v3970 = vld [vmem:[%s3927 + $0xa8] sm:$0xf]
        %v3971 = vld [vmem:[%s3927 + $0xac] sm:$0xf]
        %v3972 = vld [vmem:[%s3927 + $0xb0] sm:$0xf]
        %v3973 = vld [vmem:[%s3927 + $0xb4] sm:$0xf]
        %v3974 = vld [vmem:[%s3927 + $0xb8] sm:$0xf]
        %v3975 = vld [vmem:[%s3927 + $0xbc] sm:$0xf]
        %v4024 = vunpack.c.l.b16 %v3928
        %v4025 = vunpack.c.l.b16 %v3929
        %v4026 = vunpack.c.l.b16 %v3930
        %v4027 = vunpack.c.l.b16 %v3931
        %v4028 = vunpack.c.l.b16 %v3932
        %v4029 = vunpack.c.l.b16 %v3933
        %v4030 = vunpack.c.l.b16 %v3934
        %v4031 = vunpack.c.l.b16 %v3935
        %v4032 = vunpack.c.l.b16 %v3936
        %v4033 = vunpack.c.l.b16 %v3937
        %v4034 = vunpack.c.l.b16 %v3938
        %v4035 = vunpack.c.l.b16 %v3939
        %v4036 = vunpack.c.l.b16 %v3940
        %v4037 = vunpack.c.l.b16 %v3941
        %v4038 = vunpack.c.l.b16 %v3942
        %v4039 = vunpack.c.l.b16 %v3943
        %v4040 = vunpack.c.l.b16 %v3944
        %v4041 = vunpack.c.l.b16 %v3945
        %v4042 = vunpack.c.l.b16 %v3946
        %v4043 = vunpack.c.l.b16 %v3947
        %v4044 = vunpack.c.l.b16 %v3948
        %v4045 = vunpack.c.l.b16 %v3949
        %v4046 = vunpack.c.l.b16 %v3950
        %v4047 = vunpack.c.l.b16 %v3951
        %v4048 = vunpack.c.l.b16 %v3952
        %v4049 = vunpack.c.l.b16 %v3953
        %v4050 = vunpack.c.l.b16 %v3954
        %v4051 = vunpack.c.l.b16 %v3955
        %v4052 = vunpack.c.l.b16 %v3956
        %v4053 = vunpack.c.l.b16 %v3957
        %v4054 = vunpack.c.l.b16 %v3958
        %v4055 = vunpack.c.l.b16 %v3959
        %v4056 = vunpack.c.l.b16 %v3960
        %v4057 = vunpack.c.l.b16 %v3961
        %v4058 = vunpack.c.l.b16 %v3962
        %v4059 = vunpack.c.l.b16 %v3963
        %v4060 = vunpack.c.l.b16 %v3964
        %v4061 = vunpack.c.l.b16 %v3965
        %v4062 = vunpack.c.l.b16 %v3966
        %v4063 = vunpack.c.l.b16 %v3967
        %v4064 = vunpack.c.l.b16 %v3968
        %v4065 = vunpack.c.l.b16 %v3969
        %v4066 = vunpack.c.l.b16 %v3970
        %v4067 = vunpack.c.l.b16 %v3971
        %v4068 = vunpack.c.l.b16 %v3972
        %v4069 = vunpack.c.l.b16 %v3973
        %v4070 = vunpack.c.l.b16 %v3974
        %v4071 = vunpack.c.l.b16 %v3975
        %v4072 = vpack.c.b16 %v4025, %v4024
        %v4073 = vpack.c.b16 %v4027, %v4026
        %v4074 = vpack.c.b16 %v4029, %v4028
        %v4075 = vpack.c.b16 %v4031, %v4030
        %v4076 = vpack.c.b16 %v4033, %v4032
        %v4077 = vpack.c.b16 %v4035, %v4034
        %v4078 = vpack.c.b16 %v4037, %v4036
        %v4079 = vpack.c.b16 %v4039, %v4038
        %v4080 = vpack.c.b16 %v4041, %v4040
        %v4081 = vpack.c.b16 %v4043, %v4042
        %v4082 = vpack.c.b16 %v4045, %v4044
        %v4083 = vpack.c.b16 %v4047, %v4046
        %v4084 = vpack.c.b16 %v4049, %v4048
        %v4085 = vpack.c.b16 %v4051, %v4050
        %v4086 = vpack.c.b16 %v4053, %v4052
        %v4087 = vpack.c.b16 %v4055, %v4054
        %v4088 = vpack.c.b16 %v4057, %v4056
        %v4089 = vpack.c.b16 %v4059, %v4058
        %v4090 = vpack.c.b16 %v4061, %v4060
        %v4091 = vpack.c.b16 %v4063, %v4062
        %v4092 = vpack.c.b16 %v4065, %v4064
        %v4093 = vpack.c.b16 %v4067, %v4066
        %v4094 = vpack.c.b16 %v4069, %v4068
        %v4095 = vpack.c.b16 %v4071, %v4070
        %4120 = vmatprep.subr.bf16.mxu0 0
        %4121 = vmatpush1.bf16.msra.mxu0 %v4072
        %4122 = vmatprep.subr.bf16.mxu0 0
        %4123 = vmatpush1.bf16.msra.mxu0 %v4073
        %4124 = vmatprep.subr.bf16.mxu0 0
        %4125 = vmatpush1.bf16.msra.mxu0 %v4074
        %4126 = vmatprep.subr.bf16.mxu0 0
        %4127 = vmatpush1.bf16.msra.mxu0 %v4075
        %4128 = vmatprep.subr.bf16.mxu0 0
        %4129 = vmatpush1.bf16.msra.mxu0 %v4076
        %4130 = vmatprep.subr.bf16.mxu0 0
        %4131 = vmatpush1.bf16.msra.mxu0 %v4077
        %4132 = vmatprep.subr.bf16.mxu0 0
        %4133 = vmatpush1.bf16.msra.mxu0 %v4078
        %4134 = vmatprep.subr.bf16.mxu0 0
        %4135 = vmatpush1.bf16.msra.mxu0 %v4079
        %4136 = vmatprep.subr.bf16.mxu0 0
        %4137 = vmatpush1.bf16.msra.mxu0 %v4080
        %4138 = vmatprep.subr.bf16.mxu0 0
        %4139 = vmatpush1.bf16.msra.mxu0 %v4081
        %4140 = vmatprep.subr.bf16.mxu0 0
        %4141 = vmatpush1.bf16.msra.mxu0 %v4082
        %4142 = vmatprep.subr.bf16.mxu0 0
        %4143 = vmatpush1.bf16.msra.mxu0 %v4083
        %4144 = vmatprep.subr.bf16.mxu0 0
        %4145 = vmatpush1.bf16.msra.mxu0 %v4084
        %4146 = vmatprep.subr.bf16.mxu0 0
        %4147 = vmatpush1.bf16.msra.mxu0 %v4085
        %4148 = vmatprep.subr.bf16.mxu0 0
        %4149 = vmatpush1.bf16.msra.mxu0 %v4086
        %4150 = vmatprep.subr.bf16.mxu0 0
        %4151 = vmatpush1.bf16.msra.mxu0 %v4087
        %4152 = vmatprep.mubr.bf16.mxu0 %v3855
        %4153 = vmatmul.mubr.bf16.gmra.mrb[0].mxu0 %v3801
        %v4154 = vpop.f32.mrb[0].mxu0
        %v4155 = vadd.f32 0.0, %v4154
        %v4156 = vpop.f32.mrb[0].mxu0
        %v4157 = vpop.f32.mrb[0].mxu0
        %v4158 = vadd.f32 0.0, %v4157
        %v4159 = vpop.f32.mrb[0].mxu0
        %4160 = vmatprep.mubr.bf16.mxu0 %v3856
        %4161 = vmatmul.mubr.bf16.gmra.mrb[0].mxu0 %v3802
        %v4162 = vpop.f32.mrb[0].mxu0
        %v4163 = vadd.f32 0.0, %v4162
        %v4164 = vpop.f32.mrb[0].mxu0
        %v4165 = vpop.f32.mrb[0].mxu0
        %v4166 = vadd.f32 0.0, %v4165
        %v4167 = vpop.f32.mrb[0].mxu0
        %4168 = vmatprep.mubr.bf16.mxu0 %v3857
        %4169 = vmatmul.mubr.bf16.gmra.mrb[0].mxu0 %v3803
        %v4170 = vpop.f32.mrb[0].mxu0
        %v4171 = vadd.f32 0.0, %v4170
        %v4172 = vpop.f32.mrb[0].mxu0
        %v4173 = vpop.f32.mrb[0].mxu0
        %v4174 = vadd.f32 0.0, %v4173
        %v4175 = vpop.f32.mrb[0].mxu0
        %4176 = vmatprep.mubr.bf16.mxu0 %v3858
        %4177 = vmatmul.mubr.bf16.gmra.mrb[0].mxu0 %v3804
        %v4178 = vpop.f32.mrb[0].mxu0
        %v4179 = vadd.f32 0.0, %v4178
        %v4180 = vpop.f32.mrb[0].mxu0
        %v4181 = vpop.f32.mrb[0].mxu0
        %v4182 = vadd.f32 0.0, %v4181
        %v4183 = vpop.f32.mrb[0].mxu0
        %4184 = vmatprep.mubr.bf16.mxu0 %v3859
        %4185 = vmatmul.mubr.bf16.gmra.mrb[0].mxu0 %v3805
        %v4186 = vpop.f32.mrb[0].mxu0
        %v4187 = vadd.f32 0.0, %v4186
        %v4188 = vpop.f32.mrb[0].mxu0
        %v4189 = vpop.f32.mrb[0].mxu0
        %v4190 = vadd.f32 0.0, %v4189
        %v4191 = vpop.f32.mrb[0].mxu0
        %4192 = vmatprep.mubr.bf16.mxu0 %v3860
        %4193 = vmatmul.mubr.bf16.gmra.mrb[0].mxu0 %v3806
        %v4194 = vpop.f32.mrb[0].mxu0
        %v4195 = vadd.f32 0.0, %v4194
        %v4196 = vpop.f32.mrb[0].mxu0
        %v4197 = vpop.f32.mrb[0].mxu0
        %v4198 = vadd.f32 0.0, %v4197
        %v4199 = vpop.f32.mrb[0].mxu0
        %4200 = vmatprep.mubr.bf16.mxu0 %v3861
        %4201 = vmatmul.mubr.bf16.gmra.mrb[0].mxu0 %v3807
        %v4202 = vpop.f32.mrb[0].mxu0
        %v4203 = vadd.f32 0.0, %v4202
        %v4204 = vpop.f32.mrb[0].mxu0
        %v4205 = vpop.f32.mrb[0].mxu0
        %v4206 = vadd.f32 0.0, %v4205
        %v4207 = vpop.f32.mrb[0].mxu0
        %4208 = vmatprep.mubr.bf16.mxu0 %v3862
        %4209 = vmatmul.mubr.bf16.gmra.mrb[0].mxu0 %v3808
        %v4210 = vpop.f32.mrb[0].mxu0
        %v4211 = vadd.f32 0.0, %v4210
        %v4212 = vpop.f32.mrb[0].mxu0
        %v4213 = vpop.f32.mrb[0].mxu0
        %v4214 = vadd.f32 0.0, %v4213
        %v4215 = vpop.f32.mrb[0].mxu0
        %4216 = vmatprep.mubr.bf16.mxu0 %v3863
        %4217 = vmatmul.mubr.bf16.gmra.mrb[0].mxu0 %v3809
        %v4218 = vpop.f32.mrb[0].mxu0
        %v4219 = vadd.f32 0.0, %v4218
        %v4220 = vpop.f32.mrb[0].mxu0
        %v4221 = vpop.f32.mrb[0].mxu0
        %v4222 = vadd.f32 0.0, %v4221
        %v4223 = vpop.f32.mrb[0].mxu0
        %4224 = vmatprep.mubr.bf16.mxu0 %v3864
        %4225 = vmatmul.mubr.bf16.gmra.mrb[0].mxu0 %v3810
        %v4226 = vpop.f32.mrb[0].mxu0
        %v4227 = vadd.f32 0.0, %v4226
        %v4228 = vpop.f32.mrb[0].mxu0
        %v4229 = vpop.f32.mrb[0].mxu0
        %v4230 = vadd.f32 0.0, %v4229
        %v4231 = vpop.f32.mrb[0].mxu0
        %4232 = vmatprep.mubr.bf16.mxu0 %v3865
        %4233 = vmatmul.mubr.bf16.gmra.mrb[0].mxu0 %v3811
        %v4234 = vpop.f32.mrb[0].mxu0
        %v4235 = vadd.f32 0.0, %v4234
        %v4236 = vpop.f32.mrb[0].mxu0
        %v4237 = vpop.f32.mrb[0].mxu0
        %v4238 = vadd.f32 0.0, %v4237
        %v4239 = vpop.f32.mrb[0].mxu0
        %4240 = vmatprep.mubr.bf16.mxu0 %v3866
        %4241 = vmatmul.mubr.bf16.gmra.mrb[0].mxu0 %v3812
        %v4242 = vpop.f32.mrb[0].mxu0
        %v4243 = vadd.f32 0.0, %v4242
        %v4244 = vpop.f32.mrb[0].mxu0
        %v4245 = vpop.f32.mrb[0].mxu0
        %v4246 = vadd.f32 0.0, %v4245
        %v4247 = vpop.f32.mrb[0].mxu0
        %4248 = vmatprep.mubr.bf16.mxu0 %v3867
        %4249 = vmatmul.mubr.bf16.gmra.mrb[0].mxu0 %v3813
        %v4250 = vpop.f32.mrb[0].mxu0
        %v4251 = vadd.f32 0.0, %v4250
        %v4252 = vpop.f32.mrb[0].mxu0
        %v4253 = vpop.f32.mrb[0].mxu0
        %v4254 = vadd.f32 0.0, %v4253
        %v4255 = vpop.f32.mrb[0].mxu0
        %4256 = vmatprep.mubr.bf16.mxu0 %v3868
        %4257 = vmatmul.mubr.bf16.gmra.mrb[0].mxu0 %v3814
        %v4258 = vpop.f32.mrb[0].mxu0
        %v4259 = vadd.f32 0.0, %v4258
        %v4260 = vpop.f32.mrb[0].mxu0
        %v4261 = vpop.f32.mrb[0].mxu0
        %v4262 = vadd.f32 0.0, %v4261
        %v4263 = vpop.f32.mrb[0].mxu0
        %4264 = vmatprep.mubr.bf16.mxu0 %v3869
        %4265 = vmatmul.mubr.bf16.gmra.mrb[0].mxu0 %v3815
        %v4266 = vpop.f32.mrb[0].mxu0
        %v4267 = vadd.f32 0.0, %v4266
        %v4268 = vpop.f32.mrb[0].mxu0
        %v4269 = vpop.f32.mrb[0].mxu0
        %v4270 = vadd.f32 0.0, %v4269
        %v4271 = vpop.f32.mrb[0].mxu0
        %4272 = vmatprep.mubr.bf16.mxu0 %v3870
        %4273 = vmatmul.mubr.bf16.gmra.mrb[0].mxu0 %v3816
        %v4274 = vpop.f32.mrb[0].mxu0
        %v4275 = vadd.f32 0.0, %v4274
        %v4276 = vpop.f32.mrb[0].mxu0
        %v4277 = vpop.f32.mrb[0].mxu0
        %v4278 = vadd.f32 0.0, %v4277
        %v4279 = vpop.f32.mrb[0].mxu0
        %4280 = vmatprep.mubr.bf16.mxu0 %v3871
        %4281 = vmatmul.mubr.bf16.gmra.mrb[0].mxu0 %v3817
        %v4282 = vpop.f32.mrb[0].mxu0
        %v4283 = vadd.f32 0.0, %v4282
        %v4284 = vpop.f32.mrb[0].mxu0
        %v4285 = vpop.f32.mrb[0].mxu0
        %v4286 = vadd.f32 0.0, %v4285
        %v4287 = vpop.f32.mrb[0].mxu0
        %4288 = vmatprep.mubr.bf16.mxu0 %v3872
        %4289 = vmatmul.mubr.bf16.gmra.mrb[0].mxu0 %v3818
        %v4290 = vpop.f32.mrb[0].mxu0
        %v4291 = vadd.f32 0.0, %v4290
        %v4292 = vpop.f32.mrb[0].mxu0
        %v4293 = vpop.f32.mrb[0].mxu0
        %v4294 = vadd.f32 0.0, %v4293
        %v4295 = vpop.f32.mrb[0].mxu0
        %4296 = vdwg.mxu0
        %4297 = vmatprep.subr.bf16.mxu0 0
        %4298 = vmatpush1.bf16.msra.mxu0 %v4088
        %4299 = vmatprep.subr.bf16.mxu0 0
        %4300 = vmatpush1.bf16.msra.mxu0 %v4089
        %4301 = vmatprep.subr.bf16.mxu0 0
        %4302 = vmatpush1.bf16.msra.mxu0 %v4090
        %4303 = vmatprep.subr.bf16.mxu0 0
        %4304 = vmatpush1.bf16.msra.mxu0 %v4091
        %4305 = vmatprep.subr.bf16.mxu0 0
        %4306 = vmatpush1.bf16.msra.mxu0 %v4092
        %4307 = vmatprep.subr.bf16.mxu0 0
        %4308 = vmatpush1.bf16.msra.mxu0 %v4093
        %4309 = vmatprep.subr.bf16.mxu0 0
        %4310 = vmatpush1.bf16.msra.mxu0 %v4094
        %4311 = vmatprep.subr.bf16.mxu0 0
        %4312 = vmatpush1.bf16.msra.mxu0 %v4095
        %4313 = vmatprep.subr.bf16.mxu0 0
        %4314 = vmatpush1.bf16.msra.mxu0 0
        %4315 = vmatprep.subr.bf16.mxu0 0
        %4316 = vmatpush1.bf16.msra.mxu0 0
        %4317 = vmatprep.subr.bf16.mxu0 0
        %4318 = vmatpush1.bf16.msra.mxu0 0
        %4319 = vmatprep.subr.bf16.mxu0 0
        %4320 = vmatpush1.bf16.msra.mxu0 0
        %4321 = vmatprep.subr.bf16.mxu0 0
        %4322 = vmatpush1.bf16.msra.mxu0 0
        %4323 = vmatprep.subr.bf16.mxu0 0
        %4324 = vmatpush1.bf16.msra.mxu0 0
        %4325 = vmatprep.subr.bf16.mxu0 0
        %4326 = vmatpush1.bf16.msra.mxu0 0
        %4327 = vmatprep.subr.bf16.mxu0 0
        %4328 = vmatpush1.bf16.msra.mxu0 0
        %4329 = vmatprep.mubr.bf16.mxu0 0
        %4330 = vmatmul.mubr.bf16.gmra.mrb[0].mxu0 %v3909
        %v4331 = vpop.f32.mrb[0].mxu0
        %v4332 = vadd.f32 %v4155, %v4331
        %v4333 = vpop.f32.mrb[0].mxu0
        %v4334 = vpop.f32.mrb[0].mxu0
        %v4335 = vadd.f32 %v4158, %v4334
        %v4336 = vpop.f32.mrb[0].mxu0
        %4337 = vmatprep.mubr.bf16.mxu0 0
        %4338 = vmatmul.mubr.bf16.gmra.mrb[0].mxu0 %v3910
        %v4339 = vpop.f32.mrb[0].mxu0
        %v4340 = vadd.f32 %v4163, %v4339
        %v4341 = vpop.f32.mrb[0].mxu0
        %v4342 = vpop.f32.mrb[0].mxu0
        %v4343 = vadd.f32 %v4166, %v4342
        %v4344 = vpop.f32.mrb[0].mxu0
        %4345 = vmatprep.mubr.bf16.mxu0 0
        %4346 = vmatmul.mubr.bf16.gmra.mrb[0].mxu0 %v3911
        %v4347 = vpop.f32.mrb[0].mxu0
        %v4348 = vadd.f32 %v4171, %v4347
        %v4349 = vpop.f32.mrb[0].mxu0
        %v4350 = vpop.f32.mrb[0].mxu0
        %v4351 = vadd.f32 %v4174, %v4350
        %v4352 = vpop.f32.mrb[0].mxu0
        %4353 = vmatprep.mubr.bf16.mxu0 0
        %4354 = vmatmul.mubr.bf16.gmra.mrb[0].mxu0 %v3912
        %v4355 = vpop.f32.mrb[0].mxu0
        %v4356 = vadd.f32 %v4179, %v4355
        %v4357 = vpop.f32.mrb[0].mxu0
        %v4358 = vpop.f32.mrb[0].mxu0
        %v4359 = vadd.f32 %v4182, %v4358
        %v4360 = vpop.f32.mrb[0].mxu0
        %4361 = vmatprep.mubr.bf16.mxu0 0
        %4362 = vmatmul.mubr.bf16.gmra.mrb[0].mxu0 %v3913
        %v4363 = vpop.f32.mrb[0].mxu0
        %v4364 = vadd.f32 %v4187, %v4363
        %v4365 = vpop.f32.mrb[0].mxu0
        %v4366 = vpop.f32.mrb[0].mxu0
        %v4367 = vadd.f32 %v4190, %v4366
        %v4368 = vpop.f32.mrb[0].mxu0
        %4369 = vmatprep.mubr.bf16.mxu0 0
        %4370 = vmatmul.mubr.bf16.gmra.mrb[0].mxu0 %v3914
        %v4371 = vpop.f32.mrb[0].mxu0
        %v4372 = vadd.f32 %v4195, %v4371
        %v4373 = vpop.f32.mrb[0].mxu0
        %v4374 = vpop.f32.mrb[0].mxu0
        %v4375 = vadd.f32 %v4198, %v4374
        %v4376 = vpop.f32.mrb[0].mxu0
        %4377 = vmatprep.mubr.bf16.mxu0 0
        %4378 = vmatmul.mubr.bf16.gmra.mrb[0].mxu0 %v3915
        %v4379 = vpop.f32.mrb[0].mxu0
        %v4380 = vadd.f32 %v4203, %v4379
        %v4381 = vpop.f32.mrb[0].mxu0
        %v4382 = vpop.f32.mrb[0].mxu0
        %v4383 = vadd.f32 %v4206, %v4382
        %v4384 = vpop.f32.mrb[0].mxu0
        %4385 = vmatprep.mubr.bf16.mxu0 0
        %4386 = vmatmul.mubr.bf16.gmra.mrb[0].mxu0 %v3916
        %v4387 = vpop.f32.mrb[0].mxu0
        %v4388 = vadd.f32 %v4211, %v4387
        %v4389 = vpop.f32.mrb[0].mxu0
        %v4390 = vpop.f32.mrb[0].mxu0
        %v4391 = vadd.f32 %v4214, %v4390
        %v4392 = vpop.f32.mrb[0].mxu0
        %4393 = vmatprep.mubr.bf16.mxu0 0
        %4394 = vmatmul.mubr.bf16.gmra.mrb[0].mxu0 %v3917
        %v4395 = vpop.f32.mrb[0].mxu0
        %v4396 = vadd.f32 %v4219, %v4395
        %v4397 = vpop.f32.mrb[0].mxu0
        %v4398 = vpop.f32.mrb[0].mxu0
        %v4399 = vadd.f32 %v4222, %v4398
        %v4400 = vpop.f32.mrb[0].mxu0
        %4401 = vmatprep.mubr.bf16.mxu0 0
        %4402 = vmatmul.mubr.bf16.gmra.mrb[0].mxu0 %v3918
        %v4403 = vpop.f32.mrb[0].mxu0
        %v4404 = vadd.f32 %v4227, %v4403
        %v4405 = vpop.f32.mrb[0].mxu0
        %v4406 = vpop.f32.mrb[0].mxu0
        %v4407 = vadd.f32 %v4230, %v4406
        %v4408 = vpop.f32.mrb[0].mxu0
        %4409 = vmatprep.mubr.bf16.mxu0 0
        %4410 = vmatmul.mubr.bf16.gmra.mrb[0].mxu0 %v3919
        %v4411 = vpop.f32.mrb[0].mxu0
        %v4412 = vadd.f32 %v4235, %v4411
        %v4413 = vpop.f32.mrb[0].mxu0
        %v4414 = vpop.f32.mrb[0].mxu0
        %v4415 = vadd.f32 %v4238, %v4414
        %v4416 = vpop.f32.mrb[0].mxu0
        %4417 = vmatprep.mubr.bf16.mxu0 0
        %4418 = vmatmul.mubr.bf16.gmra.mrb[0].mxu0 %v3920
        %v4419 = vpop.f32.mrb[0].mxu0
        %v4420 = vadd.f32 %v4243, %v4419
        %v4421 = vpop.f32.mrb[0].mxu0
        %v4422 = vpop.f32.mrb[0].mxu0
        %v4423 = vadd.f32 %v4246, %v4422
        %v4424 = vpop.f32.mrb[0].mxu0
        %4425 = vmatprep.mubr.bf16.mxu0 0
        %4426 = vmatmul.mubr.bf16.gmra.mrb[0].mxu0 %v3921
        %v4427 = vpop.f32.mrb[0].mxu0
        %v4428 = vadd.f32 %v4251, %v4427
        %v4429 = vpop.f32.mrb[0].mxu0
        %v4430 = vpop.f32.mrb[0].mxu0
        %v4431 = vadd.f32 %v4254, %v4430
        %v4432 = vpop.f32.mrb[0].mxu0
        %4433 = vmatprep.mubr.bf16.mxu0 0
        %4434 = vmatmul.mubr.bf16.gmra.mrb[0].mxu0 %v3922
        %v4435 = vpop.f32.mrb[0].mxu0
        %v4436 = vadd.f32 %v4259, %v4435
        %v4437 = vpop.f32.mrb[0].mxu0
        %v4438 = vpop.f32.mrb[0].mxu0
        %v4439 = vadd.f32 %v4262, %v4438
        %v4440 = vpop.f32.mrb[0].mxu0
        %4441 = vmatprep.mubr.bf16.mxu0 0
        %4442 = vmatmul.mubr.bf16.gmra.mrb[0].mxu0 %v3923
        %v4443 = vpop.f32.mrb[0].mxu0
        %v4444 = vadd.f32 %v4267, %v4443
        %v4445 = vpop.f32.mrb[0].mxu0
        %v4446 = vpop.f32.mrb[0].mxu0
        %v4447 = vadd.f32 %v4270, %v4446
        %v4448 = vpop.f32.mrb[0].mxu0
        %4449 = vmatprep.mubr.bf16.mxu0 0
        %4450 = vmatmul.mubr.bf16.gmra.mrb[0].mxu0 %v3924
        %v4451 = vpop.f32.mrb[0].mxu0
        %v4452 = vadd.f32 %v4275, %v4451
        %v4453 = vpop.f32.mrb[0].mxu0
        %v4454 = vpop.f32.mrb[0].mxu0
        %v4455 = vadd.f32 %v4278, %v4454
        %v4456 = vpop.f32.mrb[0].mxu0
        %4457 = vmatprep.mubr.bf16.mxu0 0
        %4458 = vmatmul.mubr.bf16.gmra.mrb[0].mxu0 %v3925
        %v4459 = vpop.f32.mrb[0].mxu0
        %v4460 = vadd.f32 %v4283, %v4459
        %v4461 = vpop.f32.mrb[0].mxu0
        %v4462 = vpop.f32.mrb[0].mxu0
        %v4463 = vadd.f32 %v4286, %v4462
        %v4464 = vpop.f32.mrb[0].mxu0
        %4465 = vmatprep.mubr.bf16.mxu0 0
        %4466 = vmatmul.mubr.bf16.gmra.mrb[0].mxu0 %v3926
        %v4467 = vpop.f32.mrb[0].mxu0
        %v4468 = vadd.f32 %v4291, %v4467
        %v4469 = vpop.f32.mrb[0].mxu0
        %v4470 = vpop.f32.mrb[0].mxu0
        %v4471 = vadd.f32 %v4294, %v4470
        %v4472 = vpop.f32.mrb[0].mxu0
        %4473 = vdwg.mxu0
        %v4474 = vld [vmem:[#allocation4] sm:$0xff]
        %v4475 = vld [vmem:[#allocation4 + $0x8] sm:$0xff]
        %v4476 = vld [vmem:[#allocation4 + $0x10] sm:$0xff]
        %v4477 = vld [vmem:[#allocation4 + $0x18] sm:$0xff]
        %v4478 = vld [vmem:[#allocation4 + $0x20] sm:$0xff]
        %v4479 = vld [vmem:[#allocation4 + $0x28] sm:$0xff]
        %v4480 = vld [vmem:[#allocation4 + $0x30] sm:$0xff]
        %v4481 = vld [vmem:[#allocation4 + $0x38] sm:$0xff]
        %v4482 = vld [vmem:[#allocation4 + $0x40] sm:$0xff]
        %v4483 = vld [vmem:[#allocation4 + $0x48] sm:$0xff]
        %v4484 = vld [vmem:[#allocation4 + $0x50] sm:$0xff]
        %v4485 = vld [vmem:[#allocation4 + $0x58] sm:$0xff]
        %v4486 = vld [vmem:[#allocation4 + $0x60] sm:$0xff]
        %v4487 = vld [vmem:[#allocation4 + $0x68] sm:$0xff]
        %v4488 = vld [vmem:[#allocation4 + $0x70] sm:$0xff]
        %v4489 = vld [vmem:[#allocation4 + $0x78] sm:$0xff]
        %v4490 = vld [vmem:[#allocation4 + $0x80] sm:$0xff]
        %v4491 = vld [vmem:[#allocation4 + $0x88] sm:$0xff]
        %v4492 = vld [vmem:[#allocation4 + $0x90] sm:$0xff]
        %v4493 = vld [vmem:[#allocation4 + $0x98] sm:$0xff]
        %v4494 = vld [vmem:[#allocation4 + $0xa0] sm:$0xff]
        %v4495 = vld [vmem:[#allocation4 + $0xa8] sm:$0xff]
        %v4496 = vld [vmem:[#allocation4 + $0xb0] sm:$0xff]
        %v4497 = vld [vmem:[#allocation4 + $0xb8] sm:$0xff]
        %v4498 = vld [vmem:[#allocation4 + $0xc0] sm:$0xff]
        %v4499 = vld [vmem:[#allocation4 + $0xc8] sm:$0xff]
        %v4500 = vld [vmem:[#allocation4 + $0xd0] sm:$0xff]
        %v4501 = vld [vmem:[#allocation4 + $0xd8] sm:$0xff]
        %v4502 = vld [vmem:[#allocation4 + $0xe0] sm:$0xff]
        %v4503 = vld [vmem:[#allocation4 + $0xe8] sm:$0xff]
        %v4504 = vld [vmem:[#allocation4 + $0xf0] sm:$0xff]
        %v4505 = vld [vmem:[#allocation4 + $0xf8] sm:$0xff]
        %v4506 = vld [vmem:[#allocation4 + $0x100] sm:$0xff]
        %v4507 = vld [vmem:[#allocation4 + $0x108] sm:$0xff]
        %v4508 = vld [vmem:[#allocation4 + $0x110] sm:$0xff]
        %v4509 = vld [vmem:[#allocation4 + $0x118] sm:$0xff]
        %v4510 = vadd.f32 %v4474, %v4332
        %v4511 = vadd.f32 %v4475, %v4335
        %v4512 = vadd.f32 %v4476, %v4340
        %v4513 = vadd.f32 %v4477, %v4343
        %v4514 = vadd.f32 %v4478, %v4348
        %v4515 = vadd.f32 %v4479, %v4351
        %v4516 = vadd.f32 %v4480, %v4356
        %v4517 = vadd.f32 %v4481, %v4359
        %v4518 = vadd.f32 %v4482, %v4364
        %v4519 = vadd.f32 %v4483, %v4367
        %v4520 = vadd.f32 %v4484, %v4372
        %v4521 = vadd.f32 %v4485, %v4375
        %v4522 = vadd.f32 %v4486, %v4380
        %v4523 = vadd.f32 %v4487, %v4383
        %v4524 = vadd.f32 %v4488, %v4388
        %v4525 = vadd.f32 %v4489, %v4391
        %v4526 = vadd.f32 %v4490, %v4396
        %v4527 = vadd.f32 %v4491, %v4399
        %v4528 = vadd.f32 %v4492, %v4404
        %v4529 = vadd.f32 %v4493, %v4407
        %v4530 = vadd.f32 %v4494, %v4412
        %v4531 = vadd.f32 %v4495, %v4415
        %v4532 = vadd.f32 %v4496, %v4420
        %v4533 = vadd.f32 %v4497, %v4423
        %v4534 = vadd.f32 %v4498, %v4428
        %v4535 = vadd.f32 %v4499, %v4431
        %v4536 = vadd.f32 %v4500, %v4436
        %v4537 = vadd.f32 %v4501, %v4439
        %v4538 = vadd.f32 %v4502, %v4444
        %v4539 = vadd.f32 %v4503, %v4447
        %v4540 = vadd.f32 %v4504, %v4452
        %v4541 = vadd.f32 %v4505, %v4455
        %v4542 = vadd.f32 %v4506, %v4460
        %v4543 = vadd.f32 %v4507, %v4463
        %v4544 = vadd.f32 %v4508, %v4468
        %v4545 = vadd.f32 %v4509, %v4471
        %4546 = vst [vmem:[#allocation4] sm:$0xff] %v4510
        %4547 = vst [vmem:[#allocation4 + $0x8] sm:$0xff] %v4511
        %4548 = vst [vmem:[#allocation4 + $0x10] sm:$0xff] %v4512
        %4549 = vst [vmem:[#allocation4 + $0x18] sm:$0xff] %v4513
        %4550 = vst [vmem:[#allocation4 + $0x20] sm:$0xff] %v4514
        %4551 = vst [vmem:[#allocation4 + $0x28] sm:$0xff] %v4515
        %4552 = vst [vmem:[#allocation4 + $0x30] sm:$0xff] %v4516
        %4553 = vst [vmem:[#allocation4 + $0x38] sm:$0xff] %v4517
        %4554 = vst [vmem:[#allocation4 + $0x40] sm:$0xff] %v4518
        %4555 = vst [vmem:[#allocation4 + $0x48] sm:$0xff] %v4519
        %4556 = vst [vmem:[#allocation4 + $0x50] sm:$0xff] %v4520
        %4557 = vst [vmem:[#allocation4 + $0x58] sm:$0xff] %v4521
        %4558 = vst [vmem:[#allocation4 + $0x60] sm:$0xff] %v4522
        %4559 = vst [vmem:[#allocation4 + $0x68] sm:$0xff] %v4523
        %4560 = vst [vmem:[#allocation4 + $0x70] sm:$0xff] %v4524
        %4561 = vst [vmem:[#allocation4 + $0x78] sm:$0xff] %v4525
        %4562 = vst [vmem:[#allocation4 + $0x80] sm:$0xff] %v4526
        %4563 = vst [vmem:[#allocation4 + $0x88] sm:$0xff] %v4527
        %4564 = vst [vmem:[#allocation4 + $0x90] sm:$0xff] %v4528
        %4565 = vst [vmem:[#allocation4 + $0x98] sm:$0xff] %v4529
        %4566 = vst [vmem:[#allocation4 + $0xa0] sm:$0xff] %v4530
        %4567 = vst [vmem:[#allocation4 + $0xa8] sm:$0xff] %v4531
        %4568 = vst [vmem:[#allocation4 + $0xb0] sm:$0xff] %v4532
        %4569 = vst [vmem:[#allocation4 + $0xb8] sm:$0xff] %v4533
        %4570 = vst [vmem:[#allocation4 + $0xc0] sm:$0xff] %v4534
        %4571 = vst [vmem:[#allocation4 + $0xc8] sm:$0xff] %v4535
        %4572 = vst [vmem:[#allocation4 + $0xd0] sm:$0xff] %v4536
        %4573 = vst [vmem:[#allocation4 + $0xd8] sm:$0xff] %v4537
        %4574 = vst [vmem:[#allocation4 + $0xe0] sm:$0xff] %v4538
        %4575 = vst [vmem:[#allocation4 + $0xe8] sm:$0xff] %v4539
        %4576 = vst [vmem:[#allocation4 + $0xf0] sm:$0xff] %v4540
        %4577 = vst [vmem:[#allocation4 + $0xf8] sm:$0xff] %v4541
        %4578 = vst [vmem:[#allocation4 + $0x100] sm:$0xff] %v4542
        %4579 = vst [vmem:[#allocation4 + $0x108] sm:$0xff] %v4543
        %4580 = vst [vmem:[#allocation4 + $0x110] sm:$0xff] %v4544
        %4581 = vst [vmem:[#allocation4 + $0x118] sm:$0xff] %v4545
        %v4582 = vld [vmem:[#allocation3 + $0x24] sm:$0xff]
        %v4583 = vld [vmem:[#allocation3 + $0x2c] sm:$0xff]
        %v4584 = vld [vmem:[#allocation3 + $0x34] sm:$0xff]
        %v4585 = vld [vmem:[#allocation3 + $0x3c] sm:$0xff]
        %v4586 = vld [vmem:[#allocation3 + $0x44] sm:$0xff]
        %v4587 = vld [vmem:[#allocation3 + $0x4c] sm:$0xff]
        %v4588 = vld [vmem:[#allocation3 + $0x54] sm:$0xff]
        %v4589 = vld [vmem:[#allocation3 + $0x5c] sm:$0xff]
        %v4590 = vld [vmem:[#allocation3 + $0x64] sm:$0xff]
        %v4591 = vld [vmem:[#allocation3 + $0x6c] sm:$0xff]
        %v4592 = vld [vmem:[#allocation3 + $0x74] sm:$0xff]
        %v4593 = vld [vmem:[#allocation3 + $0x7c] sm:$0xff]
        %v4594 = vld [vmem:[#allocation3 + $0x84] sm:$0xff]
        %v4595 = vld [vmem:[#allocation3 + $0x8c] sm:$0xff]
        %v4596 = vld [vmem:[#allocation3 + $0x94] sm:$0xff]
        %v4597 = vld [vmem:[#allocation3 + $0x9c] sm:$0xff]
        %v4598 = vld [vmem:[#allocation3 + $0xa4] sm:$0xff]
        %v4599 = vld [vmem:[#allocation3 + $0xac] sm:$0xff]
        %v4600 = vld [vmem:[#allocation3 + $0xb4] sm:$0xff]
        %v4601 = vld [vmem:[#allocation3 + $0xbc] sm:$0xff]
        %v4602 = vld [vmem:[#allocation3 + $0xc4] sm:$0xff]
        %v4603 = vld [vmem:[#allocation3 + $0xcc] sm:$0xff]
        %v4604 = vld [vmem:[#allocation3 + $0xd4] sm:$0xff]
        %v4605 = vld [vmem:[#allocation3 + $0xdc] sm:$0xff]
        %v4606 = vld [vmem:[#allocation3 + $0xe4] sm:$0xff]
        %v4607 = vld [vmem:[#allocation3 + $0xec] sm:$0xff]
        %v4608 = vld [vmem:[#allocation3 + $0xf4] sm:$0xff]
        %v4609 = vld [vmem:[#allocation3 + $0xfc] sm:$0xff]
        %v4610 = vld [vmem:[#allocation3 + $0x104] sm:$0xff]
        %v4611 = vld [vmem:[#allocation3 + $0x10c] sm:$0xff]
        %v4612 = vld [vmem:[#allocation3 + $0x114] sm:$0xff]
        %v4613 = vld [vmem:[#allocation3 + $0x11c] sm:$0xff]
        %v4614 = vld [vmem:[#allocation3 + $0x124] sm:$0xff]
        %v4615 = vld [vmem:[#allocation3 + $0x12c] sm:$0xff]
        %v4616 = vld [vmem:[#allocation3 + $0x134] sm:$0xff]
        %v4617 = vld [vmem:[#allocation3 + $0x13c] sm:$0xff]
        %v4618 = vpack.c.bf16 %v4583, %v4582
        %v4619 = vpack.c.bf16 %v4585, %v4584
        %v4620 = vpack.c.bf16 %v4587, %v4586
        %v4621 = vpack.c.bf16 %v4589, %v4588
        %v4622 = vpack.c.bf16 %v4591, %v4590
        %v4623 = vpack.c.bf16 %v4593, %v4592
        %v4624 = vpack.c.bf16 %v4595, %v4594
        %v4625 = vpack.c.bf16 %v4597, %v4596
        %v4626 = vpack.c.bf16 %v4599, %v4598
        %v4627 = vpack.c.bf16 %v4601, %v4600
        %v4628 = vpack.c.bf16 %v4603, %v4602
        %v4629 = vpack.c.bf16 %v4605, %v4604
        %v4630 = vpack.c.bf16 %v4607, %v4606
        %v4631 = vpack.c.bf16 %v4609, %v4608
        %v4632 = vpack.c.bf16 %v4611, %v4610
        %v4633 = vpack.c.bf16 %v4613, %v4612
        %v4634 = vpack.c.bf16 %v4615, %v4614
        %v4635 = vpack.c.bf16 %v4617, %v4616
        %v4636 = vld [vmem:[#allocation3 + $0x25] sm:$0xff]
        %v4637 = vld [vmem:[#allocation3 + $0x2d] sm:$0xff]
        %v4638 = vld [vmem:[#allocation3 + $0x35] sm:$0xff]
        %v4639 = vld [vmem:[#allocation3 + $0x3d] sm:$0xff]
        %v4640 = vld [vmem:[#allocation3 + $0x45] sm:$0xff]
        %v4641 = vld [vmem:[#allocation3 + $0x4d] sm:$0xff]
        %v4642 = vld [vmem:[#allocation3 + $0x55] sm:$0xff]
        %v4643 = vld [vmem:[#allocation3 + $0x5d] sm:$0xff]
        %v4644 = vld [vmem:[#allocation3 + $0x65] sm:$0xff]
        %v4645 = vld [vmem:[#allocation3 + $0x6d] sm:$0xff]
        %v4646 = vld [vmem:[#allocation3 + $0x75] sm:$0xff]
        %v4647 = vld [vmem:[#allocation3 + $0x7d] sm:$0xff]
        %v4648 = vld [vmem:[#allocation3 + $0x85] sm:$0xff]
        %v4649 = vld [vmem:[#allocation3 + $0x8d] sm:$0xff]
        %v4650 = vld [vmem:[#allocation3 + $0x95] sm:$0xff]
        %v4651 = vld [vmem:[#allocation3 + $0x9d] sm:$0xff]
        %v4652 = vld [vmem:[#allocation3 + $0xa5] sm:$0xff]
        %v4653 = vld [vmem:[#allocation3 + $0xad] sm:$0xff]
        %v4654 = vld [vmem:[#allocation3 + $0xb5] sm:$0xff]
        %v4655 = vld [vmem:[#allocation3 + $0xbd] sm:$0xff]
        %v4656 = vld [vmem:[#allocation3 + $0xc5] sm:$0xff]
        %v4657 = vld [vmem:[#allocation3 + $0xcd] sm:$0xff]
        %v4658 = vld [vmem:[#allocation3 + $0xd5] sm:$0xff]
        %v4659 = vld [vmem:[#allocation3 + $0xdd] sm:$0xff]
        %v4660 = vld [vmem:[#allocation3 + $0xe5] sm:$0xff]
        %v4661 = vld [vmem:[#allocation3 + $0xed] sm:$0xff]
        %v4662 = vld [vmem:[#allocation3 + $0xf5] sm:$0xff]
        %v4663 = vld [vmem:[#allocation3 + $0xfd] sm:$0xff]
        %v4664 = vld [vmem:[#allocation3 + $0x105] sm:$0xff]
        %v4665 = vld [vmem:[#allocation3 + $0x10d] sm:$0xff]
        %v4666 = vld [vmem:[#allocation3 + $0x115] sm:$0xff]
        %v4667 = vld [vmem:[#allocation3 + $0x11d] sm:$0xff]
        %v4668 = vld [vmem:[#allocation3 + $0x125] sm:$0xff]
        %v4669 = vld [vmem:[#allocation3 + $0x12d] sm:$0xff]
        %v4670 = vld [vmem:[#allocation3 + $0x135] sm:$0xff]
        %v4671 = vld [vmem:[#allocation3 + $0x13d] sm:$0xff]
        %v4672 = vpack.c.bf16 %v4637, %v4636
        %v4673 = vpack.c.bf16 %v4639, %v4638
        %v4674 = vpack.c.bf16 %v4641, %v4640
        %v4675 = vpack.c.bf16 %v4643, %v4642
        %v4676 = vpack.c.bf16 %v4645, %v4644
        %v4677 = vpack.c.bf16 %v4647, %v4646
        %v4678 = vpack.c.bf16 %v4649, %v4648
        %v4679 = vpack.c.bf16 %v4651, %v4650
        %v4680 = vpack.c.bf16 %v4653, %v4652
        %v4681 = vpack.c.bf16 %v4655, %v4654
        %v4682 = vpack.c.bf16 %v4657, %v4656
        %v4683 = vpack.c.bf16 %v4659, %v4658
        %v4684 = vpack.c.bf16 %v4661, %v4660
        %v4685 = vpack.c.bf16 %v4663, %v4662
        %v4686 = vpack.c.bf16 %v4665, %v4664
        %v4687 = vpack.c.bf16 %v4667, %v4666
        %v4688 = vpack.c.bf16 %v4669, %v4668
        %v4689 = vpack.c.bf16 %v4671, %v4670
        %v4690 = vld [vmem:[#allocation3 + $0x26] sm:$0xff]
        %v4691 = vld [vmem:[#allocation3 + $0x2e] sm:$0xff]
        %v4692 = vld [vmem:[#allocation3 + $0x36] sm:$0xff]
        %v4693 = vld [vmem:[#allocation3 + $0x3e] sm:$0xff]
        %v4694 = vld [vmem:[#allocation3 + $0x46] sm:$0xff]
        %v4695 = vld [vmem:[#allocation3 + $0x4e] sm:$0xff]
        %v4696 = vld [vmem:[#allocation3 + $0x56] sm:$0xff]
        %v4697 = vld [vmem:[#allocation3 + $0x5e] sm:$0xff]
        %v4698 = vld [vmem:[#allocation3 + $0x66] sm:$0xff]
        %v4699 = vld [vmem:[#allocation3 + $0x6e] sm:$0xff]
        %v4700 = vld [vmem:[#allocation3 + $0x76] sm:$0xff]
        %v4701 = vld [vmem:[#allocation3 + $0x7e] sm:$0xff]
        %v4702 = vld [vmem:[#allocation3 + $0x86] sm:$0xff]
        %v4703 = vld [vmem:[#allocation3 + $0x8e] sm:$0xff]
        %v4704 = vld [vmem:[#allocation3 + $0x96] sm:$0xff]
        %v4705 = vld [vmem:[#allocation3 + $0x9e] sm:$0xff]
        %v4706 = vld [vmem:[#allocation3 + $0xa6] sm:$0xff]
        %v4707 = vld [vmem:[#allocation3 + $0xae] sm:$0xff]
        %v4708 = vld [vmem:[#allocation3 + $0xb6] sm:$0xff]
        %v4709 = vld [vmem:[#allocation3 + $0xbe] sm:$0xff]
        %v4710 = vld [vmem:[#allocation3 + $0xc6] sm:$0xff]
        %v4711 = vld [vmem:[#allocation3 + $0xce] sm:$0xff]
        %v4712 = vld [vmem:[#allocation3 + $0xd6] sm:$0xff]
        %v4713 = vld [vmem:[#allocation3 + $0xde] sm:$0xff]
        %v4714 = vld [vmem:[#allocation3 + $0xe6] sm:$0xff]
        %v4715 = vld [vmem:[#allocation3 + $0xee] sm:$0xff]
        %v4716 = vld [vmem:[#allocation3 + $0xf6] sm:$0xff]
        %v4717 = vld [vmem:[#allocation3 + $0xfe] sm:$0xff]
        %v4718 = vld [vmem:[#allocation3 + $0x106] sm:$0xff]
        %v4719 = vld [vmem:[#allocation3 + $0x10e] sm:$0xff]
        %v4720 = vld [vmem:[#allocation3 + $0x116] sm:$0xff]
        %v4721 = vld [vmem:[#allocation3 + $0x11e] sm:$0xff]
        %v4722 = vld [vmem:[#allocation3 + $0x126] sm:$0xff]
        %v4723 = vld [vmem:[#allocation3 + $0x12e] sm:$0xff]
        %v4724 = vld [vmem:[#allocation3 + $0x136] sm:$0xff]
        %v4725 = vld [vmem:[#allocation3 + $0x13e] sm:$0xff]
        %v4726 = vpack.c.bf16 %v4691, %v4690
        %v4727 = vpack.c.bf16 %v4693, %v4692
        %v4728 = vpack.c.bf16 %v4695, %v4694
        %v4729 = vpack.c.bf16 %v4697, %v4696
        %v4730 = vpack.c.bf16 %v4699, %v4698
        %v4731 = vpack.c.bf16 %v4701, %v4700
        %v4732 = vpack.c.bf16 %v4703, %v4702
        %v4733 = vpack.c.bf16 %v4705, %v4704
        %v4734 = vpack.c.bf16 %v4707, %v4706
        %v4735 = vpack.c.bf16 %v4709, %v4708
        %v4736 = vpack.c.bf16 %v4711, %v4710
        %v4737 = vpack.c.bf16 %v4713, %v4712
        %v4738 = vpack.c.bf16 %v4715, %v4714
        %v4739 = vpack.c.bf16 %v4717, %v4716
        %v4740 = vpack.c.bf16 %v4719, %v4718
        %v4741 = vpack.c.bf16 %v4721, %v4720
        %v4742 = vpack.c.bf16 %v4723, %v4722
        %v4743 = vpack.c.bf16 %v4725, %v4724
        %s4744 = scalar_lea.vmem %s4, 384
        %v4745 = vld [vmem:[%s4744] sm:$0xf]
        %v4746 = vld [vmem:[%s4744 + $0x4] sm:$0xf]
        %v4747 = vld [vmem:[%s4744 + $0x8] sm:$0xf]
        %v4748 = vld [vmem:[%s4744 + $0xc] sm:$0xf]
        %v4749 = vld [vmem:[%s4744 + $0x10] sm:$0xf]
        %v4750 = vld [vmem:[%s4744 + $0x14] sm:$0xf]
        %v4751 = vld [vmem:[%s4744 + $0x18] sm:$0xf]
        %v4752 = vld [vmem:[%s4744 + $0x1c] sm:$0xf]
        %v4753 = vld [vmem:[%s4744 + $0x20] sm:$0xf]
        %v4754 = vld [vmem:[%s4744 + $0x24] sm:$0xf]
        %v4755 = vld [vmem:[%s4744 + $0x28] sm:$0xf]
        %v4756 = vld [vmem:[%s4744 + $0x2c] sm:$0xf]
        %v4757 = vld [vmem:[%s4744 + $0x30] sm:$0xf]
        %v4758 = vld [vmem:[%s4744 + $0x34] sm:$0xf]
        %v4759 = vld [vmem:[%s4744 + $0x38] sm:$0xf]
        %v4760 = vld [vmem:[%s4744 + $0x3c] sm:$0xf]
        %v4761 = vld [vmem:[%s4744 + $0x40] sm:$0xf]
        %v4762 = vld [vmem:[%s4744 + $0x44] sm:$0xf]
        %v4763 = vld [vmem:[%s4744 + $0x48] sm:$0xf]
        %v4764 = vld [vmem:[%s4744 + $0x4c] sm:$0xf]
        %v4765 = vld [vmem:[%s4744 + $0x50] sm:$0xf]
        %v4766 = vld [vmem:[%s4744 + $0x54] sm:$0xf]
        %v4767 = vld [vmem:[%s4744 + $0x58] sm:$0xf]
        %v4768 = vld [vmem:[%s4744 + $0x5c] sm:$0xf]
        %v4769 = vld [vmem:[%s4744 + $0x60] sm:$0xf]
        %v4770 = vld [vmem:[%s4744 + $0x64] sm:$0xf]
        %v4771 = vld [vmem:[%s4744 + $0x68] sm:$0xf]
        %v4772 = vld [vmem:[%s4744 + $0x6c] sm:$0xf]
        %v4773 = vld [vmem:[%s4744 + $0x70] sm:$0xf]
        %v4774 = vld [vmem:[%s4744 + $0x74] sm:$0xf]
        %v4775 = vld [vmem:[%s4744 + $0x78] sm:$0xf]
        %v4776 = vld [vmem:[%s4744 + $0x7c] sm:$0xf]
        %v4777 = vld [vmem:[%s4744 + $0x80] sm:$0xf]
        %v4778 = vld [vmem:[%s4744 + $0x84] sm:$0xf]
        %v4779 = vld [vmem:[%s4744 + $0x88] sm:$0xf]
        %v4780 = vld [vmem:[%s4744 + $0x8c] sm:$0xf]
        %v4781 = vld [vmem:[%s4744 + $0x90] sm:$0xf]
        %v4782 = vld [vmem:[%s4744 + $0x94] sm:$0xf]
        %v4783 = vld [vmem:[%s4744 + $0x98] sm:$0xf]
        %v4784 = vld [vmem:[%s4744 + $0x9c] sm:$0xf]
        %v4785 = vld [vmem:[%s4744 + $0xa0] sm:$0xf]
        %v4786 = vld [vmem:[%s4744 + $0xa4] sm:$0xf]
        %v4787 = vld [vmem:[%s4744 + $0xa8] sm:$0xf]
        %v4788 = vld [vmem:[%s4744 + $0xac] sm:$0xf]
        %v4789 = vld [vmem:[%s4744 + $0xb0] sm:$0xf]
        %v4790 = vld [vmem:[%s4744 + $0xb4] sm:$0xf]
        %v4791 = vld [vmem:[%s4744 + $0xb8] sm:$0xf]
        %v4792 = vld [vmem:[%s4744 + $0xbc] sm:$0xf]
        %v4841 = vunpack.c.l.b16 %v4745
        %v4842 = vunpack.c.l.b16 %v4746
        %v4843 = vunpack.c.l.b16 %v4747
        %v4844 = vunpack.c.l.b16 %v4748
        %v4845 = vunpack.c.l.b16 %v4749
        %v4846 = vunpack.c.l.b16 %v4750
        %v4847 = vunpack.c.l.b16 %v4751
        %v4848 = vunpack.c.l.b16 %v4752
        %v4849 = vunpack.c.l.b16 %v4753
        %v4850 = vunpack.c.l.b16 %v4754
        %v4851 = vunpack.c.l.b16 %v4755
        %v4852 = vunpack.c.l.b16 %v4756
        %v4853 = vunpack.c.l.b16 %v4757
        %v4854 = vunpack.c.l.b16 %v4758
        %v4855 = vunpack.c.l.b16 %v4759
        %v4856 = vunpack.c.l.b16 %v4760
        %v4857 = vunpack.c.l.b16 %v4761
        %v4858 = vunpack.c.l.b16 %v4762
        %v4859 = vunpack.c.l.b16 %v4763
        %v4860 = vunpack.c.l.b16 %v4764
        %v4861 = vunpack.c.l.b16 %v4765
        %v4862 = vunpack.c.l.b16 %v4766
        %v4863 = vunpack.c.l.b16 %v4767
        %v4864 = vunpack.c.l.b16 %v4768
        %v4865 = vunpack.c.l.b16 %v4769
        %v4866 = vunpack.c.l.b16 %v4770
        %v4867 = vunpack.c.l.b16 %v4771
        %v4868 = vunpack.c.l.b16 %v4772
        %v4869 = vunpack.c.l.b16 %v4773
        %v4870 = vunpack.c.l.b16 %v4774
        %v4871 = vunpack.c.l.b16 %v4775
        %v4872 = vunpack.c.l.b16 %v4776
        %v4873 = vunpack.c.l.b16 %v4777
        %v4874 = vunpack.c.l.b16 %v4778
        %v4875 = vunpack.c.l.b16 %v4779
        %v4876 = vunpack.c.l.b16 %v4780
        %v4877 = vunpack.c.l.b16 %v4781
        %v4878 = vunpack.c.l.b16 %v4782
        %v4879 = vunpack.c.l.b16 %v4783
        %v4880 = vunpack.c.l.b16 %v4784
        %v4881 = vunpack.c.l.b16 %v4785
        %v4882 = vunpack.c.l.b16 %v4786
        %v4883 = vunpack.c.l.b16 %v4787
        %v4884 = vunpack.c.l.b16 %v4788
        %v4885 = vunpack.c.l.b16 %v4789
        %v4886 = vunpack.c.l.b16 %v4790
        %v4887 = vunpack.c.l.b16 %v4791
        %v4888 = vunpack.c.l.b16 %v4792
        %v4889 = vpack.c.b16 %v4842, %v4841
        %v4890 = vpack.c.b16 %v4844, %v4843
        %v4891 = vpack.c.b16 %v4846, %v4845
        %v4892 = vpack.c.b16 %v4848, %v4847
        %v4893 = vpack.c.b16 %v4850, %v4849
        %v4894 = vpack.c.b16 %v4852, %v4851
        %v4895 = vpack.c.b16 %v4854, %v4853
        %v4896 = vpack.c.b16 %v4856, %v4855
        %v4897 = vpack.c.b16 %v4858, %v4857
        %v4898 = vpack.c.b16 %v4860, %v4859
        %v4899 = vpack.c.b16 %v4862, %v4861
        %v4900 = vpack.c.b16 %v4864, %v4863
        %v4901 = vpack.c.b16 %v4866, %v4865
        %v4902 = vpack.c.b16 %v4868, %v4867
        %v4903 = vpack.c.b16 %v4870, %v4869
        %v4904 = vpack.c.b16 %v4872, %v4871
        %v4905 = vpack.c.b16 %v4874, %v4873
        %v4906 = vpack.c.b16 %v4876, %v4875
        %v4907 = vpack.c.b16 %v4878, %v4877
        %v4908 = vpack.c.b16 %v4880, %v4879
        %v4909 = vpack.c.b16 %v4882, %v4881
        %v4910 = vpack.c.b16 %v4884, %v4883
        %v4911 = vpack.c.b16 %v4886, %v4885
        %v4912 = vpack.c.b16 %v4888, %v4887
        %4937 = vmatprep.subr.bf16.mxu0 0
        %4938 = vmatpush1.bf16.msra.mxu0 %v4889
        %4939 = vmatprep.subr.bf16.mxu0 0
        %4940 = vmatpush1.bf16.msra.mxu0 %v4890
        %4941 = vmatprep.subr.bf16.mxu0 0
        %4942 = vmatpush1.bf16.msra.mxu0 %v4891
        %4943 = vmatprep.subr.bf16.mxu0 0
        %4944 = vmatpush1.bf16.msra.mxu0 %v4892
        %4945 = vmatprep.subr.bf16.mxu0 0
        %4946 = vmatpush1.bf16.msra.mxu0 %v4893
        %4947 = vmatprep.subr.bf16.mxu0 0
        %4948 = vmatpush1.bf16.msra.mxu0 %v4894
        %4949 = vmatprep.subr.bf16.mxu0 0
        %4950 = vmatpush1.bf16.msra.mxu0 %v4895
        %4951 = vmatprep.subr.bf16.mxu0 0
        %4952 = vmatpush1.bf16.msra.mxu0 %v4896
        %4953 = vmatprep.subr.bf16.mxu0 0
        %4954 = vmatpush1.bf16.msra.mxu0 %v4897
        %4955 = vmatprep.subr.bf16.mxu0 0
        %4956 = vmatpush1.bf16.msra.mxu0 %v4898
        %4957 = vmatprep.subr.bf16.mxu0 0
        %4958 = vmatpush1.bf16.msra.mxu0 %v4899
        %4959 = vmatprep.subr.bf16.mxu0 0
        %4960 = vmatpush1.bf16.msra.mxu0 %v4900
        %4961 = vmatprep.subr.bf16.mxu0 0
        %4962 = vmatpush1.bf16.msra.mxu0 %v4901
        %4963 = vmatprep.subr.bf16.mxu0 0
        %4964 = vmatpush1.bf16.msra.mxu0 %v4902
        %4965 = vmatprep.subr.bf16.mxu0 0
        %4966 = vmatpush1.bf16.msra.mxu0 %v4903
        %4967 = vmatprep.subr.bf16.mxu0 0
        %4968 = vmatpush1.bf16.msra.mxu0 %v4904
        %4969 = vmatprep.mubr.bf16.mxu0 %v4672
        %4970 = vmatmul.mubr.bf16.gmra.mrb[0].mxu0 %v4618
        %v4971 = vpop.f32.mrb[0].mxu0
        %v4972 = vadd.f32 0.0, %v4971
        %v4973 = vpop.f32.mrb[0].mxu0
        %v4974 = vpop.f32.mrb[0].mxu0
        %v4975 = vadd.f32 0.0, %v4974
        %v4976 = vpop.f32.mrb[0].mxu0
        %4977 = vmatprep.mubr.bf16.mxu0 %v4673
        %4978 = vmatmul.mubr.bf16.gmra.mrb[0].mxu0 %v4619
        %v4979 = vpop.f32.mrb[0].mxu0
        %v4980 = vadd.f32 0.0, %v4979
        %v4981 = vpop.f32.mrb[0].mxu0
        %v4982 = vpop.f32.mrb[0].mxu0
        %v4983 = vadd.f32 0.0, %v4982
        %v4984 = vpop.f32.mrb[0].mxu0
        %4985 = vmatprep.mubr.bf16.mxu0 %v4674
        %4986 = vmatmul.mubr.bf16.gmra.mrb[0].mxu0 %v4620
        %v4987 = vpop.f32.mrb[0].mxu0
        %v4988 = vadd.f32 0.0, %v4987
        %v4989 = vpop.f32.mrb[0].mxu0
        %v4990 = vpop.f32.mrb[0].mxu0
        %v4991 = vadd.f32 0.0, %v4990
        %v4992 = vpop.f32.mrb[0].mxu0
        %4993 = vmatprep.mubr.bf16.mxu0 %v4675
        %4994 = vmatmul.mubr.bf16.gmra.mrb[0].mxu0 %v4621
        %v4995 = vpop.f32.mrb[0].mxu0
        %v4996 = vadd.f32 0.0, %v4995
        %v4997 = vpop.f32.mrb[0].mxu0
        %v4998 = vpop.f32.mrb[0].mxu0
        %v4999 = vadd.f32 0.0, %v4998
        %v5000 = vpop.f32.mrb[0].mxu0
        %5001 = vmatprep.mubr.bf16.mxu0 %v4676
        %5002 = vmatmul.mubr.bf16.gmra.mrb[0].mxu0 %v4622
        %v5003 = vpop.f32.mrb[0].mxu0
        %v5004 = vadd.f32 0.0, %v5003
        %v5005 = vpop.f32.mrb[0].mxu0
        %v5006 = vpop.f32.mrb[0].mxu0
        %v5007 = vadd.f32 0.0, %v5006
        %v5008 = vpop.f32.mrb[0].mxu0
        %5009 = vmatprep.mubr.bf16.mxu0 %v4677
        %5010 = vmatmul.mubr.bf16.gmra.mrb[0].mxu0 %v4623
        %v5011 = vpop.f32.mrb[0].mxu0
        %v5012 = vadd.f32 0.0, %v5011
        %v5013 = vpop.f32.mrb[0].mxu0
        %v5014 = vpop.f32.mrb[0].mxu0
        %v5015 = vadd.f32 0.0, %v5014
        %v5016 = vpop.f32.mrb[0].mxu0
        %5017 = vmatprep.mubr.bf16.mxu0 %v4678
        %5018 = vmatmul.mubr.bf16.gmra.mrb[0].mxu0 %v4624
        %v5019 = vpop.f32.mrb[0].mxu0
        %v5020 = vadd.f32 0.0, %v5019
        %v5021 = vpop.f32.mrb[0].mxu0
        %v5022 = vpop.f32.mrb[0].mxu0
        %v5023 = vadd.f32 0.0, %v5022
        %v5024 = vpop.f32.mrb[0].mxu0
        %5025 = vmatprep.mubr.bf16.mxu0 %v4679
        %5026 = vmatmul.mubr.bf16.gmra.mrb[0].mxu0 %v4625
        %v5027 = vpop.f32.mrb[0].mxu0
        %v5028 = vadd.f32 0.0, %v5027
        %v5029 = vpop.f32.mrb[0].mxu0
        %v5030 = vpop.f32.mrb[0].mxu0
        %v5031 = vadd.f32 0.0, %v5030
        %v5032 = vpop.f32.mrb[0].mxu0
        %5033 = vmatprep.mubr.bf16.mxu0 %v4680
        %5034 = vmatmul.mubr.bf16.gmra.mrb[0].mxu0 %v4626
        %v5035 = vpop.f32.mrb[0].mxu0
        %v5036 = vadd.f32 0.0, %v5035
        %v5037 = vpop.f32.mrb[0].mxu0
        %v5038 = vpop.f32.mrb[0].mxu0
        %v5039 = vadd.f32 0.0, %v5038
        %v5040 = vpop.f32.mrb[0].mxu0
        %5041 = vmatprep.mubr.bf16.mxu0 %v4681
        %5042 = vmatmul.mubr.bf16.gmra.mrb[0].mxu0 %v4627
        %v5043 = vpop.f32.mrb[0].mxu0
        %v5044 = vadd.f32 0.0, %v5043
        %v5045 = vpop.f32.mrb[0].mxu0
        %v5046 = vpop.f32.mrb[0].mxu0
        %v5047 = vadd.f32 0.0, %v5046
        %v5048 = vpop.f32.mrb[0].mxu0
        %5049 = vmatprep.mubr.bf16.mxu0 %v4682
        %5050 = vmatmul.mubr.bf16.gmra.mrb[0].mxu0 %v4628
        %v5051 = vpop.f32.mrb[0].mxu0
        %v5052 = vadd.f32 0.0, %v5051
        %v5053 = vpop.f32.mrb[0].mxu0
        %v5054 = vpop.f32.mrb[0].mxu0
        %v5055 = vadd.f32 0.0, %v5054
        %v5056 = vpop.f32.mrb[0].mxu0
        %5057 = vmatprep.mubr.bf16.mxu0 %v4683
        %5058 = vmatmul.mubr.bf16.gmra.mrb[0].mxu0 %v4629
        %v5059 = vpop.f32.mrb[0].mxu0
        %v5060 = vadd.f32 0.0, %v5059
        %v5061 = vpop.f32.mrb[0].mxu0
        %v5062 = vpop.f32.mrb[0].mxu0
        %v5063 = vadd.f32 0.0, %v5062
        %v5064 = vpop.f32.mrb[0].mxu0
        %5065 = vmatprep.mubr.bf16.mxu0 %v4684
        %5066 = vmatmul.mubr.bf16.gmra.mrb[0].mxu0 %v4630
        %v5067 = vpop.f32.mrb[0].mxu0
        %v5068 = vadd.f32 0.0, %v5067
        %v5069 = vpop.f32.mrb[0].mxu0
        %v5070 = vpop.f32.mrb[0].mxu0
        %v5071 = vadd.f32 0.0, %v5070
        %v5072 = vpop.f32.mrb[0].mxu0
        %5073 = vmatprep.mubr.bf16.mxu0 %v4685
        %5074 = vmatmul.mubr.bf16.gmra.mrb[0].mxu0 %v4631
        %v5075 = vpop.f32.mrb[0].mxu0
        %v5076 = vadd.f32 0.0, %v5075
        %v5077 = vpop.f32.mrb[0].mxu0
        %v5078 = vpop.f32.mrb[0].mxu0
        %v5079 = vadd.f32 0.0, %v5078
        %v5080 = vpop.f32.mrb[0].mxu0
        %5081 = vmatprep.mubr.bf16.mxu0 %v4686
        %5082 = vmatmul.mubr.bf16.gmra.mrb[0].mxu0 %v4632
        %v5083 = vpop.f32.mrb[0].mxu0
        %v5084 = vadd.f32 0.0, %v5083
        %v5085 = vpop.f32.mrb[0].mxu0
        %v5086 = vpop.f32.mrb[0].mxu0
        %v5087 = vadd.f32 0.0, %v5086
        %v5088 = vpop.f32.mrb[0].mxu0
        %5089 = vmatprep.mubr.bf16.mxu0 %v4687
        %5090 = vmatmul.mubr.bf16.gmra.mrb[0].mxu0 %v4633
        %v5091 = vpop.f32.mrb[0].mxu0
        %v5092 = vadd.f32 0.0, %v5091
        %v5093 = vpop.f32.mrb[0].mxu0
        %v5094 = vpop.f32.mrb[0].mxu0
        %v5095 = vadd.f32 0.0, %v5094
        %v5096 = vpop.f32.mrb[0].mxu0
        %5097 = vmatprep.mubr.bf16.mxu0 %v4688
        %5098 = vmatmul.mubr.bf16.gmra.mrb[0].mxu0 %v4634
        %v5099 = vpop.f32.mrb[0].mxu0
        %v5100 = vadd.f32 0.0, %v5099
        %v5101 = vpop.f32.mrb[0].mxu0
        %v5102 = vpop.f32.mrb[0].mxu0
        %v5103 = vadd.f32 0.0, %v5102
        %v5104 = vpop.f32.mrb[0].mxu0
        %5105 = vmatprep.mubr.bf16.mxu0 %v4689
        %5106 = vmatmul.mubr.bf16.gmra.mrb[0].mxu0 %v4635
        %v5107 = vpop.f32.mrb[0].mxu0
        %v5108 = vadd.f32 0.0, %v5107
        %v5109 = vpop.f32.mrb[0].mxu0
        %v5110 = vpop.f32.mrb[0].mxu0
        %v5111 = vadd.f32 0.0, %v5110
        %v5112 = vpop.f32.mrb[0].mxu0
        %5113 = vdwg.mxu0
        %5114 = vmatprep.subr.bf16.mxu0 0
        %5115 = vmatpush1.bf16.msra.mxu0 %v4905
        %5116 = vmatprep.subr.bf16.mxu0 0
        %5117 = vmatpush1.bf16.msra.mxu0 %v4906
        %5118 = vmatprep.subr.bf16.mxu0 0
        %5119 = vmatpush1.bf16.msra.mxu0 %v4907
        %5120 = vmatprep.subr.bf16.mxu0 0
        %5121 = vmatpush1.bf16.msra.mxu0 %v4908
        %5122 = vmatprep.subr.bf16.mxu0 0
        %5123 = vmatpush1.bf16.msra.mxu0 %v4909
        %5124 = vmatprep.subr.bf16.mxu0 0
        %5125 = vmatpush1.bf16.msra.mxu0 %v4910
        %5126 = vmatprep.subr.bf16.mxu0 0
        %5127 = vmatpush1.bf16.msra.mxu0 %v4911
        %5128 = vmatprep.subr.bf16.mxu0 0
        %5129 = vmatpush1.bf16.msra.mxu0 %v4912
        %5130 = vmatprep.subr.bf16.mxu0 0
        %5131 = vmatpush1.bf16.msra.mxu0 0
        %5132 = vmatprep.subr.bf16.mxu0 0
        %5133 = vmatpush1.bf16.msra.mxu0 0
        %5134 = vmatprep.subr.bf16.mxu0 0
        %5135 = vmatpush1.bf16.msra.mxu0 0
        %5136 = vmatprep.subr.bf16.mxu0 0
        %5137 = vmatpush1.bf16.msra.mxu0 0
        %5138 = vmatprep.subr.bf16.mxu0 0
        %5139 = vmatpush1.bf16.msra.mxu0 0
        %5140 = vmatprep.subr.bf16.mxu0 0
        %5141 = vmatpush1.bf16.msra.mxu0 0
        %5142 = vmatprep.subr.bf16.mxu0 0
        %5143 = vmatpush1.bf16.msra.mxu0 0
        %5144 = vmatprep.subr.bf16.mxu0 0
        %5145 = vmatpush1.bf16.msra.mxu0 0
        %5146 = vmatprep.mubr.bf16.mxu0 0
        %5147 = vmatmul.mubr.bf16.gmra.mrb[0].mxu0 %v4726
        %v5148 = vpop.f32.mrb[0].mxu0
        %v5149 = vadd.f32 %v4972, %v5148
        %v5150 = vpop.f32.mrb[0].mxu0
        %v5151 = vpop.f32.mrb[0].mxu0
        %v5152 = vadd.f32 %v4975, %v5151
        %v5153 = vpop.f32.mrb[0].mxu0
        %5154 = vmatprep.mubr.bf16.mxu0 0
        %5155 = vmatmul.mubr.bf16.gmra.mrb[0].mxu0 %v4727
        %v5156 = vpop.f32.mrb[0].mxu0
        %v5157 = vadd.f32 %v4980, %v5156
        %v5158 = vpop.f32.mrb[0].mxu0
        %v5159 = vpop.f32.mrb[0].mxu0
        %v5160 = vadd.f32 %v4983, %v5159
        %v5161 = vpop.f32.mrb[0].mxu0
        %5162 = vmatprep.mubr.bf16.mxu0 0
        %5163 = vmatmul.mubr.bf16.gmra.mrb[0].mxu0 %v4728
        %v5164 = vpop.f32.mrb[0].mxu0
        %v5165 = vadd.f32 %v4988, %v5164
        %v5166 = vpop.f32.mrb[0].mxu0
        %v5167 = vpop.f32.mrb[0].mxu0
        %v5168 = vadd.f32 %v4991, %v5167
        %v5169 = vpop.f32.mrb[0].mxu0
        %5170 = vmatprep.mubr.bf16.mxu0 0
        %5171 = vmatmul.mubr.bf16.gmra.mrb[0].mxu0 %v4729
        %v5172 = vpop.f32.mrb[0].mxu0
        %v5173 = vadd.f32 %v4996, %v5172
        %v5174 = vpop.f32.mrb[0].mxu0
        %v5175 = vpop.f32.mrb[0].mxu0
        %v5176 = vadd.f32 %v4999, %v5175
        %v5177 = vpop.f32.mrb[0].mxu0
        %5178 = vmatprep.mubr.bf16.mxu0 0
        %5179 = vmatmul.mubr.bf16.gmra.mrb[0].mxu0 %v4730
        %v5180 = vpop.f32.mrb[0].mxu0
        %v5181 = vadd.f32 %v5004, %v5180
        %v5182 = vpop.f32.mrb[0].mxu0
        %v5183 = vpop.f32.mrb[0].mxu0
        %v5184 = vadd.f32 %v5007, %v5183
        %v5185 = vpop.f32.mrb[0].mxu0
        %5186 = vmatprep.mubr.bf16.mxu0 0
        %5187 = vmatmul.mubr.bf16.gmra.mrb[0].mxu0 %v4731
        %v5188 = vpop.f32.mrb[0].mxu0
        %v5189 = vadd.f32 %v5012, %v5188
        %v5190 = vpop.f32.mrb[0].mxu0
        %v5191 = vpop.f32.mrb[0].mxu0
        %v5192 = vadd.f32 %v5015, %v5191
        %v5193 = vpop.f32.mrb[0].mxu0
        %5194 = vmatprep.mubr.bf16.mxu0 0
        %5195 = vmatmul.mubr.bf16.gmra.mrb[0].mxu0 %v4732
        %v5196 = vpop.f32.mrb[0].mxu0
        %v5197 = vadd.f32 %v5020, %v5196
        %v5198 = vpop.f32.mrb[0].mxu0
        %v5199 = vpop.f32.mrb[0].mxu0
        %v5200 = vadd.f32 %v5023, %v5199
        %v5201 = vpop.f32.mrb[0].mxu0
        %5202 = vmatprep.mubr.bf16.mxu0 0
        %5203 = vmatmul.mubr.bf16.gmra.mrb[0].mxu0 %v4733
        %v5204 = vpop.f32.mrb[0].mxu0
        %v5205 = vadd.f32 %v5028, %v5204
        %v5206 = vpop.f32.mrb[0].mxu0
        %v5207 = vpop.f32.mrb[0].mxu0
        %v5208 = vadd.f32 %v5031, %v5207
        %v5209 = vpop.f32.mrb[0].mxu0
        %5210 = vmatprep.mubr.bf16.mxu0 0
        %5211 = vmatmul.mubr.bf16.gmra.mrb[0].mxu0 %v4734
        %v5212 = vpop.f32.mrb[0].mxu0
        %v5213 = vadd.f32 %v5036, %v5212
        %v5214 = vpop.f32.mrb[0].mxu0
        %v5215 = vpop.f32.mrb[0].mxu0
        %v5216 = vadd.f32 %v5039, %v5215
        %v5217 = vpop.f32.mrb[0].mxu0
        %5218 = vmatprep.mubr.bf16.mxu0 0
        %5219 = vmatmul.mubr.bf16.gmra.mrb[0].mxu0 %v4735
        %v5220 = vpop.f32.mrb[0].mxu0
        %v5221 = vadd.f32 %v5044, %v5220
        %v5222 = vpop.f32.mrb[0].mxu0
        %v5223 = vpop.f32.mrb[0].mxu0
        %v5224 = vadd.f32 %v5047, %v5223
        %v5225 = vpop.f32.mrb[0].mxu0
        %5226 = vmatprep.mubr.bf16.mxu0 0
        %5227 = vmatmul.mubr.bf16.gmra.mrb[0].mxu0 %v4736
        %v5228 = vpop.f32.mrb[0].mxu0
        %v5229 = vadd.f32 %v5052, %v5228
        %v5230 = vpop.f32.mrb[0].mxu0
        %v5231 = vpop.f32.mrb[0].mxu0
        %v5232 = vadd.f32 %v5055, %v5231
        %v5233 = vpop.f32.mrb[0].mxu0
        %5234 = vmatprep.mubr.bf16.mxu0 0
        %5235 = vmatmul.mubr.bf16.gmra.mrb[0].mxu0 %v4737
        %v5236 = vpop.f32.mrb[0].mxu0
        %v5237 = vadd.f32 %v5060, %v5236
        %v5238 = vpop.f32.mrb[0].mxu0
        %v5239 = vpop.f32.mrb[0].mxu0
        %v5240 = vadd.f32 %v5063, %v5239
        %v5241 = vpop.f32.mrb[0].mxu0
        %5242 = vmatprep.mubr.bf16.mxu0 0
        %5243 = vmatmul.mubr.bf16.gmra.mrb[0].mxu0 %v4738
        %v5244 = vpop.f32.mrb[0].mxu0
        %v5245 = vadd.f32 %v5068, %v5244
        %v5246 = vpop.f32.mrb[0].mxu0
        %v5247 = vpop.f32.mrb[0].mxu0
        %v5248 = vadd.f32 %v5071, %v5247
        %v5249 = vpop.f32.mrb[0].mxu0
        %5250 = vmatprep.mubr.bf16.mxu0 0
        %5251 = vmatmul.mubr.bf16.gmra.mrb[0].mxu0 %v4739
        %v5252 = vpop.f32.mrb[0].mxu0
        %v5253 = vadd.f32 %v5076, %v5252
        %v5254 = vpop.f32.mrb[0].mxu0
        %v5255 = vpop.f32.mrb[0].mxu0
        %v5256 = vadd.f32 %v5079, %v5255
        %v5257 = vpop.f32.mrb[0].mxu0
        %5258 = vmatprep.mubr.bf16.mxu0 0
        %5259 = vmatmul.mubr.bf16.gmra.mrb[0].mxu0 %v4740
        %v5260 = vpop.f32.mrb[0].mxu0
        %v5261 = vadd.f32 %v5084, %v5260
        %v5262 = vpop.f32.mrb[0].mxu0
        %v5263 = vpop.f32.mrb[0].mxu0
        %v5264 = vadd.f32 %v5087, %v5263
        %v5265 = vpop.f32.mrb[0].mxu0
        %5266 = vmatprep.mubr.bf16.mxu0 0
        %5267 = vmatmul.mubr.bf16.gmra.mrb[0].mxu0 %v4741
        %v5268 = vpop.f32.mrb[0].mxu0
        %v5269 = vadd.f32 %v5092, %v5268
        %v5270 = vpop.f32.mrb[0].mxu0
        %v5271 = vpop.f32.mrb[0].mxu0
        %v5272 = vadd.f32 %v5095, %v5271
        %v5273 = vpop.f32.mrb[0].mxu0
        %5274 = vmatprep.mubr.bf16.mxu0 0
        %5275 = vmatmul.mubr.bf16.gmra.mrb[0].mxu0 %v4742
        %v5276 = vpop.f32.mrb[0].mxu0
        %v5277 = vadd.f32 %v5100, %v5276
        %v5278 = vpop.f32.mrb[0].mxu0
        %v5279 = vpop.f32.mrb[0].mxu0
        %v5280 = vadd.f32 %v5103, %v5279
        %v5281 = vpop.f32.mrb[0].mxu0
        %5282 = vmatprep.mubr.bf16.mxu0 0
        %5283 = vmatmul.mubr.bf16.gmra.mrb[0].mxu0 %v4743
        %v5284 = vpop.f32.mrb[0].mxu0
        %v5285 = vadd.f32 %v5108, %v5284
        %v5286 = vpop.f32.mrb[0].mxu0
        %v5287 = vpop.f32.mrb[0].mxu0
        %v5288 = vadd.f32 %v5111, %v5287
        %v5289 = vpop.f32.mrb[0].mxu0
        %5290 = vdwg.mxu0
        %v5291 = vld [vmem:[#allocation4] sm:$0xff]
        %v5292 = vld [vmem:[#allocation4 + $0x8] sm:$0xff]
        %v5293 = vld [vmem:[#allocation4 + $0x10] sm:$0xff]
        %v5294 = vld [vmem:[#allocation4 + $0x18] sm:$0xff]
        %v5295 = vld [vmem:[#allocation4 + $0x20] sm:$0xff]
        %v5296 = vld [vmem:[#allocation4 + $0x28] sm:$0xff]
        %v5297 = vld [vmem:[#allocation4 + $0x30] sm:$0xff]
        %v5298 = vld [vmem:[#allocation4 + $0x38] sm:$0xff]
        %v5299 = vld [vmem:[#allocation4 + $0x40] sm:$0xff]
        %v5300 = vld [vmem:[#allocation4 + $0x48] sm:$0xff]
        %v5301 = vld [vmem:[#allocation4 + $0x50] sm:$0xff]
        %v5302 = vld [vmem:[#allocation4 + $0x58] sm:$0xff]
        %v5303 = vld [vmem:[#allocation4 + $0x60] sm:$0xff]
        %v5304 = vld [vmem:[#allocation4 + $0x68] sm:$0xff]
        %v5305 = vld [vmem:[#allocation4 + $0x70] sm:$0xff]
        %v5306 = vld [vmem:[#allocation4 + $0x78] sm:$0xff]
        %v5307 = vld [vmem:[#allocation4 + $0x80] sm:$0xff]
        %v5308 = vld [vmem:[#allocation4 + $0x88] sm:$0xff]
        %v5309 = vld [vmem:[#allocation4 + $0x90] sm:$0xff]
        %v5310 = vld [vmem:[#allocation4 + $0x98] sm:$0xff]
        %v5311 = vld [vmem:[#allocation4 + $0xa0] sm:$0xff]
        %v5312 = vld [vmem:[#allocation4 + $0xa8] sm:$0xff]
        %v5313 = vld [vmem:[#allocation4 + $0xb0] sm:$0xff]
        %v5314 = vld [vmem:[#allocation4 + $0xb8] sm:$0xff]
        %v5315 = vld [vmem:[#allocation4 + $0xc0] sm:$0xff]
        %v5316 = vld [vmem:[#allocation4 + $0xc8] sm:$0xff]
        %v5317 = vld [vmem:[#allocation4 + $0xd0] sm:$0xff]
        %v5318 = vld [vmem:[#allocation4 + $0xd8] sm:$0xff]
        %v5319 = vld [vmem:[#allocation4 + $0xe0] sm:$0xff]
        %v5320 = vld [vmem:[#allocation4 + $0xe8] sm:$0xff]
        %v5321 = vld [vmem:[#allocation4 + $0xf0] sm:$0xff]
        %v5322 = vld [vmem:[#allocation4 + $0xf8] sm:$0xff]
        %v5323 = vld [vmem:[#allocation4 + $0x100] sm:$0xff]
        %v5324 = vld [vmem:[#allocation4 + $0x108] sm:$0xff]
        %v5325 = vld [vmem:[#allocation4 + $0x110] sm:$0xff]
        %v5326 = vld [vmem:[#allocation4 + $0x118] sm:$0xff]
        %v5327 = vadd.f32 %v5291, %v5149
        %v5328 = vadd.f32 %v5292, %v5152
        %v5329 = vadd.f32 %v5293, %v5157
        %v5330 = vadd.f32 %v5294, %v5160
        %v5331 = vadd.f32 %v5295, %v5165
        %v5332 = vadd.f32 %v5296, %v5168
        %v5333 = vadd.f32 %v5297, %v5173
        %v5334 = vadd.f32 %v5298, %v5176
        %v5335 = vadd.f32 %v5299, %v5181
        %v5336 = vadd.f32 %v5300, %v5184
        %v5337 = vadd.f32 %v5301, %v5189
        %v5338 = vadd.f32 %v5302, %v5192
        %v5339 = vadd.f32 %v5303, %v5197
        %v5340 = vadd.f32 %v5304, %v5200
        %v5341 = vadd.f32 %v5305, %v5205
        %v5342 = vadd.f32 %v5306, %v5208
        %v5343 = vadd.f32 %v5307, %v5213
        %v5344 = vadd.f32 %v5308, %v5216
        %v5345 = vadd.f32 %v5309, %v5221
        %v5346 = vadd.f32 %v5310, %v5224
        %v5347 = vadd.f32 %v5311, %v5229
        %v5348 = vadd.f32 %v5312, %v5232
        %v5349 = vadd.f32 %v5313, %v5237
        %v5350 = vadd.f32 %v5314, %v5240
        %v5351 = vadd.f32 %v5315, %v5245
        %v5352 = vadd.f32 %v5316, %v5248
        %v5353 = vadd.f32 %v5317, %v5253
        %v5354 = vadd.f32 %v5318, %v5256
        %v5355 = vadd.f32 %v5319, %v5261
        %v5356 = vadd.f32 %v5320, %v5264
        %v5357 = vadd.f32 %v5321, %v5269
        %v5358 = vadd.f32 %v5322, %v5272
        %v5359 = vadd.f32 %v5323, %v5277
        %v5360 = vadd.f32 %v5324, %v5280
        %v5361 = vadd.f32 %v5325, %v5285
        %v5362 = vadd.f32 %v5326, %v5288
        %5363 = vst [vmem:[#allocation4] sm:$0xff] %v5327
        %5364 = vst [vmem:[#allocation4 + $0x8] sm:$0xff] %v5328
        %5365 = vst [vmem:[#allocation4 + $0x10] sm:$0xff] %v5329
        %5366 = vst [vmem:[#allocation4 + $0x18] sm:$0xff] %v5330
        %5367 = vst [vmem:[#allocation4 + $0x20] sm:$0xff] %v5331
        %5368 = vst [vmem:[#allocation4 + $0x28] sm:$0xff] %v5332
        %5369 = vst [vmem:[#allocation4 + $0x30] sm:$0xff] %v5333
        %5370 = vst [vmem:[#allocation4 + $0x38] sm:$0xff] %v5334
        %5371 = vst [vmem:[#allocation4 + $0x40] sm:$0xff] %v5335
        %5372 = vst [vmem:[#allocation4 + $0x48] sm:$0xff] %v5336
        %5373 = vst [vmem:[#allocation4 + $0x50] sm:$0xff] %v5337
        %5374 = vst [vmem:[#allocation4 + $0x58] sm:$0xff] %v5338
        %5375 = vst [vmem:[#allocation4 + $0x60] sm:$0xff] %v5339
        %5376 = vst [vmem:[#allocation4 + $0x68] sm:$0xff] %v5340
        %5377 = vst [vmem:[#allocation4 + $0x70] sm:$0xff] %v5341
        %5378 = vst [vmem:[#allocation4 + $0x78] sm:$0xff] %v5342
        %5379 = vst [vmem:[#allocation4 + $0x80] sm:$0xff] %v5343
        %5380 = vst [vmem:[#allocation4 + $0x88] sm:$0xff] %v5344
        %5381 = vst [vmem:[#allocation4 + $0x90] sm:$0xff] %v5345
        %5382 = vst [vmem:[#allocation4 + $0x98] sm:$0xff] %v5346
        %5383 = vst [vmem:[#allocation4 + $0xa0] sm:$0xff] %v5347
        %5384 = vst [vmem:[#allocation4 + $0xa8] sm:$0xff] %v5348
        %5385 = vst [vmem:[#allocation4 + $0xb0] sm:$0xff] %v5349
        %5386 = vst [vmem:[#allocation4 + $0xb8] sm:$0xff] %v5350
        %5387 = vst [vmem:[#allocation4 + $0xc0] sm:$0xff] %v5351
        %5388 = vst [vmem:[#allocation4 + $0xc8] sm:$0xff] %v5352
        %5389 = vst [vmem:[#allocation4 + $0xd0] sm:$0xff] %v5353
        %5390 = vst [vmem:[#allocation4 + $0xd8] sm:$0xff] %v5354
        %5391 = vst [vmem:[#allocation4 + $0xe0] sm:$0xff] %v5355
        %5392 = vst [vmem:[#allocation4 + $0xe8] sm:$0xff] %v5356
        %5393 = vst [vmem:[#allocation4 + $0xf0] sm:$0xff] %v5357
        %5394 = vst [vmem:[#allocation4 + $0xf8] sm:$0xff] %v5358
        %5395 = vst [vmem:[#allocation4 + $0x100] sm:$0xff] %v5359
        %5396 = vst [vmem:[#allocation4 + $0x108] sm:$0xff] %v5360
        %5397 = vst [vmem:[#allocation4 + $0x110] sm:$0xff] %v5361
        %5398 = vst [vmem:[#allocation4 + $0x118] sm:$0xff] %v5362
        %v5399 = vld [vmem:[#allocation4] sm:$0xff]
        %v5400 = vld [vmem:[#allocation4 + $0x8] sm:$0xff]
        %v5401 = vld [vmem:[#allocation4 + $0x10] sm:$0xff]
        %v5402 = vld [vmem:[#allocation4 + $0x18] sm:$0xff]
        %v5403 = vld [vmem:[#allocation4 + $0x20] sm:$0xff]
        %v5404 = vld [vmem:[#allocation4 + $0x28] sm:$0xff]
        %v5405 = vld [vmem:[#allocation4 + $0x30] sm:$0xff]
        %v5406 = vld [vmem:[#allocation4 + $0x38] sm:$0xff]
        %v5407 = vld [vmem:[#allocation4 + $0x40] sm:$0xff]
        %v5408 = vld [vmem:[#allocation4 + $0x48] sm:$0xff]
        %v5409 = vld [vmem:[#allocation4 + $0x50] sm:$0xff]
        %v5410 = vld [vmem:[#allocation4 + $0x58] sm:$0xff]
        %v5411 = vld [vmem:[#allocation4 + $0x60] sm:$0xff]
        %v5412 = vld [vmem:[#allocation4 + $0x68] sm:$0xff]
        %v5413 = vld [vmem:[#allocation4 + $0x70] sm:$0xff]
        %v5414 = vld [vmem:[#allocation4 + $0x78] sm:$0xff]
        %v5415 = vld [vmem:[#allocation4 + $0x80] sm:$0xff]
        %v5416 = vld [vmem:[#allocation4 + $0x88] sm:$0xff]
        %v5417 = vld [vmem:[#allocation4 + $0x90] sm:$0xff]
        %v5418 = vld [vmem:[#allocation4 + $0x98] sm:$0xff]
        %v5419 = vld [vmem:[#allocation4 + $0xa0] sm:$0xff]
        %v5420 = vld [vmem:[#allocation4 + $0xa8] sm:$0xff]
        %v5421 = vld [vmem:[#allocation4 + $0xb0] sm:$0xff]
        %v5422 = vld [vmem:[#allocation4 + $0xb8] sm:$0xff]
        %v5423 = vld [vmem:[#allocation4 + $0xc0] sm:$0xff]
        %v5424 = vld [vmem:[#allocation4 + $0xc8] sm:$0xff]
        %v5425 = vld [vmem:[#allocation4 + $0xd0] sm:$0xff]
        %v5426 = vld [vmem:[#allocation4 + $0xd8] sm:$0xff]
        %v5427 = vld [vmem:[#allocation4 + $0xe0] sm:$0xff]
        %v5428 = vld [vmem:[#allocation4 + $0xe8] sm:$0xff]
        %v5429 = vld [vmem:[#allocation4 + $0xf0] sm:$0xff]
        %v5430 = vld [vmem:[#allocation4 + $0xf8] sm:$0xff]
        %v5431 = vld [vmem:[#allocation4 + $0x100] sm:$0xff]
        %v5432 = vld [vmem:[#allocation4 + $0x108] sm:$0xff]
        %v5433 = vld [vmem:[#allocation4 + $0x110] sm:$0xff]
        %v5434 = vld [vmem:[#allocation4 + $0x118] sm:$0xff]
        %v5435 = vld [vmem:[%s5] sm:$0x1]
        %v5437 = vlaneseq
        %v5438 = vshrl.u32 %v5437, 7
        %v5439 = vsub.s32 0, %v5438
        %v5440 = vrot.slane %v5435, %v5439
        %v5442 = vmul.f32 %v5399, %v5440
        %v5443 = vmul.f32 %v5400, %v5440
        %v5444 = vmul.f32 %v5401, %v5440
        %v5445 = vmul.f32 %v5402, %v5440
        %v5446 = vmul.f32 %v5403, %v5440
        %v5447 = vmul.f32 %v5404, %v5440
        %v5448 = vmul.f32 %v5405, %v5440
        %v5449 = vmul.f32 %v5406, %v5440
        %v5450 = vmul.f32 %v5407, %v5440
        %v5451 = vmul.f32 %v5408, %v5440
        %v5452 = vmul.f32 %v5409, %v5440
        %v5453 = vmul.f32 %v5410, %v5440
        %v5454 = vmul.f32 %v5411, %v5440
        %v5455 = vmul.f32 %v5412, %v5440
        %v5456 = vmul.f32 %v5413, %v5440
        %v5457 = vmul.f32 %v5414, %v5440
        %v5458 = vmul.f32 %v5415, %v5440
        %v5459 = vmul.f32 %v5416, %v5440
        %v5460 = vmul.f32 %v5417, %v5440
        %v5461 = vmul.f32 %v5418, %v5440
        %v5462 = vmul.f32 %v5419, %v5440
        %v5463 = vmul.f32 %v5420, %v5440
        %v5464 = vmul.f32 %v5421, %v5440
        %v5465 = vmul.f32 %v5422, %v5440
        %v5466 = vmul.f32 %v5423, %v5440
        %v5467 = vmul.f32 %v5424, %v5440
        %v5468 = vmul.f32 %v5425, %v5440
        %v5469 = vmul.f32 %v5426, %v5440
        %v5470 = vmul.f32 %v5427, %v5440
        %v5471 = vmul.f32 %v5428, %v5440
        %v5472 = vmul.f32 %v5429, %v5440
        %v5473 = vmul.f32 %v5430, %v5440
        %v5474 = vmul.f32 %v5431, %v5440
        %v5475 = vmul.f32 %v5432, %v5440
        %v5476 = vmul.f32 %v5433, %v5440
        %v5477 = vmul.f32 %v5434, %v5440
        %v5478 = vld [vmem:[%s6] sm:$0x1]
        %v5480 = vlaneseq
        %v5481 = vshrl.u32 %v5480, 7
        %v5482 = vsub.s32 0, %v5481
        %v5483 = vrot.slane %v5478, %v5482
        %v5485 = vadd.f32 %v5442, %v5483
        %v5486 = vadd.f32 %v5443, %v5483
        %v5487 = vadd.f32 %v5444, %v5483
        %v5488 = vadd.f32 %v5445, %v5483
        %v5489 = vadd.f32 %v5446, %v5483
        %v5490 = vadd.f32 %v5447, %v5483
        %v5491 = vadd.f32 %v5448, %v5483
        %v5492 = vadd.f32 %v5449, %v5483
        %v5493 = vadd.f32 %v5450, %v5483
        %v5494 = vadd.f32 %v5451, %v5483
        %v5495 = vadd.f32 %v5452, %v5483
        %v5496 = vadd.f32 %v5453, %v5483
        %v5497 = vadd.f32 %v5454, %v5483
        %v5498 = vadd.f32 %v5455, %v5483
        %v5499 = vadd.f32 %v5456, %v5483
        %v5500 = vadd.f32 %v5457, %v5483
        %v5501 = vadd.f32 %v5458, %v5483
        %v5502 = vadd.f32 %v5459, %v5483
        %v5503 = vadd.f32 %v5460, %v5483
        %v5504 = vadd.f32 %v5461, %v5483
        %v5505 = vadd.f32 %v5462, %v5483
        %v5506 = vadd.f32 %v5463, %v5483
        %v5507 = vadd.f32 %v5464, %v5483
        %v5508 = vadd.f32 %v5465, %v5483
        %v5509 = vadd.f32 %v5466, %v5483
        %v5510 = vadd.f32 %v5467, %v5483
        %v5511 = vadd.f32 %v5468, %v5483
        %v5512 = vadd.f32 %v5469, %v5483
        %v5513 = vadd.f32 %v5470, %v5483
        %v5514 = vadd.f32 %v5471, %v5483
        %v5515 = vadd.f32 %v5472, %v5483
        %v5516 = vadd.f32 %v5473, %v5483
        %v5517 = vadd.f32 %v5474, %v5483
        %v5518 = vadd.f32 %v5475, %v5483
        %v5519 = vadd.f32 %v5476, %v5483
        %v5520 = vadd.f32 %v5477, %v5483
        %v5521 = vld [vmem:[%s276] sm:$0xff]
        %v5522 = vld [vmem:[%s276 + $0x8] sm:$0xff]
        %v5523 = vadd.f32 %v5485, %v5521
        %v5524 = vadd.f32 %v5486, %v5522
        %v5525 = vmax.f32 %v5523, 0.0
        %v5526 = vmax.f32 %v5524, 0.0
        %5527 = vst [vmem:[%s271] sm:$0xff] %v5525
        %5528 = vst [vmem:[%s271 + $0x8] sm:$0xff] %v5526
        %v5529 = vld [vmem:[%s366] sm:$0xff]
        %v5530 = vld [vmem:[%s366 + $0x8] sm:$0xff]
        %vm5533 = vcmask 1041408
        %v5534 = vrot.slane %v5529, 6
        %v5535 = vrot.slane %v5530, 6
        %v5536 = vsel %vm5533, %v5534, %v5535
        %v5540 = vadd.f32 %v5487, %v5534
        %v5541 = vadd.f32 %v5488, %v5536
        %v5542 = vadd.f32 %v5489, %v5535
        %v5543 = vmax.f32 %v5540, 0.0
        %v5544 = vmax.f32 %v5541, 0.0
        %v5545 = vmax.f32 %v5542, 0.0
        %s5546 = scalar_lea.vmem %s271, 16 [#allocation5]
        %5547 = vst [vmem:[%s5546 - $0x2] sm:$0xfc] %v5543
        %5548 = vst [vmem:[%s5546 + $0x6] sm:$0xff] %v5544
        %5549 = vst [vmem:[%s5546 + $0xe] sm:$0x3] %v5545
        %v5550 = vld [vmem:[%s371] sm:$0xff]
        %v5551 = vld [vmem:[%s371 + $0x8] sm:$0xff]
        %vm5554 = vcmask 1043456
        %v5555 = vrot.slane %v5550, 4
        %v5556 = vrot.slane %v5551, 4
        %v5557 = vsel %vm5554, %v5555, %v5556
        %v5561 = vadd.f32 %v5489, %v5555
        %v5562 = vadd.f32 %v5490, %v5557
        %v5563 = vadd.f32 %v5491, %v5556
        %v5564 = vmax.f32 %v5561, 0.0
        %v5565 = vmax.f32 %v5562, 0.0
        %v5566 = vmax.f32 %v5563, 0.0
        %s5567 = scalar_lea.vmem %s271, 32 [#allocation5]
        %5568 = vst [vmem:[%s5567 - $0x4] sm:$0xf0] %v5564
        %5569 = vst [vmem:[%s5567 + $0x4] sm:$0xff] %v5565
        %5570 = vst [vmem:[%s5567 + $0xc] sm:$0xf] %v5566
        %v5571 = vld [vmem:[%s376] sm:$0xff]
        %v5572 = vld [vmem:[%s376 + $0x8] sm:$0xff]
        %vm5575 = vcmask 1045504
        %v5576 = vrot.slane %v5571, 2
        %v5577 = vrot.slane %v5572, 2
        %v5578 = vsel %vm5575, %v5576, %v5577
        %v5582 = vadd.f32 %v5491, %v5576
        %v5583 = vadd.f32 %v5492, %v5578
        %v5584 = vadd.f32 %v5493, %v5577
        %v5585 = vmax.f32 %v5582, 0.0
        %v5586 = vmax.f32 %v5583, 0.0
        %v5587 = vmax.f32 %v5584, 0.0
        %s5588 = scalar_lea.vmem %s271, 48 [#allocation5]
        %5589 = vst [vmem:[%s5588 - $0x6] sm:$0xc0] %v5585
        %5590 = vst [vmem:[%s5588 + $0x2] sm:$0xff] %v5586
        %5591 = vst [vmem:[%s5588 + $0xa] sm:$0x3f] %v5587
        %v5592 = vld [vmem:[%s381] sm:$0xff]
        %v5593 = vld [vmem:[%s381 + $0x8] sm:$0xff]
        %v5594 = vadd.f32 %v5494, %v5592
        %v5595 = vadd.f32 %v5495, %v5593
        %v5596 = vmax.f32 %v5594, 0.0
        %v5597 = vmax.f32 %v5595, 0.0
        %s5598 = scalar_lea.vmem %s271, 64 [#allocation5]
        %5599 = vst [vmem:[%s5598] sm:$0xff] %v5596
        %5600 = vst [vmem:[%s5598 + $0x8] sm:$0xff] %v5597
        %v5601 = vld [vmem:[%s386] sm:$0xff]
        %v5602 = vld [vmem:[%s386 + $0x8] sm:$0xff]
        %v5605 = vrot.slane %v5601, 6
        %v5606 = vrot.slane %v5602, 6
        %v5607 = vsel %vm5533, %v5605, %v5606
        %v5611 = vadd.f32 %v5496, %v5605
        %v5612 = vadd.f32 %v5497, %v5607
        %v5613 = vadd.f32 %v5498, %v5606
        %v5614 = vmax.f32 %v5611, 0.0
        %v5615 = vmax.f32 %v5612, 0.0
        %v5616 = vmax.f32 %v5613, 0.0
        %s5617 = scalar_lea.vmem %s271, 80 [#allocation5]
        %5618 = vst [vmem:[%s5617 - $0x2] sm:$0xfc] %v5614
        %5619 = vst [vmem:[%s5617 + $0x6] sm:$0xff] %v5615
        %5620 = vst [vmem:[%s5617 + $0xe] sm:$0x3] %v5616
        %v5621 = vld [vmem:[%s391] sm:$0xff]
        %v5622 = vld [vmem:[%s391 + $0x8] sm:$0xff]
        %v5625 = vrot.slane %v5621, 4
        %v5626 = vrot.slane %v5622, 4
        %v5627 = vsel %vm5554, %v5625, %v5626
        %v5631 = vadd.f32 %v5498, %v5625
        %v5632 = vadd.f32 %v5499, %v5627
        %v5633 = vadd.f32 %v5500, %v5626
        %v5634 = vmax.f32 %v5631, 0.0
        %v5635 = vmax.f32 %v5632, 0.0
        %v5636 = vmax.f32 %v5633, 0.0
        %s5637 = scalar_lea.vmem %s271, 96 [#allocation5]
        %5638 = vst [vmem:[%s5637 - $0x4] sm:$0xf0] %v5634
        %5639 = vst [vmem:[%s5637 + $0x4] sm:$0xff] %v5635
        %5640 = vst [vmem:[%s5637 + $0xc] sm:$0xf] %v5636
        %v5641 = vld [vmem:[%s396] sm:$0xff]
        %v5642 = vld [vmem:[%s396 + $0x8] sm:$0xff]
        %v5645 = vrot.slane %v5641, 2
        %v5646 = vrot.slane %v5642, 2
        %v5647 = vsel %vm5575, %v5645, %v5646
        %v5651 = vadd.f32 %v5500, %v5645
        %v5652 = vadd.f32 %v5501, %v5647
        %v5653 = vadd.f32 %v5502, %v5646
        %v5654 = vmax.f32 %v5651, 0.0
        %v5655 = vmax.f32 %v5652, 0.0
        %v5656 = vmax.f32 %v5653, 0.0
        %s5657 = scalar_lea.vmem %s271, 112 [#allocation5]
        %5658 = vst [vmem:[%s5657 - $0x6] sm:$0xc0] %v5654
        %5659 = vst [vmem:[%s5657 + $0x2] sm:$0xff] %v5655
        %5660 = vst [vmem:[%s5657 + $0xa] sm:$0x3f] %v5656
        %v5661 = vld [vmem:[%s401] sm:$0xff]
        %v5662 = vld [vmem:[%s401 + $0x8] sm:$0xff]
        %v5663 = vadd.f32 %v5503, %v5661
        %v5664 = vadd.f32 %v5504, %v5662
        %v5665 = vmax.f32 %v5663, 0.0
        %v5666 = vmax.f32 %v5664, 0.0
        %s5667 = scalar_lea.vmem %s271, 128 [#allocation5]
        %5668 = vst [vmem:[%s5667] sm:$0xff] %v5665
        %5669 = vst [vmem:[%s5667 + $0x8] sm:$0xff] %v5666
        %v5670 = vld [vmem:[%s406] sm:$0xff]
        %v5671 = vld [vmem:[%s406 + $0x8] sm:$0xff]
        %v5674 = vrot.slane %v5670, 6
        %v5675 = vrot.slane %v5671, 6
        %v5676 = vsel %vm5533, %v5674, %v5675
        %v5680 = vadd.f32 %v5505, %v5674
        %v5681 = vadd.f32 %v5506, %v5676
        %v5682 = vadd.f32 %v5507, %v5675
        %v5683 = vmax.f32 %v5680, 0.0
        %v5684 = vmax.f32 %v5681, 0.0
        %v5685 = vmax.f32 %v5682, 0.0
        %s5686 = scalar_lea.vmem %s271, 144 [#allocation5]
        %5687 = vst [vmem:[%s5686 - $0x2] sm:$0xfc] %v5683
        %5688 = vst [vmem:[%s5686 + $0x6] sm:$0xff] %v5684
        %5689 = vst [vmem:[%s5686 + $0xe] sm:$0x3] %v5685
        %v5690 = vld [vmem:[%s411] sm:$0xff]
        %v5691 = vld [vmem:[%s411 + $0x8] sm:$0xff]
        %v5694 = vrot.slane %v5690, 4
        %v5695 = vrot.slane %v5691, 4
        %v5696 = vsel %vm5554, %v5694, %v5695
        %v5700 = vadd.f32 %v5507, %v5694
        %v5701 = vadd.f32 %v5508, %v5696
        %v5702 = vadd.f32 %v5509, %v5695
        %v5703 = vmax.f32 %v5700, 0.0
        %v5704 = vmax.f32 %v5701, 0.0
        %v5705 = vmax.f32 %v5702, 0.0
        %s5706 = scalar_lea.vmem %s271, 160 [#allocation5]
        %5707 = vst [vmem:[%s5706 - $0x4] sm:$0xf0] %v5703
        %5708 = vst [vmem:[%s5706 + $0x4] sm:$0xff] %v5704
        %5709 = vst [vmem:[%s5706 + $0xc] sm:$0xf] %v5705
        %v5710 = vld [vmem:[%s416] sm:$0xff]
        %v5711 = vld [vmem:[%s416 + $0x8] sm:$0xff]
        %v5714 = vrot.slane %v5710, 2
        %v5715 = vrot.slane %v5711, 2
        %v5716 = vsel %vm5575, %v5714, %v5715
        %v5720 = vadd.f32 %v5509, %v5714
        %v5721 = vadd.f32 %v5510, %v5716
        %v5722 = vadd.f32 %v5511, %v5715
        %v5723 = vmax.f32 %v5720, 0.0
        %v5724 = vmax.f32 %v5721, 0.0
        %v5725 = vmax.f32 %v5722, 0.0
        %s5726 = scalar_lea.vmem %s271, 176 [#allocation5]
        %5727 = vst [vmem:[%s5726 - $0x6] sm:$0xc0] %v5723
        %5728 = vst [vmem:[%s5726 + $0x2] sm:$0xff] %v5724
        %5729 = vst [vmem:[%s5726 + $0xa] sm:$0x3f] %v5725
        %v5730 = vld [vmem:[%s421] sm:$0xff]
        %v5731 = vld [vmem:[%s421 + $0x8] sm:$0xff]
        %v5732 = vadd.f32 %v5512, %v5730
        %v5733 = vadd.f32 %v5513, %v5731
        %v5734 = vmax.f32 %v5732, 0.0
        %v5735 = vmax.f32 %v5733, 0.0
        %s5736 = scalar_lea.vmem %s271, 192 [#allocation5]
        %5737 = vst [vmem:[%s5736] sm:$0xff] %v5734
        %5738 = vst [vmem:[%s5736 + $0x8] sm:$0xff] %v5735
        %v5739 = vld [vmem:[%s426] sm:$0xff]
        %v5740 = vld [vmem:[%s426 + $0x8] sm:$0xff]
        %v5743 = vrot.slane %v5739, 6
        %v5744 = vrot.slane %v5740, 6
        %v5745 = vsel %vm5533, %v5743, %v5744
        %v5749 = vadd.f32 %v5514, %v5743
        %v5750 = vadd.f32 %v5515, %v5745
        %v5751 = vadd.f32 %v5516, %v5744
        %v5752 = vmax.f32 %v5749, 0.0
        %v5753 = vmax.f32 %v5750, 0.0
        %v5754 = vmax.f32 %v5751, 0.0
        %s5755 = scalar_lea.vmem %s271, 208 [#allocation5]
        %5756 = vst [vmem:[%s5755 - $0x2] sm:$0xfc] %v5752
        %5757 = vst [vmem:[%s5755 + $0x6] sm:$0xff] %v5753
        %5758 = vst [vmem:[%s5755 + $0xe] sm:$0x3] %v5754
        %v5759 = vld [vmem:[%s431] sm:$0xff]
        %v5760 = vld [vmem:[%s431 + $0x8] sm:$0xff]
        %v5763 = vrot.slane %v5759, 4
        %v5764 = vrot.slane %v5760, 4
        %v5765 = vsel %vm5554, %v5763, %v5764
        %v5769 = vadd.f32 %v5516, %v5763
        %v5770 = vadd.f32 %v5517, %v5765
        %v5771 = vadd.f32 %v5518, %v5764
        %v5772 = vmax.f32 %v5769, 0.0
        %v5773 = vmax.f32 %v5770, 0.0
        %v5774 = vmax.f32 %v5771, 0.0
        %s5775 = scalar_lea.vmem %s271, 224 [#allocation5]
        %5776 = vst [vmem:[%s5775 - $0x4] sm:$0xf0] %v5772
        %5777 = vst [vmem:[%s5775 + $0x4] sm:$0xff] %v5773
        %5778 = vst [vmem:[%s5775 + $0xc] sm:$0xf] %v5774
        %v5779 = vld [vmem:[%s436] sm:$0xff]
        %v5780 = vld [vmem:[%s436 + $0x8] sm:$0xff]
        %v5783 = vrot.slane %v5779, 2
        %v5784 = vrot.slane %v5780, 2
        %v5785 = vsel %vm5575, %v5783, %v5784
        %v5789 = vadd.f32 %v5518, %v5783
        %v5790 = vadd.f32 %v5519, %v5785
        %v5791 = vadd.f32 %v5520, %v5784
        %v5792 = vmax.f32 %v5789, 0.0
        %v5793 = vmax.f32 %v5790, 0.0
        %v5794 = vmax.f32 %v5791, 0.0
        %s5795 = scalar_lea.vmem %s271, 240 [#allocation5]
        %5796 = vst [vmem:[%s5795 - $0x6] sm:$0xc0] %v5792
        %5797 = vst [vmem:[%s5795 + $0x2] sm:$0xff] %v5793
        %5798 = vst [vmem:[%s5795 + $0xa] sm:$0x3f] %v5794
        %s5799 = sand.u32 %s181, 1
        %s5800 = scalar_lea.sflag [#allocation6], %s5799
        %s5801 = sand.u32 %s181, 1
        %s5802 = smul.addr %s5801, 256
        %s5803 = scalar_lea.vmem [#allocation5], %s5802
        // Predicated region
        $region49: #{residual_block_forward.1} parent=47 // pred_check
          %p5804 = pneg %p191
        $region50: #{residual_block_forward.1} parent=47 // pred_check_branch
          %5806 = sbr.rel (%p5804) target = $region52
        $region51: #{residual_block_forward.1} parent=47 // pred_region
          %s5808 = ssub.s32 4096, 4096
          %5809 = vsyncadd %s5800, %s5808
          %s5810 = smul.addr %s21, 32
          %s5811 = smul.addr %s5810, 128
          %s5812 = scalar_lea.hbm %s7, %s5811
          %s5813 = sshll.u32 %s5803, 4
          %s5814 = int_to_ptr.vmem [resolvable:$true] %s5813
          %5819 = dma.vmem_to_hbm [thread:$0]  %s5814, 4096, %s5812, %s5800, 128, 128, 8
        $region52: #{residual_block_forward.1} parent=47 // pred_fallthru
          _
      $region48: #{residual_block_forward.1} parent=5 // pred_fallthru
        _
      %p5820 = scmp.le.s32.totalorder 2, %s16
      // Predicated region
      $region53: #{residual_block_forward.1} parent=5 // pred_check
        %p5821 = pneg %p5820
      $region54: #{residual_block_forward.1} parent=5 // pred_check_branch
        %5823 = sbr.rel (%p5821) target = $region56
      $region55: #{residual_block_forward.1} parent=5 // pred_region
        %s5824 = ssub.s32 %s16, 2
        // Predicated region
        $region57: #{residual_block_forward.1} parent=55 // pred_check
          %p5825 = pneg %p197
        $region58: #{residual_block_forward.1} parent=55 // pred_check_branch
          %5827 = sbr.rel (%p5825) target = $region60
        $region59: #{residual_block_forward.1} parent=55 // pred_region
          %s5828 = sand.u32 %s182, 1
          %s5829 = scalar_lea.sflag [#allocation6], %s5828
          %s5830 = sand.u32 %s182, 1
          %s5831 = smul.addr %s5830, 256
          %s5832 = scalar_lea.vmem [#allocation5], %s5831
          %5833 = dma.done %s5829, 4096
        $region60: #{residual_block_forward.1} parent=55 // pred_fallthru
          _
      $region56: #{residual_block_forward.1} parent=5 // pred_fallthru
        _
    $region6: #{residual_block_forward.1} parent=1 // loop_footer
      %s20 = sadd.s32 1, %s16
    $region7: #{residual_block_forward.1} parent=1 // loop_footer_branch
      %15 = sbr.rel target = $region3
    $region8: #{residual_block_forward.1} parent=1 // loop_exit
      _
    %5834 = vsyncpa [#allocation6], 1
    %s5835 = scalar_lea.sflag [#allocation6], 1
    %5836 = vsyncpa %s5835, 1

</llo_original>
